<compile_context>
chip_gen: v7x
topology: tpu7x:2x2x1
jax: 0.10.0
libtpu: 0.0.40
codegen_flags: <defaults>
</compile_context>

<pallas_src>
import functools

import numpy as np
import jax
import jax.numpy as jnp
from jax import lax
from jax.experimental import pallas as pl
from jax.experimental.pallas import tpu as pltpu

NUM_OUT = 26       # reference hard-codes 26 output channels
MAX_REGIONS = 32   # static cap on number of tracked components
AREA_MIN = 100     # reference skips regions with bbox area < 100


def _doubling_dists(extent):
    """Doubling distances 1,2,4,... whose prefix sums cover extent-1 pixels."""
    ds, reach, d = [], 0, 1
    while reach < extent - 1:
        ds.append(d)
        reach += d
        d *= 2
    return ds


def _region_cluster_kernel(mask_ref, out_ref, mpad_ref, *, H, W, HP, WP, max_outer):
    big = jnp.int32(HP * WP + 2)

    # ---------------- mask compare + padding folded into the kernel ----------
    mpad_ref[...] = jnp.zeros((HP, WP), jnp.int32)
    mpad_ref[0:H, 0:W] = (mask_ref[...].astype(jnp.int32) != 0).astype(jnp.int32)
    m_i32 = mpad_ref[...]                                    # (HP, WP) 0/1

    row = lax.broadcasted_iota(jnp.int32, (HP, WP), 0)
    col = lax.broadcasted_iota(jnp.int32, (HP, WP), 1)
    lin1 = row * WP + col + 1
    init = jnp.where(m_i32 > 0, lin1, big)                   # label = linear idx + 1
    bg_pen = jnp.where(m_i32 > 0, jnp.int32(0), big)         # max() with this resets bg

    # ------------- loop-invariant in-run gating penalties (precomputed) -------
    # gate == 0 where taking the min with the value 2**k away (same all-
    # foreground run) is allowed, `big` where it must be suppressed.  Built
    # with the same roll op used for the values, so it is correct regardless
    # of the hardware rotate direction; wrap-around spans always contain the
    # padded background border row/column, hence are never spuriously enabled.
    def _gates(axis, size, dists):
        toward, away = [], []
        ok, prev = None, None
        for d in dists:
            if ok is None:
                ok = jnp.minimum(m_i32, pltpu.roll(m_i32, d, axis=axis))
            else:
                ok = jnp.minimum(ok, pltpu.roll(ok, prev, axis=axis))
            toward.append(jnp.where(ok > 0, jnp.int32(0), big))
            away.append(jnp.where(pltpu.roll(ok, size - d, axis=axis) > 0,
                                  jnp.int32(0), big))
            prev = d
        return toward, away

    h_dists = _doubling_dists(W)
    v_dists = _doubling_dists(H)
    h_toward, h_away = _gates(1, WP, h_dists)
    v_toward, v_away = _gates(0, HP, v_dists)

    # ---------------- connected-component labeling (8-connected) -------------
    def neighborhood_min(lab):
        # 3x3 8-neighbour min handles diagonal adjacency; the max() reset keeps
        # roll wrap-around artifacts confined to the padded background border.
        h = jnp.minimum(lab, jnp.minimum(pltpu.roll(lab, 1, axis=1),
                                         pltpu.roll(lab, WP - 1, axis=1)))
        v = jnp.minimum(h, jnp.minimum(pltpu.roll(h, 1, axis=0),
                                       pltpu.roll(h, HP - 1, axis=0)))
        return jnp.maximum(v, bg_pen)

    def run_sweep(lab, axis, size, dists, toward, away):
        # Segmented symmetric-doubling min: after the sweep every foreground
        # cell holds the min label of its whole row/column run.
        for d, gt, ga in zip(dists, toward, away):
            vt = pltpu.roll(lab, d, axis=axis)
            va = pltpu.roll(lab, size - d, axis=axis)
            lab = jnp.minimum(lab, vt + gt)
            lab = jnp.minimum(lab, va + ga)
        return lab

    def ccl_cond(state):
        it, changed, _ = state
        return jnp.logical_and(changed > 0, it < max_outer)

    def ccl_body(state):
        it, _, lab = state
        new = neighborhood_min(lab)
        new = run_sweep(new, 1, WP, h_dists, h_toward, h_away)
        new = run_sweep(new, 0, HP, v_dists, v_toward, v_away)
        changed = jnp.max(jnp.where(new != lab, jnp.int32(1), jnp.int32(0)))
        return it + 1, changed, new

    _, _, lab = lax.while_loop(ccl_cond, ccl_body,
                               (jnp.int32(0), jnp.int32(1), init))

    # ------------- fused candidate extraction + bounding boxes ----------------
    # Component roots = cells whose converged label equals their own initial
    # label; extracting them in ascending order matches skimage's label order.
    roots0 = jnp.where(lab == lin1, lab, big)

    riota = lax.broadcasted_iota(jnp.int32, (HP, 1), 0)
    ciota = lax.broadcasted_iota(jnp.int32, (1, WP), 1)
    lane = lax.broadcasted_iota(jnp.int32, (1, MAX_REGIONS), 1)
    subl = lax.broadcasted_iota(jnp.int32, (MAX_REGIONS, 1), 0)
    zl = jnp.zeros((1, MAX_REGIONS), jnp.int32)
    zs = jnp.zeros((MAX_REGIONS, 1), jnp.int32)
    one = jnp.int32(1)

    def cand_cond(state):
        i, go = state[0], state[1]
        return jnp.logical_and(go > 0, i < MAX_REGIONS)

    def cand_body(state):
        (i, _, roots,
         ymin_l, xmin_l, ymax_l, xmax_l, vld_l,
         ymin_s, xmin_s, ymax_s, xmax_s, vld_s) = state
        cur = jnp.min(roots)                                 # smallest remaining root
        valid = cur < big
        match = jnp.where(jnp.logical_and(lab == cur, valid), one, 0)
        rowp = jnp.max(match, axis=1, keepdims=True) > 0     # (HP, 1) presence
        colp = jnp.max(match, axis=0, keepdims=True) > 0     # (1, WP) presence
        ymin_i = jnp.min(jnp.where(rowp, riota, big))
        ymax_i = jnp.max(jnp.where(rowp, riota + 1, 0))
        xmin_i = jnp.min(jnp.where(colp, ciota, big))
        xmax_i = jnp.max(jnp.where(colp, ciota + 1, 0))
        vld_i = jnp.where(valid, one, jnp.int32(0))
        sl = lane == i                                        # lane one-hot
        ss = subl == i                                        # sublane one-hot
        ymin_l = jnp.where(sl, ymin_i, ymin_l); ymin_s = jnp.where(ss, ymin_i, ymin_s)
        xmin_l = jnp.where(sl, xmin_i, xmin_l); xmin_s = jnp.where(ss, xmin_i, xmin_s)
        ymax_l = jnp.where(sl, ymax_i, ymax_l); ymax_s = jnp.where(ss, ymax_i, ymax_s)
        xmax_l = jnp.where(sl, xmax_i, xmax_l); xmax_s = jnp.where(ss, xmax_i, xmax_s)
        vld_l = jnp.where(sl, vld_i, vld_l);    vld_s = jnp.where(ss, vld_i, vld_s)
        roots = jnp.where(roots == cur, big, roots)
        return (i + 1, vld_i, roots,
                ymin_l, xmin_l, ymax_l, xmax_l, vld_l,
                ymin_s, xmin_s, ymax_s, xmax_s, vld_s)

    state = (jnp.int32(0), jnp.int32(1), roots0,
             zl, zl, zl, zl, zl, zs, zs, zs, zs, zs)
    state = lax.while_loop(cand_cond, cand_body, state)
    (_, _, _, ymin_l, xmin_l, ymax_l, xmax_l, vld_l,
     ymin_s, xmin_s, ymax_s, xmax_s, vld_s) = state

    # ------------- centroid sort / top-26 / area filter / slot assignment -----
    key_l = xmin_l + xmax_l                                  # 2*centroid, same order
    key_s = xmin_s + xmax_s
    area_l = (xmax_l - xmin_l) * (ymax_l - ymin_l)
    area_s = (xmax_s - xmin_s) * (ymax_s - ymin_s)
    valid_l = vld_l > 0
    valid_s = vld_s > 0

    # before[i, j]: candidate i (sublane) precedes candidate j (lane) in the
    # stable (centroid, label-order) sort; behind is the mirrored relation.
    before = jnp.logical_or(key_s < key_l,
                            jnp.logical_and(key_s == key_l, subl < lane))
    behind = jnp.logical_or(key_l < key_s,
                            jnp.logical_and(key_l == key_s, lane < subl))
    rank_l = jnp.sum(jnp.where(jnp.logical_and(before, valid_s), one, 0),
                     axis=0, keepdims=True)                  # (1, 32)
    rank_s = jnp.sum(jnp.where(jnp.logical_and(behind, valid_l), one, 0),
                     axis=1, keepdims=True)                  # (32, 1)
    keep_l = jnp.logical_and(jnp.logical_and(valid_l, rank_l < NUM_OUT),
                             area_l >= AREA_MIN)
    keep_s = jnp.logical_and(jnp.logical_and(valid_s, rank_s < NUM_OUT),
                             area_s >= AREA_MIN)
    channel_l = jnp.sum(jnp.where(jnp.logical_and(before, keep_s), one, 0),
                        axis=0, keepdims=True)               # output slot per cand.
    keep_flag = jnp.where(keep_l, one, jnp.int32(0))

    # ------------- paint the (26, H, W) uint8 output directly -----------------
    prow = lax.broadcasted_iota(jnp.int32, (H, W), 0)
    pcol = lax.broadcasted_iota(jnp.int32, (H, W), 1)
    for ch in range(NUM_OUT):
        sel = jnp.logical_and(keep_flag > 0, channel_l == ch)   # at most one lane
        y0 = jnp.min(jnp.where(sel, ymin_l, big))
        x0 = jnp.min(jnp.where(sel, xmin_l, big))
        y1 = jnp.max(jnp.where(sel, ymax_l, 0))
        x1 = jnp.max(jnp.where(sel, xmax_l, 0))
        inside = jnp.logical_and(
            jnp.logical_and(prow >= y0, prow < y1),
            jnp.logical_and(pcol >= x0, pcol < x1))
        out_ref[ch, :, :] = inside.astype(jnp.uint8)


def _pad_dims(H, W):
    # >= 1 background border row/col so roll wrap-around only carries the
    # background sentinel; padded dims are (multiple of 8, multiple of 128).
    HP = -(-(H + 1) // 8) * 8
    WP = -(-(W + 1) // 128) * 128
    return HP, WP


@jax.jit
def region_cluster_forward(mask):
    """Equivalent of region_cluster.forward(mask) -> uint8[26, H, W]."""
    H, W = mask.shape
    HP, WP = _pad_dims(H, W)
    kernel = functools.partial(_region_cluster_kernel, H=H, W=W, HP=HP, WP=WP,
                               max_outer=2 * (HP + WP))
    return pl.pallas_call(
        kernel,
        out_shape=jax.ShapeDtypeStruct((NUM_OUT, H, W), jnp.uint8),
        scratch_shapes=[pltpu.VMEM((HP, WP), jnp.int32)],
    )(mask)


if __name__ == "__main__":
    H = W = 64
    key = jax.random.PRNGKey(0)

    # --- Structured test with a known answer (disjoint blobs) ---
    mask_np = np.zeros((H, W), np.uint8)
    mask_np[2:20, 40:60] = 1       # rect: bbox area 360, centroid 50
    mask_np[30:62, 4:30] = 1       # rect: bbox area 832, centroid 17
    mask_np[5:9, 5:9] = 1          # rect: bbox area 16 (<100 -> skipped), centroid 7
    mask_np[40:60, 40:50] = 1      # L-shape (two touching rects):
    mask_np[55:60, 50:62] = 1      #   union bbox area 440, centroid 51
    mask = jnp.asarray(mask_np)

    out = jax.block_until_ready(region_cluster_forward(mask))

    expected = np.zeros((NUM_OUT, H, W), np.uint8)
    expected[0, 30:62, 4:30] = 1   # centroid 17, area 832
    expected[1, 2:20, 40:60] = 1   # centroid 50, area 360
    expected[2, 40:60, 40:62] = 1  # centroid 51, area 440 (merged L-shape bbox)
    assert out.shape == (NUM_OUT, H, W) and out.dtype == jnp.uint8
    assert np.array_equal(np.asarray(out), expected), "mismatch vs reference"

    # --- Empty-mask test (reference returns all zeros) ---
    out_empty = jax.block_until_ready(
        region_cluster_forward(jnp.zeros((H, W), jnp.uint8)))
    assert not np.asarray(out_empty).any()

    # --- Random smoke test (deterministic input via PRNGKey(0)) ---
    rand_mask = (jax.random.uniform(key, (H, W)) > 0.8).astype(jnp.uint8)
    out2 = jax.block_until_ready(region_cluster_forward(rand_mask))
    assert out2.shape == (NUM_OUT, H, W) and out2.dtype == jnp.uint8

    print("KERNEL_OK")
</pallas_src>

<mosaic_0001>
module attributes {stable_mosaic.version = 11 : i64} {
  func.func @_region_cluster_kernel(%arg0: memref<64x64xi8, #tpu.memory_space<vmem>>, %arg1: memref<26x64x64xi8, #tpu.memory_space<vmem>>, %arg2: memref<72x128xi32, #tpu.memory_space<vmem>>) attributes {dimension_semantics = [], scalar_prefetch = 0 : i64, scratch_operands = 1 : i64, tpu.core_type = #tpu.core_type<tc>} {
    %c0_i32 = arith.constant 0 : i32
    %0 = vector.broadcast %c0_i32 : i32 to vector<72x128xi32>
    %c0 = arith.constant 0 : index
    %c0_0 = arith.constant 0 : index
    %1 = vector.load %arg2[%c0, %c0_0] : memref<72x128xi32, #tpu.memory_space<vmem>>, vector<72x128xi32>
    tpu.vector_store %arg2[%c0, %c0_0], %0 {strides = array<i32>} : memref<72x128xi32, #tpu.memory_space<vmem>>, vector<72x128xi32>,
    %c0_1 = arith.constant 0 : index
    %c0_2 = arith.constant 0 : index
    %2 = vector.load %arg0[%c0_1, %c0_2] : memref<64x64xi8, #tpu.memory_space<vmem>>, vector<64x64xi8>
    %3 = arith.extui %2 : vector<64x64xi8> to vector<64x64xi32>
    %c0_i32_3 = arith.constant 0 : i32
    %4 = vector.broadcast %c0_i32_3 : i32 to vector<64x64xi32>
    %5 = arith.cmpi ne, %3, %4 : vector<64x64xi32>
    %6 = arith.extui %5 : vector<64x64xi1> to vector<64x64xi32>
    %c0_4 = arith.constant 0 : index
    %c0_5 = arith.constant 0 : index
    %7 = vector.load %arg2[%c0_4, %c0_5] : memref<72x128xi32, #tpu.memory_space<vmem>>, vector<64x64xi32>
    tpu.vector_store %arg2[%c0_4, %c0_5], %6 {strides = array<i32>} : memref<72x128xi32, #tpu.memory_space<vmem>>, vector<64x64xi32>,
    %c0_6 = arith.constant 0 : index
    %c0_7 = arith.constant 0 : index
    %8 = vector.load %arg2[%c0_6, %c0_7] : memref<72x128xi32, #tpu.memory_space<vmem>>, vector<72x128xi32>
    %9 = tpu.iota {dimensions = array<i32: 0>} : vector<72x128xi32>
    %10 = tpu.iota {dimensions = array<i32: 1>} : vector<72x128xi32>
    %c128_i32 = arith.constant 128 : i32
    %11 = vector.broadcast %c128_i32 : i32 to vector<72x128xi32>
    %12 = arith.muli %9, %11 : vector<72x128xi32>
    %13 = arith.addi %12, %10 : vector<72x128xi32>
    %c1_i32 = arith.constant 1 : i32
    %14 = vector.broadcast %c1_i32 : i32 to vector<72x128xi32>
    %15 = arith.addi %13, %14 : vector<72x128xi32>
    %c0_i32_8 = arith.constant 0 : i32
    %16 = vector.broadcast %c0_i32_8 : i32 to vector<72x128xi32>
    %17 = arith.cmpi sgt, %8, %16 : vector<72x128xi32>
    %c9218_i32 = arith.constant 9218 : i32
    %18 = vector.broadcast %c9218_i32 : i32 to vector<72x128xi32>
    %19 = arith.select %17, %15, %18 : vector<72x128xi1>, vector<72x128xi32>
    %c0_i32_9 = arith.constant 0 : i32
    %20 = vector.broadcast %c0_i32_9 : i32 to vector<72x128xi32>
    %21 = arith.cmpi sgt, %8, %20 : vector<72x128xi32>
    %c0_i32_10 = arith.constant 0 : i32
    %c9218_i32_11 = arith.constant 9218 : i32
    %22 = vector.broadcast %c0_i32_10 : i32 to vector<72x128xi32>
    %23 = vector.broadcast %c9218_i32_11 : i32 to vector<72x128xi32>
    %24 = arith.select %21, %22, %23 : vector<72x128xi1>, vector<72x128xi32>
    %c1_i32_12 = arith.constant 1 : i32
    %25 = tpu.dynamic_rotate %8 by %c1_i32_12 dim 1 : vector<72x128xi32>, i32 -> vector<72x128xi32>
    %26 = arith.minsi %8, %25 : vector<72x128xi32>
    %c0_i32_13 = arith.constant 0 : i32
    %27 = vector.broadcast %c0_i32_13 : i32 to vector<72x128xi32>
    %28 = arith.cmpi sgt, %26, %27 : vector<72x128xi32>
    %c0_i32_14 = arith.constant 0 : i32
    %c9218_i32_15 = arith.constant 9218 : i32
    %29 = vector.broadcast %c0_i32_14 : i32 to vector<72x128xi32>
    %30 = vector.broadcast %c9218_i32_15 : i32 to vector<72x128xi32>
    %31 = arith.select %28, %29, %30 : vector<72x128xi1>, vector<72x128xi32>
    %c127_i32 = arith.constant 127 : i32
    %32 = tpu.dynamic_rotate %26 by %c127_i32 dim 1 : vector<72x128xi32>, i32 -> vector<72x128xi32>
    %c0_i32_16 = arith.constant 0 : i32
    %33 = vector.broadcast %c0_i32_16 : i32 to vector<72x128xi32>
    %34 = arith.cmpi sgt, %32, %33 : vector<72x128xi32>
    %c0_i32_17 = arith.constant 0 : i32
    %c9218_i32_18 = arith.constant 9218 : i32
    %35 = vector.broadcast %c0_i32_17 : i32 to vector<72x128xi32>
    %36 = vector.broadcast %c9218_i32_18 : i32 to vector<72x128xi32>
    %37 = arith.select %34, %35, %36 : vector<72x128xi1>, vector<72x128xi32>
    %c1_i32_19 = arith.constant 1 : i32
    %38 = tpu.dynamic_rotate %26 by %c1_i32_19 dim 1 : vector<72x128xi32>, i32 -> vector<72x128xi32>
    %39 = arith.minsi %26, %38 : vector<72x128xi32>
    %c0_i32_20 = arith.constant 0 : i32
    %40 = vector.broadcast %c0_i32_20 : i32 to vector<72x128xi32>
    %41 = arith.cmpi sgt, %39, %40 : vector<72x128xi32>
    %c0_i32_21 = arith.constant 0 : i32
    %c9218_i32_22 = arith.constant 9218 : i32
    %42 = vector.broadcast %c0_i32_21 : i32 to vector<72x128xi32>
    %43 = vector.broadcast %c9218_i32_22 : i32 to vector<72x128xi32>
    %44 = arith.select %41, %42, %43 : vector<72x128xi1>, vector<72x128xi32>
    %c126_i32 = arith.constant 126 : i32
    %45 = tpu.dynamic_rotate %39 by %c126_i32 dim 1 : vector<72x128xi32>, i32 -> vector<72x128xi32>
    %c0_i32_23 = arith.constant 0 : i32
    %46 = vector.broadcast %c0_i32_23 : i32 to vector<72x128xi32>
    %47 = arith.cmpi sgt, %45, %46 : vector<72x128xi32>
    %c0_i32_24 = arith.constant 0 : i32
    %c9218_i32_25 = arith.constant 9218 : i32
    %48 = vector.broadcast %c0_i32_24 : i32 to vector<72x128xi32>
    %49 = vector.broadcast %c9218_i32_25 : i32 to vector<72x128xi32>
    %50 = arith.select %47, %48, %49 : vector<72x128xi1>, vector<72x128xi32>
    %c2_i32 = arith.constant 2 : i32
    %51 = tpu.dynamic_rotate %39 by %c2_i32 dim 1 : vector<72x128xi32>, i32 -> vector<72x128xi32>
    %52 = arith.minsi %39, %51 : vector<72x128xi32>
    %c0_i32_26 = arith.constant 0 : i32
    %53 = vector.broadcast %c0_i32_26 : i32 to vector<72x128xi32>
    %54 = arith.cmpi sgt, %52, %53 : vector<72x128xi32>
    %c0_i32_27 = arith.constant 0 : i32
    %c9218_i32_28 = arith.constant 9218 : i32
    %55 = vector.broadcast %c0_i32_27 : i32 to vector<72x128xi32>
    %56 = vector.broadcast %c9218_i32_28 : i32 to vector<72x128xi32>
    %57 = arith.select %54, %55, %56 : vector<72x128xi1>, vector<72x128xi32>
    %c124_i32 = arith.constant 124 : i32
    %58 = tpu.dynamic_rotate %52 by %c124_i32 dim 1 : vector<72x128xi32>, i32 -> vector<72x128xi32>
    %c0_i32_29 = arith.constant 0 : i32
    %59 = vector.broadcast %c0_i32_29 : i32 to vector<72x128xi32>
    %60 = arith.cmpi sgt, %58, %59 : vector<72x128xi32>
    %c0_i32_30 = arith.constant 0 : i32
    %c9218_i32_31 = arith.constant 9218 : i32
    %61 = vector.broadcast %c0_i32_30 : i32 to vector<72x128xi32>
    %62 = vector.broadcast %c9218_i32_31 : i32 to vector<72x128xi32>
    %63 = arith.select %60, %61, %62 : vector<72x128xi1>, vector<72x128xi32>
    %c4_i32 = arith.constant 4 : i32
    %64 = tpu.dynamic_rotate %52 by %c4_i32 dim 1 : vector<72x128xi32>, i32 -> vector<72x128xi32>
    %65 = arith.minsi %52, %64 : vector<72x128xi32>
    %c0_i32_32 = arith.constant 0 : i32
    %66 = vector.broadcast %c0_i32_32 : i32 to vector<72x128xi32>
    %67 = arith.cmpi sgt, %65, %66 : vector<72x128xi32>
    %c0_i32_33 = arith.constant 0 : i32
    %c9218_i32_34 = arith.constant 9218 : i32
    %68 = vector.broadcast %c0_i32_33 : i32 to vector<72x128xi32>
    %69 = vector.broadcast %c9218_i32_34 : i32 to vector<72x128xi32>
    %70 = arith.select %67, %68, %69 : vector<72x128xi1>, vector<72x128xi32>
    %c120_i32 = arith.constant 120 : i32
    %71 = tpu.dynamic_rotate %65 by %c120_i32 dim 1 : vector<72x128xi32>, i32 -> vector<72x128xi32>
    %c0_i32_35 = arith.constant 0 : i32
    %72 = vector.broadcast %c0_i32_35 : i32 to vector<72x128xi32>
    %73 = arith.cmpi sgt, %71, %72 : vector<72x128xi32>
    %c0_i32_36 = arith.constant 0 : i32
    %c9218_i32_37 = arith.constant 9218 : i32
    %74 = vector.broadcast %c0_i32_36 : i32 to vector<72x128xi32>
    %75 = vector.broadcast %c9218_i32_37 : i32 to vector<72x128xi32>
    %76 = arith.select %73, %74, %75 : vector<72x128xi1>, vector<72x128xi32>
    %c8_i32 = arith.constant 8 : i32
    %77 = tpu.dynamic_rotate %65 by %c8_i32 dim 1 : vector<72x128xi32>, i32 -> vector<72x128xi32>
    %78 = arith.minsi %65, %77 : vector<72x128xi32>
    %c0_i32_38 = arith.constant 0 : i32
    %79 = vector.broadcast %c0_i32_38 : i32 to vector<72x128xi32>
    %80 = arith.cmpi sgt, %78, %79 : vector<72x128xi32>
    %c0_i32_39 = arith.constant 0 : i32
    %c9218_i32_40 = arith.constant 9218 : i32
    %81 = vector.broadcast %c0_i32_39 : i32 to vector<72x128xi32>
    %82 = vector.broadcast %c9218_i32_40 : i32 to vector<72x128xi32>
    %83 = arith.select %80, %81, %82 : vector<72x128xi1>, vector<72x128xi32>
    %c112_i32 = arith.constant 112 : i32
    %84 = tpu.dynamic_rotate %78 by %c112_i32 dim 1 : vector<72x128xi32>, i32 -> vector<72x128xi32>
    %c0_i32_41 = arith.constant 0 : i32
    %85 = vector.broadcast %c0_i32_41 : i32 to vector<72x128xi32>
    %86 = arith.cmpi sgt, %84, %85 : vector<72x128xi32>
    %c0_i32_42 = arith.constant 0 : i32
    %c9218_i32_43 = arith.constant 9218 : i32
    %87 = vector.broadcast %c0_i32_42 : i32 to vector<72x128xi32>
    %88 = vector.broadcast %c9218_i32_43 : i32 to vector<72x128xi32>
    %89 = arith.select %86, %87, %88 : vector<72x128xi1>, vector<72x128xi32>
    %c16_i32 = arith.constant 16 : i32
    %90 = tpu.dynamic_rotate %78 by %c16_i32 dim 1 : vector<72x128xi32>, i32 -> vector<72x128xi32>
    %91 = arith.minsi %78, %90 : vector<72x128xi32>
    %c0_i32_44 = arith.constant 0 : i32
    %92 = vector.broadcast %c0_i32_44 : i32 to vector<72x128xi32>
    %93 = arith.cmpi sgt, %91, %92 : vector<72x128xi32>
    %c0_i32_45 = arith.constant 0 : i32
    %c9218_i32_46 = arith.constant 9218 : i32
    %94 = vector.broadcast %c0_i32_45 : i32 to vector<72x128xi32>
    %95 = vector.broadcast %c9218_i32_46 : i32 to vector<72x128xi32>
    %96 = arith.select %93, %94, %95 : vector<72x128xi1>, vector<72x128xi32>
    %c96_i32 = arith.constant 96 : i32
    %97 = tpu.dynamic_rotate %91 by %c96_i32 dim 1 : vector<72x128xi32>, i32 -> vector<72x128xi32>
    %c0_i32_47 = arith.constant 0 : i32
    %98 = vector.broadcast %c0_i32_47 : i32 to vector<72x128xi32>
    %99 = arith.cmpi sgt, %97, %98 : vector<72x128xi32>
    %c0_i32_48 = arith.constant 0 : i32
    %c9218_i32_49 = arith.constant 9218 : i32
    %100 = vector.broadcast %c0_i32_48 : i32 to vector<72x128xi32>
    %101 = vector.broadcast %c9218_i32_49 : i32 to vector<72x128xi32>
    %102 = arith.select %99, %100, %101 : vector<72x128xi1>, vector<72x128xi32>
    %c1_i32_50 = arith.constant 1 : i32
    %103 = tpu.dynamic_rotate %8 by %c1_i32_50 dim 0 : vector<72x128xi32>, i32 -> vector<72x128xi32>
    %104 = arith.minsi %8, %103 : vector<72x128xi32>
    %c0_i32_51 = arith.constant 0 : i32
    %105 = vector.broadcast %c0_i32_51 : i32 to vector<72x128xi32>
    %106 = arith.cmpi sgt, %104, %105 : vector<72x128xi32>
    %c0_i32_52 = arith.constant 0 : i32
    %c9218_i32_53 = arith.constant 9218 : i32
    %107 = vector.broadcast %c0_i32_52 : i32 to vector<72x128xi32>
    %108 = vector.broadcast %c9218_i32_53 : i32 to vector<72x128xi32>
    %109 = arith.select %106, %107, %108 : vector<72x128xi1>, vector<72x128xi32>
    %c71_i32 = arith.constant 71 : i32
    %110 = tpu.dynamic_rotate %104 by %c71_i32 dim 0 : vector<72x128xi32>, i32 -> vector<72x128xi32>
    %c0_i32_54 = arith.constant 0 : i32
    %111 = vector.broadcast %c0_i32_54 : i32 to vector<72x128xi32>
    %112 = arith.cmpi sgt, %110, %111 : vector<72x128xi32>
    %c0_i32_55 = arith.constant 0 : i32
    %c9218_i32_56 = arith.constant 9218 : i32
    %113 = vector.broadcast %c0_i32_55 : i32 to vector<72x128xi32>
    %114 = vector.broadcast %c9218_i32_56 : i32 to vector<72x128xi32>
    %115 = arith.select %112, %113, %114 : vector<72x128xi1>, vector<72x128xi32>
    %c1_i32_57 = arith.constant 1 : i32
    %116 = tpu.dynamic_rotate %104 by %c1_i32_57 dim 0 : vector<72x128xi32>, i32 -> vector<72x128xi32>
    %117 = arith.minsi %104, %116 : vector<72x128xi32>
    %c0_i32_58 = arith.constant 0 : i32
    %118 = vector.broadcast %c0_i32_58 : i32 to vector<72x128xi32>
    %119 = arith.cmpi sgt, %117, %118 : vector<72x128xi32>
    %c0_i32_59 = arith.constant 0 : i32
    %c9218_i32_60 = arith.constant 9218 : i32
    %120 = vector.broadcast %c0_i32_59 : i32 to vector<72x128xi32>
    %121 = vector.broadcast %c9218_i32_60 : i32 to vector<72x128xi32>
    %122 = arith.select %119, %120, %121 : vector<72x128xi1>, vector<72x128xi32>
    %c70_i32 = arith.constant 70 : i32
    %123 = tpu.dynamic_rotate %117 by %c70_i32 dim 0 : vector<72x128xi32>, i32 -> vector<72x128xi32>
    %c0_i32_61 = arith.constant 0 : i32
    %124 = vector.broadcast %c0_i32_61 : i32 to vector<72x128xi32>
    %125 = arith.cmpi sgt, %123, %124 : vector<72x128xi32>
    %c0_i32_62 = arith.constant 0 : i32
    %c9218_i32_63 = arith.constant 9218 : i32
    %126 = vector.broadcast %c0_i32_62 : i32 to vector<72x128xi32>
    %127 = vector.broadcast %c9218_i32_63 : i32 to vector<72x128xi32>
    %128 = arith.select %125, %126, %127 : vector<72x128xi1>, vector<72x128xi32>
    %c2_i32_64 = arith.constant 2 : i32
    %129 = tpu.dynamic_rotate %117 by %c2_i32_64 dim 0 : vector<72x128xi32>, i32 -> vector<72x128xi32>
    %130 = arith.minsi %117, %129 : vector<72x128xi32>
    %c0_i32_65 = arith.constant 0 : i32
    %131 = vector.broadcast %c0_i32_65 : i32 to vector<72x128xi32>
    %132 = arith.cmpi sgt, %130, %131 : vector<72x128xi32>
    %c0_i32_66 = arith.constant 0 : i32
    %c9218_i32_67 = arith.constant 9218 : i32
    %133 = vector.broadcast %c0_i32_66 : i32 to vector<72x128xi32>
    %134 = vector.broadcast %c9218_i32_67 : i32 to vector<72x128xi32>
    %135 = arith.select %132, %133, %134 : vector<72x128xi1>, vector<72x128xi32>
    %c68_i32 = arith.constant 68 : i32
    %136 = tpu.dynamic_rotate %130 by %c68_i32 dim 0 : vector<72x128xi32>, i32 -> vector<72x128xi32>
    %c0_i32_68 = arith.constant 0 : i32
    %137 = vector.broadcast %c0_i32_68 : i32 to vector<72x128xi32>
    %138 = arith.cmpi sgt, %136, %137 : vector<72x128xi32>
    %c0_i32_69 = arith.constant 0 : i32
    %c9218_i32_70 = arith.constant 9218 : i32
    %139 = vector.broadcast %c0_i32_69 : i32 to vector<72x128xi32>
    %140 = vector.broadcast %c9218_i32_70 : i32 to vector<72x128xi32>
    %141 = arith.select %138, %139, %140 : vector<72x128xi1>, vector<72x128xi32>
    %c4_i32_71 = arith.constant 4 : i32
    %142 = tpu.dynamic_rotate %130 by %c4_i32_71 dim 0 : vector<72x128xi32>, i32 -> vector<72x128xi32>
    %143 = arith.minsi %130, %142 : vector<72x128xi32>
    %c0_i32_72 = arith.constant 0 : i32
    %144 = vector.broadcast %c0_i32_72 : i32 to vector<72x128xi32>
    %145 = arith.cmpi sgt, %143, %144 : vector<72x128xi32>
    %c0_i32_73 = arith.constant 0 : i32
    %c9218_i32_74 = arith.constant 9218 : i32
    %146 = vector.broadcast %c0_i32_73 : i32 to vector<72x128xi32>
    %147 = vector.broadcast %c9218_i32_74 : i32 to vector<72x128xi32>
    %148 = arith.select %145, %146, %147 : vector<72x128xi1>, vector<72x128xi32>
    %c64_i32 = arith.constant 64 : i32
    %149 = tpu.dynamic_rotate %143 by %c64_i32 dim 0 : vector<72x128xi32>, i32 -> vector<72x128xi32>
    %c0_i32_75 = arith.constant 0 : i32
    %150 = vector.broadcast %c0_i32_75 : i32 to vector<72x128xi32>
    %151 = arith.cmpi sgt, %149, %150 : vector<72x128xi32>
    %c0_i32_76 = arith.constant 0 : i32
    %c9218_i32_77 = arith.constant 9218 : i32
    %152 = vector.broadcast %c0_i32_76 : i32 to vector<72x128xi32>
    %153 = vector.broadcast %c9218_i32_77 : i32 to vector<72x128xi32>
    %154 = arith.select %151, %152, %153 : vector<72x128xi1>, vector<72x128xi32>
    %c8_i32_78 = arith.constant 8 : i32
    %155 = tpu.dynamic_rotate %143 by %c8_i32_78 dim 0 : vector<72x128xi32>, i32 -> vector<72x128xi32>
    %156 = arith.minsi %143, %155 : vector<72x128xi32>
    %c0_i32_79 = arith.constant 0 : i32
    %157 = vector.broadcast %c0_i32_79 : i32 to vector<72x128xi32>
    %158 = arith.cmpi sgt, %156, %157 : vector<72x128xi32>
    %c0_i32_80 = arith.constant 0 : i32
    %c9218_i32_81 = arith.constant 9218 : i32
    %159 = vector.broadcast %c0_i32_80 : i32 to vector<72x128xi32>
    %160 = vector.broadcast %c9218_i32_81 : i32 to vector<72x128xi32>
    %161 = arith.select %158, %159, %160 : vector<72x128xi1>, vector<72x128xi32>
    %c56_i32 = arith.constant 56 : i32
    %162 = tpu.dynamic_rotate %156 by %c56_i32 dim 0 : vector<72x128xi32>, i32 -> vector<72x128xi32>
    %c0_i32_82 = arith.constant 0 : i32
    %163 = vector.broadcast %c0_i32_82 : i32 to vector<72x128xi32>
    %164 = arith.cmpi sgt, %162, %163 : vector<72x128xi32>
    %c0_i32_83 = arith.constant 0 : i32
    %c9218_i32_84 = arith.constant 9218 : i32
    %165 = vector.broadcast %c0_i32_83 : i32 to vector<72x128xi32>
    %166 = vector.broadcast %c9218_i32_84 : i32 to vector<72x128xi32>
    %167 = arith.select %164, %165, %166 : vector<72x128xi1>, vector<72x128xi32>
    %c16_i32_85 = arith.constant 16 : i32
    %168 = tpu.dynamic_rotate %156 by %c16_i32_85 dim 0 : vector<72x128xi32>, i32 -> vector<72x128xi32>
    %169 = arith.minsi %156, %168 : vector<72x128xi32>
    %c0_i32_86 = arith.constant 0 : i32
    %170 = vector.broadcast %c0_i32_86 : i32 to vector<72x128xi32>
    %171 = arith.cmpi sgt, %169, %170 : vector<72x128xi32>
    %c0_i32_87 = arith.constant 0 : i32
    %c9218_i32_88 = arith.constant 9218 : i32
    %172 = vector.broadcast %c0_i32_87 : i32 to vector<72x128xi32>
    %173 = vector.broadcast %c9218_i32_88 : i32 to vector<72x128xi32>
    %174 = arith.select %171, %172, %173 : vector<72x128xi1>, vector<72x128xi32>
    %c40_i32 = arith.constant 40 : i32
    %175 = tpu.dynamic_rotate %169 by %c40_i32 dim 0 : vector<72x128xi32>, i32 -> vector<72x128xi32>
    %c0_i32_89 = arith.constant 0 : i32
    %176 = vector.broadcast %c0_i32_89 : i32 to vector<72x128xi32>
    %177 = arith.cmpi sgt, %175, %176 : vector<72x128xi32>
    %c0_i32_90 = arith.constant 0 : i32
    %c9218_i32_91 = arith.constant 9218 : i32
    %178 = vector.broadcast %c0_i32_90 : i32 to vector<72x128xi32>
    %179 = vector.broadcast %c9218_i32_91 : i32 to vector<72x128xi32>
    %180 = arith.select %177, %178, %179 : vector<72x128xi1>, vector<72x128xi32>
    %c0_i32_92 = arith.constant 0 : i32
    %c1_i32_93 = arith.constant 1 : i32
    %181:3 = scf.while (%arg3 = %c0_i32_92, %arg4 = %c1_i32_93, %arg5 = %19) : (i32, i32, vector<72x128xi32>) -> (i32, i32, vector<72x128xi32>) {
      %c0_i32_408 = arith.constant 0 : i32
      %1408 = arith.cmpi sgt, %arg4, %c0_i32_408 : i32
      %c400_i32 = arith.constant 400 : i32
      %1409 = arith.cmpi slt, %arg3, %c400_i32 : i32
      %1410 = arith.andi %1408, %1409 : i1
      scf.condition(%1410) %arg3, %arg4, %arg5 : i32, i32, vector<72x128xi32>
    } do {
    ^bb0(%arg3: i32, %arg4: i32, %arg5: vector<72x128xi32>):
      %c1_i32_408 = arith.constant 1 : i32
      %1408 = tpu.dynamic_rotate %arg5 by %c1_i32_408 dim 1 : vector<72x128xi32>, i32 -> vector<72x128xi32>
      %c127_i32_409 = arith.constant 127 : i32
      %1409 = tpu.dynamic_rotate %arg5 by %c127_i32_409 dim 1 : vector<72x128xi32>, i32 -> vector<72x128xi32>
      %1410 = arith.minsi %1408, %1409 : vector<72x128xi32>
      %1411 = arith.minsi %arg5, %1410 : vector<72x128xi32>
      %c1_i32_410 = arith.constant 1 : i32
      %1412 = tpu.dynamic_rotate %1411 by %c1_i32_410 dim 0 : vector<72x128xi32>, i32 -> vector<72x128xi32>
      %c71_i32_411 = arith.constant 71 : i32
      %1413 = tpu.dynamic_rotate %1411 by %c71_i32_411 dim 0 : vector<72x128xi32>, i32 -> vector<72x128xi32>
      %1414 = arith.minsi %1412, %1413 : vector<72x128xi32>
      %1415 = arith.minsi %1411, %1414 : vector<72x128xi32>
      %1416 = arith.maxsi %1415, %24 : vector<72x128xi32>
      %c1_i32_412 = arith.constant 1 : i32
      %1417 = tpu.dynamic_rotate %1416 by %c1_i32_412 dim 1 : vector<72x128xi32>, i32 -> vector<72x128xi32>
      %c127_i32_413 = arith.constant 127 : i32
      %1418 = tpu.dynamic_rotate %1416 by %c127_i32_413 dim 1 : vector<72x128xi32>, i32 -> vector<72x128xi32>
      %1419 = arith.addi %1417, %31 : vector<72x128xi32>
      %1420 = arith.minsi %1416, %1419 : vector<72x128xi32>
      %1421 = arith.addi %1418, %37 : vector<72x128xi32>
      %1422 = arith.minsi %1420, %1421 : vector<72x128xi32>
      %c2_i32_414 = arith.constant 2 : i32
      %1423 = tpu.dynamic_rotate %1422 by %c2_i32_414 dim 1 : vector<72x128xi32>, i32 -> vector<72x128xi32>
      %c126_i32_415 = arith.constant 126 : i32
      %1424 = tpu.dynamic_rotate %1422 by %c126_i32_415 dim 1 : vector<72x128xi32>, i32 -> vector<72x128xi32>
      %1425 = arith.addi %1423, %44 : vector<72x128xi32>
      %1426 = arith.minsi %1422, %1425 : vector<72x128xi32>
      %1427 = arith.addi %1424, %50 : vector<72x128xi32>
      %1428 = arith.minsi %1426, %1427 : vector<72x128xi32>
      %c4_i32_416 = arith.constant 4 : i32
      %1429 = tpu.dynamic_rotate %1428 by %c4_i32_416 dim 1 : vector<72x128xi32>, i32 -> vector<72x128xi32>
      %c124_i32_417 = arith.constant 124 : i32
      %1430 = tpu.dynamic_rotate %1428 by %c124_i32_417 dim 1 : vector<72x128xi32>, i32 -> vector<72x128xi32>
      %1431 = arith.addi %1429, %57 : vector<72x128xi32>
      %1432 = arith.minsi %1428, %1431 : vector<72x128xi32>
      %1433 = arith.addi %1430, %63 : vector<72x128xi32>
      %1434 = arith.minsi %1432, %1433 : vector<72x128xi32>
      %c8_i32_418 = arith.constant 8 : i32
      %1435 = tpu.dynamic_rotate %1434 by %c8_i32_418 dim 1 : vector<72x128xi32>, i32 -> vector<72x128xi32>
      %c120_i32_419 = arith.constant 120 : i32
      %1436 = tpu.dynamic_rotate %1434 by %c120_i32_419 dim 1 : vector<72x128xi32>, i32 -> vector<72x128xi32>
      %1437 = arith.addi %1435, %70 : vector<72x128xi32>
      %1438 = arith.minsi %1434, %1437 : vector<72x128xi32>
      %1439 = arith.addi %1436, %76 : vector<72x128xi32>
      %1440 = arith.minsi %1438, %1439 : vector<72x128xi32>
      %c16_i32_420 = arith.constant 16 : i32
      %1441 = tpu.dynamic_rotate %1440 by %c16_i32_420 dim 1 : vector<72x128xi32>, i32 -> vector<72x128xi32>
      %c112_i32_421 = arith.constant 112 : i32
      %1442 = tpu.dynamic_rotate %1440 by %c112_i32_421 dim 1 : vector<72x128xi32>, i32 -> vector<72x128xi32>
      %1443 = arith.addi %1441, %83 : vector<72x128xi32>
      %1444 = arith.minsi %1440, %1443 : vector<72x128xi32>
      %1445 = arith.addi %1442, %89 : vector<72x128xi32>
      %1446 = arith.minsi %1444, %1445 : vector<72x128xi32>
      %c32_i32 = arith.constant 32 : i32
      %1447 = tpu.dynamic_rotate %1446 by %c32_i32 dim 1 : vector<72x128xi32>, i32 -> vector<72x128xi32>
      %c96_i32_422 = arith.constant 96 : i32
      %1448 = tpu.dynamic_rotate %1446 by %c96_i32_422 dim 1 : vector<72x128xi32>, i32 -> vector<72x128xi32>
      %1449 = arith.addi %1447, %96 : vector<72x128xi32>
      %1450 = arith.minsi %1446, %1449 : vector<72x128xi32>
      %1451 = arith.addi %1448, %102 : vector<72x128xi32>
      %1452 = arith.minsi %1450, %1451 : vector<72x128xi32>
      %c1_i32_423 = arith.constant 1 : i32
      %1453 = tpu.dynamic_rotate %1452 by %c1_i32_423 dim 0 : vector<72x128xi32>, i32 -> vector<72x128xi32>
      %c71_i32_424 = arith.constant 71 : i32
      %1454 = tpu.dynamic_rotate %1452 by %c71_i32_424 dim 0 : vector<72x128xi32>, i32 -> vector<72x128xi32>
      %1455 = arith.addi %1453, %109 : vector<72x128xi32>
      %1456 = arith.minsi %1452, %1455 : vector<72x128xi32>
      %1457 = arith.addi %1454, %115 : vector<72x128xi32>
      %1458 = arith.minsi %1456, %1457 : vector<72x128xi32>
      %c2_i32_425 = arith.constant 2 : i32
      %1459 = tpu.dynamic_rotate %1458 by %c2_i32_425 dim 0 : vector<72x128xi32>, i32 -> vector<72x128xi32>
      %c70_i32_426 = arith.constant 70 : i32
      %1460 = tpu.dynamic_rotate %1458 by %c70_i32_426 dim 0 : vector<72x128xi32>, i32 -> vector<72x128xi32>
      %1461 = arith.addi %1459, %122 : vector<72x128xi32>
      %1462 = arith.minsi %1458, %1461 : vector<72x128xi32>
      %1463 = arith.addi %1460, %128 : vector<72x128xi32>
      %1464 = arith.minsi %1462, %1463 : vector<72x128xi32>
      %c4_i32_427 = arith.constant 4 : i32
      %1465 = tpu.dynamic_rotate %1464 by %c4_i32_427 dim 0 : vector<72x128xi32>, i32 -> vector<72x128xi32>
      %c68_i32_428 = arith.constant 68 : i32
      %1466 = tpu.dynamic_rotate %1464 by %c68_i32_428 dim 0 : vector<72x128xi32>, i32 -> vector<72x128xi32>
      %1467 = arith.addi %1465, %135 : vector<72x128xi32>
      %1468 = arith.minsi %1464, %1467 : vector<72x128xi32>
      %1469 = arith.addi %1466, %141 : vector<72x128xi32>
      %1470 = arith.minsi %1468, %1469 : vector<72x128xi32>
      %c8_i32_429 = arith.constant 8 : i32
      %1471 = tpu.dynamic_rotate %1470 by %c8_i32_429 dim 0 : vector<72x128xi32>, i32 -> vector<72x128xi32>
      %c64_i32_430 = arith.constant 64 : i32
      %1472 = tpu.dynamic_rotate %1470 by %c64_i32_430 dim 0 : vector<72x128xi32>, i32 -> vector<72x128xi32>
      %1473 = arith.addi %1471, %148 : vector<72x128xi32>
      %1474 = arith.minsi %1470, %1473 : vector<72x128xi32>
      %1475 = arith.addi %1472, %154 : vector<72x128xi32>
      %1476 = arith.minsi %1474, %1475 : vector<72x128xi32>
      %c16_i32_431 = arith.constant 16 : i32
      %1477 = tpu.dynamic_rotate %1476 by %c16_i32_431 dim 0 : vector<72x128xi32>, i32 -> vector<72x128xi32>
      %c56_i32_432 = arith.constant 56 : i32
      %1478 = tpu.dynamic_rotate %1476 by %c56_i32_432 dim 0 : vector<72x128xi32>, i32 -> vector<72x128xi32>
      %1479 = arith.addi %1477, %161 : vector<72x128xi32>
      %1480 = arith.minsi %1476, %1479 : vector<72x128xi32>
      %1481 = arith.addi %1478, %167 : vector<72x128xi32>
      %1482 = arith.minsi %1480, %1481 : vector<72x128xi32>
      %c32_i32_433 = arith.constant 32 : i32
      %1483 = tpu.dynamic_rotate %1482 by %c32_i32_433 dim 0 : vector<72x128xi32>, i32 -> vector<72x128xi32>
      %c40_i32_434 = arith.constant 40 : i32
      %1484 = tpu.dynamic_rotate %1482 by %c40_i32_434 dim 0 : vector<72x128xi32>, i32 -> vector<72x128xi32>
      %1485 = arith.addi %1483, %174 : vector<72x128xi32>
      %1486 = arith.minsi %1482, %1485 : vector<72x128xi32>
      %1487 = arith.addi %1484, %180 : vector<72x128xi32>
      %1488 = arith.minsi %1486, %1487 : vector<72x128xi32>
      %1489 = arith.cmpi ne, %1488, %arg5 : vector<72x128xi32>
      %c1_i32_435 = arith.constant 1 : i32
      %c0_i32_436 = arith.constant 0 : i32
      %1490 = vector.broadcast %c1_i32_435 : i32 to vector<72x128xi32>
      %1491 = vector.broadcast %c0_i32_436 : i32 to vector<72x128xi32>
      %1492 = arith.select %1489, %1490, %1491 : vector<72x128xi1>, vector<72x128xi32>
      %1493 = vector.shape_cast %1492 : vector<72x128xi32> to vector<1x72x128xi32>
      %cst_437 = arith.constant dense<-2147483648> : vector<1xi32>
      %1494 = vector.multi_reduction <maxsi>, %1493, %cst_437 [1, 2] : vector<1x72x128xi32> to vector<1xi32>
      %1495 = vector.shape_cast %1494 : vector<1xi32> to vector<1x1x1xi32>
      %1496 = vector.extract %1495[0, 0, 0] : i32 from vector<1x1x1xi32>
      %c1_i32_438 = arith.constant 1 : i32
      %1497 = arith.addi %arg3, %c1_i32_438 : i32
      scf.yield %1497, %1496, %1488 : i32, i32, vector<72x128xi32>
    }
    %182 = arith.cmpi eq, %181#2, %15 : vector<72x128xi32>
    %c9218_i32_94 = arith.constant 9218 : i32
    %183 = vector.broadcast %c9218_i32_94 : i32 to vector<72x128xi32>
    %184 = arith.select %182, %181#2, %183 : vector<72x128xi1>, vector<72x128xi32>
    %185 = tpu.iota {dimensions = array<i32: 0>} : vector<72x1xi32>
    %186 = tpu.iota {dimensions = array<i32: 1>} : vector<1x128xi32>
    %187 = tpu.iota {dimensions = array<i32: 1>} : vector<1x32xi32>
    %188 = tpu.iota {dimensions = array<i32: 0>} : vector<32x1xi32>
    %c0_i32_95 = arith.constant 0 : i32
    %189 = vector.broadcast %c0_i32_95 : i32 to vector<1x32xi32>
    %c0_i32_96 = arith.constant 0 : i32
    %190 = vector.broadcast %c0_i32_96 : i32 to vector<32x1xi32>
    %c9218_i32_97 = arith.constant 9218 : i32
    %c1_i32_98 = arith.constant 1 : i32
    %c0_i32_99 = arith.constant 0 : i32
    %c1_i32_100 = arith.constant 1 : i32
    %191:13 = scf.while (%arg3 = %c0_i32_99, %arg4 = %c1_i32_100, %arg5 = %184, %arg6 = %189, %arg7 = %189, %arg8 = %189, %arg9 = %189, %arg10 = %189, %arg11 = %190, %arg12 = %190, %arg13 = %190, %arg14 = %190, %arg15 = %190) : (i32, i32, vector<72x128xi32>, vector<1x32xi32>, vector<1x32xi32>, vector<1x32xi32>, vector<1x32xi32>, vector<1x32xi32>, vector<32x1xi32>, vector<32x1xi32>, vector<32x1xi32>, vector<32x1xi32>, vector<32x1xi32>) -> (i32, i32, vector<72x128xi32>, vector<1x32xi32>, vector<1x32xi32>, vector<1x32xi32>, vector<1x32xi32>, vector<1x32xi32>, vector<32x1xi32>, vector<32x1xi32>, vector<32x1xi32>, vector<32x1xi32>, vector<32x1xi32>) {
      %c0_i32_408 = arith.constant 0 : i32
      %1408 = arith.cmpi sgt, %arg4, %c0_i32_408 : i32
      %c32_i32 = arith.constant 32 : i32
      %1409 = arith.cmpi slt, %arg3, %c32_i32 : i32
      %1410 = arith.andi %1408, %1409 : i1
      scf.condition(%1410) %arg3, %arg4, %arg5, %arg6, %arg7, %arg8, %arg9, %arg10, %arg11, %arg12, %arg13, %arg14, %arg15 : i32, i32, vector<72x128xi32>, vector<1x32xi32>, vector<1x32xi32>, vector<1x32xi32>, vector<1x32xi32>, vector<1x32xi32>, vector<32x1xi32>, vector<32x1xi32>, vector<32x1xi32>, vector<32x1xi32>, vector<32x1xi32>
    } do {
    ^bb0(%arg3: i32, %arg4: i32, %arg5: vector<72x128xi32>, %arg6: vector<1x32xi32>, %arg7: vector<1x32xi32>, %arg8: vector<1x32xi32>, %arg9: vector<1x32xi32>, %arg10: vector<1x32xi32>, %arg11: vector<32x1xi32>, %arg12: vector<32x1xi32>, %arg13: vector<32x1xi32>, %arg14: vector<32x1xi32>, %arg15: vector<32x1xi32>):
      %1408 = vector.shape_cast %arg5 : vector<72x128xi32> to vector<1x72x128xi32>
      %cst_408 = arith.constant dense<2147483647> : vector<1xi32>
      %1409 = vector.multi_reduction <minsi>, %1408, %cst_408 [1, 2] : vector<1x72x128xi32> to vector<1xi32>
      %1410 = vector.shape_cast %1409 : vector<1xi32> to vector<1x1x1xi32>
      %1411 = vector.extract %1410[0, 0, 0] : i32 from vector<1x1x1xi32>
      %1412 = arith.cmpi slt, %1411, %c9218_i32_97 : i32
      %1413 = vector.broadcast %1411 : i32 to vector<72x128xi32>
      %1414 = arith.cmpi eq, %181#2, %1413 : vector<72x128xi32>
      %1415 = vector.broadcast %1412 : i1 to vector<72x128xi1>
      %1416 = arith.andi %1414, %1415 : vector<72x128xi1>
      %c0_i32_409 = arith.constant 0 : i32
      %1417 = vector.broadcast %c1_i32_98 : i32 to vector<72x128xi32>
      %1418 = vector.broadcast %c0_i32_409 : i32 to vector<72x128xi32>
      %1419 = arith.select %1416, %1417, %1418 : vector<72x128xi1>, vector<72x128xi32>
      %cst_410 = arith.constant dense<-2147483648> : vector<72xi32>
      %1420 = vector.multi_reduction <maxsi>, %1419, %cst_410 [1] : vector<72x128xi32> to vector<72xi32>
      %1421 = vector.shape_cast %1420 : vector<72xi32> to vector<72x1xi32>
      %c0_i32_411 = arith.constant 0 : i32
      %1422 = vector.broadcast %c0_i32_411 : i32 to vector<72x1xi32>
      %1423 = arith.cmpi sgt, %1421, %1422 : vector<72x1xi32>
      %cst_412 = arith.constant dense<-2147483648> : vector<128xi32>
      %1424 = vector.multi_reduction <maxsi>, %1419, %cst_412 [0] : vector<72x128xi32> to vector<128xi32>
      %1425 = vector.shape_cast %1424 : vector<128xi32> to vector<1x128xi32>
      %c0_i32_413 = arith.constant 0 : i32
      %1426 = vector.broadcast %c0_i32_413 : i32 to vector<1x128xi32>
      %1427 = arith.cmpi sgt, %1425, %1426 : vector<1x128xi32>
      %1428 = vector.broadcast %c9218_i32_97 : i32 to vector<72x1xi32>
      %1429 = arith.select %1423, %185, %1428 : vector<72x1xi1>, vector<72x1xi32>
      %1430 = vector.shape_cast %1429 : vector<72x1xi32> to vector<1x72x1xi32>
      %cst_414 = arith.constant dense<2147483647> : vector<1xi32>
      %1431 = vector.multi_reduction <minsi>, %1430, %cst_414 [1, 2] : vector<1x72x1xi32> to vector<1xi32>
      %1432 = vector.shape_cast %1431 : vector<1xi32> to vector<1x1x1xi32>
      %1433 = vector.extract %1432[0, 0, 0] : i32 from vector<1x1x1xi32>
      %c1_i32_415 = arith.constant 1 : i32
      %1434 = vector.broadcast %c1_i32_415 : i32 to vector<72x1xi32>
      %1435 = arith.addi %185, %1434 : vector<72x1xi32>
      %c0_i32_416 = arith.constant 0 : i32
      %1436 = vector.broadcast %c0_i32_416 : i32 to vector<72x1xi32>
      %1437 = arith.select %1423, %1435, %1436 : vector<72x1xi1>, vector<72x1xi32>
      %1438 = vector.shape_cast %1437 : vector<72x1xi32> to vector<1x72x1xi32>
      %cst_417 = arith.constant dense<-2147483648> : vector<1xi32>
      %1439 = vector.multi_reduction <maxsi>, %1438, %cst_417 [1, 2] : vector<1x72x1xi32> to vector<1xi32>
      %1440 = vector.shape_cast %1439 : vector<1xi32> to vector<1x1x1xi32>
      %1441 = vector.extract %1440[0, 0, 0] : i32 from vector<1x1x1xi32>
      %1442 = vector.broadcast %c9218_i32_97 : i32 to vector<1x128xi32>
      %1443 = arith.select %1427, %186, %1442 : vector<1x128xi1>, vector<1x128xi32>
      %1444 = vector.shape_cast %1443 : vector<1x128xi32> to vector<1x1x128xi32>
      %cst_418 = arith.constant dense<2147483647> : vector<1xi32>
      %1445 = vector.multi_reduction <minsi>, %1444, %cst_418 [1, 2] : vector<1x1x128xi32> to vector<1xi32>
      %1446 = vector.shape_cast %1445 : vector<1xi32> to vector<1x1x1xi32>
      %1447 = vector.extract %1446[0, 0, 0] : i32 from vector<1x1x1xi32>
      %c1_i32_419 = arith.constant 1 : i32
      %1448 = vector.broadcast %c1_i32_419 : i32 to vector<1x128xi32>
      %1449 = arith.addi %186, %1448 : vector<1x128xi32>
      %c0_i32_420 = arith.constant 0 : i32
      %1450 = vector.broadcast %c0_i32_420 : i32 to vector<1x128xi32>
      %1451 = arith.select %1427, %1449, %1450 : vector<1x128xi1>, vector<1x128xi32>
      %1452 = vector.shape_cast %1451 : vector<1x128xi32> to vector<1x1x128xi32>
      %cst_421 = arith.constant dense<-2147483648> : vector<1xi32>
      %1453 = vector.multi_reduction <maxsi>, %1452, %cst_421 [1, 2] : vector<1x1x128xi32> to vector<1xi32>
      %1454 = vector.shape_cast %1453 : vector<1xi32> to vector<1x1x1xi32>
      %1455 = vector.extract %1454[0, 0, 0] : i32 from vector<1x1x1xi32>
      %c0_i32_422 = arith.constant 0 : i32
      %1456 = arith.select %1412, %c1_i32_98, %c0_i32_422 : i32
      %1457 = vector.broadcast %arg3 : i32 to vector<1x32xi32>
      %1458 = arith.cmpi eq, %187, %1457 : vector<1x32xi32>
      %1459 = vector.broadcast %arg3 : i32 to vector<32x1xi32>
      %1460 = arith.cmpi eq, %188, %1459 : vector<32x1xi32>
      %1461 = vector.broadcast %1433 : i32 to vector<1x32xi32>
      %1462 = arith.select %1458, %1461, %arg6 : vector<1x32xi1>, vector<1x32xi32>
      %1463 = vector.broadcast %1433 : i32 to vector<32x1xi32>
      %1464 = arith.select %1460, %1463, %arg11 : vector<32x1xi1>, vector<32x1xi32>
      %1465 = vector.broadcast %1447 : i32 to vector<1x32xi32>
      %1466 = arith.select %1458, %1465, %arg7 : vector<1x32xi1>, vector<1x32xi32>
      %1467 = vector.broadcast %1447 : i32 to vector<32x1xi32>
      %1468 = arith.select %1460, %1467, %arg12 : vector<32x1xi1>, vector<32x1xi32>
      %1469 = vector.broadcast %1441 : i32 to vector<1x32xi32>
      %1470 = arith.select %1458, %1469, %arg8 : vector<1x32xi1>, vector<1x32xi32>
      %1471 = vector.broadcast %1441 : i32 to vector<32x1xi32>
      %1472 = arith.select %1460, %1471, %arg13 : vector<32x1xi1>, vector<32x1xi32>
      %1473 = vector.broadcast %1455 : i32 to vector<1x32xi32>
      %1474 = arith.select %1458, %1473, %arg9 : vector<1x32xi1>, vector<1x32xi32>
      %1475 = vector.broadcast %1455 : i32 to vector<32x1xi32>
      %1476 = arith.select %1460, %1475, %arg14 : vector<32x1xi1>, vector<32x1xi32>
      %1477 = vector.broadcast %1456 : i32 to vector<1x32xi32>
      %1478 = arith.select %1458, %1477, %arg10 : vector<1x32xi1>, vector<1x32xi32>
      %1479 = vector.broadcast %1456 : i32 to vector<32x1xi32>
      %1480 = arith.select %1460, %1479, %arg15 : vector<32x1xi1>, vector<32x1xi32>
      %1481 = vector.broadcast %1411 : i32 to vector<72x128xi32>
      %1482 = arith.cmpi eq, %arg5, %1481 : vector<72x128xi32>
      %1483 = vector.broadcast %c9218_i32_97 : i32 to vector<72x128xi32>
      %1484 = arith.select %1482, %1483, %arg5 : vector<72x128xi1>, vector<72x128xi32>
      %c1_i32_423 = arith.constant 1 : i32
      %1485 = arith.addi %arg3, %c1_i32_423 : i32
      scf.yield %1485, %1456, %1484, %1462, %1466, %1470, %1474, %1478, %1464, %1468, %1472, %1476, %1480 : i32, i32, vector<72x128xi32>, vector<1x32xi32>, vector<1x32xi32>, vector<1x32xi32>, vector<1x32xi32>, vector<1x32xi32>, vector<32x1xi32>, vector<32x1xi32>, vector<32x1xi32>, vector<32x1xi32>, vector<32x1xi32>
    }
    %192 = arith.addi %191#4, %191#6 : vector<1x32xi32>
    %193 = arith.addi %191#9, %191#11 : vector<32x1xi32>
    %194 = arith.subi %191#6, %191#4 : vector<1x32xi32>
    %195 = arith.subi %191#5, %191#3 : vector<1x32xi32>
    %196 = arith.muli %194, %195 : vector<1x32xi32>
    %197 = arith.subi %191#11, %191#9 : vector<32x1xi32>
    %198 = arith.subi %191#10, %191#8 : vector<32x1xi32>
    %199 = arith.muli %197, %198 : vector<32x1xi32>
    %c0_i32_101 = arith.constant 0 : i32
    %200 = vector.broadcast %c0_i32_101 : i32 to vector<1x32xi32>
    %201 = arith.cmpi sgt, %191#7, %200 : vector<1x32xi32>
    %c0_i32_102 = arith.constant 0 : i32
    %202 = vector.broadcast %c0_i32_102 : i32 to vector<32x1xi32>
    %203 = arith.cmpi sgt, %191#12, %202 : vector<32x1xi32>
    %204 = vector.broadcast %193 : vector<32x1xi32> to vector<32x32xi32>
    %205 = vector.broadcast %192 : vector<1x32xi32> to vector<32x32xi32>
    %206 = arith.cmpi slt, %204, %205 : vector<32x32xi32>
    %207 = vector.broadcast %193 : vector<32x1xi32> to vector<32x32xi32>
    %208 = vector.broadcast %192 : vector<1x32xi32> to vector<32x32xi32>
    %209 = arith.cmpi eq, %207, %208 : vector<32x32xi32>
    %210 = vector.broadcast %188 : vector<32x1xi32> to vector<32x32xi32>
    %211 = vector.broadcast %187 : vector<1x32xi32> to vector<32x32xi32>
    %212 = arith.cmpi slt, %210, %211 : vector<32x32xi32>
    %213 = arith.andi %209, %212 : vector<32x32xi1>
    %214 = arith.ori %206, %213 : vector<32x32xi1>
    %215 = vector.broadcast %192 : vector<1x32xi32> to vector<32x32xi32>
    %216 = vector.broadcast %193 : vector<32x1xi32> to vector<32x32xi32>
    %217 = arith.cmpi slt, %215, %216 : vector<32x32xi32>
    %218 = vector.broadcast %192 : vector<1x32xi32> to vector<32x32xi32>
    %219 = vector.broadcast %193 : vector<32x1xi32> to vector<32x32xi32>
    %220 = arith.cmpi eq, %218, %219 : vector<32x32xi32>
    %221 = vector.broadcast %187 : vector<1x32xi32> to vector<32x32xi32>
    %222 = vector.broadcast %188 : vector<32x1xi32> to vector<32x32xi32>
    %223 = arith.cmpi slt, %221, %222 : vector<32x32xi32>
    %224 = arith.andi %220, %223 : vector<32x32xi1>
    %225 = arith.ori %217, %224 : vector<32x32xi1>
    %226 = vector.broadcast %203 : vector<32x1xi1> to vector<32x32xi1>
    %227 = arith.andi %214, %226 : vector<32x32xi1>
    %c1_i32_103 = arith.constant 1 : i32
    %c0_i32_104 = arith.constant 0 : i32
    %228 = vector.broadcast %c1_i32_103 : i32 to vector<32x32xi32>
    %229 = vector.broadcast %c0_i32_104 : i32 to vector<32x32xi32>
    %230 = arith.select %227, %228, %229 : vector<32x32xi1>, vector<32x32xi32>
    %cst = arith.constant dense<0> : vector<32xi32>
    %231 = vector.multi_reduction <add>, %230, %cst [0] : vector<32x32xi32> to vector<32xi32>
    %232 = vector.shape_cast %231 : vector<32xi32> to vector<1x32xi32>
    %233 = vector.broadcast %201 : vector<1x32xi1> to vector<32x32xi1>
    %234 = arith.andi %225, %233 : vector<32x32xi1>
    %c1_i32_105 = arith.constant 1 : i32
    %c0_i32_106 = arith.constant 0 : i32
    %235 = vector.broadcast %c1_i32_105 : i32 to vector<32x32xi32>
    %236 = vector.broadcast %c0_i32_106 : i32 to vector<32x32xi32>
    %237 = arith.select %234, %235, %236 : vector<32x32xi1>, vector<32x32xi32>
    %cst_107 = arith.constant dense<0> : vector<32xi32>
    %238 = vector.multi_reduction <add>, %237, %cst_107 [1] : vector<32x32xi32> to vector<32xi32>
    %239 = vector.shape_cast %238 : vector<32xi32> to vector<32x1xi32>
    %c26_i32 = arith.constant 26 : i32
    %240 = vector.broadcast %c26_i32 : i32 to vector<1x32xi32>
    %241 = arith.cmpi slt, %232, %240 : vector<1x32xi32>
    %242 = arith.andi %201, %241 : vector<1x32xi1>
    %c100_i32 = arith.constant 100 : i32
    %243 = vector.broadcast %c100_i32 : i32 to vector<1x32xi32>
    %244 = arith.cmpi sge, %196, %243 : vector<1x32xi32>
    %245 = arith.andi %242, %244 : vector<1x32xi1>
    %c26_i32_108 = arith.constant 26 : i32
    %246 = vector.broadcast %c26_i32_108 : i32 to vector<32x1xi32>
    %247 = arith.cmpi slt, %239, %246 : vector<32x1xi32>
    %248 = arith.andi %203, %247 : vector<32x1xi1>
    %c100_i32_109 = arith.constant 100 : i32
    %249 = vector.broadcast %c100_i32_109 : i32 to vector<32x1xi32>
    %250 = arith.cmpi sge, %199, %249 : vector<32x1xi32>
    %251 = arith.andi %248, %250 : vector<32x1xi1>
    %252 = vector.broadcast %251 : vector<32x1xi1> to vector<32x32xi1>
    %253 = arith.andi %214, %252 : vector<32x32xi1>
    %c1_i32_110 = arith.constant 1 : i32
    %c0_i32_111 = arith.constant 0 : i32
    %254 = vector.broadcast %c1_i32_110 : i32 to vector<32x32xi32>
    %255 = vector.broadcast %c0_i32_111 : i32 to vector<32x32xi32>
    %256 = arith.select %253, %254, %255 : vector<32x32xi1>, vector<32x32xi32>
    %cst_112 = arith.constant dense<0> : vector<32xi32>
    %257 = vector.multi_reduction <add>, %256, %cst_112 [0] : vector<32x32xi32> to vector<32xi32>
    %258 = vector.shape_cast %257 : vector<32xi32> to vector<1x32xi32>
    %c1_i32_113 = arith.constant 1 : i32
    %c0_i32_114 = arith.constant 0 : i32
    %259 = vector.broadcast %c1_i32_113 : i32 to vector<1x32xi32>
    %260 = vector.broadcast %c0_i32_114 : i32 to vector<1x32xi32>
    %261 = arith.select %245, %259, %260 : vector<1x32xi1>, vector<1x32xi32>
    %262 = tpu.iota {dimensions = array<i32: 0>} : vector<64x64xi32>
    %263 = tpu.iota {dimensions = array<i32: 1>} : vector<64x64xi32>
    %c0_i32_115 = arith.constant 0 : i32
    %264 = vector.broadcast %c0_i32_115 : i32 to vector<1x32xi32>
    %265 = arith.cmpi sgt, %261, %264 : vector<1x32xi32>
    %c0_i32_116 = arith.constant 0 : i32
    %266 = vector.broadcast %c0_i32_116 : i32 to vector<1x32xi32>
    %267 = arith.cmpi eq, %258, %266 : vector<1x32xi32>
    %268 = arith.andi %265, %267 : vector<1x32xi1>
    %c9218_i32_117 = arith.constant 9218 : i32
    %269 = vector.broadcast %c9218_i32_117 : i32 to vector<1x32xi32>
    %270 = arith.select %268, %191#3, %269 : vector<1x32xi1>, vector<1x32xi32>
    %271 = vector.shape_cast %270 : vector<1x32xi32> to vector<1x1x32xi32>
    %cst_118 = arith.constant dense<2147483647> : vector<1xi32>
    %272 = vector.multi_reduction <minsi>, %271, %cst_118 [1, 2] : vector<1x1x32xi32> to vector<1xi32>
    %273 = vector.shape_cast %272 : vector<1xi32> to vector<1x1x1xi32>
    %274 = vector.extract %273[0, 0, 0] : i32 from vector<1x1x1xi32>
    %c9218_i32_119 = arith.constant 9218 : i32
    %275 = vector.broadcast %c9218_i32_119 : i32 to vector<1x32xi32>
    %276 = arith.select %268, %191#4, %275 : vector<1x32xi1>, vector<1x32xi32>
    %277 = vector.shape_cast %276 : vector<1x32xi32> to vector<1x1x32xi32>
    %cst_120 = arith.constant dense<2147483647> : vector<1xi32>
    %278 = vector.multi_reduction <minsi>, %277, %cst_120 [1, 2] : vector<1x1x32xi32> to vector<1xi32>
    %279 = vector.shape_cast %278 : vector<1xi32> to vector<1x1x1xi32>
    %280 = vector.extract %279[0, 0, 0] : i32 from vector<1x1x1xi32>
    %c0_i32_121 = arith.constant 0 : i32
    %281 = vector.broadcast %c0_i32_121 : i32 to vector<1x32xi32>
    %282 = arith.select %268, %191#5, %281 : vector<1x32xi1>, vector<1x32xi32>
    %283 = vector.shape_cast %282 : vector<1x32xi32> to vector<1x1x32xi32>
    %cst_122 = arith.constant dense<-2147483648> : vector<1xi32>
    %284 = vector.multi_reduction <maxsi>, %283, %cst_122 [1, 2] : vector<1x1x32xi32> to vector<1xi32>
    %285 = vector.shape_cast %284 : vector<1xi32> to vector<1x1x1xi32>
    %286 = vector.extract %285[0, 0, 0] : i32 from vector<1x1x1xi32>
    %c0_i32_123 = arith.constant 0 : i32
    %287 = vector.broadcast %c0_i32_123 : i32 to vector<1x32xi32>
    %288 = arith.select %268, %191#6, %287 : vector<1x32xi1>, vector<1x32xi32>
    %289 = vector.shape_cast %288 : vector<1x32xi32> to vector<1x1x32xi32>
    %cst_124 = arith.constant dense<-2147483648> : vector<1xi32>
    %290 = vector.multi_reduction <maxsi>, %289, %cst_124 [1, 2] : vector<1x1x32xi32> to vector<1xi32>
    %291 = vector.shape_cast %290 : vector<1xi32> to vector<1x1x1xi32>
    %292 = vector.extract %291[0, 0, 0] : i32 from vector<1x1x1xi32>
    %293 = vector.broadcast %274 : i32 to vector<64x64xi32>
    %294 = arith.cmpi sge, %262, %293 : vector<64x64xi32>
    %295 = vector.broadcast %286 : i32 to vector<64x64xi32>
    %296 = arith.cmpi slt, %262, %295 : vector<64x64xi32>
    %297 = arith.andi %294, %296 : vector<64x64xi1>
    %298 = vector.broadcast %280 : i32 to vector<64x64xi32>
    %299 = arith.cmpi sge, %263, %298 : vector<64x64xi32>
    %300 = vector.broadcast %292 : i32 to vector<64x64xi32>
    %301 = arith.cmpi slt, %263, %300 : vector<64x64xi32>
    %302 = arith.andi %299, %301 : vector<64x64xi1>
    %303 = arith.andi %297, %302 : vector<64x64xi1>
    %304 = arith.extui %303 : vector<64x64xi1> to vector<64x64xi8>
    %c0_125 = arith.constant 0 : index
    %c0_126 = arith.constant 0 : index
    %c0_127 = arith.constant 0 : index
    %305 = vector.load %arg1[%c0_125, %c0_126, %c0_127] : memref<26x64x64xi8, #tpu.memory_space<vmem>>, vector<1x64x64xi8>
    %306 = vector.shape_cast %305 : vector<1x64x64xi8> to vector<64x64xi8>
    %307 = vector.shape_cast %304 : vector<64x64xi8> to vector<1x64x64xi8>
    tpu.vector_store %arg1[%c0_125, %c0_126, %c0_127], %307 {strides = array<i32>} : memref<26x64x64xi8, #tpu.memory_space<vmem>>, vector<1x64x64xi8>,
    %c0_i32_128 = arith.constant 0 : i32
    %308 = vector.broadcast %c0_i32_128 : i32 to vector<1x32xi32>
    %309 = arith.cmpi sgt, %261, %308 : vector<1x32xi32>
    %c1_i32_129 = arith.constant 1 : i32
    %310 = vector.broadcast %c1_i32_129 : i32 to vector<1x32xi32>
    %311 = arith.cmpi eq, %258, %310 : vector<1x32xi32>
    %312 = arith.andi %309, %311 : vector<1x32xi1>
    %c9218_i32_130 = arith.constant 9218 : i32
    %313 = vector.broadcast %c9218_i32_130 : i32 to vector<1x32xi32>
    %314 = arith.select %312, %191#3, %313 : vector<1x32xi1>, vector<1x32xi32>
    %315 = vector.shape_cast %314 : vector<1x32xi32> to vector<1x1x32xi32>
    %cst_131 = arith.constant dense<2147483647> : vector<1xi32>
    %316 = vector.multi_reduction <minsi>, %315, %cst_131 [1, 2] : vector<1x1x32xi32> to vector<1xi32>
    %317 = vector.shape_cast %316 : vector<1xi32> to vector<1x1x1xi32>
    %318 = vector.extract %317[0, 0, 0] : i32 from vector<1x1x1xi32>
    %c9218_i32_132 = arith.constant 9218 : i32
    %319 = vector.broadcast %c9218_i32_132 : i32 to vector<1x32xi32>
    %320 = arith.select %312, %191#4, %319 : vector<1x32xi1>, vector<1x32xi32>
    %321 = vector.shape_cast %320 : vector<1x32xi32> to vector<1x1x32xi32>
    %cst_133 = arith.constant dense<2147483647> : vector<1xi32>
    %322 = vector.multi_reduction <minsi>, %321, %cst_133 [1, 2] : vector<1x1x32xi32> to vector<1xi32>
    %323 = vector.shape_cast %322 : vector<1xi32> to vector<1x1x1xi32>
    %324 = vector.extract %323[0, 0, 0] : i32 from vector<1x1x1xi32>
    %c0_i32_134 = arith.constant 0 : i32
    %325 = vector.broadcast %c0_i32_134 : i32 to vector<1x32xi32>
    %326 = arith.select %312, %191#5, %325 : vector<1x32xi1>, vector<1x32xi32>
    %327 = vector.shape_cast %326 : vector<1x32xi32> to vector<1x1x32xi32>
    %cst_135 = arith.constant dense<-2147483648> : vector<1xi32>
    %328 = vector.multi_reduction <maxsi>, %327, %cst_135 [1, 2] : vector<1x1x32xi32> to vector<1xi32>
    %329 = vector.shape_cast %328 : vector<1xi32> to vector<1x1x1xi32>
    %330 = vector.extract %329[0, 0, 0] : i32 from vector<1x1x1xi32>
    %c0_i32_136 = arith.constant 0 : i32
    %331 = vector.broadcast %c0_i32_136 : i32 to vector<1x32xi32>
    %332 = arith.select %312, %191#6, %331 : vector<1x32xi1>, vector<1x32xi32>
    %333 = vector.shape_cast %332 : vector<1x32xi32> to vector<1x1x32xi32>
    %cst_137 = arith.constant dense<-2147483648> : vector<1xi32>
    %334 = vector.multi_reduction <maxsi>, %333, %cst_137 [1, 2] : vector<1x1x32xi32> to vector<1xi32>
    %335 = vector.shape_cast %334 : vector<1xi32> to vector<1x1x1xi32>
    %336 = vector.extract %335[0, 0, 0] : i32 from vector<1x1x1xi32>
    %337 = vector.broadcast %318 : i32 to vector<64x64xi32>
    %338 = arith.cmpi sge, %262, %337 : vector<64x64xi32>
    %339 = vector.broadcast %330 : i32 to vector<64x64xi32>
    %340 = arith.cmpi slt, %262, %339 : vector<64x64xi32>
    %341 = arith.andi %338, %340 : vector<64x64xi1>
    %342 = vector.broadcast %324 : i32 to vector<64x64xi32>
    %343 = arith.cmpi sge, %263, %342 : vector<64x64xi32>
    %344 = vector.broadcast %336 : i32 to vector<64x64xi32>
    %345 = arith.cmpi slt, %263, %344 : vector<64x64xi32>
    %346 = arith.andi %343, %345 : vector<64x64xi1>
    %347 = arith.andi %341, %346 : vector<64x64xi1>
    %348 = arith.extui %347 : vector<64x64xi1> to vector<64x64xi8>
    %c1 = arith.constant 1 : index
    %c0_138 = arith.constant 0 : index
    %c0_139 = arith.constant 0 : index
    %349 = vector.load %arg1[%c1, %c0_138, %c0_139] : memref<26x64x64xi8, #tpu.memory_space<vmem>>, vector<1x64x64xi8>
    %350 = vector.shape_cast %349 : vector<1x64x64xi8> to vector<64x64xi8>
    %351 = vector.shape_cast %348 : vector<64x64xi8> to vector<1x64x64xi8>
    tpu.vector_store %arg1[%c1, %c0_138, %c0_139], %351 {strides = array<i32>} : memref<26x64x64xi8, #tpu.memory_space<vmem>>, vector<1x64x64xi8>,
    %c0_i32_140 = arith.constant 0 : i32
    %352 = vector.broadcast %c0_i32_140 : i32 to vector<1x32xi32>
    %353 = arith.cmpi sgt, %261, %352 : vector<1x32xi32>
    %c2_i32_141 = arith.constant 2 : i32
    %354 = vector.broadcast %c2_i32_141 : i32 to vector<1x32xi32>
    %355 = arith.cmpi eq, %258, %354 : vector<1x32xi32>
    %356 = arith.andi %353, %355 : vector<1x32xi1>
    %c9218_i32_142 = arith.constant 9218 : i32
    %357 = vector.broadcast %c9218_i32_142 : i32 to vector<1x32xi32>
    %358 = arith.select %356, %191#3, %357 : vector<1x32xi1>, vector<1x32xi32>
    %359 = vector.shape_cast %358 : vector<1x32xi32> to vector<1x1x32xi32>
    %cst_143 = arith.constant dense<2147483647> : vector<1xi32>
    %360 = vector.multi_reduction <minsi>, %359, %cst_143 [1, 2] : vector<1x1x32xi32> to vector<1xi32>
    %361 = vector.shape_cast %360 : vector<1xi32> to vector<1x1x1xi32>
    %362 = vector.extract %361[0, 0, 0] : i32 from vector<1x1x1xi32>
    %c9218_i32_144 = arith.constant 9218 : i32
    %363 = vector.broadcast %c9218_i32_144 : i32 to vector<1x32xi32>
    %364 = arith.select %356, %191#4, %363 : vector<1x32xi1>, vector<1x32xi32>
    %365 = vector.shape_cast %364 : vector<1x32xi32> to vector<1x1x32xi32>
    %cst_145 = arith.constant dense<2147483647> : vector<1xi32>
    %366 = vector.multi_reduction <minsi>, %365, %cst_145 [1, 2] : vector<1x1x32xi32> to vector<1xi32>
    %367 = vector.shape_cast %366 : vector<1xi32> to vector<1x1x1xi32>
    %368 = vector.extract %367[0, 0, 0] : i32 from vector<1x1x1xi32>
    %c0_i32_146 = arith.constant 0 : i32
    %369 = vector.broadcast %c0_i32_146 : i32 to vector<1x32xi32>
    %370 = arith.select %356, %191#5, %369 : vector<1x32xi1>, vector<1x32xi32>
    %371 = vector.shape_cast %370 : vector<1x32xi32> to vector<1x1x32xi32>
    %cst_147 = arith.constant dense<-2147483648> : vector<1xi32>
    %372 = vector.multi_reduction <maxsi>, %371, %cst_147 [1, 2] : vector<1x1x32xi32> to vector<1xi32>
    %373 = vector.shape_cast %372 : vector<1xi32> to vector<1x1x1xi32>
    %374 = vector.extract %373[0, 0, 0] : i32 from vector<1x1x1xi32>
    %c0_i32_148 = arith.constant 0 : i32
    %375 = vector.broadcast %c0_i32_148 : i32 to vector<1x32xi32>
    %376 = arith.select %356, %191#6, %375 : vector<1x32xi1>, vector<1x32xi32>
    %377 = vector.shape_cast %376 : vector<1x32xi32> to vector<1x1x32xi32>
    %cst_149 = arith.constant dense<-2147483648> : vector<1xi32>
    %378 = vector.multi_reduction <maxsi>, %377, %cst_149 [1, 2] : vector<1x1x32xi32> to vector<1xi32>
    %379 = vector.shape_cast %378 : vector<1xi32> to vector<1x1x1xi32>
    %380 = vector.extract %379[0, 0, 0] : i32 from vector<1x1x1xi32>
    %381 = vector.broadcast %362 : i32 to vector<64x64xi32>
    %382 = arith.cmpi sge, %262, %381 : vector<64x64xi32>
    %383 = vector.broadcast %374 : i32 to vector<64x64xi32>
    %384 = arith.cmpi slt, %262, %383 : vector<64x64xi32>
    %385 = arith.andi %382, %384 : vector<64x64xi1>
    %386 = vector.broadcast %368 : i32 to vector<64x64xi32>
    %387 = arith.cmpi sge, %263, %386 : vector<64x64xi32>
    %388 = vector.broadcast %380 : i32 to vector<64x64xi32>
    %389 = arith.cmpi slt, %263, %388 : vector<64x64xi32>
    %390 = arith.andi %387, %389 : vector<64x64xi1>
    %391 = arith.andi %385, %390 : vector<64x64xi1>
    %392 = arith.extui %391 : vector<64x64xi1> to vector<64x64xi8>
    %c2 = arith.constant 2 : index
    %c0_150 = arith.constant 0 : index
    %c0_151 = arith.constant 0 : index
    %393 = vector.load %arg1[%c2, %c0_150, %c0_151] : memref<26x64x64xi8, #tpu.memory_space<vmem>>, vector<1x64x64xi8>
    %394 = vector.shape_cast %393 : vector<1x64x64xi8> to vector<64x64xi8>
    %395 = vector.shape_cast %392 : vector<64x64xi8> to vector<1x64x64xi8>
    tpu.vector_store %arg1[%c2, %c0_150, %c0_151], %395 {strides = array<i32>} : memref<26x64x64xi8, #tpu.memory_space<vmem>>, vector<1x64x64xi8>,
    %c0_i32_152 = arith.constant 0 : i32
    %396 = vector.broadcast %c0_i32_152 : i32 to vector<1x32xi32>
    %397 = arith.cmpi sgt, %261, %396 : vector<1x32xi32>
    %c3_i32 = arith.constant 3 : i32
    %398 = vector.broadcast %c3_i32 : i32 to vector<1x32xi32>
    %399 = arith.cmpi eq, %258, %398 : vector<1x32xi32>
    %400 = arith.andi %397, %399 : vector<1x32xi1>
    %c9218_i32_153 = arith.constant 9218 : i32
    %401 = vector.broadcast %c9218_i32_153 : i32 to vector<1x32xi32>
    %402 = arith.select %400, %191#3, %401 : vector<1x32xi1>, vector<1x32xi32>
    %403 = vector.shape_cast %402 : vector<1x32xi32> to vector<1x1x32xi32>
    %cst_154 = arith.constant dense<2147483647> : vector<1xi32>
    %404 = vector.multi_reduction <minsi>, %403, %cst_154 [1, 2] : vector<1x1x32xi32> to vector<1xi32>
    %405 = vector.shape_cast %404 : vector<1xi32> to vector<1x1x1xi32>
    %406 = vector.extract %405[0, 0, 0] : i32 from vector<1x1x1xi32>
    %c9218_i32_155 = arith.constant 9218 : i32
    %407 = vector.broadcast %c9218_i32_155 : i32 to vector<1x32xi32>
    %408 = arith.select %400, %191#4, %407 : vector<1x32xi1>, vector<1x32xi32>
    %409 = vector.shape_cast %408 : vector<1x32xi32> to vector<1x1x32xi32>
    %cst_156 = arith.constant dense<2147483647> : vector<1xi32>
    %410 = vector.multi_reduction <minsi>, %409, %cst_156 [1, 2] : vector<1x1x32xi32> to vector<1xi32>
    %411 = vector.shape_cast %410 : vector<1xi32> to vector<1x1x1xi32>
    %412 = vector.extract %411[0, 0, 0] : i32 from vector<1x1x1xi32>
    %c0_i32_157 = arith.constant 0 : i32
    %413 = vector.broadcast %c0_i32_157 : i32 to vector<1x32xi32>
    %414 = arith.select %400, %191#5, %413 : vector<1x32xi1>, vector<1x32xi32>
    %415 = vector.shape_cast %414 : vector<1x32xi32> to vector<1x1x32xi32>
    %cst_158 = arith.constant dense<-2147483648> : vector<1xi32>
    %416 = vector.multi_reduction <maxsi>, %415, %cst_158 [1, 2] : vector<1x1x32xi32> to vector<1xi32>
    %417 = vector.shape_cast %416 : vector<1xi32> to vector<1x1x1xi32>
    %418 = vector.extract %417[0, 0, 0] : i32 from vector<1x1x1xi32>
    %c0_i32_159 = arith.constant 0 : i32
    %419 = vector.broadcast %c0_i32_159 : i32 to vector<1x32xi32>
    %420 = arith.select %400, %191#6, %419 : vector<1x32xi1>, vector<1x32xi32>
    %421 = vector.shape_cast %420 : vector<1x32xi32> to vector<1x1x32xi32>
    %cst_160 = arith.constant dense<-2147483648> : vector<1xi32>
    %422 = vector.multi_reduction <maxsi>, %421, %cst_160 [1, 2] : vector<1x1x32xi32> to vector<1xi32>
    %423 = vector.shape_cast %422 : vector<1xi32> to vector<1x1x1xi32>
    %424 = vector.extract %423[0, 0, 0] : i32 from vector<1x1x1xi32>
    %425 = vector.broadcast %406 : i32 to vector<64x64xi32>
    %426 = arith.cmpi sge, %262, %425 : vector<64x64xi32>
    %427 = vector.broadcast %418 : i32 to vector<64x64xi32>
    %428 = arith.cmpi slt, %262, %427 : vector<64x64xi32>
    %429 = arith.andi %426, %428 : vector<64x64xi1>
    %430 = vector.broadcast %412 : i32 to vector<64x64xi32>
    %431 = arith.cmpi sge, %263, %430 : vector<64x64xi32>
    %432 = vector.broadcast %424 : i32 to vector<64x64xi32>
    %433 = arith.cmpi slt, %263, %432 : vector<64x64xi32>
    %434 = arith.andi %431, %433 : vector<64x64xi1>
    %435 = arith.andi %429, %434 : vector<64x64xi1>
    %436 = arith.extui %435 : vector<64x64xi1> to vector<64x64xi8>
    %c3 = arith.constant 3 : index
    %c0_161 = arith.constant 0 : index
    %c0_162 = arith.constant 0 : index
    %437 = vector.load %arg1[%c3, %c0_161, %c0_162] : memref<26x64x64xi8, #tpu.memory_space<vmem>>, vector<1x64x64xi8>
    %438 = vector.shape_cast %437 : vector<1x64x64xi8> to vector<64x64xi8>
    %439 = vector.shape_cast %436 : vector<64x64xi8> to vector<1x64x64xi8>
    tpu.vector_store %arg1[%c3, %c0_161, %c0_162], %439 {strides = array<i32>} : memref<26x64x64xi8, #tpu.memory_space<vmem>>, vector<1x64x64xi8>,
    %c0_i32_163 = arith.constant 0 : i32
    %440 = vector.broadcast %c0_i32_163 : i32 to vector<1x32xi32>
    %441 = arith.cmpi sgt, %261, %440 : vector<1x32xi32>
    %c4_i32_164 = arith.constant 4 : i32
    %442 = vector.broadcast %c4_i32_164 : i32 to vector<1x32xi32>
    %443 = arith.cmpi eq, %258, %442 : vector<1x32xi32>
    %444 = arith.andi %441, %443 : vector<1x32xi1>
    %c9218_i32_165 = arith.constant 9218 : i32
    %445 = vector.broadcast %c9218_i32_165 : i32 to vector<1x32xi32>
    %446 = arith.select %444, %191#3, %445 : vector<1x32xi1>, vector<1x32xi32>
    %447 = vector.shape_cast %446 : vector<1x32xi32> to vector<1x1x32xi32>
    %cst_166 = arith.constant dense<2147483647> : vector<1xi32>
    %448 = vector.multi_reduction <minsi>, %447, %cst_166 [1, 2] : vector<1x1x32xi32> to vector<1xi32>
    %449 = vector.shape_cast %448 : vector<1xi32> to vector<1x1x1xi32>
    %450 = vector.extract %449[0, 0, 0] : i32 from vector<1x1x1xi32>
    %c9218_i32_167 = arith.constant 9218 : i32
    %451 = vector.broadcast %c9218_i32_167 : i32 to vector<1x32xi32>
    %452 = arith.select %444, %191#4, %451 : vector<1x32xi1>, vector<1x32xi32>
    %453 = vector.shape_cast %452 : vector<1x32xi32> to vector<1x1x32xi32>
    %cst_168 = arith.constant dense<2147483647> : vector<1xi32>
    %454 = vector.multi_reduction <minsi>, %453, %cst_168 [1, 2] : vector<1x1x32xi32> to vector<1xi32>
    %455 = vector.shape_cast %454 : vector<1xi32> to vector<1x1x1xi32>
    %456 = vector.extract %455[0, 0, 0] : i32 from vector<1x1x1xi32>
    %c0_i32_169 = arith.constant 0 : i32
    %457 = vector.broadcast %c0_i32_169 : i32 to vector<1x32xi32>
    %458 = arith.select %444, %191#5, %457 : vector<1x32xi1>, vector<1x32xi32>
    %459 = vector.shape_cast %458 : vector<1x32xi32> to vector<1x1x32xi32>
    %cst_170 = arith.constant dense<-2147483648> : vector<1xi32>
    %460 = vector.multi_reduction <maxsi>, %459, %cst_170 [1, 2] : vector<1x1x32xi32> to vector<1xi32>
    %461 = vector.shape_cast %460 : vector<1xi32> to vector<1x1x1xi32>
    %462 = vector.extract %461[0, 0, 0] : i32 from vector<1x1x1xi32>
    %c0_i32_171 = arith.constant 0 : i32
    %463 = vector.broadcast %c0_i32_171 : i32 to vector<1x32xi32>
    %464 = arith.select %444, %191#6, %463 : vector<1x32xi1>, vector<1x32xi32>
    %465 = vector.shape_cast %464 : vector<1x32xi32> to vector<1x1x32xi32>
    %cst_172 = arith.constant dense<-2147483648> : vector<1xi32>
    %466 = vector.multi_reduction <maxsi>, %465, %cst_172 [1, 2] : vector<1x1x32xi32> to vector<1xi32>
    %467 = vector.shape_cast %466 : vector<1xi32> to vector<1x1x1xi32>
    %468 = vector.extract %467[0, 0, 0] : i32 from vector<1x1x1xi32>
    %469 = vector.broadcast %450 : i32 to vector<64x64xi32>
    %470 = arith.cmpi sge, %262, %469 : vector<64x64xi32>
    %471 = vector.broadcast %462 : i32 to vector<64x64xi32>
    %472 = arith.cmpi slt, %262, %471 : vector<64x64xi32>
    %473 = arith.andi %470, %472 : vector<64x64xi1>
    %474 = vector.broadcast %456 : i32 to vector<64x64xi32>
    %475 = arith.cmpi sge, %263, %474 : vector<64x64xi32>
    %476 = vector.broadcast %468 : i32 to vector<64x64xi32>
    %477 = arith.cmpi slt, %263, %476 : vector<64x64xi32>
    %478 = arith.andi %475, %477 : vector<64x64xi1>
    %479 = arith.andi %473, %478 : vector<64x64xi1>
    %480 = arith.extui %479 : vector<64x64xi1> to vector<64x64xi8>
    %c4 = arith.constant 4 : index
    %c0_173 = arith.constant 0 : index
    %c0_174 = arith.constant 0 : index
    %481 = vector.load %arg1[%c4, %c0_173, %c0_174] : memref<26x64x64xi8, #tpu.memory_space<vmem>>, vector<1x64x64xi8>
    %482 = vector.shape_cast %481 : vector<1x64x64xi8> to vector<64x64xi8>
    %483 = vector.shape_cast %480 : vector<64x64xi8> to vector<1x64x64xi8>
    tpu.vector_store %arg1[%c4, %c0_173, %c0_174], %483 {strides = array<i32>} : memref<26x64x64xi8, #tpu.memory_space<vmem>>, vector<1x64x64xi8>,
    %c0_i32_175 = arith.constant 0 : i32
    %484 = vector.broadcast %c0_i32_175 : i32 to vector<1x32xi32>
    %485 = arith.cmpi sgt, %261, %484 : vector<1x32xi32>
    %c5_i32 = arith.constant 5 : i32
    %486 = vector.broadcast %c5_i32 : i32 to vector<1x32xi32>
    %487 = arith.cmpi eq, %258, %486 : vector<1x32xi32>
    %488 = arith.andi %485, %487 : vector<1x32xi1>
    %c9218_i32_176 = arith.constant 9218 : i32
    %489 = vector.broadcast %c9218_i32_176 : i32 to vector<1x32xi32>
    %490 = arith.select %488, %191#3, %489 : vector<1x32xi1>, vector<1x32xi32>
    %491 = vector.shape_cast %490 : vector<1x32xi32> to vector<1x1x32xi32>
    %cst_177 = arith.constant dense<2147483647> : vector<1xi32>
    %492 = vector.multi_reduction <minsi>, %491, %cst_177 [1, 2] : vector<1x1x32xi32> to vector<1xi32>
    %493 = vector.shape_cast %492 : vector<1xi32> to vector<1x1x1xi32>
    %494 = vector.extract %493[0, 0, 0] : i32 from vector<1x1x1xi32>
    %c9218_i32_178 = arith.constant 9218 : i32
    %495 = vector.broadcast %c9218_i32_178 : i32 to vector<1x32xi32>
    %496 = arith.select %488, %191#4, %495 : vector<1x32xi1>, vector<1x32xi32>
    %497 = vector.shape_cast %496 : vector<1x32xi32> to vector<1x1x32xi32>
    %cst_179 = arith.constant dense<2147483647> : vector<1xi32>
    %498 = vector.multi_reduction <minsi>, %497, %cst_179 [1, 2] : vector<1x1x32xi32> to vector<1xi32>
    %499 = vector.shape_cast %498 : vector<1xi32> to vector<1x1x1xi32>
    %500 = vector.extract %499[0, 0, 0] : i32 from vector<1x1x1xi32>
    %c0_i32_180 = arith.constant 0 : i32
    %501 = vector.broadcast %c0_i32_180 : i32 to vector<1x32xi32>
    %502 = arith.select %488, %191#5, %501 : vector<1x32xi1>, vector<1x32xi32>
    %503 = vector.shape_cast %502 : vector<1x32xi32> to vector<1x1x32xi32>
    %cst_181 = arith.constant dense<-2147483648> : vector<1xi32>
    %504 = vector.multi_reduction <maxsi>, %503, %cst_181 [1, 2] : vector<1x1x32xi32> to vector<1xi32>
    %505 = vector.shape_cast %504 : vector<1xi32> to vector<1x1x1xi32>
    %506 = vector.extract %505[0, 0, 0] : i32 from vector<1x1x1xi32>
    %c0_i32_182 = arith.constant 0 : i32
    %507 = vector.broadcast %c0_i32_182 : i32 to vector<1x32xi32>
    %508 = arith.select %488, %191#6, %507 : vector<1x32xi1>, vector<1x32xi32>
    %509 = vector.shape_cast %508 : vector<1x32xi32> to vector<1x1x32xi32>
    %cst_183 = arith.constant dense<-2147483648> : vector<1xi32>
    %510 = vector.multi_reduction <maxsi>, %509, %cst_183 [1, 2] : vector<1x1x32xi32> to vector<1xi32>
    %511 = vector.shape_cast %510 : vector<1xi32> to vector<1x1x1xi32>
    %512 = vector.extract %511[0, 0, 0] : i32 from vector<1x1x1xi32>
    %513 = vector.broadcast %494 : i32 to vector<64x64xi32>
    %514 = arith.cmpi sge, %262, %513 : vector<64x64xi32>
    %515 = vector.broadcast %506 : i32 to vector<64x64xi32>
    %516 = arith.cmpi slt, %262, %515 : vector<64x64xi32>
    %517 = arith.andi %514, %516 : vector<64x64xi1>
    %518 = vector.broadcast %500 : i32 to vector<64x64xi32>
    %519 = arith.cmpi sge, %263, %518 : vector<64x64xi32>
    %520 = vector.broadcast %512 : i32 to vector<64x64xi32>
    %521 = arith.cmpi slt, %263, %520 : vector<64x64xi32>
    %522 = arith.andi %519, %521 : vector<64x64xi1>
    %523 = arith.andi %517, %522 : vector<64x64xi1>
    %524 = arith.extui %523 : vector<64x64xi1> to vector<64x64xi8>
    %c5 = arith.constant 5 : index
    %c0_184 = arith.constant 0 : index
    %c0_185 = arith.constant 0 : index
    %525 = vector.load %arg1[%c5, %c0_184, %c0_185] : memref<26x64x64xi8, #tpu.memory_space<vmem>>, vector<1x64x64xi8>
    %526 = vector.shape_cast %525 : vector<1x64x64xi8> to vector<64x64xi8>
    %527 = vector.shape_cast %524 : vector<64x64xi8> to vector<1x64x64xi8>
    tpu.vector_store %arg1[%c5, %c0_184, %c0_185], %527 {strides = array<i32>} : memref<26x64x64xi8, #tpu.memory_space<vmem>>, vector<1x64x64xi8>,
    %c0_i32_186 = arith.constant 0 : i32
    %528 = vector.broadcast %c0_i32_186 : i32 to vector<1x32xi32>
    %529 = arith.cmpi sgt, %261, %528 : vector<1x32xi32>
    %c6_i32 = arith.constant 6 : i32
    %530 = vector.broadcast %c6_i32 : i32 to vector<1x32xi32>
    %531 = arith.cmpi eq, %258, %530 : vector<1x32xi32>
    %532 = arith.andi %529, %531 : vector<1x32xi1>
    %c9218_i32_187 = arith.constant 9218 : i32
    %533 = vector.broadcast %c9218_i32_187 : i32 to vector<1x32xi32>
    %534 = arith.select %532, %191#3, %533 : vector<1x32xi1>, vector<1x32xi32>
    %535 = vector.shape_cast %534 : vector<1x32xi32> to vector<1x1x32xi32>
    %cst_188 = arith.constant dense<2147483647> : vector<1xi32>
    %536 = vector.multi_reduction <minsi>, %535, %cst_188 [1, 2] : vector<1x1x32xi32> to vector<1xi32>
    %537 = vector.shape_cast %536 : vector<1xi32> to vector<1x1x1xi32>
    %538 = vector.extract %537[0, 0, 0] : i32 from vector<1x1x1xi32>
    %c9218_i32_189 = arith.constant 9218 : i32
    %539 = vector.broadcast %c9218_i32_189 : i32 to vector<1x32xi32>
    %540 = arith.select %532, %191#4, %539 : vector<1x32xi1>, vector<1x32xi32>
    %541 = vector.shape_cast %540 : vector<1x32xi32> to vector<1x1x32xi32>
    %cst_190 = arith.constant dense<2147483647> : vector<1xi32>
    %542 = vector.multi_reduction <minsi>, %541, %cst_190 [1, 2] : vector<1x1x32xi32> to vector<1xi32>
    %543 = vector.shape_cast %542 : vector<1xi32> to vector<1x1x1xi32>
    %544 = vector.extract %543[0, 0, 0] : i32 from vector<1x1x1xi32>
    %c0_i32_191 = arith.constant 0 : i32
    %545 = vector.broadcast %c0_i32_191 : i32 to vector<1x32xi32>
    %546 = arith.select %532, %191#5, %545 : vector<1x32xi1>, vector<1x32xi32>
    %547 = vector.shape_cast %546 : vector<1x32xi32> to vector<1x1x32xi32>
    %cst_192 = arith.constant dense<-2147483648> : vector<1xi32>
    %548 = vector.multi_reduction <maxsi>, %547, %cst_192 [1, 2] : vector<1x1x32xi32> to vector<1xi32>
    %549 = vector.shape_cast %548 : vector<1xi32> to vector<1x1x1xi32>
    %550 = vector.extract %549[0, 0, 0] : i32 from vector<1x1x1xi32>
    %c0_i32_193 = arith.constant 0 : i32
    %551 = vector.broadcast %c0_i32_193 : i32 to vector<1x32xi32>
    %552 = arith.select %532, %191#6, %551 : vector<1x32xi1>, vector<1x32xi32>
    %553 = vector.shape_cast %552 : vector<1x32xi32> to vector<1x1x32xi32>
    %cst_194 = arith.constant dense<-2147483648> : vector<1xi32>
    %554 = vector.multi_reduction <maxsi>, %553, %cst_194 [1, 2] : vector<1x1x32xi32> to vector<1xi32>
    %555 = vector.shape_cast %554 : vector<1xi32> to vector<1x1x1xi32>
    %556 = vector.extract %555[0, 0, 0] : i32 from vector<1x1x1xi32>
    %557 = vector.broadcast %538 : i32 to vector<64x64xi32>
    %558 = arith.cmpi sge, %262, %557 : vector<64x64xi32>
    %559 = vector.broadcast %550 : i32 to vector<64x64xi32>
    %560 = arith.cmpi slt, %262, %559 : vector<64x64xi32>
    %561 = arith.andi %558, %560 : vector<64x64xi1>
    %562 = vector.broadcast %544 : i32 to vector<64x64xi32>
    %563 = arith.cmpi sge, %263, %562 : vector<64x64xi32>
    %564 = vector.broadcast %556 : i32 to vector<64x64xi32>
    %565 = arith.cmpi slt, %263, %564 : vector<64x64xi32>
    %566 = arith.andi %563, %565 : vector<64x64xi1>
    %567 = arith.andi %561, %566 : vector<64x64xi1>
    %568 = arith.extui %567 : vector<64x64xi1> to vector<64x64xi8>
    %c6 = arith.constant 6 : index
    %c0_195 = arith.constant 0 : index
    %c0_196 = arith.constant 0 : index
    %569 = vector.load %arg1[%c6, %c0_195, %c0_196] : memref<26x64x64xi8, #tpu.memory_space<vmem>>, vector<1x64x64xi8>
    %570 = vector.shape_cast %569 : vector<1x64x64xi8> to vector<64x64xi8>
    %571 = vector.shape_cast %568 : vector<64x64xi8> to vector<1x64x64xi8>
    tpu.vector_store %arg1[%c6, %c0_195, %c0_196], %571 {strides = array<i32>} : memref<26x64x64xi8, #tpu.memory_space<vmem>>, vector<1x64x64xi8>,
    %c0_i32_197 = arith.constant 0 : i32
    %572 = vector.broadcast %c0_i32_197 : i32 to vector<1x32xi32>
    %573 = arith.cmpi sgt, %261, %572 : vector<1x32xi32>
    %c7_i32 = arith.constant 7 : i32
    %574 = vector.broadcast %c7_i32 : i32 to vector<1x32xi32>
    %575 = arith.cmpi eq, %258, %574 : vector<1x32xi32>
    %576 = arith.andi %573, %575 : vector<1x32xi1>
    %c9218_i32_198 = arith.constant 9218 : i32
    %577 = vector.broadcast %c9218_i32_198 : i32 to vector<1x32xi32>
    %578 = arith.select %576, %191#3, %577 : vector<1x32xi1>, vector<1x32xi32>
    %579 = vector.shape_cast %578 : vector<1x32xi32> to vector<1x1x32xi32>
    %cst_199 = arith.constant dense<2147483647> : vector<1xi32>
    %580 = vector.multi_reduction <minsi>, %579, %cst_199 [1, 2] : vector<1x1x32xi32> to vector<1xi32>
    %581 = vector.shape_cast %580 : vector<1xi32> to vector<1x1x1xi32>
    %582 = vector.extract %581[0, 0, 0] : i32 from vector<1x1x1xi32>
    %c9218_i32_200 = arith.constant 9218 : i32
    %583 = vector.broadcast %c9218_i32_200 : i32 to vector<1x32xi32>
    %584 = arith.select %576, %191#4, %583 : vector<1x32xi1>, vector<1x32xi32>
    %585 = vector.shape_cast %584 : vector<1x32xi32> to vector<1x1x32xi32>
    %cst_201 = arith.constant dense<2147483647> : vector<1xi32>
    %586 = vector.multi_reduction <minsi>, %585, %cst_201 [1, 2] : vector<1x1x32xi32> to vector<1xi32>
    %587 = vector.shape_cast %586 : vector<1xi32> to vector<1x1x1xi32>
    %588 = vector.extract %587[0, 0, 0] : i32 from vector<1x1x1xi32>
    %c0_i32_202 = arith.constant 0 : i32
    %589 = vector.broadcast %c0_i32_202 : i32 to vector<1x32xi32>
    %590 = arith.select %576, %191#5, %589 : vector<1x32xi1>, vector<1x32xi32>
    %591 = vector.shape_cast %590 : vector<1x32xi32> to vector<1x1x32xi32>
    %cst_203 = arith.constant dense<-2147483648> : vector<1xi32>
    %592 = vector.multi_reduction <maxsi>, %591, %cst_203 [1, 2] : vector<1x1x32xi32> to vector<1xi32>
    %593 = vector.shape_cast %592 : vector<1xi32> to vector<1x1x1xi32>
    %594 = vector.extract %593[0, 0, 0] : i32 from vector<1x1x1xi32>
    %c0_i32_204 = arith.constant 0 : i32
    %595 = vector.broadcast %c0_i32_204 : i32 to vector<1x32xi32>
    %596 = arith.select %576, %191#6, %595 : vector<1x32xi1>, vector<1x32xi32>
    %597 = vector.shape_cast %596 : vector<1x32xi32> to vector<1x1x32xi32>
    %cst_205 = arith.constant dense<-2147483648> : vector<1xi32>
    %598 = vector.multi_reduction <maxsi>, %597, %cst_205 [1, 2] : vector<1x1x32xi32> to vector<1xi32>
    %599 = vector.shape_cast %598 : vector<1xi32> to vector<1x1x1xi32>
    %600 = vector.extract %599[0, 0, 0] : i32 from vector<1x1x1xi32>
    %601 = vector.broadcast %582 : i32 to vector<64x64xi32>
    %602 = arith.cmpi sge, %262, %601 : vector<64x64xi32>
    %603 = vector.broadcast %594 : i32 to vector<64x64xi32>
    %604 = arith.cmpi slt, %262, %603 : vector<64x64xi32>
    %605 = arith.andi %602, %604 : vector<64x64xi1>
    %606 = vector.broadcast %588 : i32 to vector<64x64xi32>
    %607 = arith.cmpi sge, %263, %606 : vector<64x64xi32>
    %608 = vector.broadcast %600 : i32 to vector<64x64xi32>
    %609 = arith.cmpi slt, %263, %608 : vector<64x64xi32>
    %610 = arith.andi %607, %609 : vector<64x64xi1>
    %611 = arith.andi %605, %610 : vector<64x64xi1>
    %612 = arith.extui %611 : vector<64x64xi1> to vector<64x64xi8>
    %c7 = arith.constant 7 : index
    %c0_206 = arith.constant 0 : index
    %c0_207 = arith.constant 0 : index
    %613 = vector.load %arg1[%c7, %c0_206, %c0_207] : memref<26x64x64xi8, #tpu.memory_space<vmem>>, vector<1x64x64xi8>
    %614 = vector.shape_cast %613 : vector<1x64x64xi8> to vector<64x64xi8>
    %615 = vector.shape_cast %612 : vector<64x64xi8> to vector<1x64x64xi8>
    tpu.vector_store %arg1[%c7, %c0_206, %c0_207], %615 {strides = array<i32>} : memref<26x64x64xi8, #tpu.memory_space<vmem>>, vector<1x64x64xi8>,
    %c0_i32_208 = arith.constant 0 : i32
    %616 = vector.broadcast %c0_i32_208 : i32 to vector<1x32xi32>
    %617 = arith.cmpi sgt, %261, %616 : vector<1x32xi32>
    %c8_i32_209 = arith.constant 8 : i32
    %618 = vector.broadcast %c8_i32_209 : i32 to vector<1x32xi32>
    %619 = arith.cmpi eq, %258, %618 : vector<1x32xi32>
    %620 = arith.andi %617, %619 : vector<1x32xi1>
    %c9218_i32_210 = arith.constant 9218 : i32
    %621 = vector.broadcast %c9218_i32_210 : i32 to vector<1x32xi32>
    %622 = arith.select %620, %191#3, %621 : vector<1x32xi1>, vector<1x32xi32>
    %623 = vector.shape_cast %622 : vector<1x32xi32> to vector<1x1x32xi32>
    %cst_211 = arith.constant dense<2147483647> : vector<1xi32>
    %624 = vector.multi_reduction <minsi>, %623, %cst_211 [1, 2] : vector<1x1x32xi32> to vector<1xi32>
    %625 = vector.shape_cast %624 : vector<1xi32> to vector<1x1x1xi32>
    %626 = vector.extract %625[0, 0, 0] : i32 from vector<1x1x1xi32>
    %c9218_i32_212 = arith.constant 9218 : i32
    %627 = vector.broadcast %c9218_i32_212 : i32 to vector<1x32xi32>
    %628 = arith.select %620, %191#4, %627 : vector<1x32xi1>, vector<1x32xi32>
    %629 = vector.shape_cast %628 : vector<1x32xi32> to vector<1x1x32xi32>
    %cst_213 = arith.constant dense<2147483647> : vector<1xi32>
    %630 = vector.multi_reduction <minsi>, %629, %cst_213 [1, 2] : vector<1x1x32xi32> to vector<1xi32>
    %631 = vector.shape_cast %630 : vector<1xi32> to vector<1x1x1xi32>
    %632 = vector.extract %631[0, 0, 0] : i32 from vector<1x1x1xi32>
    %c0_i32_214 = arith.constant 0 : i32
    %633 = vector.broadcast %c0_i32_214 : i32 to vector<1x32xi32>
    %634 = arith.select %620, %191#5, %633 : vector<1x32xi1>, vector<1x32xi32>
    %635 = vector.shape_cast %634 : vector<1x32xi32> to vector<1x1x32xi32>
    %cst_215 = arith.constant dense<-2147483648> : vector<1xi32>
    %636 = vector.multi_reduction <maxsi>, %635, %cst_215 [1, 2] : vector<1x1x32xi32> to vector<1xi32>
    %637 = vector.shape_cast %636 : vector<1xi32> to vector<1x1x1xi32>
    %638 = vector.extract %637[0, 0, 0] : i32 from vector<1x1x1xi32>
    %c0_i32_216 = arith.constant 0 : i32
    %639 = vector.broadcast %c0_i32_216 : i32 to vector<1x32xi32>
    %640 = arith.select %620, %191#6, %639 : vector<1x32xi1>, vector<1x32xi32>
    %641 = vector.shape_cast %640 : vector<1x32xi32> to vector<1x1x32xi32>
    %cst_217 = arith.constant dense<-2147483648> : vector<1xi32>
    %642 = vector.multi_reduction <maxsi>, %641, %cst_217 [1, 2] : vector<1x1x32xi32> to vector<1xi32>
    %643 = vector.shape_cast %642 : vector<1xi32> to vector<1x1x1xi32>
    %644 = vector.extract %643[0, 0, 0] : i32 from vector<1x1x1xi32>
    %645 = vector.broadcast %626 : i32 to vector<64x64xi32>
    %646 = arith.cmpi sge, %262, %645 : vector<64x64xi32>
    %647 = vector.broadcast %638 : i32 to vector<64x64xi32>
    %648 = arith.cmpi slt, %262, %647 : vector<64x64xi32>
    %649 = arith.andi %646, %648 : vector<64x64xi1>
    %650 = vector.broadcast %632 : i32 to vector<64x64xi32>
    %651 = arith.cmpi sge, %263, %650 : vector<64x64xi32>
    %652 = vector.broadcast %644 : i32 to vector<64x64xi32>
    %653 = arith.cmpi slt, %263, %652 : vector<64x64xi32>
    %654 = arith.andi %651, %653 : vector<64x64xi1>
    %655 = arith.andi %649, %654 : vector<64x64xi1>
    %656 = arith.extui %655 : vector<64x64xi1> to vector<64x64xi8>
    %c8 = arith.constant 8 : index
    %c0_218 = arith.constant 0 : index
    %c0_219 = arith.constant 0 : index
    %657 = vector.load %arg1[%c8, %c0_218, %c0_219] : memref<26x64x64xi8, #tpu.memory_space<vmem>>, vector<1x64x64xi8>
    %658 = vector.shape_cast %657 : vector<1x64x64xi8> to vector<64x64xi8>
    %659 = vector.shape_cast %656 : vector<64x64xi8> to vector<1x64x64xi8>
    tpu.vector_store %arg1[%c8, %c0_218, %c0_219], %659 {strides = array<i32>} : memref<26x64x64xi8, #tpu.memory_space<vmem>>, vector<1x64x64xi8>,
    %c0_i32_220 = arith.constant 0 : i32
    %660 = vector.broadcast %c0_i32_220 : i32 to vector<1x32xi32>
    %661 = arith.cmpi sgt, %261, %660 : vector<1x32xi32>
    %c9_i32 = arith.constant 9 : i32
    %662 = vector.broadcast %c9_i32 : i32 to vector<1x32xi32>
    %663 = arith.cmpi eq, %258, %662 : vector<1x32xi32>
    %664 = arith.andi %661, %663 : vector<1x32xi1>
    %c9218_i32_221 = arith.constant 9218 : i32
    %665 = vector.broadcast %c9218_i32_221 : i32 to vector<1x32xi32>
    %666 = arith.select %664, %191#3, %665 : vector<1x32xi1>, vector<1x32xi32>
    %667 = vector.shape_cast %666 : vector<1x32xi32> to vector<1x1x32xi32>
    %cst_222 = arith.constant dense<2147483647> : vector<1xi32>
    %668 = vector.multi_reduction <minsi>, %667, %cst_222 [1, 2] : vector<1x1x32xi32> to vector<1xi32>
    %669 = vector.shape_cast %668 : vector<1xi32> to vector<1x1x1xi32>
    %670 = vector.extract %669[0, 0, 0] : i32 from vector<1x1x1xi32>
    %c9218_i32_223 = arith.constant 9218 : i32
    %671 = vector.broadcast %c9218_i32_223 : i32 to vector<1x32xi32>
    %672 = arith.select %664, %191#4, %671 : vector<1x32xi1>, vector<1x32xi32>
    %673 = vector.shape_cast %672 : vector<1x32xi32> to vector<1x1x32xi32>
    %cst_224 = arith.constant dense<2147483647> : vector<1xi32>
    %674 = vector.multi_reduction <minsi>, %673, %cst_224 [1, 2] : vector<1x1x32xi32> to vector<1xi32>
    %675 = vector.shape_cast %674 : vector<1xi32> to vector<1x1x1xi32>
    %676 = vector.extract %675[0, 0, 0] : i32 from vector<1x1x1xi32>
    %c0_i32_225 = arith.constant 0 : i32
    %677 = vector.broadcast %c0_i32_225 : i32 to vector<1x32xi32>
    %678 = arith.select %664, %191#5, %677 : vector<1x32xi1>, vector<1x32xi32>
    %679 = vector.shape_cast %678 : vector<1x32xi32> to vector<1x1x32xi32>
    %cst_226 = arith.constant dense<-2147483648> : vector<1xi32>
    %680 = vector.multi_reduction <maxsi>, %679, %cst_226 [1, 2] : vector<1x1x32xi32> to vector<1xi32>
    %681 = vector.shape_cast %680 : vector<1xi32> to vector<1x1x1xi32>
    %682 = vector.extract %681[0, 0, 0] : i32 from vector<1x1x1xi32>
    %c0_i32_227 = arith.constant 0 : i32
    %683 = vector.broadcast %c0_i32_227 : i32 to vector<1x32xi32>
    %684 = arith.select %664, %191#6, %683 : vector<1x32xi1>, vector<1x32xi32>
    %685 = vector.shape_cast %684 : vector<1x32xi32> to vector<1x1x32xi32>
    %cst_228 = arith.constant dense<-2147483648> : vector<1xi32>
    %686 = vector.multi_reduction <maxsi>, %685, %cst_228 [1, 2] : vector<1x1x32xi32> to vector<1xi32>
    %687 = vector.shape_cast %686 : vector<1xi32> to vector<1x1x1xi32>
    %688 = vector.extract %687[0, 0, 0] : i32 from vector<1x1x1xi32>
    %689 = vector.broadcast %670 : i32 to vector<64x64xi32>
    %690 = arith.cmpi sge, %262, %689 : vector<64x64xi32>
    %691 = vector.broadcast %682 : i32 to vector<64x64xi32>
    %692 = arith.cmpi slt, %262, %691 : vector<64x64xi32>
    %693 = arith.andi %690, %692 : vector<64x64xi1>
    %694 = vector.broadcast %676 : i32 to vector<64x64xi32>
    %695 = arith.cmpi sge, %263, %694 : vector<64x64xi32>
    %696 = vector.broadcast %688 : i32 to vector<64x64xi32>
    %697 = arith.cmpi slt, %263, %696 : vector<64x64xi32>
    %698 = arith.andi %695, %697 : vector<64x64xi1>
    %699 = arith.andi %693, %698 : vector<64x64xi1>
    %700 = arith.extui %699 : vector<64x64xi1> to vector<64x64xi8>
    %c9 = arith.constant 9 : index
    %c0_229 = arith.constant 0 : index
    %c0_230 = arith.constant 0 : index
    %701 = vector.load %arg1[%c9, %c0_229, %c0_230] : memref<26x64x64xi8, #tpu.memory_space<vmem>>, vector<1x64x64xi8>
    %702 = vector.shape_cast %701 : vector<1x64x64xi8> to vector<64x64xi8>
    %703 = vector.shape_cast %700 : vector<64x64xi8> to vector<1x64x64xi8>
    tpu.vector_store %arg1[%c9, %c0_229, %c0_230], %703 {strides = array<i32>} : memref<26x64x64xi8, #tpu.memory_space<vmem>>, vector<1x64x64xi8>,
    %c0_i32_231 = arith.constant 0 : i32
    %704 = vector.broadcast %c0_i32_231 : i32 to vector<1x32xi32>
    %705 = arith.cmpi sgt, %261, %704 : vector<1x32xi32>
    %c10_i32 = arith.constant 10 : i32
    %706 = vector.broadcast %c10_i32 : i32 to vector<1x32xi32>
    %707 = arith.cmpi eq, %258, %706 : vector<1x32xi32>
    %708 = arith.andi %705, %707 : vector<1x32xi1>
    %c9218_i32_232 = arith.constant 9218 : i32
    %709 = vector.broadcast %c9218_i32_232 : i32 to vector<1x32xi32>
    %710 = arith.select %708, %191#3, %709 : vector<1x32xi1>, vector<1x32xi32>
    %711 = vector.shape_cast %710 : vector<1x32xi32> to vector<1x1x32xi32>
    %cst_233 = arith.constant dense<2147483647> : vector<1xi32>
    %712 = vector.multi_reduction <minsi>, %711, %cst_233 [1, 2] : vector<1x1x32xi32> to vector<1xi32>
    %713 = vector.shape_cast %712 : vector<1xi32> to vector<1x1x1xi32>
    %714 = vector.extract %713[0, 0, 0] : i32 from vector<1x1x1xi32>
    %c9218_i32_234 = arith.constant 9218 : i32
    %715 = vector.broadcast %c9218_i32_234 : i32 to vector<1x32xi32>
    %716 = arith.select %708, %191#4, %715 : vector<1x32xi1>, vector<1x32xi32>
    %717 = vector.shape_cast %716 : vector<1x32xi32> to vector<1x1x32xi32>
    %cst_235 = arith.constant dense<2147483647> : vector<1xi32>
    %718 = vector.multi_reduction <minsi>, %717, %cst_235 [1, 2] : vector<1x1x32xi32> to vector<1xi32>
    %719 = vector.shape_cast %718 : vector<1xi32> to vector<1x1x1xi32>
    %720 = vector.extract %719[0, 0, 0] : i32 from vector<1x1x1xi32>
    %c0_i32_236 = arith.constant 0 : i32
    %721 = vector.broadcast %c0_i32_236 : i32 to vector<1x32xi32>
    %722 = arith.select %708, %191#5, %721 : vector<1x32xi1>, vector<1x32xi32>
    %723 = vector.shape_cast %722 : vector<1x32xi32> to vector<1x1x32xi32>
    %cst_237 = arith.constant dense<-2147483648> : vector<1xi32>
    %724 = vector.multi_reduction <maxsi>, %723, %cst_237 [1, 2] : vector<1x1x32xi32> to vector<1xi32>
    %725 = vector.shape_cast %724 : vector<1xi32> to vector<1x1x1xi32>
    %726 = vector.extract %725[0, 0, 0] : i32 from vector<1x1x1xi32>
    %c0_i32_238 = arith.constant 0 : i32
    %727 = vector.broadcast %c0_i32_238 : i32 to vector<1x32xi32>
    %728 = arith.select %708, %191#6, %727 : vector<1x32xi1>, vector<1x32xi32>
    %729 = vector.shape_cast %728 : vector<1x32xi32> to vector<1x1x32xi32>
    %cst_239 = arith.constant dense<-2147483648> : vector<1xi32>
    %730 = vector.multi_reduction <maxsi>, %729, %cst_239 [1, 2] : vector<1x1x32xi32> to vector<1xi32>
    %731 = vector.shape_cast %730 : vector<1xi32> to vector<1x1x1xi32>
    %732 = vector.extract %731[0, 0, 0] : i32 from vector<1x1x1xi32>
    %733 = vector.broadcast %714 : i32 to vector<64x64xi32>
    %734 = arith.cmpi sge, %262, %733 : vector<64x64xi32>
    %735 = vector.broadcast %726 : i32 to vector<64x64xi32>
    %736 = arith.cmpi slt, %262, %735 : vector<64x64xi32>
    %737 = arith.andi %734, %736 : vector<64x64xi1>
    %738 = vector.broadcast %720 : i32 to vector<64x64xi32>
    %739 = arith.cmpi sge, %263, %738 : vector<64x64xi32>
    %740 = vector.broadcast %732 : i32 to vector<64x64xi32>
    %741 = arith.cmpi slt, %263, %740 : vector<64x64xi32>
    %742 = arith.andi %739, %741 : vector<64x64xi1>
    %743 = arith.andi %737, %742 : vector<64x64xi1>
    %744 = arith.extui %743 : vector<64x64xi1> to vector<64x64xi8>
    %c10 = arith.constant 10 : index
    %c0_240 = arith.constant 0 : index
    %c0_241 = arith.constant 0 : index
    %745 = vector.load %arg1[%c10, %c0_240, %c0_241] : memref<26x64x64xi8, #tpu.memory_space<vmem>>, vector<1x64x64xi8>
    %746 = vector.shape_cast %745 : vector<1x64x64xi8> to vector<64x64xi8>
    %747 = vector.shape_cast %744 : vector<64x64xi8> to vector<1x64x64xi8>
    tpu.vector_store %arg1[%c10, %c0_240, %c0_241], %747 {strides = array<i32>} : memref<26x64x64xi8, #tpu.memory_space<vmem>>, vector<1x64x64xi8>,
    %c0_i32_242 = arith.constant 0 : i32
    %748 = vector.broadcast %c0_i32_242 : i32 to vector<1x32xi32>
    %749 = arith.cmpi sgt, %261, %748 : vector<1x32xi32>
    %c11_i32 = arith.constant 11 : i32
    %750 = vector.broadcast %c11_i32 : i32 to vector<1x32xi32>
    %751 = arith.cmpi eq, %258, %750 : vector<1x32xi32>
    %752 = arith.andi %749, %751 : vector<1x32xi1>
    %c9218_i32_243 = arith.constant 9218 : i32
    %753 = vector.broadcast %c9218_i32_243 : i32 to vector<1x32xi32>
    %754 = arith.select %752, %191#3, %753 : vector<1x32xi1>, vector<1x32xi32>
    %755 = vector.shape_cast %754 : vector<1x32xi32> to vector<1x1x32xi32>
    %cst_244 = arith.constant dense<2147483647> : vector<1xi32>
    %756 = vector.multi_reduction <minsi>, %755, %cst_244 [1, 2] : vector<1x1x32xi32> to vector<1xi32>
    %757 = vector.shape_cast %756 : vector<1xi32> to vector<1x1x1xi32>
    %758 = vector.extract %757[0, 0, 0] : i32 from vector<1x1x1xi32>
    %c9218_i32_245 = arith.constant 9218 : i32
    %759 = vector.broadcast %c9218_i32_245 : i32 to vector<1x32xi32>
    %760 = arith.select %752, %191#4, %759 : vector<1x32xi1>, vector<1x32xi32>
    %761 = vector.shape_cast %760 : vector<1x32xi32> to vector<1x1x32xi32>
    %cst_246 = arith.constant dense<2147483647> : vector<1xi32>
    %762 = vector.multi_reduction <minsi>, %761, %cst_246 [1, 2] : vector<1x1x32xi32> to vector<1xi32>
    %763 = vector.shape_cast %762 : vector<1xi32> to vector<1x1x1xi32>
    %764 = vector.extract %763[0, 0, 0] : i32 from vector<1x1x1xi32>
    %c0_i32_247 = arith.constant 0 : i32
    %765 = vector.broadcast %c0_i32_247 : i32 to vector<1x32xi32>
    %766 = arith.select %752, %191#5, %765 : vector<1x32xi1>, vector<1x32xi32>
    %767 = vector.shape_cast %766 : vector<1x32xi32> to vector<1x1x32xi32>
    %cst_248 = arith.constant dense<-2147483648> : vector<1xi32>
    %768 = vector.multi_reduction <maxsi>, %767, %cst_248 [1, 2] : vector<1x1x32xi32> to vector<1xi32>
    %769 = vector.shape_cast %768 : vector<1xi32> to vector<1x1x1xi32>
    %770 = vector.extract %769[0, 0, 0] : i32 from vector<1x1x1xi32>
    %c0_i32_249 = arith.constant 0 : i32
    %771 = vector.broadcast %c0_i32_249 : i32 to vector<1x32xi32>
    %772 = arith.select %752, %191#6, %771 : vector<1x32xi1>, vector<1x32xi32>
    %773 = vector.shape_cast %772 : vector<1x32xi32> to vector<1x1x32xi32>
    %cst_250 = arith.constant dense<-2147483648> : vector<1xi32>
    %774 = vector.multi_reduction <maxsi>, %773, %cst_250 [1, 2] : vector<1x1x32xi32> to vector<1xi32>
    %775 = vector.shape_cast %774 : vector<1xi32> to vector<1x1x1xi32>
    %776 = vector.extract %775[0, 0, 0] : i32 from vector<1x1x1xi32>
    %777 = vector.broadcast %758 : i32 to vector<64x64xi32>
    %778 = arith.cmpi sge, %262, %777 : vector<64x64xi32>
    %779 = vector.broadcast %770 : i32 to vector<64x64xi32>
    %780 = arith.cmpi slt, %262, %779 : vector<64x64xi32>
    %781 = arith.andi %778, %780 : vector<64x64xi1>
    %782 = vector.broadcast %764 : i32 to vector<64x64xi32>
    %783 = arith.cmpi sge, %263, %782 : vector<64x64xi32>
    %784 = vector.broadcast %776 : i32 to vector<64x64xi32>
    %785 = arith.cmpi slt, %263, %784 : vector<64x64xi32>
    %786 = arith.andi %783, %785 : vector<64x64xi1>
    %787 = arith.andi %781, %786 : vector<64x64xi1>
    %788 = arith.extui %787 : vector<64x64xi1> to vector<64x64xi8>
    %c11 = arith.constant 11 : index
    %c0_251 = arith.constant 0 : index
    %c0_252 = arith.constant 0 : index
    %789 = vector.load %arg1[%c11, %c0_251, %c0_252] : memref<26x64x64xi8, #tpu.memory_space<vmem>>, vector<1x64x64xi8>
    %790 = vector.shape_cast %789 : vector<1x64x64xi8> to vector<64x64xi8>
    %791 = vector.shape_cast %788 : vector<64x64xi8> to vector<1x64x64xi8>
    tpu.vector_store %arg1[%c11, %c0_251, %c0_252], %791 {strides = array<i32>} : memref<26x64x64xi8, #tpu.memory_space<vmem>>, vector<1x64x64xi8>,
    %c0_i32_253 = arith.constant 0 : i32
    %792 = vector.broadcast %c0_i32_253 : i32 to vector<1x32xi32>
    %793 = arith.cmpi sgt, %261, %792 : vector<1x32xi32>
    %c12_i32 = arith.constant 12 : i32
    %794 = vector.broadcast %c12_i32 : i32 to vector<1x32xi32>
    %795 = arith.cmpi eq, %258, %794 : vector<1x32xi32>
    %796 = arith.andi %793, %795 : vector<1x32xi1>
    %c9218_i32_254 = arith.constant 9218 : i32
    %797 = vector.broadcast %c9218_i32_254 : i32 to vector<1x32xi32>
    %798 = arith.select %796, %191#3, %797 : vector<1x32xi1>, vector<1x32xi32>
    %799 = vector.shape_cast %798 : vector<1x32xi32> to vector<1x1x32xi32>
    %cst_255 = arith.constant dense<2147483647> : vector<1xi32>
    %800 = vector.multi_reduction <minsi>, %799, %cst_255 [1, 2] : vector<1x1x32xi32> to vector<1xi32>
    %801 = vector.shape_cast %800 : vector<1xi32> to vector<1x1x1xi32>
    %802 = vector.extract %801[0, 0, 0] : i32 from vector<1x1x1xi32>
    %c9218_i32_256 = arith.constant 9218 : i32
    %803 = vector.broadcast %c9218_i32_256 : i32 to vector<1x32xi32>
    %804 = arith.select %796, %191#4, %803 : vector<1x32xi1>, vector<1x32xi32>
    %805 = vector.shape_cast %804 : vector<1x32xi32> to vector<1x1x32xi32>
    %cst_257 = arith.constant dense<2147483647> : vector<1xi32>
    %806 = vector.multi_reduction <minsi>, %805, %cst_257 [1, 2] : vector<1x1x32xi32> to vector<1xi32>
    %807 = vector.shape_cast %806 : vector<1xi32> to vector<1x1x1xi32>
    %808 = vector.extract %807[0, 0, 0] : i32 from vector<1x1x1xi32>
    %c0_i32_258 = arith.constant 0 : i32
    %809 = vector.broadcast %c0_i32_258 : i32 to vector<1x32xi32>
    %810 = arith.select %796, %191#5, %809 : vector<1x32xi1>, vector<1x32xi32>
    %811 = vector.shape_cast %810 : vector<1x32xi32> to vector<1x1x32xi32>
    %cst_259 = arith.constant dense<-2147483648> : vector<1xi32>
    %812 = vector.multi_reduction <maxsi>, %811, %cst_259 [1, 2] : vector<1x1x32xi32> to vector<1xi32>
    %813 = vector.shape_cast %812 : vector<1xi32> to vector<1x1x1xi32>
    %814 = vector.extract %813[0, 0, 0] : i32 from vector<1x1x1xi32>
    %c0_i32_260 = arith.constant 0 : i32
    %815 = vector.broadcast %c0_i32_260 : i32 to vector<1x32xi32>
    %816 = arith.select %796, %191#6, %815 : vector<1x32xi1>, vector<1x32xi32>
    %817 = vector.shape_cast %816 : vector<1x32xi32> to vector<1x1x32xi32>
    %cst_261 = arith.constant dense<-2147483648> : vector<1xi32>
    %818 = vector.multi_reduction <maxsi>, %817, %cst_261 [1, 2] : vector<1x1x32xi32> to vector<1xi32>
    %819 = vector.shape_cast %818 : vector<1xi32> to vector<1x1x1xi32>
    %820 = vector.extract %819[0, 0, 0] : i32 from vector<1x1x1xi32>
    %821 = vector.broadcast %802 : i32 to vector<64x64xi32>
    %822 = arith.cmpi sge, %262, %821 : vector<64x64xi32>
    %823 = vector.broadcast %814 : i32 to vector<64x64xi32>
    %824 = arith.cmpi slt, %262, %823 : vector<64x64xi32>
    %825 = arith.andi %822, %824 : vector<64x64xi1>
    %826 = vector.broadcast %808 : i32 to vector<64x64xi32>
    %827 = arith.cmpi sge, %263, %826 : vector<64x64xi32>
    %828 = vector.broadcast %820 : i32 to vector<64x64xi32>
    %829 = arith.cmpi slt, %263, %828 : vector<64x64xi32>
    %830 = arith.andi %827, %829 : vector<64x64xi1>
    %831 = arith.andi %825, %830 : vector<64x64xi1>
    %832 = arith.extui %831 : vector<64x64xi1> to vector<64x64xi8>
    %c12 = arith.constant 12 : index
    %c0_262 = arith.constant 0 : index
    %c0_263 = arith.constant 0 : index
    %833 = vector.load %arg1[%c12, %c0_262, %c0_263] : memref<26x64x64xi8, #tpu.memory_space<vmem>>, vector<1x64x64xi8>
    %834 = vector.shape_cast %833 : vector<1x64x64xi8> to vector<64x64xi8>
    %835 = vector.shape_cast %832 : vector<64x64xi8> to vector<1x64x64xi8>
    tpu.vector_store %arg1[%c12, %c0_262, %c0_263], %835 {strides = array<i32>} : memref<26x64x64xi8, #tpu.memory_space<vmem>>, vector<1x64x64xi8>,
    %c0_i32_264 = arith.constant 0 : i32
    %836 = vector.broadcast %c0_i32_264 : i32 to vector<1x32xi32>
    %837 = arith.cmpi sgt, %261, %836 : vector<1x32xi32>
    %c13_i32 = arith.constant 13 : i32
    %838 = vector.broadcast %c13_i32 : i32 to vector<1x32xi32>
    %839 = arith.cmpi eq, %258, %838 : vector<1x32xi32>
    %840 = arith.andi %837, %839 : vector<1x32xi1>
    %c9218_i32_265 = arith.constant 9218 : i32
    %841 = vector.broadcast %c9218_i32_265 : i32 to vector<1x32xi32>
    %842 = arith.select %840, %191#3, %841 : vector<1x32xi1>, vector<1x32xi32>
    %843 = vector.shape_cast %842 : vector<1x32xi32> to vector<1x1x32xi32>
    %cst_266 = arith.constant dense<2147483647> : vector<1xi32>
    %844 = vector.multi_reduction <minsi>, %843, %cst_266 [1, 2] : vector<1x1x32xi32> to vector<1xi32>
    %845 = vector.shape_cast %844 : vector<1xi32> to vector<1x1x1xi32>
    %846 = vector.extract %845[0, 0, 0] : i32 from vector<1x1x1xi32>
    %c9218_i32_267 = arith.constant 9218 : i32
    %847 = vector.broadcast %c9218_i32_267 : i32 to vector<1x32xi32>
    %848 = arith.select %840, %191#4, %847 : vector<1x32xi1>, vector<1x32xi32>
    %849 = vector.shape_cast %848 : vector<1x32xi32> to vector<1x1x32xi32>
    %cst_268 = arith.constant dense<2147483647> : vector<1xi32>
    %850 = vector.multi_reduction <minsi>, %849, %cst_268 [1, 2] : vector<1x1x32xi32> to vector<1xi32>
    %851 = vector.shape_cast %850 : vector<1xi32> to vector<1x1x1xi32>
    %852 = vector.extract %851[0, 0, 0] : i32 from vector<1x1x1xi32>
    %c0_i32_269 = arith.constant 0 : i32
    %853 = vector.broadcast %c0_i32_269 : i32 to vector<1x32xi32>
    %854 = arith.select %840, %191#5, %853 : vector<1x32xi1>, vector<1x32xi32>
    %855 = vector.shape_cast %854 : vector<1x32xi32> to vector<1x1x32xi32>
    %cst_270 = arith.constant dense<-2147483648> : vector<1xi32>
    %856 = vector.multi_reduction <maxsi>, %855, %cst_270 [1, 2] : vector<1x1x32xi32> to vector<1xi32>
    %857 = vector.shape_cast %856 : vector<1xi32> to vector<1x1x1xi32>
    %858 = vector.extract %857[0, 0, 0] : i32 from vector<1x1x1xi32>
    %c0_i32_271 = arith.constant 0 : i32
    %859 = vector.broadcast %c0_i32_271 : i32 to vector<1x32xi32>
    %860 = arith.select %840, %191#6, %859 : vector<1x32xi1>, vector<1x32xi32>
    %861 = vector.shape_cast %860 : vector<1x32xi32> to vector<1x1x32xi32>
    %cst_272 = arith.constant dense<-2147483648> : vector<1xi32>
    %862 = vector.multi_reduction <maxsi>, %861, %cst_272 [1, 2] : vector<1x1x32xi32> to vector<1xi32>
    %863 = vector.shape_cast %862 : vector<1xi32> to vector<1x1x1xi32>
    %864 = vector.extract %863[0, 0, 0] : i32 from vector<1x1x1xi32>
    %865 = vector.broadcast %846 : i32 to vector<64x64xi32>
    %866 = arith.cmpi sge, %262, %865 : vector<64x64xi32>
    %867 = vector.broadcast %858 : i32 to vector<64x64xi32>
    %868 = arith.cmpi slt, %262, %867 : vector<64x64xi32>
    %869 = arith.andi %866, %868 : vector<64x64xi1>
    %870 = vector.broadcast %852 : i32 to vector<64x64xi32>
    %871 = arith.cmpi sge, %263, %870 : vector<64x64xi32>
    %872 = vector.broadcast %864 : i32 to vector<64x64xi32>
    %873 = arith.cmpi slt, %263, %872 : vector<64x64xi32>
    %874 = arith.andi %871, %873 : vector<64x64xi1>
    %875 = arith.andi %869, %874 : vector<64x64xi1>
    %876 = arith.extui %875 : vector<64x64xi1> to vector<64x64xi8>
    %c13 = arith.constant 13 : index
    %c0_273 = arith.constant 0 : index
    %c0_274 = arith.constant 0 : index
    %877 = vector.load %arg1[%c13, %c0_273, %c0_274] : memref<26x64x64xi8, #tpu.memory_space<vmem>>, vector<1x64x64xi8>
    %878 = vector.shape_cast %877 : vector<1x64x64xi8> to vector<64x64xi8>
    %879 = vector.shape_cast %876 : vector<64x64xi8> to vector<1x64x64xi8>
    tpu.vector_store %arg1[%c13, %c0_273, %c0_274], %879 {strides = array<i32>} : memref<26x64x64xi8, #tpu.memory_space<vmem>>, vector<1x64x64xi8>,
    %c0_i32_275 = arith.constant 0 : i32
    %880 = vector.broadcast %c0_i32_275 : i32 to vector<1x32xi32>
    %881 = arith.cmpi sgt, %261, %880 : vector<1x32xi32>
    %c14_i32 = arith.constant 14 : i32
    %882 = vector.broadcast %c14_i32 : i32 to vector<1x32xi32>
    %883 = arith.cmpi eq, %258, %882 : vector<1x32xi32>
    %884 = arith.andi %881, %883 : vector<1x32xi1>
    %c9218_i32_276 = arith.constant 9218 : i32
    %885 = vector.broadcast %c9218_i32_276 : i32 to vector<1x32xi32>
    %886 = arith.select %884, %191#3, %885 : vector<1x32xi1>, vector<1x32xi32>
    %887 = vector.shape_cast %886 : vector<1x32xi32> to vector<1x1x32xi32>
    %cst_277 = arith.constant dense<2147483647> : vector<1xi32>
    %888 = vector.multi_reduction <minsi>, %887, %cst_277 [1, 2] : vector<1x1x32xi32> to vector<1xi32>
    %889 = vector.shape_cast %888 : vector<1xi32> to vector<1x1x1xi32>
    %890 = vector.extract %889[0, 0, 0] : i32 from vector<1x1x1xi32>
    %c9218_i32_278 = arith.constant 9218 : i32
    %891 = vector.broadcast %c9218_i32_278 : i32 to vector<1x32xi32>
    %892 = arith.select %884, %191#4, %891 : vector<1x32xi1>, vector<1x32xi32>
    %893 = vector.shape_cast %892 : vector<1x32xi32> to vector<1x1x32xi32>
    %cst_279 = arith.constant dense<2147483647> : vector<1xi32>
    %894 = vector.multi_reduction <minsi>, %893, %cst_279 [1, 2] : vector<1x1x32xi32> to vector<1xi32>
    %895 = vector.shape_cast %894 : vector<1xi32> to vector<1x1x1xi32>
    %896 = vector.extract %895[0, 0, 0] : i32 from vector<1x1x1xi32>
    %c0_i32_280 = arith.constant 0 : i32
    %897 = vector.broadcast %c0_i32_280 : i32 to vector<1x32xi32>
    %898 = arith.select %884, %191#5, %897 : vector<1x32xi1>, vector<1x32xi32>
    %899 = vector.shape_cast %898 : vector<1x32xi32> to vector<1x1x32xi32>
    %cst_281 = arith.constant dense<-2147483648> : vector<1xi32>
    %900 = vector.multi_reduction <maxsi>, %899, %cst_281 [1, 2] : vector<1x1x32xi32> to vector<1xi32>
    %901 = vector.shape_cast %900 : vector<1xi32> to vector<1x1x1xi32>
    %902 = vector.extract %901[0, 0, 0] : i32 from vector<1x1x1xi32>
    %c0_i32_282 = arith.constant 0 : i32
    %903 = vector.broadcast %c0_i32_282 : i32 to vector<1x32xi32>
    %904 = arith.select %884, %191#6, %903 : vector<1x32xi1>, vector<1x32xi32>
    %905 = vector.shape_cast %904 : vector<1x32xi32> to vector<1x1x32xi32>
    %cst_283 = arith.constant dense<-2147483648> : vector<1xi32>
    %906 = vector.multi_reduction <maxsi>, %905, %cst_283 [1, 2] : vector<1x1x32xi32> to vector<1xi32>
    %907 = vector.shape_cast %906 : vector<1xi32> to vector<1x1x1xi32>
    %908 = vector.extract %907[0, 0, 0] : i32 from vector<1x1x1xi32>
    %909 = vector.broadcast %890 : i32 to vector<64x64xi32>
    %910 = arith.cmpi sge, %262, %909 : vector<64x64xi32>
    %911 = vector.broadcast %902 : i32 to vector<64x64xi32>
    %912 = arith.cmpi slt, %262, %911 : vector<64x64xi32>
    %913 = arith.andi %910, %912 : vector<64x64xi1>
    %914 = vector.broadcast %896 : i32 to vector<64x64xi32>
    %915 = arith.cmpi sge, %263, %914 : vector<64x64xi32>
    %916 = vector.broadcast %908 : i32 to vector<64x64xi32>
    %917 = arith.cmpi slt, %263, %916 : vector<64x64xi32>
    %918 = arith.andi %915, %917 : vector<64x64xi1>
    %919 = arith.andi %913, %918 : vector<64x64xi1>
    %920 = arith.extui %919 : vector<64x64xi1> to vector<64x64xi8>
    %c14 = arith.constant 14 : index
    %c0_284 = arith.constant 0 : index
    %c0_285 = arith.constant 0 : index
    %921 = vector.load %arg1[%c14, %c0_284, %c0_285] : memref<26x64x64xi8, #tpu.memory_space<vmem>>, vector<1x64x64xi8>
    %922 = vector.shape_cast %921 : vector<1x64x64xi8> to vector<64x64xi8>
    %923 = vector.shape_cast %920 : vector<64x64xi8> to vector<1x64x64xi8>
    tpu.vector_store %arg1[%c14, %c0_284, %c0_285], %923 {strides = array<i32>} : memref<26x64x64xi8, #tpu.memory_space<vmem>>, vector<1x64x64xi8>,
    %c0_i32_286 = arith.constant 0 : i32
    %924 = vector.broadcast %c0_i32_286 : i32 to vector<1x32xi32>
    %925 = arith.cmpi sgt, %261, %924 : vector<1x32xi32>
    %c15_i32 = arith.constant 15 : i32
    %926 = vector.broadcast %c15_i32 : i32 to vector<1x32xi32>
    %927 = arith.cmpi eq, %258, %926 : vector<1x32xi32>
    %928 = arith.andi %925, %927 : vector<1x32xi1>
    %c9218_i32_287 = arith.constant 9218 : i32
    %929 = vector.broadcast %c9218_i32_287 : i32 to vector<1x32xi32>
    %930 = arith.select %928, %191#3, %929 : vector<1x32xi1>, vector<1x32xi32>
    %931 = vector.shape_cast %930 : vector<1x32xi32> to vector<1x1x32xi32>
    %cst_288 = arith.constant dense<2147483647> : vector<1xi32>
    %932 = vector.multi_reduction <minsi>, %931, %cst_288 [1, 2] : vector<1x1x32xi32> to vector<1xi32>
    %933 = vector.shape_cast %932 : vector<1xi32> to vector<1x1x1xi32>
    %934 = vector.extract %933[0, 0, 0] : i32 from vector<1x1x1xi32>
    %c9218_i32_289 = arith.constant 9218 : i32
    %935 = vector.broadcast %c9218_i32_289 : i32 to vector<1x32xi32>
    %936 = arith.select %928, %191#4, %935 : vector<1x32xi1>, vector<1x32xi32>
    %937 = vector.shape_cast %936 : vector<1x32xi32> to vector<1x1x32xi32>
    %cst_290 = arith.constant dense<2147483647> : vector<1xi32>
    %938 = vector.multi_reduction <minsi>, %937, %cst_290 [1, 2] : vector<1x1x32xi32> to vector<1xi32>
    %939 = vector.shape_cast %938 : vector<1xi32> to vector<1x1x1xi32>
    %940 = vector.extract %939[0, 0, 0] : i32 from vector<1x1x1xi32>
    %c0_i32_291 = arith.constant 0 : i32
    %941 = vector.broadcast %c0_i32_291 : i32 to vector<1x32xi32>
    %942 = arith.select %928, %191#5, %941 : vector<1x32xi1>, vector<1x32xi32>
    %943 = vector.shape_cast %942 : vector<1x32xi32> to vector<1x1x32xi32>
    %cst_292 = arith.constant dense<-2147483648> : vector<1xi32>
    %944 = vector.multi_reduction <maxsi>, %943, %cst_292 [1, 2] : vector<1x1x32xi32> to vector<1xi32>
    %945 = vector.shape_cast %944 : vector<1xi32> to vector<1x1x1xi32>
    %946 = vector.extract %945[0, 0, 0] : i32 from vector<1x1x1xi32>
    %c0_i32_293 = arith.constant 0 : i32
    %947 = vector.broadcast %c0_i32_293 : i32 to vector<1x32xi32>
    %948 = arith.select %928, %191#6, %947 : vector<1x32xi1>, vector<1x32xi32>
    %949 = vector.shape_cast %948 : vector<1x32xi32> to vector<1x1x32xi32>
    %cst_294 = arith.constant dense<-2147483648> : vector<1xi32>
    %950 = vector.multi_reduction <maxsi>, %949, %cst_294 [1, 2] : vector<1x1x32xi32> to vector<1xi32>
    %951 = vector.shape_cast %950 : vector<1xi32> to vector<1x1x1xi32>
    %952 = vector.extract %951[0, 0, 0] : i32 from vector<1x1x1xi32>
    %953 = vector.broadcast %934 : i32 to vector<64x64xi32>
    %954 = arith.cmpi sge, %262, %953 : vector<64x64xi32>
    %955 = vector.broadcast %946 : i32 to vector<64x64xi32>
    %956 = arith.cmpi slt, %262, %955 : vector<64x64xi32>
    %957 = arith.andi %954, %956 : vector<64x64xi1>
    %958 = vector.broadcast %940 : i32 to vector<64x64xi32>
    %959 = arith.cmpi sge, %263, %958 : vector<64x64xi32>
    %960 = vector.broadcast %952 : i32 to vector<64x64xi32>
    %961 = arith.cmpi slt, %263, %960 : vector<64x64xi32>
    %962 = arith.andi %959, %961 : vector<64x64xi1>
    %963 = arith.andi %957, %962 : vector<64x64xi1>
    %964 = arith.extui %963 : vector<64x64xi1> to vector<64x64xi8>
    %c15 = arith.constant 15 : index
    %c0_295 = arith.constant 0 : index
    %c0_296 = arith.constant 0 : index
    %965 = vector.load %arg1[%c15, %c0_295, %c0_296] : memref<26x64x64xi8, #tpu.memory_space<vmem>>, vector<1x64x64xi8>
    %966 = vector.shape_cast %965 : vector<1x64x64xi8> to vector<64x64xi8>
    %967 = vector.shape_cast %964 : vector<64x64xi8> to vector<1x64x64xi8>
    tpu.vector_store %arg1[%c15, %c0_295, %c0_296], %967 {strides = array<i32>} : memref<26x64x64xi8, #tpu.memory_space<vmem>>, vector<1x64x64xi8>,
    %c0_i32_297 = arith.constant 0 : i32
    %968 = vector.broadcast %c0_i32_297 : i32 to vector<1x32xi32>
    %969 = arith.cmpi sgt, %261, %968 : vector<1x32xi32>
    %c16_i32_298 = arith.constant 16 : i32
    %970 = vector.broadcast %c16_i32_298 : i32 to vector<1x32xi32>
    %971 = arith.cmpi eq, %258, %970 : vector<1x32xi32>
    %972 = arith.andi %969, %971 : vector<1x32xi1>
    %c9218_i32_299 = arith.constant 9218 : i32
    %973 = vector.broadcast %c9218_i32_299 : i32 to vector<1x32xi32>
    %974 = arith.select %972, %191#3, %973 : vector<1x32xi1>, vector<1x32xi32>
    %975 = vector.shape_cast %974 : vector<1x32xi32> to vector<1x1x32xi32>
    %cst_300 = arith.constant dense<2147483647> : vector<1xi32>
    %976 = vector.multi_reduction <minsi>, %975, %cst_300 [1, 2] : vector<1x1x32xi32> to vector<1xi32>
    %977 = vector.shape_cast %976 : vector<1xi32> to vector<1x1x1xi32>
    %978 = vector.extract %977[0, 0, 0] : i32 from vector<1x1x1xi32>
    %c9218_i32_301 = arith.constant 9218 : i32
    %979 = vector.broadcast %c9218_i32_301 : i32 to vector<1x32xi32>
    %980 = arith.select %972, %191#4, %979 : vector<1x32xi1>, vector<1x32xi32>
    %981 = vector.shape_cast %980 : vector<1x32xi32> to vector<1x1x32xi32>
    %cst_302 = arith.constant dense<2147483647> : vector<1xi32>
    %982 = vector.multi_reduction <minsi>, %981, %cst_302 [1, 2] : vector<1x1x32xi32> to vector<1xi32>
    %983 = vector.shape_cast %982 : vector<1xi32> to vector<1x1x1xi32>
    %984 = vector.extract %983[0, 0, 0] : i32 from vector<1x1x1xi32>
    %c0_i32_303 = arith.constant 0 : i32
    %985 = vector.broadcast %c0_i32_303 : i32 to vector<1x32xi32>
    %986 = arith.select %972, %191#5, %985 : vector<1x32xi1>, vector<1x32xi32>
    %987 = vector.shape_cast %986 : vector<1x32xi32> to vector<1x1x32xi32>
    %cst_304 = arith.constant dense<-2147483648> : vector<1xi32>
    %988 = vector.multi_reduction <maxsi>, %987, %cst_304 [1, 2] : vector<1x1x32xi32> to vector<1xi32>
    %989 = vector.shape_cast %988 : vector<1xi32> to vector<1x1x1xi32>
    %990 = vector.extract %989[0, 0, 0] : i32 from vector<1x1x1xi32>
    %c0_i32_305 = arith.constant 0 : i32
    %991 = vector.broadcast %c0_i32_305 : i32 to vector<1x32xi32>
    %992 = arith.select %972, %191#6, %991 : vector<1x32xi1>, vector<1x32xi32>
    %993 = vector.shape_cast %992 : vector<1x32xi32> to vector<1x1x32xi32>
    %cst_306 = arith.constant dense<-2147483648> : vector<1xi32>
    %994 = vector.multi_reduction <maxsi>, %993, %cst_306 [1, 2] : vector<1x1x32xi32> to vector<1xi32>
    %995 = vector.shape_cast %994 : vector<1xi32> to vector<1x1x1xi32>
    %996 = vector.extract %995[0, 0, 0] : i32 from vector<1x1x1xi32>
    %997 = vector.broadcast %978 : i32 to vector<64x64xi32>
    %998 = arith.cmpi sge, %262, %997 : vector<64x64xi32>
    %999 = vector.broadcast %990 : i32 to vector<64x64xi32>
    %1000 = arith.cmpi slt, %262, %999 : vector<64x64xi32>
    %1001 = arith.andi %998, %1000 : vector<64x64xi1>
    %1002 = vector.broadcast %984 : i32 to vector<64x64xi32>
    %1003 = arith.cmpi sge, %263, %1002 : vector<64x64xi32>
    %1004 = vector.broadcast %996 : i32 to vector<64x64xi32>
    %1005 = arith.cmpi slt, %263, %1004 : vector<64x64xi32>
    %1006 = arith.andi %1003, %1005 : vector<64x64xi1>
    %1007 = arith.andi %1001, %1006 : vector<64x64xi1>
    %1008 = arith.extui %1007 : vector<64x64xi1> to vector<64x64xi8>
    %c16 = arith.constant 16 : index
    %c0_307 = arith.constant 0 : index
    %c0_308 = arith.constant 0 : index
    %1009 = vector.load %arg1[%c16, %c0_307, %c0_308] : memref<26x64x64xi8, #tpu.memory_space<vmem>>, vector<1x64x64xi8>
    %1010 = vector.shape_cast %1009 : vector<1x64x64xi8> to vector<64x64xi8>
    %1011 = vector.shape_cast %1008 : vector<64x64xi8> to vector<1x64x64xi8>
    tpu.vector_store %arg1[%c16, %c0_307, %c0_308], %1011 {strides = array<i32>} : memref<26x64x64xi8, #tpu.memory_space<vmem>>, vector<1x64x64xi8>,
    %c0_i32_309 = arith.constant 0 : i32
    %1012 = vector.broadcast %c0_i32_309 : i32 to vector<1x32xi32>
    %1013 = arith.cmpi sgt, %261, %1012 : vector<1x32xi32>
    %c17_i32 = arith.constant 17 : i32
    %1014 = vector.broadcast %c17_i32 : i32 to vector<1x32xi32>
    %1015 = arith.cmpi eq, %258, %1014 : vector<1x32xi32>
    %1016 = arith.andi %1013, %1015 : vector<1x32xi1>
    %c9218_i32_310 = arith.constant 9218 : i32
    %1017 = vector.broadcast %c9218_i32_310 : i32 to vector<1x32xi32>
    %1018 = arith.select %1016, %191#3, %1017 : vector<1x32xi1>, vector<1x32xi32>
    %1019 = vector.shape_cast %1018 : vector<1x32xi32> to vector<1x1x32xi32>
    %cst_311 = arith.constant dense<2147483647> : vector<1xi32>
    %1020 = vector.multi_reduction <minsi>, %1019, %cst_311 [1, 2] : vector<1x1x32xi32> to vector<1xi32>
    %1021 = vector.shape_cast %1020 : vector<1xi32> to vector<1x1x1xi32>
    %1022 = vector.extract %1021[0, 0, 0] : i32 from vector<1x1x1xi32>
    %c9218_i32_312 = arith.constant 9218 : i32
    %1023 = vector.broadcast %c9218_i32_312 : i32 to vector<1x32xi32>
    %1024 = arith.select %1016, %191#4, %1023 : vector<1x32xi1>, vector<1x32xi32>
    %1025 = vector.shape_cast %1024 : vector<1x32xi32> to vector<1x1x32xi32>
    %cst_313 = arith.constant dense<2147483647> : vector<1xi32>
    %1026 = vector.multi_reduction <minsi>, %1025, %cst_313 [1, 2] : vector<1x1x32xi32> to vector<1xi32>
    %1027 = vector.shape_cast %1026 : vector<1xi32> to vector<1x1x1xi32>
    %1028 = vector.extract %1027[0, 0, 0] : i32 from vector<1x1x1xi32>
    %c0_i32_314 = arith.constant 0 : i32
    %1029 = vector.broadcast %c0_i32_314 : i32 to vector<1x32xi32>
    %1030 = arith.select %1016, %191#5, %1029 : vector<1x32xi1>, vector<1x32xi32>
    %1031 = vector.shape_cast %1030 : vector<1x32xi32> to vector<1x1x32xi32>
    %cst_315 = arith.constant dense<-2147483648> : vector<1xi32>
    %1032 = vector.multi_reduction <maxsi>, %1031, %cst_315 [1, 2] : vector<1x1x32xi32> to vector<1xi32>
    %1033 = vector.shape_cast %1032 : vector<1xi32> to vector<1x1x1xi32>
    %1034 = vector.extract %1033[0, 0, 0] : i32 from vector<1x1x1xi32>
    %c0_i32_316 = arith.constant 0 : i32
    %1035 = vector.broadcast %c0_i32_316 : i32 to vector<1x32xi32>
    %1036 = arith.select %1016, %191#6, %1035 : vector<1x32xi1>, vector<1x32xi32>
    %1037 = vector.shape_cast %1036 : vector<1x32xi32> to vector<1x1x32xi32>
    %cst_317 = arith.constant dense<-2147483648> : vector<1xi32>
    %1038 = vector.multi_reduction <maxsi>, %1037, %cst_317 [1, 2] : vector<1x1x32xi32> to vector<1xi32>
    %1039 = vector.shape_cast %1038 : vector<1xi32> to vector<1x1x1xi32>
    %1040 = vector.extract %1039[0, 0, 0] : i32 from vector<1x1x1xi32>
    %1041 = vector.broadcast %1022 : i32 to vector<64x64xi32>
    %1042 = arith.cmpi sge, %262, %1041 : vector<64x64xi32>
    %1043 = vector.broadcast %1034 : i32 to vector<64x64xi32>
    %1044 = arith.cmpi slt, %262, %1043 : vector<64x64xi32>
    %1045 = arith.andi %1042, %1044 : vector<64x64xi1>
    %1046 = vector.broadcast %1028 : i32 to vector<64x64xi32>
    %1047 = arith.cmpi sge, %263, %1046 : vector<64x64xi32>
    %1048 = vector.broadcast %1040 : i32 to vector<64x64xi32>
    %1049 = arith.cmpi slt, %263, %1048 : vector<64x64xi32>
    %1050 = arith.andi %1047, %1049 : vector<64x64xi1>
    %1051 = arith.andi %1045, %1050 : vector<64x64xi1>
    %1052 = arith.extui %1051 : vector<64x64xi1> to vector<64x64xi8>
    %c17 = arith.constant 17 : index
    %c0_318 = arith.constant 0 : index
    %c0_319 = arith.constant 0 : index
    %1053 = vector.load %arg1[%c17, %c0_318, %c0_319] : memref<26x64x64xi8, #tpu.memory_space<vmem>>, vector<1x64x64xi8>
    %1054 = vector.shape_cast %1053 : vector<1x64x64xi8> to vector<64x64xi8>
    %1055 = vector.shape_cast %1052 : vector<64x64xi8> to vector<1x64x64xi8>
    tpu.vector_store %arg1[%c17, %c0_318, %c0_319], %1055 {strides = array<i32>} : memref<26x64x64xi8, #tpu.memory_space<vmem>>, vector<1x64x64xi8>,
    %c0_i32_320 = arith.constant 0 : i32
    %1056 = vector.broadcast %c0_i32_320 : i32 to vector<1x32xi32>
    %1057 = arith.cmpi sgt, %261, %1056 : vector<1x32xi32>
    %c18_i32 = arith.constant 18 : i32
    %1058 = vector.broadcast %c18_i32 : i32 to vector<1x32xi32>
    %1059 = arith.cmpi eq, %258, %1058 : vector<1x32xi32>
    %1060 = arith.andi %1057, %1059 : vector<1x32xi1>
    %c9218_i32_321 = arith.constant 9218 : i32
    %1061 = vector.broadcast %c9218_i32_321 : i32 to vector<1x32xi32>
    %1062 = arith.select %1060, %191#3, %1061 : vector<1x32xi1>, vector<1x32xi32>
    %1063 = vector.shape_cast %1062 : vector<1x32xi32> to vector<1x1x32xi32>
    %cst_322 = arith.constant dense<2147483647> : vector<1xi32>
    %1064 = vector.multi_reduction <minsi>, %1063, %cst_322 [1, 2] : vector<1x1x32xi32> to vector<1xi32>
    %1065 = vector.shape_cast %1064 : vector<1xi32> to vector<1x1x1xi32>
    %1066 = vector.extract %1065[0, 0, 0] : i32 from vector<1x1x1xi32>
    %c9218_i32_323 = arith.constant 9218 : i32
    %1067 = vector.broadcast %c9218_i32_323 : i32 to vector<1x32xi32>
    %1068 = arith.select %1060, %191#4, %1067 : vector<1x32xi1>, vector<1x32xi32>
    %1069 = vector.shape_cast %1068 : vector<1x32xi32> to vector<1x1x32xi32>
    %cst_324 = arith.constant dense<2147483647> : vector<1xi32>
    %1070 = vector.multi_reduction <minsi>, %1069, %cst_324 [1, 2] : vector<1x1x32xi32> to vector<1xi32>
    %1071 = vector.shape_cast %1070 : vector<1xi32> to vector<1x1x1xi32>
    %1072 = vector.extract %1071[0, 0, 0] : i32 from vector<1x1x1xi32>
    %c0_i32_325 = arith.constant 0 : i32
    %1073 = vector.broadcast %c0_i32_325 : i32 to vector<1x32xi32>
    %1074 = arith.select %1060, %191#5, %1073 : vector<1x32xi1>, vector<1x32xi32>
    %1075 = vector.shape_cast %1074 : vector<1x32xi32> to vector<1x1x32xi32>
    %cst_326 = arith.constant dense<-2147483648> : vector<1xi32>
    %1076 = vector.multi_reduction <maxsi>, %1075, %cst_326 [1, 2] : vector<1x1x32xi32> to vector<1xi32>
    %1077 = vector.shape_cast %1076 : vector<1xi32> to vector<1x1x1xi32>
    %1078 = vector.extract %1077[0, 0, 0] : i32 from vector<1x1x1xi32>
    %c0_i32_327 = arith.constant 0 : i32
    %1079 = vector.broadcast %c0_i32_327 : i32 to vector<1x32xi32>
    %1080 = arith.select %1060, %191#6, %1079 : vector<1x32xi1>, vector<1x32xi32>
    %1081 = vector.shape_cast %1080 : vector<1x32xi32> to vector<1x1x32xi32>
    %cst_328 = arith.constant dense<-2147483648> : vector<1xi32>
    %1082 = vector.multi_reduction <maxsi>, %1081, %cst_328 [1, 2] : vector<1x1x32xi32> to vector<1xi32>
    %1083 = vector.shape_cast %1082 : vector<1xi32> to vector<1x1x1xi32>
    %1084 = vector.extract %1083[0, 0, 0] : i32 from vector<1x1x1xi32>
    %1085 = vector.broadcast %1066 : i32 to vector<64x64xi32>
    %1086 = arith.cmpi sge, %262, %1085 : vector<64x64xi32>
    %1087 = vector.broadcast %1078 : i32 to vector<64x64xi32>
    %1088 = arith.cmpi slt, %262, %1087 : vector<64x64xi32>
    %1089 = arith.andi %1086, %1088 : vector<64x64xi1>
    %1090 = vector.broadcast %1072 : i32 to vector<64x64xi32>
    %1091 = arith.cmpi sge, %263, %1090 : vector<64x64xi32>
    %1092 = vector.broadcast %1084 : i32 to vector<64x64xi32>
    %1093 = arith.cmpi slt, %263, %1092 : vector<64x64xi32>
    %1094 = arith.andi %1091, %1093 : vector<64x64xi1>
    %1095 = arith.andi %1089, %1094 : vector<64x64xi1>
    %1096 = arith.extui %1095 : vector<64x64xi1> to vector<64x64xi8>
    %c18 = arith.constant 18 : index
    %c0_329 = arith.constant 0 : index
    %c0_330 = arith.constant 0 : index
    %1097 = vector.load %arg1[%c18, %c0_329, %c0_330] : memref<26x64x64xi8, #tpu.memory_space<vmem>>, vector<1x64x64xi8>
    %1098 = vector.shape_cast %1097 : vector<1x64x64xi8> to vector<64x64xi8>
    %1099 = vector.shape_cast %1096 : vector<64x64xi8> to vector<1x64x64xi8>
    tpu.vector_store %arg1[%c18, %c0_329, %c0_330], %1099 {strides = array<i32>} : memref<26x64x64xi8, #tpu.memory_space<vmem>>, vector<1x64x64xi8>,
    %c0_i32_331 = arith.constant 0 : i32
    %1100 = vector.broadcast %c0_i32_331 : i32 to vector<1x32xi32>
    %1101 = arith.cmpi sgt, %261, %1100 : vector<1x32xi32>
    %c19_i32 = arith.constant 19 : i32
    %1102 = vector.broadcast %c19_i32 : i32 to vector<1x32xi32>
    %1103 = arith.cmpi eq, %258, %1102 : vector<1x32xi32>
    %1104 = arith.andi %1101, %1103 : vector<1x32xi1>
    %c9218_i32_332 = arith.constant 9218 : i32
    %1105 = vector.broadcast %c9218_i32_332 : i32 to vector<1x32xi32>
    %1106 = arith.select %1104, %191#3, %1105 : vector<1x32xi1>, vector<1x32xi32>
    %1107 = vector.shape_cast %1106 : vector<1x32xi32> to vector<1x1x32xi32>
    %cst_333 = arith.constant dense<2147483647> : vector<1xi32>
    %1108 = vector.multi_reduction <minsi>, %1107, %cst_333 [1, 2] : vector<1x1x32xi32> to vector<1xi32>
    %1109 = vector.shape_cast %1108 : vector<1xi32> to vector<1x1x1xi32>
    %1110 = vector.extract %1109[0, 0, 0] : i32 from vector<1x1x1xi32>
    %c9218_i32_334 = arith.constant 9218 : i32
    %1111 = vector.broadcast %c9218_i32_334 : i32 to vector<1x32xi32>
    %1112 = arith.select %1104, %191#4, %1111 : vector<1x32xi1>, vector<1x32xi32>
    %1113 = vector.shape_cast %1112 : vector<1x32xi32> to vector<1x1x32xi32>
    %cst_335 = arith.constant dense<2147483647> : vector<1xi32>
    %1114 = vector.multi_reduction <minsi>, %1113, %cst_335 [1, 2] : vector<1x1x32xi32> to vector<1xi32>
    %1115 = vector.shape_cast %1114 : vector<1xi32> to vector<1x1x1xi32>
    %1116 = vector.extract %1115[0, 0, 0] : i32 from vector<1x1x1xi32>
    %c0_i32_336 = arith.constant 0 : i32
    %1117 = vector.broadcast %c0_i32_336 : i32 to vector<1x32xi32>
    %1118 = arith.select %1104, %191#5, %1117 : vector<1x32xi1>, vector<1x32xi32>
    %1119 = vector.shape_cast %1118 : vector<1x32xi32> to vector<1x1x32xi32>
    %cst_337 = arith.constant dense<-2147483648> : vector<1xi32>
    %1120 = vector.multi_reduction <maxsi>, %1119, %cst_337 [1, 2] : vector<1x1x32xi32> to vector<1xi32>
    %1121 = vector.shape_cast %1120 : vector<1xi32> to vector<1x1x1xi32>
    %1122 = vector.extract %1121[0, 0, 0] : i32 from vector<1x1x1xi32>
    %c0_i32_338 = arith.constant 0 : i32
    %1123 = vector.broadcast %c0_i32_338 : i32 to vector<1x32xi32>
    %1124 = arith.select %1104, %191#6, %1123 : vector<1x32xi1>, vector<1x32xi32>
    %1125 = vector.shape_cast %1124 : vector<1x32xi32> to vector<1x1x32xi32>
    %cst_339 = arith.constant dense<-2147483648> : vector<1xi32>
    %1126 = vector.multi_reduction <maxsi>, %1125, %cst_339 [1, 2] : vector<1x1x32xi32> to vector<1xi32>
    %1127 = vector.shape_cast %1126 : vector<1xi32> to vector<1x1x1xi32>
    %1128 = vector.extract %1127[0, 0, 0] : i32 from vector<1x1x1xi32>
    %1129 = vector.broadcast %1110 : i32 to vector<64x64xi32>
    %1130 = arith.cmpi sge, %262, %1129 : vector<64x64xi32>
    %1131 = vector.broadcast %1122 : i32 to vector<64x64xi32>
    %1132 = arith.cmpi slt, %262, %1131 : vector<64x64xi32>
    %1133 = arith.andi %1130, %1132 : vector<64x64xi1>
    %1134 = vector.broadcast %1116 : i32 to vector<64x64xi32>
    %1135 = arith.cmpi sge, %263, %1134 : vector<64x64xi32>
    %1136 = vector.broadcast %1128 : i32 to vector<64x64xi32>
    %1137 = arith.cmpi slt, %263, %1136 : vector<64x64xi32>
    %1138 = arith.andi %1135, %1137 : vector<64x64xi1>
    %1139 = arith.andi %1133, %1138 : vector<64x64xi1>
    %1140 = arith.extui %1139 : vector<64x64xi1> to vector<64x64xi8>
    %c19 = arith.constant 19 : index
    %c0_340 = arith.constant 0 : index
    %c0_341 = arith.constant 0 : index
    %1141 = vector.load %arg1[%c19, %c0_340, %c0_341] : memref<26x64x64xi8, #tpu.memory_space<vmem>>, vector<1x64x64xi8>
    %1142 = vector.shape_cast %1141 : vector<1x64x64xi8> to vector<64x64xi8>
    %1143 = vector.shape_cast %1140 : vector<64x64xi8> to vector<1x64x64xi8>
    tpu.vector_store %arg1[%c19, %c0_340, %c0_341], %1143 {strides = array<i32>} : memref<26x64x64xi8, #tpu.memory_space<vmem>>, vector<1x64x64xi8>,
    %c0_i32_342 = arith.constant 0 : i32
    %1144 = vector.broadcast %c0_i32_342 : i32 to vector<1x32xi32>
    %1145 = arith.cmpi sgt, %261, %1144 : vector<1x32xi32>
    %c20_i32 = arith.constant 20 : i32
    %1146 = vector.broadcast %c20_i32 : i32 to vector<1x32xi32>
    %1147 = arith.cmpi eq, %258, %1146 : vector<1x32xi32>
    %1148 = arith.andi %1145, %1147 : vector<1x32xi1>
    %c9218_i32_343 = arith.constant 9218 : i32
    %1149 = vector.broadcast %c9218_i32_343 : i32 to vector<1x32xi32>
    %1150 = arith.select %1148, %191#3, %1149 : vector<1x32xi1>, vector<1x32xi32>
    %1151 = vector.shape_cast %1150 : vector<1x32xi32> to vector<1x1x32xi32>
    %cst_344 = arith.constant dense<2147483647> : vector<1xi32>
    %1152 = vector.multi_reduction <minsi>, %1151, %cst_344 [1, 2] : vector<1x1x32xi32> to vector<1xi32>
    %1153 = vector.shape_cast %1152 : vector<1xi32> to vector<1x1x1xi32>
    %1154 = vector.extract %1153[0, 0, 0] : i32 from vector<1x1x1xi32>
    %c9218_i32_345 = arith.constant 9218 : i32
    %1155 = vector.broadcast %c9218_i32_345 : i32 to vector<1x32xi32>
    %1156 = arith.select %1148, %191#4, %1155 : vector<1x32xi1>, vector<1x32xi32>
    %1157 = vector.shape_cast %1156 : vector<1x32xi32> to vector<1x1x32xi32>
    %cst_346 = arith.constant dense<2147483647> : vector<1xi32>
    %1158 = vector.multi_reduction <minsi>, %1157, %cst_346 [1, 2] : vector<1x1x32xi32> to vector<1xi32>
    %1159 = vector.shape_cast %1158 : vector<1xi32> to vector<1x1x1xi32>
    %1160 = vector.extract %1159[0, 0, 0] : i32 from vector<1x1x1xi32>
    %c0_i32_347 = arith.constant 0 : i32
    %1161 = vector.broadcast %c0_i32_347 : i32 to vector<1x32xi32>
    %1162 = arith.select %1148, %191#5, %1161 : vector<1x32xi1>, vector<1x32xi32>
    %1163 = vector.shape_cast %1162 : vector<1x32xi32> to vector<1x1x32xi32>
    %cst_348 = arith.constant dense<-2147483648> : vector<1xi32>
    %1164 = vector.multi_reduction <maxsi>, %1163, %cst_348 [1, 2] : vector<1x1x32xi32> to vector<1xi32>
    %1165 = vector.shape_cast %1164 : vector<1xi32> to vector<1x1x1xi32>
    %1166 = vector.extract %1165[0, 0, 0] : i32 from vector<1x1x1xi32>
    %c0_i32_349 = arith.constant 0 : i32
    %1167 = vector.broadcast %c0_i32_349 : i32 to vector<1x32xi32>
    %1168 = arith.select %1148, %191#6, %1167 : vector<1x32xi1>, vector<1x32xi32>
    %1169 = vector.shape_cast %1168 : vector<1x32xi32> to vector<1x1x32xi32>
    %cst_350 = arith.constant dense<-2147483648> : vector<1xi32>
    %1170 = vector.multi_reduction <maxsi>, %1169, %cst_350 [1, 2] : vector<1x1x32xi32> to vector<1xi32>
    %1171 = vector.shape_cast %1170 : vector<1xi32> to vector<1x1x1xi32>
    %1172 = vector.extract %1171[0, 0, 0] : i32 from vector<1x1x1xi32>
    %1173 = vector.broadcast %1154 : i32 to vector<64x64xi32>
    %1174 = arith.cmpi sge, %262, %1173 : vector<64x64xi32>
    %1175 = vector.broadcast %1166 : i32 to vector<64x64xi32>
    %1176 = arith.cmpi slt, %262, %1175 : vector<64x64xi32>
    %1177 = arith.andi %1174, %1176 : vector<64x64xi1>
    %1178 = vector.broadcast %1160 : i32 to vector<64x64xi32>
    %1179 = arith.cmpi sge, %263, %1178 : vector<64x64xi32>
    %1180 = vector.broadcast %1172 : i32 to vector<64x64xi32>
    %1181 = arith.cmpi slt, %263, %1180 : vector<64x64xi32>
    %1182 = arith.andi %1179, %1181 : vector<64x64xi1>
    %1183 = arith.andi %1177, %1182 : vector<64x64xi1>
    %1184 = arith.extui %1183 : vector<64x64xi1> to vector<64x64xi8>
    %c20 = arith.constant 20 : index
    %c0_351 = arith.constant 0 : index
    %c0_352 = arith.constant 0 : index
    %1185 = vector.load %arg1[%c20, %c0_351, %c0_352] : memref<26x64x64xi8, #tpu.memory_space<vmem>>, vector<1x64x64xi8>
    %1186 = vector.shape_cast %1185 : vector<1x64x64xi8> to vector<64x64xi8>
    %1187 = vector.shape_cast %1184 : vector<64x64xi8> to vector<1x64x64xi8>
    tpu.vector_store %arg1[%c20, %c0_351, %c0_352], %1187 {strides = array<i32>} : memref<26x64x64xi8, #tpu.memory_space<vmem>>, vector<1x64x64xi8>,
    %c0_i32_353 = arith.constant 0 : i32
    %1188 = vector.broadcast %c0_i32_353 : i32 to vector<1x32xi32>
    %1189 = arith.cmpi sgt, %261, %1188 : vector<1x32xi32>
    %c21_i32 = arith.constant 21 : i32
    %1190 = vector.broadcast %c21_i32 : i32 to vector<1x32xi32>
    %1191 = arith.cmpi eq, %258, %1190 : vector<1x32xi32>
    %1192 = arith.andi %1189, %1191 : vector<1x32xi1>
    %c9218_i32_354 = arith.constant 9218 : i32
    %1193 = vector.broadcast %c9218_i32_354 : i32 to vector<1x32xi32>
    %1194 = arith.select %1192, %191#3, %1193 : vector<1x32xi1>, vector<1x32xi32>
    %1195 = vector.shape_cast %1194 : vector<1x32xi32> to vector<1x1x32xi32>
    %cst_355 = arith.constant dense<2147483647> : vector<1xi32>
    %1196 = vector.multi_reduction <minsi>, %1195, %cst_355 [1, 2] : vector<1x1x32xi32> to vector<1xi32>
    %1197 = vector.shape_cast %1196 : vector<1xi32> to vector<1x1x1xi32>
    %1198 = vector.extract %1197[0, 0, 0] : i32 from vector<1x1x1xi32>
    %c9218_i32_356 = arith.constant 9218 : i32
    %1199 = vector.broadcast %c9218_i32_356 : i32 to vector<1x32xi32>
    %1200 = arith.select %1192, %191#4, %1199 : vector<1x32xi1>, vector<1x32xi32>
    %1201 = vector.shape_cast %1200 : vector<1x32xi32> to vector<1x1x32xi32>
    %cst_357 = arith.constant dense<2147483647> : vector<1xi32>
    %1202 = vector.multi_reduction <minsi>, %1201, %cst_357 [1, 2] : vector<1x1x32xi32> to vector<1xi32>
    %1203 = vector.shape_cast %1202 : vector<1xi32> to vector<1x1x1xi32>
    %1204 = vector.extract %1203[0, 0, 0] : i32 from vector<1x1x1xi32>
    %c0_i32_358 = arith.constant 0 : i32
    %1205 = vector.broadcast %c0_i32_358 : i32 to vector<1x32xi32>
    %1206 = arith.select %1192, %191#5, %1205 : vector<1x32xi1>, vector<1x32xi32>
    %1207 = vector.shape_cast %1206 : vector<1x32xi32> to vector<1x1x32xi32>
    %cst_359 = arith.constant dense<-2147483648> : vector<1xi32>
    %1208 = vector.multi_reduction <maxsi>, %1207, %cst_359 [1, 2] : vector<1x1x32xi32> to vector<1xi32>
    %1209 = vector.shape_cast %1208 : vector<1xi32> to vector<1x1x1xi32>
    %1210 = vector.extract %1209[0, 0, 0] : i32 from vector<1x1x1xi32>
    %c0_i32_360 = arith.constant 0 : i32
    %1211 = vector.broadcast %c0_i32_360 : i32 to vector<1x32xi32>
    %1212 = arith.select %1192, %191#6, %1211 : vector<1x32xi1>, vector<1x32xi32>
    %1213 = vector.shape_cast %1212 : vector<1x32xi32> to vector<1x1x32xi32>
    %cst_361 = arith.constant dense<-2147483648> : vector<1xi32>
    %1214 = vector.multi_reduction <maxsi>, %1213, %cst_361 [1, 2] : vector<1x1x32xi32> to vector<1xi32>
    %1215 = vector.shape_cast %1214 : vector<1xi32> to vector<1x1x1xi32>
    %1216 = vector.extract %1215[0, 0, 0] : i32 from vector<1x1x1xi32>
    %1217 = vector.broadcast %1198 : i32 to vector<64x64xi32>
    %1218 = arith.cmpi sge, %262, %1217 : vector<64x64xi32>
    %1219 = vector.broadcast %1210 : i32 to vector<64x64xi32>
    %1220 = arith.cmpi slt, %262, %1219 : vector<64x64xi32>
    %1221 = arith.andi %1218, %1220 : vector<64x64xi1>
    %1222 = vector.broadcast %1204 : i32 to vector<64x64xi32>
    %1223 = arith.cmpi sge, %263, %1222 : vector<64x64xi32>
    %1224 = vector.broadcast %1216 : i32 to vector<64x64xi32>
    %1225 = arith.cmpi slt, %263, %1224 : vector<64x64xi32>
    %1226 = arith.andi %1223, %1225 : vector<64x64xi1>
    %1227 = arith.andi %1221, %1226 : vector<64x64xi1>
    %1228 = arith.extui %1227 : vector<64x64xi1> to vector<64x64xi8>
    %c21 = arith.constant 21 : index
    %c0_362 = arith.constant 0 : index
    %c0_363 = arith.constant 0 : index
    %1229 = vector.load %arg1[%c21, %c0_362, %c0_363] : memref<26x64x64xi8, #tpu.memory_space<vmem>>, vector<1x64x64xi8>
    %1230 = vector.shape_cast %1229 : vector<1x64x64xi8> to vector<64x64xi8>
    %1231 = vector.shape_cast %1228 : vector<64x64xi8> to vector<1x64x64xi8>
    tpu.vector_store %arg1[%c21, %c0_362, %c0_363], %1231 {strides = array<i32>} : memref<26x64x64xi8, #tpu.memory_space<vmem>>, vector<1x64x64xi8>,
    %c0_i32_364 = arith.constant 0 : i32
    %1232 = vector.broadcast %c0_i32_364 : i32 to vector<1x32xi32>
    %1233 = arith.cmpi sgt, %261, %1232 : vector<1x32xi32>
    %c22_i32 = arith.constant 22 : i32
    %1234 = vector.broadcast %c22_i32 : i32 to vector<1x32xi32>
    %1235 = arith.cmpi eq, %258, %1234 : vector<1x32xi32>
    %1236 = arith.andi %1233, %1235 : vector<1x32xi1>
    %c9218_i32_365 = arith.constant 9218 : i32
    %1237 = vector.broadcast %c9218_i32_365 : i32 to vector<1x32xi32>
    %1238 = arith.select %1236, %191#3, %1237 : vector<1x32xi1>, vector<1x32xi32>
    %1239 = vector.shape_cast %1238 : vector<1x32xi32> to vector<1x1x32xi32>
    %cst_366 = arith.constant dense<2147483647> : vector<1xi32>
    %1240 = vector.multi_reduction <minsi>, %1239, %cst_366 [1, 2] : vector<1x1x32xi32> to vector<1xi32>
    %1241 = vector.shape_cast %1240 : vector<1xi32> to vector<1x1x1xi32>
    %1242 = vector.extract %1241[0, 0, 0] : i32 from vector<1x1x1xi32>
    %c9218_i32_367 = arith.constant 9218 : i32
    %1243 = vector.broadcast %c9218_i32_367 : i32 to vector<1x32xi32>
    %1244 = arith.select %1236, %191#4, %1243 : vector<1x32xi1>, vector<1x32xi32>
    %1245 = vector.shape_cast %1244 : vector<1x32xi32> to vector<1x1x32xi32>
    %cst_368 = arith.constant dense<2147483647> : vector<1xi32>
    %1246 = vector.multi_reduction <minsi>, %1245, %cst_368 [1, 2] : vector<1x1x32xi32> to vector<1xi32>
    %1247 = vector.shape_cast %1246 : vector<1xi32> to vector<1x1x1xi32>
    %1248 = vector.extract %1247[0, 0, 0] : i32 from vector<1x1x1xi32>
    %c0_i32_369 = arith.constant 0 : i32
    %1249 = vector.broadcast %c0_i32_369 : i32 to vector<1x32xi32>
    %1250 = arith.select %1236, %191#5, %1249 : vector<1x32xi1>, vector<1x32xi32>
    %1251 = vector.shape_cast %1250 : vector<1x32xi32> to vector<1x1x32xi32>
    %cst_370 = arith.constant dense<-2147483648> : vector<1xi32>
    %1252 = vector.multi_reduction <maxsi>, %1251, %cst_370 [1, 2] : vector<1x1x32xi32> to vector<1xi32>
    %1253 = vector.shape_cast %1252 : vector<1xi32> to vector<1x1x1xi32>
    %1254 = vector.extract %1253[0, 0, 0] : i32 from vector<1x1x1xi32>
    %c0_i32_371 = arith.constant 0 : i32
    %1255 = vector.broadcast %c0_i32_371 : i32 to vector<1x32xi32>
    %1256 = arith.select %1236, %191#6, %1255 : vector<1x32xi1>, vector<1x32xi32>
    %1257 = vector.shape_cast %1256 : vector<1x32xi32> to vector<1x1x32xi32>
    %cst_372 = arith.constant dense<-2147483648> : vector<1xi32>
    %1258 = vector.multi_reduction <maxsi>, %1257, %cst_372 [1, 2] : vector<1x1x32xi32> to vector<1xi32>
    %1259 = vector.shape_cast %1258 : vector<1xi32> to vector<1x1x1xi32>
    %1260 = vector.extract %1259[0, 0, 0] : i32 from vector<1x1x1xi32>
    %1261 = vector.broadcast %1242 : i32 to vector<64x64xi32>
    %1262 = arith.cmpi sge, %262, %1261 : vector<64x64xi32>
    %1263 = vector.broadcast %1254 : i32 to vector<64x64xi32>
    %1264 = arith.cmpi slt, %262, %1263 : vector<64x64xi32>
    %1265 = arith.andi %1262, %1264 : vector<64x64xi1>
    %1266 = vector.broadcast %1248 : i32 to vector<64x64xi32>
    %1267 = arith.cmpi sge, %263, %1266 : vector<64x64xi32>
    %1268 = vector.broadcast %1260 : i32 to vector<64x64xi32>
    %1269 = arith.cmpi slt, %263, %1268 : vector<64x64xi32>
    %1270 = arith.andi %1267, %1269 : vector<64x64xi1>
    %1271 = arith.andi %1265, %1270 : vector<64x64xi1>
    %1272 = arith.extui %1271 : vector<64x64xi1> to vector<64x64xi8>
    %c22 = arith.constant 22 : index
    %c0_373 = arith.constant 0 : index
    %c0_374 = arith.constant 0 : index
    %1273 = vector.load %arg1[%c22, %c0_373, %c0_374] : memref<26x64x64xi8, #tpu.memory_space<vmem>>, vector<1x64x64xi8>
    %1274 = vector.shape_cast %1273 : vector<1x64x64xi8> to vector<64x64xi8>
    %1275 = vector.shape_cast %1272 : vector<64x64xi8> to vector<1x64x64xi8>
    tpu.vector_store %arg1[%c22, %c0_373, %c0_374], %1275 {strides = array<i32>} : memref<26x64x64xi8, #tpu.memory_space<vmem>>, vector<1x64x64xi8>,
    %c0_i32_375 = arith.constant 0 : i32
    %1276 = vector.broadcast %c0_i32_375 : i32 to vector<1x32xi32>
    %1277 = arith.cmpi sgt, %261, %1276 : vector<1x32xi32>
    %c23_i32 = arith.constant 23 : i32
    %1278 = vector.broadcast %c23_i32 : i32 to vector<1x32xi32>
    %1279 = arith.cmpi eq, %258, %1278 : vector<1x32xi32>
    %1280 = arith.andi %1277, %1279 : vector<1x32xi1>
    %c9218_i32_376 = arith.constant 9218 : i32
    %1281 = vector.broadcast %c9218_i32_376 : i32 to vector<1x32xi32>
    %1282 = arith.select %1280, %191#3, %1281 : vector<1x32xi1>, vector<1x32xi32>
    %1283 = vector.shape_cast %1282 : vector<1x32xi32> to vector<1x1x32xi32>
    %cst_377 = arith.constant dense<2147483647> : vector<1xi32>
    %1284 = vector.multi_reduction <minsi>, %1283, %cst_377 [1, 2] : vector<1x1x32xi32> to vector<1xi32>
    %1285 = vector.shape_cast %1284 : vector<1xi32> to vector<1x1x1xi32>
    %1286 = vector.extract %1285[0, 0, 0] : i32 from vector<1x1x1xi32>
    %c9218_i32_378 = arith.constant 9218 : i32
    %1287 = vector.broadcast %c9218_i32_378 : i32 to vector<1x32xi32>
    %1288 = arith.select %1280, %191#4, %1287 : vector<1x32xi1>, vector<1x32xi32>
    %1289 = vector.shape_cast %1288 : vector<1x32xi32> to vector<1x1x32xi32>
    %cst_379 = arith.constant dense<2147483647> : vector<1xi32>
    %1290 = vector.multi_reduction <minsi>, %1289, %cst_379 [1, 2] : vector<1x1x32xi32> to vector<1xi32>
    %1291 = vector.shape_cast %1290 : vector<1xi32> to vector<1x1x1xi32>
    %1292 = vector.extract %1291[0, 0, 0] : i32 from vector<1x1x1xi32>
    %c0_i32_380 = arith.constant 0 : i32
    %1293 = vector.broadcast %c0_i32_380 : i32 to vector<1x32xi32>
    %1294 = arith.select %1280, %191#5, %1293 : vector<1x32xi1>, vector<1x32xi32>
    %1295 = vector.shape_cast %1294 : vector<1x32xi32> to vector<1x1x32xi32>
    %cst_381 = arith.constant dense<-2147483648> : vector<1xi32>
    %1296 = vector.multi_reduction <maxsi>, %1295, %cst_381 [1, 2] : vector<1x1x32xi32> to vector<1xi32>
    %1297 = vector.shape_cast %1296 : vector<1xi32> to vector<1x1x1xi32>
    %1298 = vector.extract %1297[0, 0, 0] : i32 from vector<1x1x1xi32>
    %c0_i32_382 = arith.constant 0 : i32
    %1299 = vector.broadcast %c0_i32_382 : i32 to vector<1x32xi32>
    %1300 = arith.select %1280, %191#6, %1299 : vector<1x32xi1>, vector<1x32xi32>
    %1301 = vector.shape_cast %1300 : vector<1x32xi32> to vector<1x1x32xi32>
    %cst_383 = arith.constant dense<-2147483648> : vector<1xi32>
    %1302 = vector.multi_reduction <maxsi>, %1301, %cst_383 [1, 2] : vector<1x1x32xi32> to vector<1xi32>
    %1303 = vector.shape_cast %1302 : vector<1xi32> to vector<1x1x1xi32>
    %1304 = vector.extract %1303[0, 0, 0] : i32 from vector<1x1x1xi32>
    %1305 = vector.broadcast %1286 : i32 to vector<64x64xi32>
    %1306 = arith.cmpi sge, %262, %1305 : vector<64x64xi32>
    %1307 = vector.broadcast %1298 : i32 to vector<64x64xi32>
    %1308 = arith.cmpi slt, %262, %1307 : vector<64x64xi32>
    %1309 = arith.andi %1306, %1308 : vector<64x64xi1>
    %1310 = vector.broadcast %1292 : i32 to vector<64x64xi32>
    %1311 = arith.cmpi sge, %263, %1310 : vector<64x64xi32>
    %1312 = vector.broadcast %1304 : i32 to vector<64x64xi32>
    %1313 = arith.cmpi slt, %263, %1312 : vector<64x64xi32>
    %1314 = arith.andi %1311, %1313 : vector<64x64xi1>
    %1315 = arith.andi %1309, %1314 : vector<64x64xi1>
    %1316 = arith.extui %1315 : vector<64x64xi1> to vector<64x64xi8>
    %c23 = arith.constant 23 : index
    %c0_384 = arith.constant 0 : index
    %c0_385 = arith.constant 0 : index
    %1317 = vector.load %arg1[%c23, %c0_384, %c0_385] : memref<26x64x64xi8, #tpu.memory_space<vmem>>, vector<1x64x64xi8>
    %1318 = vector.shape_cast %1317 : vector<1x64x64xi8> to vector<64x64xi8>
    %1319 = vector.shape_cast %1316 : vector<64x64xi8> to vector<1x64x64xi8>
    tpu.vector_store %arg1[%c23, %c0_384, %c0_385], %1319 {strides = array<i32>} : memref<26x64x64xi8, #tpu.memory_space<vmem>>, vector<1x64x64xi8>,
    %c0_i32_386 = arith.constant 0 : i32
    %1320 = vector.broadcast %c0_i32_386 : i32 to vector<1x32xi32>
    %1321 = arith.cmpi sgt, %261, %1320 : vector<1x32xi32>
    %c24_i32 = arith.constant 24 : i32
    %1322 = vector.broadcast %c24_i32 : i32 to vector<1x32xi32>
    %1323 = arith.cmpi eq, %258, %1322 : vector<1x32xi32>
    %1324 = arith.andi %1321, %1323 : vector<1x32xi1>
    %c9218_i32_387 = arith.constant 9218 : i32
    %1325 = vector.broadcast %c9218_i32_387 : i32 to vector<1x32xi32>
    %1326 = arith.select %1324, %191#3, %1325 : vector<1x32xi1>, vector<1x32xi32>
    %1327 = vector.shape_cast %1326 : vector<1x32xi32> to vector<1x1x32xi32>
    %cst_388 = arith.constant dense<2147483647> : vector<1xi32>
    %1328 = vector.multi_reduction <minsi>, %1327, %cst_388 [1, 2] : vector<1x1x32xi32> to vector<1xi32>
    %1329 = vector.shape_cast %1328 : vector<1xi32> to vector<1x1x1xi32>
    %1330 = vector.extract %1329[0, 0, 0] : i32 from vector<1x1x1xi32>
    %c9218_i32_389 = arith.constant 9218 : i32
    %1331 = vector.broadcast %c9218_i32_389 : i32 to vector<1x32xi32>
    %1332 = arith.select %1324, %191#4, %1331 : vector<1x32xi1>, vector<1x32xi32>
    %1333 = vector.shape_cast %1332 : vector<1x32xi32> to vector<1x1x32xi32>
    %cst_390 = arith.constant dense<2147483647> : vector<1xi32>
    %1334 = vector.multi_reduction <minsi>, %1333, %cst_390 [1, 2] : vector<1x1x32xi32> to vector<1xi32>
    %1335 = vector.shape_cast %1334 : vector<1xi32> to vector<1x1x1xi32>
    %1336 = vector.extract %1335[0, 0, 0] : i32 from vector<1x1x1xi32>
    %c0_i32_391 = arith.constant 0 : i32
    %1337 = vector.broadcast %c0_i32_391 : i32 to vector<1x32xi32>
    %1338 = arith.select %1324, %191#5, %1337 : vector<1x32xi1>, vector<1x32xi32>
    %1339 = vector.shape_cast %1338 : vector<1x32xi32> to vector<1x1x32xi32>
    %cst_392 = arith.constant dense<-2147483648> : vector<1xi32>
    %1340 = vector.multi_reduction <maxsi>, %1339, %cst_392 [1, 2] : vector<1x1x32xi32> to vector<1xi32>
    %1341 = vector.shape_cast %1340 : vector<1xi32> to vector<1x1x1xi32>
    %1342 = vector.extract %1341[0, 0, 0] : i32 from vector<1x1x1xi32>
    %c0_i32_393 = arith.constant 0 : i32
    %1343 = vector.broadcast %c0_i32_393 : i32 to vector<1x32xi32>
    %1344 = arith.select %1324, %191#6, %1343 : vector<1x32xi1>, vector<1x32xi32>
    %1345 = vector.shape_cast %1344 : vector<1x32xi32> to vector<1x1x32xi32>
    %cst_394 = arith.constant dense<-2147483648> : vector<1xi32>
    %1346 = vector.multi_reduction <maxsi>, %1345, %cst_394 [1, 2] : vector<1x1x32xi32> to vector<1xi32>
    %1347 = vector.shape_cast %1346 : vector<1xi32> to vector<1x1x1xi32>
    %1348 = vector.extract %1347[0, 0, 0] : i32 from vector<1x1x1xi32>
    %1349 = vector.broadcast %1330 : i32 to vector<64x64xi32>
    %1350 = arith.cmpi sge, %262, %1349 : vector<64x64xi32>
    %1351 = vector.broadcast %1342 : i32 to vector<64x64xi32>
    %1352 = arith.cmpi slt, %262, %1351 : vector<64x64xi32>
    %1353 = arith.andi %1350, %1352 : vector<64x64xi1>
    %1354 = vector.broadcast %1336 : i32 to vector<64x64xi32>
    %1355 = arith.cmpi sge, %263, %1354 : vector<64x64xi32>
    %1356 = vector.broadcast %1348 : i32 to vector<64x64xi32>
    %1357 = arith.cmpi slt, %263, %1356 : vector<64x64xi32>
    %1358 = arith.andi %1355, %1357 : vector<64x64xi1>
    %1359 = arith.andi %1353, %1358 : vector<64x64xi1>
    %1360 = arith.extui %1359 : vector<64x64xi1> to vector<64x64xi8>
    %c24 = arith.constant 24 : index
    %c0_395 = arith.constant 0 : index
    %c0_396 = arith.constant 0 : index
    %1361 = vector.load %arg1[%c24, %c0_395, %c0_396] : memref<26x64x64xi8, #tpu.memory_space<vmem>>, vector<1x64x64xi8>
    %1362 = vector.shape_cast %1361 : vector<1x64x64xi8> to vector<64x64xi8>
    %1363 = vector.shape_cast %1360 : vector<64x64xi8> to vector<1x64x64xi8>
    tpu.vector_store %arg1[%c24, %c0_395, %c0_396], %1363 {strides = array<i32>} : memref<26x64x64xi8, #tpu.memory_space<vmem>>, vector<1x64x64xi8>,
    %c0_i32_397 = arith.constant 0 : i32
    %1364 = vector.broadcast %c0_i32_397 : i32 to vector<1x32xi32>
    %1365 = arith.cmpi sgt, %261, %1364 : vector<1x32xi32>
    %c25_i32 = arith.constant 25 : i32
    %1366 = vector.broadcast %c25_i32 : i32 to vector<1x32xi32>
    %1367 = arith.cmpi eq, %258, %1366 : vector<1x32xi32>
    %1368 = arith.andi %1365, %1367 : vector<1x32xi1>
    %c9218_i32_398 = arith.constant 9218 : i32
    %1369 = vector.broadcast %c9218_i32_398 : i32 to vector<1x32xi32>
    %1370 = arith.select %1368, %191#3, %1369 : vector<1x32xi1>, vector<1x32xi32>
    %1371 = vector.shape_cast %1370 : vector<1x32xi32> to vector<1x1x32xi32>
    %cst_399 = arith.constant dense<2147483647> : vector<1xi32>
    %1372 = vector.multi_reduction <minsi>, %1371, %cst_399 [1, 2] : vector<1x1x32xi32> to vector<1xi32>
    %1373 = vector.shape_cast %1372 : vector<1xi32> to vector<1x1x1xi32>
    %1374 = vector.extract %1373[0, 0, 0] : i32 from vector<1x1x1xi32>
    %c9218_i32_400 = arith.constant 9218 : i32
    %1375 = vector.broadcast %c9218_i32_400 : i32 to vector<1x32xi32>
    %1376 = arith.select %1368, %191#4, %1375 : vector<1x32xi1>, vector<1x32xi32>
    %1377 = vector.shape_cast %1376 : vector<1x32xi32> to vector<1x1x32xi32>
    %cst_401 = arith.constant dense<2147483647> : vector<1xi32>
    %1378 = vector.multi_reduction <minsi>, %1377, %cst_401 [1, 2] : vector<1x1x32xi32> to vector<1xi32>
    %1379 = vector.shape_cast %1378 : vector<1xi32> to vector<1x1x1xi32>
    %1380 = vector.extract %1379[0, 0, 0] : i32 from vector<1x1x1xi32>
    %c0_i32_402 = arith.constant 0 : i32
    %1381 = vector.broadcast %c0_i32_402 : i32 to vector<1x32xi32>
    %1382 = arith.select %1368, %191#5, %1381 : vector<1x32xi1>, vector<1x32xi32>
    %1383 = vector.shape_cast %1382 : vector<1x32xi32> to vector<1x1x32xi32>
    %cst_403 = arith.constant dense<-2147483648> : vector<1xi32>
    %1384 = vector.multi_reduction <maxsi>, %1383, %cst_403 [1, 2] : vector<1x1x32xi32> to vector<1xi32>
    %1385 = vector.shape_cast %1384 : vector<1xi32> to vector<1x1x1xi32>
    %1386 = vector.extract %1385[0, 0, 0] : i32 from vector<1x1x1xi32>
    %c0_i32_404 = arith.constant 0 : i32
    %1387 = vector.broadcast %c0_i32_404 : i32 to vector<1x32xi32>
    %1388 = arith.select %1368, %191#6, %1387 : vector<1x32xi1>, vector<1x32xi32>
    %1389 = vector.shape_cast %1388 : vector<1x32xi32> to vector<1x1x32xi32>
    %cst_405 = arith.constant dense<-2147483648> : vector<1xi32>
    %1390 = vector.multi_reduction <maxsi>, %1389, %cst_405 [1, 2] : vector<1x1x32xi32> to vector<1xi32>
    %1391 = vector.shape_cast %1390 : vector<1xi32> to vector<1x1x1xi32>
    %1392 = vector.extract %1391[0, 0, 0] : i32 from vector<1x1x1xi32>
    %1393 = vector.broadcast %1374 : i32 to vector<64x64xi32>
    %1394 = arith.cmpi sge, %262, %1393 : vector<64x64xi32>
    %1395 = vector.broadcast %1386 : i32 to vector<64x64xi32>
    %1396 = arith.cmpi slt, %262, %1395 : vector<64x64xi32>
    %1397 = arith.andi %1394, %1396 : vector<64x64xi1>
    %1398 = vector.broadcast %1380 : i32 to vector<64x64xi32>
    %1399 = arith.cmpi sge, %263, %1398 : vector<64x64xi32>
    %1400 = vector.broadcast %1392 : i32 to vector<64x64xi32>
    %1401 = arith.cmpi slt, %263, %1400 : vector<64x64xi32>
    %1402 = arith.andi %1399, %1401 : vector<64x64xi1>
    %1403 = arith.andi %1397, %1402 : vector<64x64xi1>
    %1404 = arith.extui %1403 : vector<64x64xi1> to vector<64x64xi8>
    %c25 = arith.constant 25 : index
    %c0_406 = arith.constant 0 : index
    %c0_407 = arith.constant 0 : index
    %1405 = vector.load %arg1[%c25, %c0_406, %c0_407] : memref<26x64x64xi8, #tpu.memory_space<vmem>>, vector<1x64x64xi8>
    %1406 = vector.shape_cast %1405 : vector<1x64x64xi8> to vector<64x64xi8>
    %1407 = vector.shape_cast %1404 : vector<64x64xi8> to vector<1x64x64xi8>
    tpu.vector_store %arg1[%c25, %c0_406, %c0_407], %1407 {strides = array<i32>} : memref<26x64x64xi8, #tpu.memory_space<vmem>>, vector<1x64x64xi8>,
    return
  }
}

</mosaic_0001>

<llo_original>
// kernel: region_cluster_forward.1
$region0: #{region_cluster_forward.1}
  #allocation0 [shape = 'u32[]', space=smem, size = 0x4, offset = 0x4, fixed_abs, tag = 'smem constant byte address 0x4 - core index']
  #allocation1 [shape = 'u32[144,128]{1,0:T(1,128)}', space=vmem, size = 0x12000, scoped, tag = 'internal scratch']
  #allocation2 [shape = 's32[72,128]{1,0:T(8,128)}', space=vmem, size = 0x9000, scoped, tag = 'scratch operand']
  %s0 = inlined_call_operand.hbm [shape: u8[64,64], index: 0, kind: input, shape index: {}]
  %s1 = inlined_call_operand.hbm [shape: u8[26,64,64], index: 1, kind: output, shape index: {}]
  %s2 = sld [smem:[#allocation0]]
  $region32: #{region_cluster_forward.1} parent=0
    _
  %s4 = ssub.s32 1, %s2
  %s5 = scalar_select 0, %s4, %s2
  $region1: #{region_cluster_forward.1} parent=0
    #allocation3 [shape = 'u8[8192]{0}', space=vmem, size = 0x2000, scoped, tag = 'input window, operand 0, single buffered']
    #allocation4 [shape = 's32[1]{0}', space=sflag, size = 0x4, scoped, tag = 'scoped memory for region_cluster_forward.1']
    #allocation5 [shape = 's32[1]{0}', space=sflag, size = 0x4, scoped, tag = 'scoped memory for region_cluster_forward.1']
    #allocation6 [shape = 'u8[212992]{0}', space=vmem, size = 0x34000, scoped, tag = 'output window, operand 0, single buffered']
    %6 = vsyncpa [#allocation4], 0
    %7 = vsyncpa [#allocation5], 0
    // Predicated region
    $region2: #{region_cluster_forward.1} parent=1 // pred_check
      _
    $region3: #{region_cluster_forward.1} parent=1 // pred_check_branch
      %9 = sbr.rel (0) target = $region5
    $region4: #{region_cluster_forward.1} parent=1 // pred_region
      %s11 = ssub.s32 256, 256
      %12 = vsyncadd [#allocation4], %s11
      %s13 = sshll.u32 [#allocation3], 4
      %s14 = int_to_ptr.vmem [resolvable:$true] %s13
      %19 = dma.hbm_to_vmem [thread:$0]  %s0, 256, %s14, [#allocation4], 128, 128, 8
    $region5: #{region_cluster_forward.1} parent=1 // pred_fallthru
      _
    // Predicated region
    $region6: #{region_cluster_forward.1} parent=1 // pred_check
      _
    $region7: #{region_cluster_forward.1} parent=1 // pred_check_branch
      %21 = sbr.rel (0) target = $region9
    $region8: #{region_cluster_forward.1} parent=1 // pred_region
      %22 = dma.done [#allocation4], 256
    $region9: #{region_cluster_forward.1} parent=1 // pred_fallthru
      _
    %25 = vst [vmem:[#allocation2] sm:$0xff] 0
    %26 = vst [vmem:[#allocation2 + $0x8] sm:$0xff] 0
    %27 = vst [vmem:[#allocation2 + $0x10] sm:$0xff] 0
    %28 = vst [vmem:[#allocation2 + $0x18] sm:$0xff] 0
    %29 = vst [vmem:[#allocation2 + $0x20] sm:$0xff] 0
    %30 = vst [vmem:[#allocation2 + $0x28] sm:$0xff] 0
    %31 = vst [vmem:[#allocation2 + $0x30] sm:$0xff] 0
    %32 = vst [vmem:[#allocation2 + $0x38] sm:$0xff] 0
    %33 = vst [vmem:[#allocation2 + $0x40] sm:$0xff] 0
    %v34 = vld [vmem:[#allocation3] sm:$0xff]
    %v35 = vld [vmem:[#allocation3 + $0x8] sm:$0xff]
    %v36 = vunpack.c.0.s8 %v34
    %v37 = vunpack.c.1.s8 %v34
    %v38 = vunpack.c.2.s8 %v34
    %v39 = vunpack.c.3.s8 %v34
    %v40 = vunpack.c.0.s8 %v35
    %v41 = vunpack.c.1.s8 %v35
    %v42 = vunpack.c.2.s8 %v35
    %v43 = vunpack.c.3.s8 %v35
    %v44 = vand.u32 %v36, 255
    %v45 = vand.u32 %v37, 255
    %v46 = vand.u32 %v38, 255
    %v47 = vand.u32 %v39, 255
    %v48 = vand.u32 %v40, 255
    %v49 = vand.u32 %v41, 255
    %v50 = vand.u32 %v42, 255
    %v51 = vand.u32 %v43, 255
    %vm52 = vcmp.ne.s32.totalorder %v44, 0
    %vm53 = vcmp.ne.s32.totalorder %v45, 0
    %vm54 = vcmp.ne.s32.totalorder %v46, 0
    %vm55 = vcmp.ne.s32.totalorder %v47, 0
    %vm56 = vcmp.ne.s32.totalorder %v48, 0
    %vm57 = vcmp.ne.s32.totalorder %v49, 0
    %vm58 = vcmp.ne.s32.totalorder %v50, 0
    %vm59 = vcmp.ne.s32.totalorder %v51, 0
    %v60 = vsel %vm52, 1, 0
    %v61 = vsel %vm53, 1, 0
    %v62 = vsel %vm54, 1, 0
    %v63 = vsel %vm55, 1, 0
    %v64 = vsel %vm56, 1, 0
    %v65 = vsel %vm57, 1, 0
    %v66 = vsel %vm58, 1, 0
    %v67 = vsel %vm59, 1, 0
    %vm68 = vcmask 523264
    %69 = vst.msk [vmem:[#allocation2] sm:$0xff] %vm68, %v60
    %70 = vst.msk [vmem:[#allocation2 + $0x8] sm:$0xff] %vm68, %v61
    %71 = vst.msk [vmem:[#allocation2 + $0x10] sm:$0xff] %vm68, %v62
    %72 = vst.msk [vmem:[#allocation2 + $0x18] sm:$0xff] %vm68, %v63
    %73 = vst.msk [vmem:[#allocation2 + $0x20] sm:$0xff] %vm68, %v64
    %74 = vst.msk [vmem:[#allocation2 + $0x28] sm:$0xff] %vm68, %v65
    %75 = vst.msk [vmem:[#allocation2 + $0x30] sm:$0xff] %vm68, %v66
    %76 = vst.msk [vmem:[#allocation2 + $0x38] sm:$0xff] %vm68, %v67
    %v77 = vld [vmem:[#allocation2] sm:$0xff]
    %v78 = vld [vmem:[#allocation2 + $0x8] sm:$0xff]
    %v79 = vld [vmem:[#allocation2 + $0x10] sm:$0xff]
    %v80 = vld [vmem:[#allocation2 + $0x18] sm:$0xff]
    %v81 = vld [vmem:[#allocation2 + $0x20] sm:$0xff]
    %v82 = vld [vmem:[#allocation2 + $0x28] sm:$0xff]
    %v83 = vld [vmem:[#allocation2 + $0x30] sm:$0xff]
    %v84 = vld [vmem:[#allocation2 + $0x38] sm:$0xff]
    %v85 = vld [vmem:[#allocation2 + $0x40] sm:$0xff]
    %v86 = vlaneseq
    %v87 = vshrl.u32 %v86, 7
    %v88 = vadd.s32 %v87, 8
    %v89 = vadd.s32 %v87, 16
    %v90 = vadd.s32 %v87, 24
    %v91 = vadd.s32 %v87, 32
    %v92 = vadd.s32 %v87, 40
    %v93 = vadd.s32 %v87, 48
    %v94 = vadd.s32 %v87, 56
    %v95 = vadd.s32 %v87, 64
    %v96 = vlaneseq
    %v97 = vand.u32 %v96, 127
    %v98 = vmul.u32 %v87, 128
    %v99 = vmul.u32 %v88, 128
    %v100 = vmul.u32 %v89, 128
    %v101 = vmul.u32 %v90, 128
    %v102 = vmul.u32 %v91, 128
    %v103 = vmul.u32 %v92, 128
    %v104 = vmul.u32 %v93, 128
    %v105 = vmul.u32 %v94, 128
    %v106 = vmul.u32 %v95, 128
    %v107 = vadd.s32 %v98, %v97
    %v108 = vadd.s32 %v99, %v97
    %v109 = vadd.s32 %v100, %v97
    %v110 = vadd.s32 %v101, %v97
    %v111 = vadd.s32 %v102, %v97
    %v112 = vadd.s32 %v103, %v97
    %v113 = vadd.s32 %v104, %v97
    %v114 = vadd.s32 %v105, %v97
    %v115 = vadd.s32 %v106, %v97
    %v116 = vadd.s32 %v107, 1
    %v117 = vadd.s32 %v108, 1
    %v118 = vadd.s32 %v109, 1
    %v119 = vadd.s32 %v110, 1
    %v120 = vadd.s32 %v111, 1
    %v121 = vadd.s32 %v112, 1
    %v122 = vadd.s32 %v113, 1
    %v123 = vadd.s32 %v114, 1
    %v124 = vadd.s32 %v115, 1
    %vm125 = vcmp.gt.s32.totalorder %v77, 0
    %vm126 = vcmp.gt.s32.totalorder %v78, 0
    %vm127 = vcmp.gt.s32.totalorder %v79, 0
    %vm128 = vcmp.gt.s32.totalorder %v80, 0
    %vm129 = vcmp.gt.s32.totalorder %v81, 0
    %vm130 = vcmp.gt.s32.totalorder %v82, 0
    %vm131 = vcmp.gt.s32.totalorder %v83, 0
    %vm132 = vcmp.gt.s32.totalorder %v84, 0
    %vm133 = vcmp.gt.s32.totalorder %v85, 0
    %v134 = vsel %vm125, %v116, 9218
    %v135 = vsel %vm126, %v117, 9218
    %v136 = vsel %vm127, %v118, 9218
    %v137 = vsel %vm128, %v119, 9218
    %v138 = vsel %vm129, %v120, 9218
    %v139 = vsel %vm130, %v121, 9218
    %v140 = vsel %vm131, %v122, 9218
    %v141 = vsel %vm132, %v123, 9218
    %v142 = vsel %vm133, %v124, 9218
    %v143 = vsel %vm125, 0, 9218
    %v144 = vsel %vm126, 0, 9218
    %v145 = vsel %vm127, 0, 9218
    %v146 = vsel %vm128, 0, 9218
    %v147 = vsel %vm129, 0, 9218
    %v148 = vsel %vm130, 0, 9218
    %v149 = vsel %vm131, 0, 9218
    %v150 = vsel %vm132, 0, 9218
    %v151 = vsel %vm133, 0, 9218
    %152 = vrot.lane.b32.xlu0 %v77, 1
    %v153 = vpop.permute.xlu0 %152
    %154 = vrot.lane.b32.xlu0 %v78, 1
    %v155 = vpop.permute.xlu0 %154
    %156 = vrot.lane.b32.xlu0 %v79, 1
    %v157 = vpop.permute.xlu0 %156
    %158 = vrot.lane.b32.xlu0 %v80, 1
    %v159 = vpop.permute.xlu0 %158
    %160 = vrot.lane.b32.xlu0 %v81, 1
    %v161 = vpop.permute.xlu0 %160
    %162 = vrot.lane.b32.xlu0 %v82, 1
    %v163 = vpop.permute.xlu0 %162
    %164 = vrot.lane.b32.xlu0 %v83, 1
    %v165 = vpop.permute.xlu0 %164
    %166 = vrot.lane.b32.xlu0 %v84, 1
    %v167 = vpop.permute.xlu0 %166
    %168 = vrot.lane.b32.xlu0 %v85, 1
    %v169 = vpop.permute.xlu0 %168
    %vm170 = vcmp.lt.s32.totalorder %v77, %v153
    %v171 = vsel %vm170, %v77, %v153
    %vm172 = vcmp.lt.s32.totalorder %v78, %v155
    %v173 = vsel %vm172, %v78, %v155
    %vm174 = vcmp.lt.s32.totalorder %v79, %v157
    %v175 = vsel %vm174, %v79, %v157
    %vm176 = vcmp.lt.s32.totalorder %v80, %v159
    %v177 = vsel %vm176, %v80, %v159
    %vm178 = vcmp.lt.s32.totalorder %v81, %v161
    %v179 = vsel %vm178, %v81, %v161
    %vm180 = vcmp.lt.s32.totalorder %v82, %v163
    %v181 = vsel %vm180, %v82, %v163
    %vm182 = vcmp.lt.s32.totalorder %v83, %v165
    %v183 = vsel %vm182, %v83, %v165
    %vm184 = vcmp.lt.s32.totalorder %v84, %v167
    %v185 = vsel %vm184, %v84, %v167
    %vm186 = vcmp.lt.s32.totalorder %v85, %v169
    %v187 = vsel %vm186, %v85, %v169
    %vm188 = vcmp.gt.s32.totalorder %v171, 0
    %vm189 = vcmp.gt.s32.totalorder %v173, 0
    %vm190 = vcmp.gt.s32.totalorder %v175, 0
    %vm191 = vcmp.gt.s32.totalorder %v177, 0
    %vm192 = vcmp.gt.s32.totalorder %v179, 0
    %vm193 = vcmp.gt.s32.totalorder %v181, 0
    %vm194 = vcmp.gt.s32.totalorder %v183, 0
    %vm195 = vcmp.gt.s32.totalorder %v185, 0
    %vm196 = vcmp.gt.s32.totalorder %v187, 0
    %v197 = vsel %vm188, 0, 9218
    %v198 = vsel %vm189, 0, 9218
    %v199 = vsel %vm190, 0, 9218
    %v200 = vsel %vm191, 0, 9218
    %v201 = vsel %vm192, 0, 9218
    %v202 = vsel %vm193, 0, 9218
    %v203 = vsel %vm194, 0, 9218
    %v204 = vsel %vm195, 0, 9218
    %v205 = vsel %vm196, 0, 9218
    %206 = vrot.lane.b32.xlu0 %v171, 127
    %v207 = vpop.permute.xlu0 %206
    %208 = vrot.lane.b32.xlu0 %v173, 127
    %v209 = vpop.permute.xlu0 %208
    %210 = vrot.lane.b32.xlu0 %v175, 127
    %v211 = vpop.permute.xlu0 %210
    %212 = vrot.lane.b32.xlu0 %v177, 127
    %v213 = vpop.permute.xlu0 %212
    %214 = vrot.lane.b32.xlu0 %v179, 127
    %v215 = vpop.permute.xlu0 %214
    %216 = vrot.lane.b32.xlu0 %v181, 127
    %v217 = vpop.permute.xlu0 %216
    %218 = vrot.lane.b32.xlu0 %v183, 127
    %v219 = vpop.permute.xlu0 %218
    %220 = vrot.lane.b32.xlu0 %v185, 127
    %v221 = vpop.permute.xlu0 %220
    %222 = vrot.lane.b32.xlu0 %v187, 127
    %v223 = vpop.permute.xlu0 %222
    %vm224 = vcmp.gt.s32.totalorder %v207, 0
    %vm225 = vcmp.gt.s32.totalorder %v209, 0
    %vm226 = vcmp.gt.s32.totalorder %v211, 0
    %vm227 = vcmp.gt.s32.totalorder %v213, 0
    %vm228 = vcmp.gt.s32.totalorder %v215, 0
    %vm229 = vcmp.gt.s32.totalorder %v217, 0
    %vm230 = vcmp.gt.s32.totalorder %v219, 0
    %vm231 = vcmp.gt.s32.totalorder %v221, 0
    %vm232 = vcmp.gt.s32.totalorder %v223, 0
    %v233 = vsel %vm224, 0, 9218
    %v234 = vsel %vm225, 0, 9218
    %v235 = vsel %vm226, 0, 9218
    %v236 = vsel %vm227, 0, 9218
    %v237 = vsel %vm228, 0, 9218
    %v238 = vsel %vm229, 0, 9218
    %v239 = vsel %vm230, 0, 9218
    %v240 = vsel %vm231, 0, 9218
    %v241 = vsel %vm232, 0, 9218
    %242 = vrot.lane.b32.xlu0 %v171, 1
    %v243 = vpop.permute.xlu0 %242
    %244 = vrot.lane.b32.xlu0 %v173, 1
    %v245 = vpop.permute.xlu0 %244
    %246 = vrot.lane.b32.xlu0 %v175, 1
    %v247 = vpop.permute.xlu0 %246
    %248 = vrot.lane.b32.xlu0 %v177, 1
    %v249 = vpop.permute.xlu0 %248
    %250 = vrot.lane.b32.xlu0 %v179, 1
    %v251 = vpop.permute.xlu0 %250
    %252 = vrot.lane.b32.xlu0 %v181, 1
    %v253 = vpop.permute.xlu0 %252
    %254 = vrot.lane.b32.xlu0 %v183, 1
    %v255 = vpop.permute.xlu0 %254
    %256 = vrot.lane.b32.xlu0 %v185, 1
    %v257 = vpop.permute.xlu0 %256
    %258 = vrot.lane.b32.xlu0 %v187, 1
    %v259 = vpop.permute.xlu0 %258
    %vm260 = vcmp.lt.s32.totalorder %v171, %v243
    %v261 = vsel %vm260, %v171, %v243
    %vm262 = vcmp.lt.s32.totalorder %v173, %v245
    %v263 = vsel %vm262, %v173, %v245
    %vm264 = vcmp.lt.s32.totalorder %v175, %v247
    %v265 = vsel %vm264, %v175, %v247
    %vm266 = vcmp.lt.s32.totalorder %v177, %v249
    %v267 = vsel %vm266, %v177, %v249
    %vm268 = vcmp.lt.s32.totalorder %v179, %v251
    %v269 = vsel %vm268, %v179, %v251
    %vm270 = vcmp.lt.s32.totalorder %v181, %v253
    %v271 = vsel %vm270, %v181, %v253
    %vm272 = vcmp.lt.s32.totalorder %v183, %v255
    %v273 = vsel %vm272, %v183, %v255
    %vm274 = vcmp.lt.s32.totalorder %v185, %v257
    %v275 = vsel %vm274, %v185, %v257
    %vm276 = vcmp.lt.s32.totalorder %v187, %v259
    %v277 = vsel %vm276, %v187, %v259
    %vm278 = vcmp.gt.s32.totalorder %v261, 0
    %vm279 = vcmp.gt.s32.totalorder %v263, 0
    %vm280 = vcmp.gt.s32.totalorder %v265, 0
    %vm281 = vcmp.gt.s32.totalorder %v267, 0
    %vm282 = vcmp.gt.s32.totalorder %v269, 0
    %vm283 = vcmp.gt.s32.totalorder %v271, 0
    %vm284 = vcmp.gt.s32.totalorder %v273, 0
    %vm285 = vcmp.gt.s32.totalorder %v275, 0
    %vm286 = vcmp.gt.s32.totalorder %v277, 0
    %v287 = vsel %vm278, 0, 9218
    %v288 = vsel %vm279, 0, 9218
    %v289 = vsel %vm280, 0, 9218
    %v290 = vsel %vm281, 0, 9218
    %v291 = vsel %vm282, 0, 9218
    %v292 = vsel %vm283, 0, 9218
    %v293 = vsel %vm284, 0, 9218
    %v294 = vsel %vm285, 0, 9218
    %v295 = vsel %vm286, 0, 9218
    %296 = vrot.lane.b32.xlu0 %v261, 126
    %v297 = vpop.permute.xlu0 %296
    %298 = vrot.lane.b32.xlu0 %v263, 126
    %v299 = vpop.permute.xlu0 %298
    %300 = vrot.lane.b32.xlu0 %v265, 126
    %v301 = vpop.permute.xlu0 %300
    %302 = vrot.lane.b32.xlu0 %v267, 126
    %v303 = vpop.permute.xlu0 %302
    %304 = vrot.lane.b32.xlu0 %v269, 126
    %v305 = vpop.permute.xlu0 %304
    %306 = vrot.lane.b32.xlu0 %v271, 126
    %v307 = vpop.permute.xlu0 %306
    %308 = vrot.lane.b32.xlu0 %v273, 126
    %v309 = vpop.permute.xlu0 %308
    %310 = vrot.lane.b32.xlu0 %v275, 126
    %v311 = vpop.permute.xlu0 %310
    %312 = vrot.lane.b32.xlu0 %v277, 126
    %v313 = vpop.permute.xlu0 %312
    %vm314 = vcmp.gt.s32.totalorder %v297, 0
    %vm315 = vcmp.gt.s32.totalorder %v299, 0
    %vm316 = vcmp.gt.s32.totalorder %v301, 0
    %vm317 = vcmp.gt.s32.totalorder %v303, 0
    %vm318 = vcmp.gt.s32.totalorder %v305, 0
    %vm319 = vcmp.gt.s32.totalorder %v307, 0
    %vm320 = vcmp.gt.s32.totalorder %v309, 0
    %vm321 = vcmp.gt.s32.totalorder %v311, 0
    %vm322 = vcmp.gt.s32.totalorder %v313, 0
    %v323 = vsel %vm314, 0, 9218
    %v324 = vsel %vm315, 0, 9218
    %v325 = vsel %vm316, 0, 9218
    %v326 = vsel %vm317, 0, 9218
    %v327 = vsel %vm318, 0, 9218
    %v328 = vsel %vm319, 0, 9218
    %v329 = vsel %vm320, 0, 9218
    %v330 = vsel %vm321, 0, 9218
    %v331 = vsel %vm322, 0, 9218
    %332 = vrot.lane.b32.xlu0 %v261, 2
    %v333 = vpop.permute.xlu0 %332
    %334 = vrot.lane.b32.xlu0 %v263, 2
    %v335 = vpop.permute.xlu0 %334
    %336 = vrot.lane.b32.xlu0 %v265, 2
    %v337 = vpop.permute.xlu0 %336
    %338 = vrot.lane.b32.xlu0 %v267, 2
    %v339 = vpop.permute.xlu0 %338
    %340 = vrot.lane.b32.xlu0 %v269, 2
    %v341 = vpop.permute.xlu0 %340
    %342 = vrot.lane.b32.xlu0 %v271, 2
    %v343 = vpop.permute.xlu0 %342
    %344 = vrot.lane.b32.xlu0 %v273, 2
    %v345 = vpop.permute.xlu0 %344
    %346 = vrot.lane.b32.xlu0 %v275, 2
    %v347 = vpop.permute.xlu0 %346
    %348 = vrot.lane.b32.xlu0 %v277, 2
    %v349 = vpop.permute.xlu0 %348
    %vm350 = vcmp.lt.s32.totalorder %v261, %v333
    %v351 = vsel %vm350, %v261, %v333
    %vm352 = vcmp.lt.s32.totalorder %v263, %v335
    %v353 = vsel %vm352, %v263, %v335
    %vm354 = vcmp.lt.s32.totalorder %v265, %v337
    %v355 = vsel %vm354, %v265, %v337
    %vm356 = vcmp.lt.s32.totalorder %v267, %v339
    %v357 = vsel %vm356, %v267, %v339
    %vm358 = vcmp.lt.s32.totalorder %v269, %v341
    %v359 = vsel %vm358, %v269, %v341
    %vm360 = vcmp.lt.s32.totalorder %v271, %v343
    %v361 = vsel %vm360, %v271, %v343
    %vm362 = vcmp.lt.s32.totalorder %v273, %v345
    %v363 = vsel %vm362, %v273, %v345
    %vm364 = vcmp.lt.s32.totalorder %v275, %v347
    %v365 = vsel %vm364, %v275, %v347
    %vm366 = vcmp.lt.s32.totalorder %v277, %v349
    %v367 = vsel %vm366, %v277, %v349
    %vm368 = vcmp.gt.s32.totalorder %v351, 0
    %vm369 = vcmp.gt.s32.totalorder %v353, 0
    %vm370 = vcmp.gt.s32.totalorder %v355, 0
    %vm371 = vcmp.gt.s32.totalorder %v357, 0
    %vm372 = vcmp.gt.s32.totalorder %v359, 0
    %vm373 = vcmp.gt.s32.totalorder %v361, 0
    %vm374 = vcmp.gt.s32.totalorder %v363, 0
    %vm375 = vcmp.gt.s32.totalorder %v365, 0
    %vm376 = vcmp.gt.s32.totalorder %v367, 0
    %v377 = vsel %vm368, 0, 9218
    %v378 = vsel %vm369, 0, 9218
    %v379 = vsel %vm370, 0, 9218
    %v380 = vsel %vm371, 0, 9218
    %v381 = vsel %vm372, 0, 9218
    %v382 = vsel %vm373, 0, 9218
    %v383 = vsel %vm374, 0, 9218
    %v384 = vsel %vm375, 0, 9218
    %v385 = vsel %vm376, 0, 9218
    %386 = vrot.lane.b32.xlu0 %v351, 124
    %v387 = vpop.permute.xlu0 %386
    %388 = vrot.lane.b32.xlu0 %v353, 124
    %v389 = vpop.permute.xlu0 %388
    %390 = vrot.lane.b32.xlu0 %v355, 124
    %v391 = vpop.permute.xlu0 %390
    %392 = vrot.lane.b32.xlu0 %v357, 124
    %v393 = vpop.permute.xlu0 %392
    %394 = vrot.lane.b32.xlu0 %v359, 124
    %v395 = vpop.permute.xlu0 %394
    %396 = vrot.lane.b32.xlu0 %v361, 124
    %v397 = vpop.permute.xlu0 %396
    %398 = vrot.lane.b32.xlu0 %v363, 124
    %v399 = vpop.permute.xlu0 %398
    %400 = vrot.lane.b32.xlu0 %v365, 124
    %v401 = vpop.permute.xlu0 %400
    %402 = vrot.lane.b32.xlu0 %v367, 124
    %v403 = vpop.permute.xlu0 %402
    %vm404 = vcmp.gt.s32.totalorder %v387, 0
    %vm405 = vcmp.gt.s32.totalorder %v389, 0
    %vm406 = vcmp.gt.s32.totalorder %v391, 0
    %vm407 = vcmp.gt.s32.totalorder %v393, 0
    %vm408 = vcmp.gt.s32.totalorder %v395, 0
    %vm409 = vcmp.gt.s32.totalorder %v397, 0
    %vm410 = vcmp.gt.s32.totalorder %v399, 0
    %vm411 = vcmp.gt.s32.totalorder %v401, 0
    %vm412 = vcmp.gt.s32.totalorder %v403, 0
    %v413 = vsel %vm404, 0, 9218
    %v414 = vsel %vm405, 0, 9218
    %v415 = vsel %vm406, 0, 9218
    %v416 = vsel %vm407, 0, 9218
    %v417 = vsel %vm408, 0, 9218
    %v418 = vsel %vm409, 0, 9218
    %v419 = vsel %vm410, 0, 9218
    %v420 = vsel %vm411, 0, 9218
    %v421 = vsel %vm412, 0, 9218
    %422 = vrot.lane.b32.xlu0 %v351, 4
    %v423 = vpop.permute.xlu0 %422
    %424 = vrot.lane.b32.xlu0 %v353, 4
    %v425 = vpop.permute.xlu0 %424
    %426 = vrot.lane.b32.xlu0 %v355, 4
    %v427 = vpop.permute.xlu0 %426
    %428 = vrot.lane.b32.xlu0 %v357, 4
    %v429 = vpop.permute.xlu0 %428
    %430 = vrot.lane.b32.xlu0 %v359, 4
    %v431 = vpop.permute.xlu0 %430
    %432 = vrot.lane.b32.xlu0 %v361, 4
    %v433 = vpop.permute.xlu0 %432
    %434 = vrot.lane.b32.xlu0 %v363, 4
    %v435 = vpop.permute.xlu0 %434
    %436 = vrot.lane.b32.xlu0 %v365, 4
    %v437 = vpop.permute.xlu0 %436
    %438 = vrot.lane.b32.xlu0 %v367, 4
    %v439 = vpop.permute.xlu0 %438
    %vm440 = vcmp.lt.s32.totalorder %v351, %v423
    %v441 = vsel %vm440, %v351, %v423
    %vm442 = vcmp.lt.s32.totalorder %v353, %v425
    %v443 = vsel %vm442, %v353, %v425
    %vm444 = vcmp.lt.s32.totalorder %v355, %v427
    %v445 = vsel %vm444, %v355, %v427
    %vm446 = vcmp.lt.s32.totalorder %v357, %v429
    %v447 = vsel %vm446, %v357, %v429
    %vm448 = vcmp.lt.s32.totalorder %v359, %v431
    %v449 = vsel %vm448, %v359, %v431
    %vm450 = vcmp.lt.s32.totalorder %v361, %v433
    %v451 = vsel %vm450, %v361, %v433
    %vm452 = vcmp.lt.s32.totalorder %v363, %v435
    %v453 = vsel %vm452, %v363, %v435
    %vm454 = vcmp.lt.s32.totalorder %v365, %v437
    %v455 = vsel %vm454, %v365, %v437
    %vm456 = vcmp.lt.s32.totalorder %v367, %v439
    %v457 = vsel %vm456, %v367, %v439
    %vm458 = vcmp.gt.s32.totalorder %v441, 0
    %vm459 = vcmp.gt.s32.totalorder %v443, 0
    %vm460 = vcmp.gt.s32.totalorder %v445, 0
    %vm461 = vcmp.gt.s32.totalorder %v447, 0
    %vm462 = vcmp.gt.s32.totalorder %v449, 0
    %vm463 = vcmp.gt.s32.totalorder %v451, 0
    %vm464 = vcmp.gt.s32.totalorder %v453, 0
    %vm465 = vcmp.gt.s32.totalorder %v455, 0
    %vm466 = vcmp.gt.s32.totalorder %v457, 0
    %v467 = vsel %vm458, 0, 9218
    %v468 = vsel %vm459, 0, 9218
    %v469 = vsel %vm460, 0, 9218
    %v470 = vsel %vm461, 0, 9218
    %v471 = vsel %vm462, 0, 9218
    %v472 = vsel %vm463, 0, 9218
    %v473 = vsel %vm464, 0, 9218
    %v474 = vsel %vm465, 0, 9218
    %v475 = vsel %vm466, 0, 9218
    %476 = vrot.lane.b32.xlu0 %v441, 120
    %v477 = vpop.permute.xlu0 %476
    %478 = vrot.lane.b32.xlu0 %v443, 120
    %v479 = vpop.permute.xlu0 %478
    %480 = vrot.lane.b32.xlu0 %v445, 120
    %v481 = vpop.permute.xlu0 %480
    %482 = vrot.lane.b32.xlu0 %v447, 120
    %v483 = vpop.permute.xlu0 %482
    %484 = vrot.lane.b32.xlu0 %v449, 120
    %v485 = vpop.permute.xlu0 %484
    %486 = vrot.lane.b32.xlu0 %v451, 120
    %v487 = vpop.permute.xlu0 %486
    %488 = vrot.lane.b32.xlu0 %v453, 120
    %v489 = vpop.permute.xlu0 %488
    %490 = vrot.lane.b32.xlu0 %v455, 120
    %v491 = vpop.permute.xlu0 %490
    %492 = vrot.lane.b32.xlu0 %v457, 120
    %v493 = vpop.permute.xlu0 %492
    %vm494 = vcmp.gt.s32.totalorder %v477, 0
    %vm495 = vcmp.gt.s32.totalorder %v479, 0
    %vm496 = vcmp.gt.s32.totalorder %v481, 0
    %vm497 = vcmp.gt.s32.totalorder %v483, 0
    %vm498 = vcmp.gt.s32.totalorder %v485, 0
    %vm499 = vcmp.gt.s32.totalorder %v487, 0
    %vm500 = vcmp.gt.s32.totalorder %v489, 0
    %vm501 = vcmp.gt.s32.totalorder %v491, 0
    %vm502 = vcmp.gt.s32.totalorder %v493, 0
    %v503 = vsel %vm494, 0, 9218
    %v504 = vsel %vm495, 0, 9218
    %v505 = vsel %vm496, 0, 9218
    %v506 = vsel %vm497, 0, 9218
    %v507 = vsel %vm498, 0, 9218
    %v508 = vsel %vm499, 0, 9218
    %v509 = vsel %vm500, 0, 9218
    %v510 = vsel %vm501, 0, 9218
    %v511 = vsel %vm502, 0, 9218
    %512 = vrot.lane.b32.xlu0 %v441, 8
    %v513 = vpop.permute.xlu0 %512
    %514 = vrot.lane.b32.xlu0 %v443, 8
    %v515 = vpop.permute.xlu0 %514
    %516 = vrot.lane.b32.xlu0 %v445, 8
    %v517 = vpop.permute.xlu0 %516
    %518 = vrot.lane.b32.xlu0 %v447, 8
    %v519 = vpop.permute.xlu0 %518
    %520 = vrot.lane.b32.xlu0 %v449, 8
    %v521 = vpop.permute.xlu0 %520
    %522 = vrot.lane.b32.xlu0 %v451, 8
    %v523 = vpop.permute.xlu0 %522
    %524 = vrot.lane.b32.xlu0 %v453, 8
    %v525 = vpop.permute.xlu0 %524
    %526 = vrot.lane.b32.xlu0 %v455, 8
    %v527 = vpop.permute.xlu0 %526
    %528 = vrot.lane.b32.xlu0 %v457, 8
    %v529 = vpop.permute.xlu0 %528
    %vm530 = vcmp.lt.s32.totalorder %v441, %v513
    %v531 = vsel %vm530, %v441, %v513
    %vm532 = vcmp.lt.s32.totalorder %v443, %v515
    %v533 = vsel %vm532, %v443, %v515
    %vm534 = vcmp.lt.s32.totalorder %v445, %v517
    %v535 = vsel %vm534, %v445, %v517
    %vm536 = vcmp.lt.s32.totalorder %v447, %v519
    %v537 = vsel %vm536, %v447, %v519
    %vm538 = vcmp.lt.s32.totalorder %v449, %v521
    %v539 = vsel %vm538, %v449, %v521
    %vm540 = vcmp.lt.s32.totalorder %v451, %v523
    %v541 = vsel %vm540, %v451, %v523
    %vm542 = vcmp.lt.s32.totalorder %v453, %v525
    %v543 = vsel %vm542, %v453, %v525
    %vm544 = vcmp.lt.s32.totalorder %v455, %v527
    %v545 = vsel %vm544, %v455, %v527
    %vm546 = vcmp.lt.s32.totalorder %v457, %v529
    %v547 = vsel %vm546, %v457, %v529
    %vm548 = vcmp.gt.s32.totalorder %v531, 0
    %vm549 = vcmp.gt.s32.totalorder %v533, 0
    %vm550 = vcmp.gt.s32.totalorder %v535, 0
    %vm551 = vcmp.gt.s32.totalorder %v537, 0
    %vm552 = vcmp.gt.s32.totalorder %v539, 0
    %vm553 = vcmp.gt.s32.totalorder %v541, 0
    %vm554 = vcmp.gt.s32.totalorder %v543, 0
    %vm555 = vcmp.gt.s32.totalorder %v545, 0
    %vm556 = vcmp.gt.s32.totalorder %v547, 0
    %v557 = vsel %vm548, 0, 9218
    %v558 = vsel %vm549, 0, 9218
    %v559 = vsel %vm550, 0, 9218
    %v560 = vsel %vm551, 0, 9218
    %v561 = vsel %vm552, 0, 9218
    %v562 = vsel %vm553, 0, 9218
    %v563 = vsel %vm554, 0, 9218
    %v564 = vsel %vm555, 0, 9218
    %v565 = vsel %vm556, 0, 9218
    %566 = vrot.lane.b32.xlu0 %v531, 112
    %v567 = vpop.permute.xlu0 %566
    %568 = vrot.lane.b32.xlu0 %v533, 112
    %v569 = vpop.permute.xlu0 %568
    %570 = vrot.lane.b32.xlu0 %v535, 112
    %v571 = vpop.permute.xlu0 %570
    %572 = vrot.lane.b32.xlu0 %v537, 112
    %v573 = vpop.permute.xlu0 %572
    %574 = vrot.lane.b32.xlu0 %v539, 112
    %v575 = vpop.permute.xlu0 %574
    %576 = vrot.lane.b32.xlu0 %v541, 112
    %v577 = vpop.permute.xlu0 %576
    %578 = vrot.lane.b32.xlu0 %v543, 112
    %v579 = vpop.permute.xlu0 %578
    %580 = vrot.lane.b32.xlu0 %v545, 112
    %v581 = vpop.permute.xlu0 %580
    %582 = vrot.lane.b32.xlu0 %v547, 112
    %v583 = vpop.permute.xlu0 %582
    %vm584 = vcmp.gt.s32.totalorder %v567, 0
    %vm585 = vcmp.gt.s32.totalorder %v569, 0
    %vm586 = vcmp.gt.s32.totalorder %v571, 0
    %vm587 = vcmp.gt.s32.totalorder %v573, 0
    %vm588 = vcmp.gt.s32.totalorder %v575, 0
    %vm589 = vcmp.gt.s32.totalorder %v577, 0
    %vm590 = vcmp.gt.s32.totalorder %v579, 0
    %vm591 = vcmp.gt.s32.totalorder %v581, 0
    %vm592 = vcmp.gt.s32.totalorder %v583, 0
    %v593 = vsel %vm584, 0, 9218
    %v594 = vsel %vm585, 0, 9218
    %v595 = vsel %vm586, 0, 9218
    %v596 = vsel %vm587, 0, 9218
    %v597 = vsel %vm588, 0, 9218
    %v598 = vsel %vm589, 0, 9218
    %v599 = vsel %vm590, 0, 9218
    %v600 = vsel %vm591, 0, 9218
    %v601 = vsel %vm592, 0, 9218
    %602 = vrot.lane.b32.xlu0 %v531, 16
    %v603 = vpop.permute.xlu0 %602
    %604 = vrot.lane.b32.xlu0 %v533, 16
    %v605 = vpop.permute.xlu0 %604
    %606 = vrot.lane.b32.xlu0 %v535, 16
    %v607 = vpop.permute.xlu0 %606
    %608 = vrot.lane.b32.xlu0 %v537, 16
    %v609 = vpop.permute.xlu0 %608
    %610 = vrot.lane.b32.xlu0 %v539, 16
    %v611 = vpop.permute.xlu0 %610
    %612 = vrot.lane.b32.xlu0 %v541, 16
    %v613 = vpop.permute.xlu0 %612
    %614 = vrot.lane.b32.xlu0 %v543, 16
    %v615 = vpop.permute.xlu0 %614
    %616 = vrot.lane.b32.xlu0 %v545, 16
    %v617 = vpop.permute.xlu0 %616
    %618 = vrot.lane.b32.xlu0 %v547, 16
    %v619 = vpop.permute.xlu0 %618
    %vm620 = vcmp.lt.s32.totalorder %v531, %v603
    %v621 = vsel %vm620, %v531, %v603
    %vm622 = vcmp.lt.s32.totalorder %v533, %v605
    %v623 = vsel %vm622, %v533, %v605
    %vm624 = vcmp.lt.s32.totalorder %v535, %v607
    %v625 = vsel %vm624, %v535, %v607
    %vm626 = vcmp.lt.s32.totalorder %v537, %v609
    %v627 = vsel %vm626, %v537, %v609
    %vm628 = vcmp.lt.s32.totalorder %v539, %v611
    %v629 = vsel %vm628, %v539, %v611
    %vm630 = vcmp.lt.s32.totalorder %v541, %v613
    %v631 = vsel %vm630, %v541, %v613
    %vm632 = vcmp.lt.s32.totalorder %v543, %v615
    %v633 = vsel %vm632, %v543, %v615
    %vm634 = vcmp.lt.s32.totalorder %v545, %v617
    %v635 = vsel %vm634, %v545, %v617
    %vm636 = vcmp.lt.s32.totalorder %v547, %v619
    %v637 = vsel %vm636, %v547, %v619
    %vm638 = vcmp.gt.s32.totalorder %v621, 0
    %vm639 = vcmp.gt.s32.totalorder %v623, 0
    %vm640 = vcmp.gt.s32.totalorder %v625, 0
    %vm641 = vcmp.gt.s32.totalorder %v627, 0
    %vm642 = vcmp.gt.s32.totalorder %v629, 0
    %vm643 = vcmp.gt.s32.totalorder %v631, 0
    %vm644 = vcmp.gt.s32.totalorder %v633, 0
    %vm645 = vcmp.gt.s32.totalorder %v635, 0
    %vm646 = vcmp.gt.s32.totalorder %v637, 0
    %v647 = vsel %vm638, 0, 9218
    %v648 = vsel %vm639, 0, 9218
    %v649 = vsel %vm640, 0, 9218
    %v650 = vsel %vm641, 0, 9218
    %v651 = vsel %vm642, 0, 9218
    %v652 = vsel %vm643, 0, 9218
    %v653 = vsel %vm644, 0, 9218
    %v654 = vsel %vm645, 0, 9218
    %v655 = vsel %vm646, 0, 9218
    %656 = vrot.lane.b32.xlu0 %v621, 96
    %v657 = vpop.permute.xlu0 %656
    %658 = vrot.lane.b32.xlu0 %v623, 96
    %v659 = vpop.permute.xlu0 %658
    %660 = vrot.lane.b32.xlu0 %v625, 96
    %v661 = vpop.permute.xlu0 %660
    %662 = vrot.lane.b32.xlu0 %v627, 96
    %v663 = vpop.permute.xlu0 %662
    %664 = vrot.lane.b32.xlu0 %v629, 96
    %v665 = vpop.permute.xlu0 %664
    %666 = vrot.lane.b32.xlu0 %v631, 96
    %v667 = vpop.permute.xlu0 %666
    %668 = vrot.lane.b32.xlu0 %v633, 96
    %v669 = vpop.permute.xlu0 %668
    %670 = vrot.lane.b32.xlu0 %v635, 96
    %v671 = vpop.permute.xlu0 %670
    %672 = vrot.lane.b32.xlu0 %v637, 96
    %v673 = vpop.permute.xlu0 %672
    %vm674 = vcmp.gt.s32.totalorder %v657, 0
    %vm675 = vcmp.gt.s32.totalorder %v659, 0
    %vm676 = vcmp.gt.s32.totalorder %v661, 0
    %vm677 = vcmp.gt.s32.totalorder %v663, 0
    %vm678 = vcmp.gt.s32.totalorder %v665, 0
    %vm679 = vcmp.gt.s32.totalorder %v667, 0
    %vm680 = vcmp.gt.s32.totalorder %v669, 0
    %vm681 = vcmp.gt.s32.totalorder %v671, 0
    %vm682 = vcmp.gt.s32.totalorder %v673, 0
    %v683 = vsel %vm674, 0, 9218
    %v684 = vsel %vm675, 0, 9218
    %v685 = vsel %vm676, 0, 9218
    %v686 = vsel %vm677, 0, 9218
    %v687 = vsel %vm678, 0, 9218
    %v688 = vsel %vm679, 0, 9218
    %v689 = vsel %vm680, 0, 9218
    %v690 = vsel %vm681, 0, 9218
    %v691 = vsel %vm682, 0, 9218
    %v692 = vrot.slane %v77, 7
    %v693 = vrot.slane %v78, 7
    %v694 = vrot.slane %v79, 7
    %v695 = vrot.slane %v80, 7
    %v696 = vrot.slane %v81, 7
    %v697 = vrot.slane %v82, 7
    %v698 = vrot.slane %v83, 7
    %v699 = vrot.slane %v84, 7
    %v700 = vrot.slane %v85, 7
    %vm701 = vcmp.lt.s32.totalorder %v87, 1
    %v702 = vsel %vm701, %v699, %v700
    %v703 = vsel %vm701, %v698, %v699
    %v704 = vsel %vm701, %v697, %v698
    %v705 = vsel %vm701, %v696, %v697
    %v706 = vsel %vm701, %v695, %v696
    %v707 = vsel %vm701, %v694, %v695
    %v708 = vsel %vm701, %v693, %v694
    %v709 = vsel %vm701, %v692, %v693
    %v710 = vsel %vm701, %v700, %v692
    %vm711 = vcmp.lt.s32.totalorder %v77, %v710
    %v712 = vsel %vm711, %v77, %v710
    %vm713 = vcmp.lt.s32.totalorder %v78, %v709
    %v714 = vsel %vm713, %v78, %v709
    %vm715 = vcmp.lt.s32.totalorder %v79, %v708
    %v716 = vsel %vm715, %v79, %v708
    %vm717 = vcmp.lt.s32.totalorder %v80, %v707
    %v718 = vsel %vm717, %v80, %v707
    %vm719 = vcmp.lt.s32.totalorder %v81, %v706
    %v720 = vsel %vm719, %v81, %v706
    %vm721 = vcmp.lt.s32.totalorder %v82, %v705
    %v722 = vsel %vm721, %v82, %v705
    %vm723 = vcmp.lt.s32.totalorder %v83, %v704
    %v724 = vsel %vm723, %v83, %v704
    %vm725 = vcmp.lt.s32.totalorder %v84, %v703
    %v726 = vsel %vm725, %v84, %v703
    %vm727 = vcmp.lt.s32.totalorder %v85, %v702
    %v728 = vsel %vm727, %v85, %v702
    %vm729 = vcmp.gt.s32.totalorder %v712, 0
    %vm730 = vcmp.gt.s32.totalorder %v714, 0
    %vm731 = vcmp.gt.s32.totalorder %v716, 0
    %vm732 = vcmp.gt.s32.totalorder %v718, 0
    %vm733 = vcmp.gt.s32.totalorder %v720, 0
    %vm734 = vcmp.gt.s32.totalorder %v722, 0
    %vm735 = vcmp.gt.s32.totalorder %v724, 0
    %vm736 = vcmp.gt.s32.totalorder %v726, 0
    %vm737 = vcmp.gt.s32.totalorder %v728, 0
    %v738 = vsel %vm729, 0, 9218
    %v739 = vsel %vm730, 0, 9218
    %v740 = vsel %vm731, 0, 9218
    %v741 = vsel %vm732, 0, 9218
    %v742 = vsel %vm733, 0, 9218
    %v743 = vsel %vm734, 0, 9218
    %v744 = vsel %vm735, 0, 9218
    %v745 = vsel %vm736, 0, 9218
    %v746 = vsel %vm737, 0, 9218
    %v747 = vrot.slane %v712, 1
    %v748 = vrot.slane %v714, 1
    %v749 = vrot.slane %v716, 1
    %v750 = vrot.slane %v718, 1
    %v751 = vrot.slane %v720, 1
    %v752 = vrot.slane %v722, 1
    %v753 = vrot.slane %v724, 1
    %v754 = vrot.slane %v726, 1
    %v755 = vrot.slane %v728, 1
    %vm756 = vcmp.lt.s32.totalorder %v87, 7
    %v757 = vsel %vm756, %v754, %v755
    %v758 = vsel %vm756, %v753, %v754
    %v759 = vsel %vm756, %v752, %v753
    %v760 = vsel %vm756, %v751, %v752
    %v761 = vsel %vm756, %v750, %v751
    %v762 = vsel %vm756, %v749, %v750
    %v763 = vsel %vm756, %v748, %v749
    %v764 = vsel %vm756, %v747, %v748
    %v765 = vsel %vm756, %v755, %v747
    %vm766 = vcmp.gt.s32.totalorder %v764, 0
    %vm767 = vcmp.gt.s32.totalorder %v763, 0
    %vm768 = vcmp.gt.s32.totalorder %v762, 0
    %vm769 = vcmp.gt.s32.totalorder %v761, 0
    %vm770 = vcmp.gt.s32.totalorder %v760, 0
    %vm771 = vcmp.gt.s32.totalorder %v759, 0
    %vm772 = vcmp.gt.s32.totalorder %v758, 0
    %vm773 = vcmp.gt.s32.totalorder %v757, 0
    %vm774 = vcmp.gt.s32.totalorder %v765, 0
    %v775 = vsel %vm766, 0, 9218
    %v776 = vsel %vm767, 0, 9218
    %v777 = vsel %vm768, 0, 9218
    %v778 = vsel %vm769, 0, 9218
    %v779 = vsel %vm770, 0, 9218
    %v780 = vsel %vm771, 0, 9218
    %v781 = vsel %vm772, 0, 9218
    %v782 = vsel %vm773, 0, 9218
    %v783 = vsel %vm774, 0, 9218
    %v784 = vrot.slane %v712, 7
    %v785 = vrot.slane %v714, 7
    %v786 = vrot.slane %v716, 7
    %v787 = vrot.slane %v718, 7
    %v788 = vrot.slane %v720, 7
    %v789 = vrot.slane %v722, 7
    %v790 = vrot.slane %v724, 7
    %v791 = vrot.slane %v726, 7
    %v792 = vrot.slane %v728, 7
    %v793 = vsel %vm701, %v791, %v792
    %v794 = vsel %vm701, %v790, %v791
    %v795 = vsel %vm701, %v789, %v790
    %v796 = vsel %vm701, %v788, %v789
    %v797 = vsel %vm701, %v787, %v788
    %v798 = vsel %vm701, %v786, %v787
    %v799 = vsel %vm701, %v785, %v786
    %v800 = vsel %vm701, %v784, %v785
    %v801 = vsel %vm701, %v792, %v784
    %vm802 = vcmp.lt.s32.totalorder %v712, %v801
    %v803 = vsel %vm802, %v712, %v801
    %vm804 = vcmp.lt.s32.totalorder %v714, %v800
    %v805 = vsel %vm804, %v714, %v800
    %vm806 = vcmp.lt.s32.totalorder %v716, %v799
    %v807 = vsel %vm806, %v716, %v799
    %vm808 = vcmp.lt.s32.totalorder %v718, %v798
    %v809 = vsel %vm808, %v718, %v798
    %vm810 = vcmp.lt.s32.totalorder %v720, %v797
    %v811 = vsel %vm810, %v720, %v797
    %vm812 = vcmp.lt.s32.totalorder %v722, %v796
    %v813 = vsel %vm812, %v722, %v796
    %vm814 = vcmp.lt.s32.totalorder %v724, %v795
    %v815 = vsel %vm814, %v724, %v795
    %vm816 = vcmp.lt.s32.totalorder %v726, %v794
    %v817 = vsel %vm816, %v726, %v794
    %vm818 = vcmp.lt.s32.totalorder %v728, %v793
    %v819 = vsel %vm818, %v728, %v793
    %vm820 = vcmp.gt.s32.totalorder %v803, 0
    %vm821 = vcmp.gt.s32.totalorder %v805, 0
    %vm822 = vcmp.gt.s32.totalorder %v807, 0
    %vm823 = vcmp.gt.s32.totalorder %v809, 0
    %vm824 = vcmp.gt.s32.totalorder %v811, 0
    %vm825 = vcmp.gt.s32.totalorder %v813, 0
    %vm826 = vcmp.gt.s32.totalorder %v815, 0
    %vm827 = vcmp.gt.s32.totalorder %v817, 0
    %vm828 = vcmp.gt.s32.totalorder %v819, 0
    %v829 = vsel %vm820, 0, 9218
    %v830 = vsel %vm821, 0, 9218
    %v831 = vsel %vm822, 0, 9218
    %v832 = vsel %vm823, 0, 9218
    %v833 = vsel %vm824, 0, 9218
    %v834 = vsel %vm825, 0, 9218
    %v835 = vsel %vm826, 0, 9218
    %v836 = vsel %vm827, 0, 9218
    %v837 = vsel %vm828, 0, 9218
    %v838 = vrot.slane %v803, 2
    %v839 = vrot.slane %v805, 2
    %v840 = vrot.slane %v807, 2
    %v841 = vrot.slane %v809, 2
    %v842 = vrot.slane %v811, 2
    %v843 = vrot.slane %v813, 2
    %v844 = vrot.slane %v815, 2
    %v845 = vrot.slane %v817, 2
    %v846 = vrot.slane %v819, 2
    %vm847 = vcmp.lt.s32.totalorder %v87, 6
    %v848 = vsel %vm847, %v845, %v846
    %v849 = vsel %vm847, %v844, %v845
    %v850 = vsel %vm847, %v843, %v844
    %v851 = vsel %vm847, %v842, %v843
    %v852 = vsel %vm847, %v841, %v842
    %v853 = vsel %vm847, %v840, %v841
    %v854 = vsel %vm847, %v839, %v840
    %v855 = vsel %vm847, %v838, %v839
    %v856 = vsel %vm847, %v846, %v838
    %vm857 = vcmp.gt.s32.totalorder %v855, 0
    %vm858 = vcmp.gt.s32.totalorder %v854, 0
    %vm859 = vcmp.gt.s32.totalorder %v853, 0
    %vm860 = vcmp.gt.s32.totalorder %v852, 0
    %vm861 = vcmp.gt.s32.totalorder %v851, 0
    %vm862 = vcmp.gt.s32.totalorder %v850, 0
    %vm863 = vcmp.gt.s32.totalorder %v849, 0
    %vm864 = vcmp.gt.s32.totalorder %v848, 0
    %vm865 = vcmp.gt.s32.totalorder %v856, 0
    %v866 = vsel %vm857, 0, 9218
    %v867 = vsel %vm858, 0, 9218
    %v868 = vsel %vm859, 0, 9218
    %v869 = vsel %vm860, 0, 9218
    %v870 = vsel %vm861, 0, 9218
    %v871 = vsel %vm862, 0, 9218
    %v872 = vsel %vm863, 0, 9218
    %v873 = vsel %vm864, 0, 9218
    %v874 = vsel %vm865, 0, 9218
    %v875 = vrot.slane %v803, 6
    %v876 = vrot.slane %v805, 6
    %v877 = vrot.slane %v807, 6
    %v878 = vrot.slane %v809, 6
    %v879 = vrot.slane %v811, 6
    %v880 = vrot.slane %v813, 6
    %v881 = vrot.slane %v815, 6
    %v882 = vrot.slane %v817, 6
    %v883 = vrot.slane %v819, 6
    %vm884 = vcmp.lt.s32.totalorder %v87, 2
    %v885 = vsel %vm884, %v882, %v883
    %v886 = vsel %vm884, %v881, %v882
    %v887 = vsel %vm884, %v880, %v881
    %v888 = vsel %vm884, %v879, %v880
    %v889 = vsel %vm884, %v878, %v879
    %v890 = vsel %vm884, %v877, %v878
    %v891 = vsel %vm884, %v876, %v877
    %v892 = vsel %vm884, %v875, %v876
    %v893 = vsel %vm884, %v883, %v875
    %vm894 = vcmp.lt.s32.totalorder %v803, %v893
    %v895 = vsel %vm894, %v803, %v893
    %vm896 = vcmp.lt.s32.totalorder %v805, %v892
    %v897 = vsel %vm896, %v805, %v892
    %vm898 = vcmp.lt.s32.totalorder %v807, %v891
    %v899 = vsel %vm898, %v807, %v891
    %vm900 = vcmp.lt.s32.totalorder %v809, %v890
    %v901 = vsel %vm900, %v809, %v890
    %vm902 = vcmp.lt.s32.totalorder %v811, %v889
    %v903 = vsel %vm902, %v811, %v889
    %vm904 = vcmp.lt.s32.totalorder %v813, %v888
    %v905 = vsel %vm904, %v813, %v888
    %vm906 = vcmp.lt.s32.totalorder %v815, %v887
    %v907 = vsel %vm906, %v815, %v887
    %vm908 = vcmp.lt.s32.totalorder %v817, %v886
    %v909 = vsel %vm908, %v817, %v886
    %vm910 = vcmp.lt.s32.totalorder %v819, %v885
    %v911 = vsel %vm910, %v819, %v885
    %vm912 = vcmp.gt.s32.totalorder %v895, 0
    %vm913 = vcmp.gt.s32.totalorder %v897, 0
    %vm914 = vcmp.gt.s32.totalorder %v899, 0
    %vm915 = vcmp.gt.s32.totalorder %v901, 0
    %vm916 = vcmp.gt.s32.totalorder %v903, 0
    %vm917 = vcmp.gt.s32.totalorder %v905, 0
    %vm918 = vcmp.gt.s32.totalorder %v907, 0
    %vm919 = vcmp.gt.s32.totalorder %v909, 0
    %vm920 = vcmp.gt.s32.totalorder %v911, 0
    %v921 = vsel %vm912, 0, 9218
    %v922 = vsel %vm913, 0, 9218
    %v923 = vsel %vm914, 0, 9218
    %v924 = vsel %vm915, 0, 9218
    %v925 = vsel %vm916, 0, 9218
    %v926 = vsel %vm917, 0, 9218
    %v927 = vsel %vm918, 0, 9218
    %v928 = vsel %vm919, 0, 9218
    %v929 = vsel %vm920, 0, 9218
    %v930 = vrot.slane %v895, 4
    %v931 = vrot.slane %v897, 4
    %v932 = vrot.slane %v899, 4
    %v933 = vrot.slane %v901, 4
    %v934 = vrot.slane %v903, 4
    %v935 = vrot.slane %v905, 4
    %v936 = vrot.slane %v907, 4
    %v937 = vrot.slane %v909, 4
    %v938 = vrot.slane %v911, 4
    %vm939 = vcmp.lt.s32.totalorder %v87, 4
    %v940 = vsel %vm939, %v937, %v938
    %v941 = vsel %vm939, %v936, %v937
    %v942 = vsel %vm939, %v935, %v936
    %v943 = vsel %vm939, %v934, %v935
    %v944 = vsel %vm939, %v933, %v934
    %v945 = vsel %vm939, %v932, %v933
    %v946 = vsel %vm939, %v931, %v932
    %v947 = vsel %vm939, %v930, %v931
    %v948 = vsel %vm939, %v938, %v930
    %vm949 = vcmp.gt.s32.totalorder %v947, 0
    %vm950 = vcmp.gt.s32.totalorder %v946, 0
    %vm951 = vcmp.gt.s32.totalorder %v945, 0
    %vm952 = vcmp.gt.s32.totalorder %v944, 0
    %vm953 = vcmp.gt.s32.totalorder %v943, 0
    %vm954 = vcmp.gt.s32.totalorder %v942, 0
    %vm955 = vcmp.gt.s32.totalorder %v941, 0
    %vm956 = vcmp.gt.s32.totalorder %v940, 0
    %vm957 = vcmp.gt.s32.totalorder %v948, 0
    %v958 = vsel %vm949, 0, 9218
    %v959 = vsel %vm950, 0, 9218
    %v960 = vsel %vm951, 0, 9218
    %v961 = vsel %vm952, 0, 9218
    %v962 = vsel %vm953, 0, 9218
    %v963 = vsel %vm954, 0, 9218
    %v964 = vsel %vm955, 0, 9218
    %v965 = vsel %vm956, 0, 9218
    %v966 = vsel %vm957, 0, 9218
    %vm967 = vcmp.lt.s32.totalorder %v895, %v948
    %v968 = vsel %vm967, %v895, %v948
    %vm969 = vcmp.lt.s32.totalorder %v897, %v947
    %v970 = vsel %vm969, %v897, %v947
    %vm971 = vcmp.lt.s32.totalorder %v899, %v946
    %v972 = vsel %vm971, %v899, %v946
    %vm973 = vcmp.lt.s32.totalorder %v901, %v945
    %v974 = vsel %vm973, %v901, %v945
    %vm975 = vcmp.lt.s32.totalorder %v903, %v944
    %v976 = vsel %vm975, %v903, %v944
    %vm977 = vcmp.lt.s32.totalorder %v905, %v943
    %v978 = vsel %vm977, %v905, %v943
    %vm979 = vcmp.lt.s32.totalorder %v907, %v942
    %v980 = vsel %vm979, %v907, %v942
    %vm981 = vcmp.lt.s32.totalorder %v909, %v941
    %v982 = vsel %vm981, %v909, %v941
    %vm983 = vcmp.lt.s32.totalorder %v911, %v940
    %v984 = vsel %vm983, %v911, %v940
    %vm985 = vcmp.gt.s32.totalorder %v968, 0
    %vm986 = vcmp.gt.s32.totalorder %v970, 0
    %vm987 = vcmp.gt.s32.totalorder %v972, 0
    %vm988 = vcmp.gt.s32.totalorder %v974, 0
    %vm989 = vcmp.gt.s32.totalorder %v976, 0
    %vm990 = vcmp.gt.s32.totalorder %v978, 0
    %vm991 = vcmp.gt.s32.totalorder %v980, 0
    %vm992 = vcmp.gt.s32.totalorder %v982, 0
    %vm993 = vcmp.gt.s32.totalorder %v984, 0
    %v994 = vsel %vm985, 0, 9218
    %v995 = vsel %vm986, 0, 9218
    %v996 = vsel %vm987, 0, 9218
    %v997 = vsel %vm988, 0, 9218
    %v998 = vsel %vm989, 0, 9218
    %v999 = vsel %vm990, 0, 9218
    %v1000 = vsel %vm991, 0, 9218
    %v1001 = vsel %vm992, 0, 9218
    %v1002 = vsel %vm993, 0, 9218
    %vm1003 = vcmp.lt.s32.totalorder %v968, %v984
    %v1004 = vsel %vm1003, %v968, %v984
    %vm1005 = vcmp.lt.s32.totalorder %v970, %v968
    %v1006 = vsel %vm1005, %v970, %v968
    %vm1007 = vcmp.lt.s32.totalorder %v972, %v970
    %v1008 = vsel %vm1007, %v972, %v970
    %vm1009 = vcmp.lt.s32.totalorder %v974, %v972
    %v1010 = vsel %vm1009, %v974, %v972
    %vm1011 = vcmp.lt.s32.totalorder %v976, %v974
    %v1012 = vsel %vm1011, %v976, %v974
    %vm1013 = vcmp.lt.s32.totalorder %v978, %v976
    %v1014 = vsel %vm1013, %v978, %v976
    %vm1015 = vcmp.lt.s32.totalorder %v980, %v978
    %v1016 = vsel %vm1015, %v980, %v978
    %vm1017 = vcmp.lt.s32.totalorder %v982, %v980
    %v1018 = vsel %vm1017, %v982, %v980
    %vm1019 = vcmp.lt.s32.totalorder %v984, %v982
    %v1020 = vsel %vm1019, %v984, %v982
    %vm1021 = vcmp.gt.s32.totalorder %v1004, 0
    %vm1022 = vcmp.gt.s32.totalorder %v1006, 0
    %vm1023 = vcmp.gt.s32.totalorder %v1008, 0
    %vm1024 = vcmp.gt.s32.totalorder %v1010, 0
    %vm1025 = vcmp.gt.s32.totalorder %v1012, 0
    %vm1026 = vcmp.gt.s32.totalorder %v1014, 0
    %vm1027 = vcmp.gt.s32.totalorder %v1016, 0
    %vm1028 = vcmp.gt.s32.totalorder %v1018, 0
    %vm1029 = vcmp.gt.s32.totalorder %v1020, 0
    %v1030 = vsel %vm1021, 0, 9218
    %v1031 = vsel %vm1022, 0, 9218
    %v1032 = vsel %vm1023, 0, 9218
    %v1033 = vsel %vm1024, 0, 9218
    %v1034 = vsel %vm1025, 0, 9218
    %v1035 = vsel %vm1026, 0, 9218
    %v1036 = vsel %vm1027, 0, 9218
    %v1037 = vsel %vm1028, 0, 9218
    %v1038 = vsel %vm1029, 0, 9218
    %vm1039 = vcmp.lt.s32.totalorder %v1004, %v1018
    %v1040 = vsel %vm1039, %v1004, %v1018
    %vm1041 = vcmp.lt.s32.totalorder %v1006, %v1020
    %v1042 = vsel %vm1041, %v1006, %v1020
    %vm1043 = vcmp.lt.s32.totalorder %v1008, %v1004
    %v1044 = vsel %vm1043, %v1008, %v1004
    %vm1045 = vcmp.lt.s32.totalorder %v1010, %v1006
    %v1046 = vsel %vm1045, %v1010, %v1006
    %vm1047 = vcmp.lt.s32.totalorder %v1012, %v1008
    %v1048 = vsel %vm1047, %v1012, %v1008
    %vm1049 = vcmp.lt.s32.totalorder %v1014, %v1010
    %v1050 = vsel %vm1049, %v1014, %v1010
    %vm1051 = vcmp.lt.s32.totalorder %v1016, %v1012
    %v1052 = vsel %vm1051, %v1016, %v1012
    %vm1053 = vcmp.lt.s32.totalorder %v1018, %v1014
    %v1054 = vsel %vm1053, %v1018, %v1014
    %vm1055 = vcmp.lt.s32.totalorder %v1020, %v1016
    %v1056 = vsel %vm1055, %v1020, %v1016
    %vm1057 = vcmp.gt.s32.totalorder %v1040, 0
    %vm1058 = vcmp.gt.s32.totalorder %v1042, 0
    %vm1059 = vcmp.gt.s32.totalorder %v1044, 0
    %vm1060 = vcmp.gt.s32.totalorder %v1046, 0
    %vm1061 = vcmp.gt.s32.totalorder %v1048, 0
    %vm1062 = vcmp.gt.s32.totalorder %v1050, 0
    %vm1063 = vcmp.gt.s32.totalorder %v1052, 0
    %vm1064 = vcmp.gt.s32.totalorder %v1054, 0
    %vm1065 = vcmp.gt.s32.totalorder %v1056, 0
    %v1066 = vsel %vm1057, 0, 9218
    %v1067 = vsel %vm1058, 0, 9218
    %v1068 = vsel %vm1059, 0, 9218
    %v1069 = vsel %vm1060, 0, 9218
    %v1070 = vsel %vm1061, 0, 9218
    %v1071 = vsel %vm1062, 0, 9218
    %v1072 = vsel %vm1063, 0, 9218
    %v1073 = vsel %vm1064, 0, 9218
    %v1074 = vsel %vm1065, 0, 9218
    // While loop
    $region10: #{region_cluster_forward.1} parent=1 // loop_pre_header
      _
    $region11: #{region_cluster_forward.1} parent=1 // loop_header
      %s1076 = sphi 0, %s2267
      %s1077 = sphi 1, %s2266
      %v1078 = vphi %v134, %v2192
      %v1079 = vphi %v135, %v2194
      %v1080 = vphi %v136, %v2196
      %v1081 = vphi %v137, %v2198
      %v1082 = vphi %v138, %v2200
      %v1083 = vphi %v139, %v2202
      %v1084 = vphi %v140, %v2204
      %v1085 = vphi %v141, %v2206
      %v1086 = vphi %v142, %v2208
      %p1087 = scmp.gt.s32.totalorder %s1077, 0
      %p1088 = scmp.lt.s32.totalorder %s1076, 400
      %p1089 = pnand %p1087, %p1088
      %p1090 = pneg %p1089
    $region12: #{region_cluster_forward.1} parent=1 // loop_header_branch
      %1092 = sbr.rel (%p1089) target = $region16
    $region13: #{region_cluster_forward.1} parent=1 // loop_body
      %1093 = vrot.lane.b32.xlu0 %v1078, 1
      %v1094 = vpop.permute.xlu0 %1093
      %1095 = vrot.lane.b32.xlu0 %v1079, 1
      %v1096 = vpop.permute.xlu0 %1095
      %1097 = vrot.lane.b32.xlu0 %v1080, 1
      %v1098 = vpop.permute.xlu0 %1097
      %1099 = vrot.lane.b32.xlu0 %v1081, 1
      %v1100 = vpop.permute.xlu0 %1099
      %1101 = vrot.lane.b32.xlu0 %v1082, 1
      %v1102 = vpop.permute.xlu0 %1101
      %1103 = vrot.lane.b32.xlu0 %v1083, 1
      %v1104 = vpop.permute.xlu0 %1103
      %1105 = vrot.lane.b32.xlu0 %v1084, 1
      %v1106 = vpop.permute.xlu0 %1105
      %1107 = vrot.lane.b32.xlu0 %v1085, 1
      %v1108 = vpop.permute.xlu0 %1107
      %1109 = vrot.lane.b32.xlu0 %v1086, 1
      %v1110 = vpop.permute.xlu0 %1109
      %1111 = vrot.lane.b32.xlu0 %v1078, 127
      %v1112 = vpop.permute.xlu0 %1111
      %1113 = vrot.lane.b32.xlu0 %v1079, 127
      %v1114 = vpop.permute.xlu0 %1113
      %1115 = vrot.lane.b32.xlu0 %v1080, 127
      %v1116 = vpop.permute.xlu0 %1115
      %1117 = vrot.lane.b32.xlu0 %v1081, 127
      %v1118 = vpop.permute.xlu0 %1117
      %1119 = vrot.lane.b32.xlu0 %v1082, 127
      %v1120 = vpop.permute.xlu0 %1119
      %1121 = vrot.lane.b32.xlu0 %v1083, 127
      %v1122 = vpop.permute.xlu0 %1121
      %1123 = vrot.lane.b32.xlu0 %v1084, 127
      %v1124 = vpop.permute.xlu0 %1123
      %1125 = vrot.lane.b32.xlu0 %v1085, 127
      %v1126 = vpop.permute.xlu0 %1125
      %1127 = vrot.lane.b32.xlu0 %v1086, 127
      %v1128 = vpop.permute.xlu0 %1127
      %vm1129 = vcmp.lt.s32.totalorder %v1094, %v1112
      %v1130 = vsel %vm1129, %v1094, %v1112
      %vm1131 = vcmp.lt.s32.totalorder %v1096, %v1114
      %v1132 = vsel %vm1131, %v1096, %v1114
      %vm1133 = vcmp.lt.s32.totalorder %v1098, %v1116
      %v1134 = vsel %vm1133, %v1098, %v1116
      %vm1135 = vcmp.lt.s32.totalorder %v1100, %v1118
      %v1136 = vsel %vm1135, %v1100, %v1118
      %vm1137 = vcmp.lt.s32.totalorder %v1102, %v1120
      %v1138 = vsel %vm1137, %v1102, %v1120
      %vm1139 = vcmp.lt.s32.totalorder %v1104, %v1122
      %v1140 = vsel %vm1139, %v1104, %v1122
      %vm1141 = vcmp.lt.s32.totalorder %v1106, %v1124
      %v1142 = vsel %vm1141, %v1106, %v1124
      %vm1143 = vcmp.lt.s32.totalorder %v1108, %v1126
      %v1144 = vsel %vm1143, %v1108, %v1126
      %vm1145 = vcmp.lt.s32.totalorder %v1110, %v1128
      %v1146 = vsel %vm1145, %v1110, %v1128
      %vm1147 = vcmp.lt.s32.totalorder %v1078, %v1130
      %v1148 = vsel %vm1147, %v1078, %v1130
      %vm1149 = vcmp.lt.s32.totalorder %v1079, %v1132
      %v1150 = vsel %vm1149, %v1079, %v1132
      %vm1151 = vcmp.lt.s32.totalorder %v1080, %v1134
      %v1152 = vsel %vm1151, %v1080, %v1134
      %vm1153 = vcmp.lt.s32.totalorder %v1081, %v1136
      %v1154 = vsel %vm1153, %v1081, %v1136
      %vm1155 = vcmp.lt.s32.totalorder %v1082, %v1138
      %v1156 = vsel %vm1155, %v1082, %v1138
      %vm1157 = vcmp.lt.s32.totalorder %v1083, %v1140
      %v1158 = vsel %vm1157, %v1083, %v1140
      %vm1159 = vcmp.lt.s32.totalorder %v1084, %v1142
      %v1160 = vsel %vm1159, %v1084, %v1142
      %vm1161 = vcmp.lt.s32.totalorder %v1085, %v1144
      %v1162 = vsel %vm1161, %v1085, %v1144
      %vm1163 = vcmp.lt.s32.totalorder %v1086, %v1146
      %v1164 = vsel %vm1163, %v1086, %v1146
      %v1165 = vrot.slane %v1148, 7
      %v1166 = vrot.slane %v1150, 7
      %v1167 = vrot.slane %v1152, 7
      %v1168 = vrot.slane %v1154, 7
      %v1169 = vrot.slane %v1156, 7
      %v1170 = vrot.slane %v1158, 7
      %v1171 = vrot.slane %v1160, 7
      %v1172 = vrot.slane %v1162, 7
      %v1173 = vrot.slane %v1164, 7
      %v1174 = vsel %vm701, %v1172, %v1173
      %v1175 = vsel %vm701, %v1171, %v1172
      %v1176 = vsel %vm701, %v1170, %v1171
      %v1177 = vsel %vm701, %v1169, %v1170
      %v1178 = vsel %vm701, %v1168, %v1169
      %v1179 = vsel %vm701, %v1167, %v1168
      %v1180 = vsel %vm701, %v1166, %v1167
      %v1181 = vsel %vm701, %v1165, %v1166
      %v1182 = vsel %vm701, %v1173, %v1165
      %v1183 = vrot.slane %v1148, 1
      %v1184 = vrot.slane %v1150, 1
      %v1185 = vrot.slane %v1152, 1
      %v1186 = vrot.slane %v1154, 1
      %v1187 = vrot.slane %v1156, 1
      %v1188 = vrot.slane %v1158, 1
      %v1189 = vrot.slane %v1160, 1
      %v1190 = vrot.slane %v1162, 1
      %v1191 = vrot.slane %v1164, 1
      %v1192 = vsel %vm756, %v1190, %v1191
      %v1193 = vsel %vm756, %v1189, %v1190
      %v1194 = vsel %vm756, %v1188, %v1189
      %v1195 = vsel %vm756, %v1187, %v1188
      %v1196 = vsel %vm756, %v1186, %v1187
      %v1197 = vsel %vm756, %v1185, %v1186
      %v1198 = vsel %vm756, %v1184, %v1185
      %v1199 = vsel %vm756, %v1183, %v1184
      %v1200 = vsel %vm756, %v1191, %v1183
      %vm1201 = vcmp.lt.s32.totalorder %v1182, %v1199
      %v1202 = vsel %vm1201, %v1182, %v1199
      %vm1203 = vcmp.lt.s32.totalorder %v1181, %v1198
      %v1204 = vsel %vm1203, %v1181, %v1198
      %vm1205 = vcmp.lt.s32.totalorder %v1180, %v1197
      %v1206 = vsel %vm1205, %v1180, %v1197
      %vm1207 = vcmp.lt.s32.totalorder %v1179, %v1196
      %v1208 = vsel %vm1207, %v1179, %v1196
      %vm1209 = vcmp.lt.s32.totalorder %v1178, %v1195
      %v1210 = vsel %vm1209, %v1178, %v1195
      %vm1211 = vcmp.lt.s32.totalorder %v1177, %v1194
      %v1212 = vsel %vm1211, %v1177, %v1194
      %vm1213 = vcmp.lt.s32.totalorder %v1176, %v1193
      %v1214 = vsel %vm1213, %v1176, %v1193
      %vm1215 = vcmp.lt.s32.totalorder %v1175, %v1192
      %v1216 = vsel %vm1215, %v1175, %v1192
      %vm1217 = vcmp.lt.s32.totalorder %v1174, %v1200
      %v1218 = vsel %vm1217, %v1174, %v1200
      %vm1219 = vcmp.lt.s32.totalorder %v1148, %v1202
      %v1220 = vsel %vm1219, %v1148, %v1202
      %vm1221 = vcmp.lt.s32.totalorder %v1150, %v1204
      %v1222 = vsel %vm1221, %v1150, %v1204
      %vm1223 = vcmp.lt.s32.totalorder %v1152, %v1206
      %v1224 = vsel %vm1223, %v1152, %v1206
      %vm1225 = vcmp.lt.s32.totalorder %v1154, %v1208
      %v1226 = vsel %vm1225, %v1154, %v1208
      %vm1227 = vcmp.lt.s32.totalorder %v1156, %v1210
      %v1228 = vsel %vm1227, %v1156, %v1210
      %vm1229 = vcmp.lt.s32.totalorder %v1158, %v1212
      %v1230 = vsel %vm1229, %v1158, %v1212
      %vm1231 = vcmp.lt.s32.totalorder %v1160, %v1214
      %v1232 = vsel %vm1231, %v1160, %v1214
      %vm1233 = vcmp.lt.s32.totalorder %v1162, %v1216
      %v1234 = vsel %vm1233, %v1162, %v1216
      %vm1235 = vcmp.lt.s32.totalorder %v1164, %v1218
      %v1236 = vsel %vm1235, %v1164, %v1218
      %vm1237 = vcmp.gt.s32.totalorder %v1220, %v143
      %v1238 = vsel %vm1237, %v1220, %v143
      %vm1239 = vcmp.gt.s32.totalorder %v1222, %v144
      %v1240 = vsel %vm1239, %v1222, %v144
      %vm1241 = vcmp.gt.s32.totalorder %v1224, %v145
      %v1242 = vsel %vm1241, %v1224, %v145
      %vm1243 = vcmp.gt.s32.totalorder %v1226, %v146
      %v1244 = vsel %vm1243, %v1226, %v146
      %vm1245 = vcmp.gt.s32.totalorder %v1228, %v147
      %v1246 = vsel %vm1245, %v1228, %v147
      %vm1247 = vcmp.gt.s32.totalorder %v1230, %v148
      %v1248 = vsel %vm1247, %v1230, %v148
      %vm1249 = vcmp.gt.s32.totalorder %v1232, %v149
      %v1250 = vsel %vm1249, %v1232, %v149
      %vm1251 = vcmp.gt.s32.totalorder %v1234, %v150
      %v1252 = vsel %vm1251, %v1234, %v150
      %vm1253 = vcmp.gt.s32.totalorder %v1236, %v151
      %v1254 = vsel %vm1253, %v1236, %v151
      %1255 = vrot.lane.b32.xlu0 %v1238, 1
      %v1256 = vpop.permute.xlu0 %1255
      %1257 = vrot.lane.b32.xlu0 %v1240, 1
      %v1258 = vpop.permute.xlu0 %1257
      %1259 = vrot.lane.b32.xlu0 %v1242, 1
      %v1260 = vpop.permute.xlu0 %1259
      %1261 = vrot.lane.b32.xlu0 %v1244, 1
      %v1262 = vpop.permute.xlu0 %1261
      %1263 = vrot.lane.b32.xlu0 %v1246, 1
      %v1264 = vpop.permute.xlu0 %1263
      %1265 = vrot.lane.b32.xlu0 %v1248, 1
      %v1266 = vpop.permute.xlu0 %1265
      %1267 = vrot.lane.b32.xlu0 %v1250, 1
      %v1268 = vpop.permute.xlu0 %1267
      %1269 = vrot.lane.b32.xlu0 %v1252, 1
      %v1270 = vpop.permute.xlu0 %1269
      %1271 = vrot.lane.b32.xlu0 %v1254, 1
      %v1272 = vpop.permute.xlu0 %1271
      %1273 = vrot.lane.b32.xlu0 %v1238, 127
      %v1274 = vpop.permute.xlu0 %1273
      %1275 = vrot.lane.b32.xlu0 %v1240, 127
      %v1276 = vpop.permute.xlu0 %1275
      %1277 = vrot.lane.b32.xlu0 %v1242, 127
      %v1278 = vpop.permute.xlu0 %1277
      %1279 = vrot.lane.b32.xlu0 %v1244, 127
      %v1280 = vpop.permute.xlu0 %1279
      %1281 = vrot.lane.b32.xlu0 %v1246, 127
      %v1282 = vpop.permute.xlu0 %1281
      %1283 = vrot.lane.b32.xlu0 %v1248, 127
      %v1284 = vpop.permute.xlu0 %1283
      %1285 = vrot.lane.b32.xlu0 %v1250, 127
      %v1286 = vpop.permute.xlu0 %1285
      %1287 = vrot.lane.b32.xlu0 %v1252, 127
      %v1288 = vpop.permute.xlu0 %1287
      %1289 = vrot.lane.b32.xlu0 %v1254, 127
      %v1290 = vpop.permute.xlu0 %1289
      %v1291 = vadd.s32 %v1256, %v197
      %v1292 = vadd.s32 %v1258, %v198
      %v1293 = vadd.s32 %v1260, %v199
      %v1294 = vadd.s32 %v1262, %v200
      %v1295 = vadd.s32 %v1264, %v201
      %v1296 = vadd.s32 %v1266, %v202
      %v1297 = vadd.s32 %v1268, %v203
      %v1298 = vadd.s32 %v1270, %v204
      %v1299 = vadd.s32 %v1272, %v205
      %vm1300 = vcmp.lt.s32.totalorder %v1238, %v1291
      %v1301 = vsel %vm1300, %v1238, %v1291
      %vm1302 = vcmp.lt.s32.totalorder %v1240, %v1292
      %v1303 = vsel %vm1302, %v1240, %v1292
      %vm1304 = vcmp.lt.s32.totalorder %v1242, %v1293
      %v1305 = vsel %vm1304, %v1242, %v1293
      %vm1306 = vcmp.lt.s32.totalorder %v1244, %v1294
      %v1307 = vsel %vm1306, %v1244, %v1294
      %vm1308 = vcmp.lt.s32.totalorder %v1246, %v1295
      %v1309 = vsel %vm1308, %v1246, %v1295
      %vm1310 = vcmp.lt.s32.totalorder %v1248, %v1296
      %v1311 = vsel %vm1310, %v1248, %v1296
      %vm1312 = vcmp.lt.s32.totalorder %v1250, %v1297
      %v1313 = vsel %vm1312, %v1250, %v1297
      %vm1314 = vcmp.lt.s32.totalorder %v1252, %v1298
      %v1315 = vsel %vm1314, %v1252, %v1298
      %vm1316 = vcmp.lt.s32.totalorder %v1254, %v1299
      %v1317 = vsel %vm1316, %v1254, %v1299
      %v1318 = vadd.s32 %v1274, %v233
      %v1319 = vadd.s32 %v1276, %v234
      %v1320 = vadd.s32 %v1278, %v235
      %v1321 = vadd.s32 %v1280, %v236
      %v1322 = vadd.s32 %v1282, %v237
      %v1323 = vadd.s32 %v1284, %v238
      %v1324 = vadd.s32 %v1286, %v239
      %v1325 = vadd.s32 %v1288, %v240
      %v1326 = vadd.s32 %v1290, %v241
      %vm1327 = vcmp.lt.s32.totalorder %v1301, %v1318
      %v1328 = vsel %vm1327, %v1301, %v1318
      %vm1329 = vcmp.lt.s32.totalorder %v1303, %v1319
      %v1330 = vsel %vm1329, %v1303, %v1319
      %vm1331 = vcmp.lt.s32.totalorder %v1305, %v1320
      %v1332 = vsel %vm1331, %v1305, %v1320
      %vm1333 = vcmp.lt.s32.totalorder %v1307, %v1321
      %v1334 = vsel %vm1333, %v1307, %v1321
      %vm1335 = vcmp.lt.s32.totalorder %v1309, %v1322
      %v1336 = vsel %vm1335, %v1309, %v1322
      %vm1337 = vcmp.lt.s32.totalorder %v1311, %v1323
      %v1338 = vsel %vm1337, %v1311, %v1323
      %vm1339 = vcmp.lt.s32.totalorder %v1313, %v1324
      %v1340 = vsel %vm1339, %v1313, %v1324
      %vm1341 = vcmp.lt.s32.totalorder %v1315, %v1325
      %v1342 = vsel %vm1341, %v1315, %v1325
      %vm1343 = vcmp.lt.s32.totalorder %v1317, %v1326
      %v1344 = vsel %vm1343, %v1317, %v1326
      %1345 = vrot.lane.b32.xlu0 %v1328, 2
      %v1346 = vpop.permute.xlu0 %1345
      %1347 = vrot.lane.b32.xlu0 %v1330, 2
      %v1348 = vpop.permute.xlu0 %1347
      %1349 = vrot.lane.b32.xlu0 %v1332, 2
      %v1350 = vpop.permute.xlu0 %1349
      %1351 = vrot.lane.b32.xlu0 %v1334, 2
      %v1352 = vpop.permute.xlu0 %1351
      %1353 = vrot.lane.b32.xlu0 %v1336, 2
      %v1354 = vpop.permute.xlu0 %1353
      %1355 = vrot.lane.b32.xlu0 %v1338, 2
      %v1356 = vpop.permute.xlu0 %1355
      %1357 = vrot.lane.b32.xlu0 %v1340, 2
      %v1358 = vpop.permute.xlu0 %1357
      %1359 = vrot.lane.b32.xlu0 %v1342, 2
      %v1360 = vpop.permute.xlu0 %1359
      %1361 = vrot.lane.b32.xlu0 %v1344, 2
      %v1362 = vpop.permute.xlu0 %1361
      %1363 = vrot.lane.b32.xlu0 %v1328, 126
      %v1364 = vpop.permute.xlu0 %1363
      %1365 = vrot.lane.b32.xlu0 %v1330, 126
      %v1366 = vpop.permute.xlu0 %1365
      %1367 = vrot.lane.b32.xlu0 %v1332, 126
      %v1368 = vpop.permute.xlu0 %1367
      %1369 = vrot.lane.b32.xlu0 %v1334, 126
      %v1370 = vpop.permute.xlu0 %1369
      %1371 = vrot.lane.b32.xlu0 %v1336, 126
      %v1372 = vpop.permute.xlu0 %1371
      %1373 = vrot.lane.b32.xlu0 %v1338, 126
      %v1374 = vpop.permute.xlu0 %1373
      %1375 = vrot.lane.b32.xlu0 %v1340, 126
      %v1376 = vpop.permute.xlu0 %1375
      %1377 = vrot.lane.b32.xlu0 %v1342, 126
      %v1378 = vpop.permute.xlu0 %1377
      %1379 = vrot.lane.b32.xlu0 %v1344, 126
      %v1380 = vpop.permute.xlu0 %1379
      %v1381 = vadd.s32 %v1346, %v287
      %v1382 = vadd.s32 %v1348, %v288
      %v1383 = vadd.s32 %v1350, %v289
      %v1384 = vadd.s32 %v1352, %v290
      %v1385 = vadd.s32 %v1354, %v291
      %v1386 = vadd.s32 %v1356, %v292
      %v1387 = vadd.s32 %v1358, %v293
      %v1388 = vadd.s32 %v1360, %v294
      %v1389 = vadd.s32 %v1362, %v295
      %vm1390 = vcmp.lt.s32.totalorder %v1328, %v1381
      %v1391 = vsel %vm1390, %v1328, %v1381
      %vm1392 = vcmp.lt.s32.totalorder %v1330, %v1382
      %v1393 = vsel %vm1392, %v1330, %v1382
      %vm1394 = vcmp.lt.s32.totalorder %v1332, %v1383
      %v1395 = vsel %vm1394, %v1332, %v1383
      %vm1396 = vcmp.lt.s32.totalorder %v1334, %v1384
      %v1397 = vsel %vm1396, %v1334, %v1384
      %vm1398 = vcmp.lt.s32.totalorder %v1336, %v1385
      %v1399 = vsel %vm1398, %v1336, %v1385
      %vm1400 = vcmp.lt.s32.totalorder %v1338, %v1386
      %v1401 = vsel %vm1400, %v1338, %v1386
      %vm1402 = vcmp.lt.s32.totalorder %v1340, %v1387
      %v1403 = vsel %vm1402, %v1340, %v1387
      %vm1404 = vcmp.lt.s32.totalorder %v1342, %v1388
      %v1405 = vsel %vm1404, %v1342, %v1388
      %vm1406 = vcmp.lt.s32.totalorder %v1344, %v1389
      %v1407 = vsel %vm1406, %v1344, %v1389
      %v1408 = vadd.s32 %v1364, %v323
      %v1409 = vadd.s32 %v1366, %v324
      %v1410 = vadd.s32 %v1368, %v325
      %v1411 = vadd.s32 %v1370, %v326
      %v1412 = vadd.s32 %v1372, %v327
      %v1413 = vadd.s32 %v1374, %v328
      %v1414 = vadd.s32 %v1376, %v329
      %v1415 = vadd.s32 %v1378, %v330
      %v1416 = vadd.s32 %v1380, %v331
      %vm1417 = vcmp.lt.s32.totalorder %v1391, %v1408
      %v1418 = vsel %vm1417, %v1391, %v1408
      %vm1419 = vcmp.lt.s32.totalorder %v1393, %v1409
      %v1420 = vsel %vm1419, %v1393, %v1409
      %vm1421 = vcmp.lt.s32.totalorder %v1395, %v1410
      %v1422 = vsel %vm1421, %v1395, %v1410
      %vm1423 = vcmp.lt.s32.totalorder %v1397, %v1411
      %v1424 = vsel %vm1423, %v1397, %v1411
      %vm1425 = vcmp.lt.s32.totalorder %v1399, %v1412
      %v1426 = vsel %vm1425, %v1399, %v1412
      %vm1427 = vcmp.lt.s32.totalorder %v1401, %v1413
      %v1428 = vsel %vm1427, %v1401, %v1413
      %vm1429 = vcmp.lt.s32.totalorder %v1403, %v1414
      %v1430 = vsel %vm1429, %v1403, %v1414
      %vm1431 = vcmp.lt.s32.totalorder %v1405, %v1415
      %v1432 = vsel %vm1431, %v1405, %v1415
      %vm1433 = vcmp.lt.s32.totalorder %v1407, %v1416
      %v1434 = vsel %vm1433, %v1407, %v1416
      %1435 = vrot.lane.b32.xlu0 %v1418, 4
      %v1436 = vpop.permute.xlu0 %1435
      %1437 = vrot.lane.b32.xlu0 %v1420, 4
      %v1438 = vpop.permute.xlu0 %1437
      %1439 = vrot.lane.b32.xlu0 %v1422, 4
      %v1440 = vpop.permute.xlu0 %1439
      %1441 = vrot.lane.b32.xlu0 %v1424, 4
      %v1442 = vpop.permute.xlu0 %1441
      %1443 = vrot.lane.b32.xlu0 %v1426, 4
      %v1444 = vpop.permute.xlu0 %1443
      %1445 = vrot.lane.b32.xlu0 %v1428, 4
      %v1446 = vpop.permute.xlu0 %1445
      %1447 = vrot.lane.b32.xlu0 %v1430, 4
      %v1448 = vpop.permute.xlu0 %1447
      %1449 = vrot.lane.b32.xlu0 %v1432, 4
      %v1450 = vpop.permute.xlu0 %1449
      %1451 = vrot.lane.b32.xlu0 %v1434, 4
      %v1452 = vpop.permute.xlu0 %1451
      %1453 = vrot.lane.b32.xlu0 %v1418, 124
      %v1454 = vpop.permute.xlu0 %1453
      %1455 = vrot.lane.b32.xlu0 %v1420, 124
      %v1456 = vpop.permute.xlu0 %1455
      %1457 = vrot.lane.b32.xlu0 %v1422, 124
      %v1458 = vpop.permute.xlu0 %1457
      %1459 = vrot.lane.b32.xlu0 %v1424, 124
      %v1460 = vpop.permute.xlu0 %1459
      %1461 = vrot.lane.b32.xlu0 %v1426, 124
      %v1462 = vpop.permute.xlu0 %1461
      %1463 = vrot.lane.b32.xlu0 %v1428, 124
      %v1464 = vpop.permute.xlu0 %1463
      %1465 = vrot.lane.b32.xlu0 %v1430, 124
      %v1466 = vpop.permute.xlu0 %1465
      %1467 = vrot.lane.b32.xlu0 %v1432, 124
      %v1468 = vpop.permute.xlu0 %1467
      %1469 = vrot.lane.b32.xlu0 %v1434, 124
      %v1470 = vpop.permute.xlu0 %1469
      %v1471 = vadd.s32 %v1436, %v377
      %v1472 = vadd.s32 %v1438, %v378
      %v1473 = vadd.s32 %v1440, %v379
      %v1474 = vadd.s32 %v1442, %v380
      %v1475 = vadd.s32 %v1444, %v381
      %v1476 = vadd.s32 %v1446, %v382
      %v1477 = vadd.s32 %v1448, %v383
      %v1478 = vadd.s32 %v1450, %v384
      %v1479 = vadd.s32 %v1452, %v385
      %vm1480 = vcmp.lt.s32.totalorder %v1418, %v1471
      %v1481 = vsel %vm1480, %v1418, %v1471
      %vm1482 = vcmp.lt.s32.totalorder %v1420, %v1472
      %v1483 = vsel %vm1482, %v1420, %v1472
      %vm1484 = vcmp.lt.s32.totalorder %v1422, %v1473
      %v1485 = vsel %vm1484, %v1422, %v1473
      %vm1486 = vcmp.lt.s32.totalorder %v1424, %v1474
      %v1487 = vsel %vm1486, %v1424, %v1474
      %vm1488 = vcmp.lt.s32.totalorder %v1426, %v1475
      %v1489 = vsel %vm1488, %v1426, %v1475
      %vm1490 = vcmp.lt.s32.totalorder %v1428, %v1476
      %v1491 = vsel %vm1490, %v1428, %v1476
      %vm1492 = vcmp.lt.s32.totalorder %v1430, %v1477
      %v1493 = vsel %vm1492, %v1430, %v1477
      %vm1494 = vcmp.lt.s32.totalorder %v1432, %v1478
      %v1495 = vsel %vm1494, %v1432, %v1478
      %vm1496 = vcmp.lt.s32.totalorder %v1434, %v1479
      %v1497 = vsel %vm1496, %v1434, %v1479
      %v1498 = vadd.s32 %v1454, %v413
      %v1499 = vadd.s32 %v1456, %v414
      %v1500 = vadd.s32 %v1458, %v415
      %v1501 = vadd.s32 %v1460, %v416
      %v1502 = vadd.s32 %v1462, %v417
      %v1503 = vadd.s32 %v1464, %v418
      %v1504 = vadd.s32 %v1466, %v419
      %v1505 = vadd.s32 %v1468, %v420
      %v1506 = vadd.s32 %v1470, %v421
      %vm1507 = vcmp.lt.s32.totalorder %v1481, %v1498
      %v1508 = vsel %vm1507, %v1481, %v1498
      %vm1509 = vcmp.lt.s32.totalorder %v1483, %v1499
      %v1510 = vsel %vm1509, %v1483, %v1499
      %vm1511 = vcmp.lt.s32.totalorder %v1485, %v1500
      %v1512 = vsel %vm1511, %v1485, %v1500
      %vm1513 = vcmp.lt.s32.totalorder %v1487, %v1501
      %v1514 = vsel %vm1513, %v1487, %v1501
      %vm1515 = vcmp.lt.s32.totalorder %v1489, %v1502
      %v1516 = vsel %vm1515, %v1489, %v1502
      %vm1517 = vcmp.lt.s32.totalorder %v1491, %v1503
      %v1518 = vsel %vm1517, %v1491, %v1503
      %vm1519 = vcmp.lt.s32.totalorder %v1493, %v1504
      %v1520 = vsel %vm1519, %v1493, %v1504
      %vm1521 = vcmp.lt.s32.totalorder %v1495, %v1505
      %v1522 = vsel %vm1521, %v1495, %v1505
      %vm1523 = vcmp.lt.s32.totalorder %v1497, %v1506
      %v1524 = vsel %vm1523, %v1497, %v1506
      %1525 = vrot.lane.b32.xlu0 %v1508, 8
      %v1526 = vpop.permute.xlu0 %1525
      %1527 = vrot.lane.b32.xlu0 %v1510, 8
      %v1528 = vpop.permute.xlu0 %1527
      %1529 = vrot.lane.b32.xlu0 %v1512, 8
      %v1530 = vpop.permute.xlu0 %1529
      %1531 = vrot.lane.b32.xlu0 %v1514, 8
      %v1532 = vpop.permute.xlu0 %1531
      %1533 = vrot.lane.b32.xlu0 %v1516, 8
      %v1534 = vpop.permute.xlu0 %1533
      %1535 = vrot.lane.b32.xlu0 %v1518, 8
      %v1536 = vpop.permute.xlu0 %1535
      %1537 = vrot.lane.b32.xlu0 %v1520, 8
      %v1538 = vpop.permute.xlu0 %1537
      %1539 = vrot.lane.b32.xlu0 %v1522, 8
      %v1540 = vpop.permute.xlu0 %1539
      %1541 = vrot.lane.b32.xlu0 %v1524, 8
      %v1542 = vpop.permute.xlu0 %1541
      %1543 = vrot.lane.b32.xlu0 %v1508, 120
      %v1544 = vpop.permute.xlu0 %1543
      %1545 = vrot.lane.b32.xlu0 %v1510, 120
      %v1546 = vpop.permute.xlu0 %1545
      %1547 = vrot.lane.b32.xlu0 %v1512, 120
      %v1548 = vpop.permute.xlu0 %1547
      %1549 = vrot.lane.b32.xlu0 %v1514, 120
      %v1550 = vpop.permute.xlu0 %1549
      %1551 = vrot.lane.b32.xlu0 %v1516, 120
      %v1552 = vpop.permute.xlu0 %1551
      %1553 = vrot.lane.b32.xlu0 %v1518, 120
      %v1554 = vpop.permute.xlu0 %1553
      %1555 = vrot.lane.b32.xlu0 %v1520, 120
      %v1556 = vpop.permute.xlu0 %1555
      %1557 = vrot.lane.b32.xlu0 %v1522, 120
      %v1558 = vpop.permute.xlu0 %1557
      %1559 = vrot.lane.b32.xlu0 %v1524, 120
      %v1560 = vpop.permute.xlu0 %1559
      %v1561 = vadd.s32 %v1526, %v467
      %v1562 = vadd.s32 %v1528, %v468
      %v1563 = vadd.s32 %v1530, %v469
      %v1564 = vadd.s32 %v1532, %v470
      %v1565 = vadd.s32 %v1534, %v471
      %v1566 = vadd.s32 %v1536, %v472
      %v1567 = vadd.s32 %v1538, %v473
      %v1568 = vadd.s32 %v1540, %v474
      %v1569 = vadd.s32 %v1542, %v475
      %vm1570 = vcmp.lt.s32.totalorder %v1508, %v1561
      %v1571 = vsel %vm1570, %v1508, %v1561
      %vm1572 = vcmp.lt.s32.totalorder %v1510, %v1562
      %v1573 = vsel %vm1572, %v1510, %v1562
      %vm1574 = vcmp.lt.s32.totalorder %v1512, %v1563
      %v1575 = vsel %vm1574, %v1512, %v1563
      %vm1576 = vcmp.lt.s32.totalorder %v1514, %v1564
      %v1577 = vsel %vm1576, %v1514, %v1564
      %vm1578 = vcmp.lt.s32.totalorder %v1516, %v1565
      %v1579 = vsel %vm1578, %v1516, %v1565
      %vm1580 = vcmp.lt.s32.totalorder %v1518, %v1566
      %v1581 = vsel %vm1580, %v1518, %v1566
      %vm1582 = vcmp.lt.s32.totalorder %v1520, %v1567
      %v1583 = vsel %vm1582, %v1520, %v1567
      %vm1584 = vcmp.lt.s32.totalorder %v1522, %v1568
      %v1585 = vsel %vm1584, %v1522, %v1568
      %vm1586 = vcmp.lt.s32.totalorder %v1524, %v1569
      %v1587 = vsel %vm1586, %v1524, %v1569
      %v1588 = vadd.s32 %v1544, %v503
      %v1589 = vadd.s32 %v1546, %v504
      %v1590 = vadd.s32 %v1548, %v505
      %v1591 = vadd.s32 %v1550, %v506
      %v1592 = vadd.s32 %v1552, %v507
      %v1593 = vadd.s32 %v1554, %v508
      %v1594 = vadd.s32 %v1556, %v509
      %v1595 = vadd.s32 %v1558, %v510
      %v1596 = vadd.s32 %v1560, %v511
      %vm1597 = vcmp.lt.s32.totalorder %v1571, %v1588
      %v1598 = vsel %vm1597, %v1571, %v1588
      %vm1599 = vcmp.lt.s32.totalorder %v1573, %v1589
      %v1600 = vsel %vm1599, %v1573, %v1589
      %vm1601 = vcmp.lt.s32.totalorder %v1575, %v1590
      %v1602 = vsel %vm1601, %v1575, %v1590
      %vm1603 = vcmp.lt.s32.totalorder %v1577, %v1591
      %v1604 = vsel %vm1603, %v1577, %v1591
      %vm1605 = vcmp.lt.s32.totalorder %v1579, %v1592
      %v1606 = vsel %vm1605, %v1579, %v1592
      %vm1607 = vcmp.lt.s32.totalorder %v1581, %v1593
      %v1608 = vsel %vm1607, %v1581, %v1593
      %vm1609 = vcmp.lt.s32.totalorder %v1583, %v1594
      %v1610 = vsel %vm1609, %v1583, %v1594
      %vm1611 = vcmp.lt.s32.totalorder %v1585, %v1595
      %v1612 = vsel %vm1611, %v1585, %v1595
      %vm1613 = vcmp.lt.s32.totalorder %v1587, %v1596
      %v1614 = vsel %vm1613, %v1587, %v1596
      %1615 = vrot.lane.b32.xlu0 %v1598, 16
      %v1616 = vpop.permute.xlu0 %1615
      %1617 = vrot.lane.b32.xlu0 %v1600, 16
      %v1618 = vpop.permute.xlu0 %1617
      %1619 = vrot.lane.b32.xlu0 %v1602, 16
      %v1620 = vpop.permute.xlu0 %1619
      %1621 = vrot.lane.b32.xlu0 %v1604, 16
      %v1622 = vpop.permute.xlu0 %1621
      %1623 = vrot.lane.b32.xlu0 %v1606, 16
      %v1624 = vpop.permute.xlu0 %1623
      %1625 = vrot.lane.b32.xlu0 %v1608, 16
      %v1626 = vpop.permute.xlu0 %1625
      %1627 = vrot.lane.b32.xlu0 %v1610, 16
      %v1628 = vpop.permute.xlu0 %1627
      %1629 = vrot.lane.b32.xlu0 %v1612, 16
      %v1630 = vpop.permute.xlu0 %1629
      %1631 = vrot.lane.b32.xlu0 %v1614, 16
      %v1632 = vpop.permute.xlu0 %1631
      %1633 = vrot.lane.b32.xlu0 %v1598, 112
      %v1634 = vpop.permute.xlu0 %1633
      %1635 = vrot.lane.b32.xlu0 %v1600, 112
      %v1636 = vpop.permute.xlu0 %1635
      %1637 = vrot.lane.b32.xlu0 %v1602, 112
      %v1638 = vpop.permute.xlu0 %1637
      %1639 = vrot.lane.b32.xlu0 %v1604, 112
      %v1640 = vpop.permute.xlu0 %1639
      %1641 = vrot.lane.b32.xlu0 %v1606, 112
      %v1642 = vpop.permute.xlu0 %1641
      %1643 = vrot.lane.b32.xlu0 %v1608, 112
      %v1644 = vpop.permute.xlu0 %1643
      %1645 = vrot.lane.b32.xlu0 %v1610, 112
      %v1646 = vpop.permute.xlu0 %1645
      %1647 = vrot.lane.b32.xlu0 %v1612, 112
      %v1648 = vpop.permute.xlu0 %1647
      %1649 = vrot.lane.b32.xlu0 %v1614, 112
      %v1650 = vpop.permute.xlu0 %1649
      %v1651 = vadd.s32 %v1616, %v557
      %v1652 = vadd.s32 %v1618, %v558
      %v1653 = vadd.s32 %v1620, %v559
      %v1654 = vadd.s32 %v1622, %v560
      %v1655 = vadd.s32 %v1624, %v561
      %v1656 = vadd.s32 %v1626, %v562
      %v1657 = vadd.s32 %v1628, %v563
      %v1658 = vadd.s32 %v1630, %v564
      %v1659 = vadd.s32 %v1632, %v565
      %vm1660 = vcmp.lt.s32.totalorder %v1598, %v1651
      %v1661 = vsel %vm1660, %v1598, %v1651
      %vm1662 = vcmp.lt.s32.totalorder %v1600, %v1652
      %v1663 = vsel %vm1662, %v1600, %v1652
      %vm1664 = vcmp.lt.s32.totalorder %v1602, %v1653
      %v1665 = vsel %vm1664, %v1602, %v1653
      %vm1666 = vcmp.lt.s32.totalorder %v1604, %v1654
      %v1667 = vsel %vm1666, %v1604, %v1654
      %vm1668 = vcmp.lt.s32.totalorder %v1606, %v1655
      %v1669 = vsel %vm1668, %v1606, %v1655
      %vm1670 = vcmp.lt.s32.totalorder %v1608, %v1656
      %v1671 = vsel %vm1670, %v1608, %v1656
      %vm1672 = vcmp.lt.s32.totalorder %v1610, %v1657
      %v1673 = vsel %vm1672, %v1610, %v1657
      %vm1674 = vcmp.lt.s32.totalorder %v1612, %v1658
      %v1675 = vsel %vm1674, %v1612, %v1658
      %vm1676 = vcmp.lt.s32.totalorder %v1614, %v1659
      %v1677 = vsel %vm1676, %v1614, %v1659
      %v1678 = vadd.s32 %v1634, %v593
      %v1679 = vadd.s32 %v1636, %v594
      %v1680 = vadd.s32 %v1638, %v595
      %v1681 = vadd.s32 %v1640, %v596
      %v1682 = vadd.s32 %v1642, %v597
      %v1683 = vadd.s32 %v1644, %v598
      %v1684 = vadd.s32 %v1646, %v599
      %v1685 = vadd.s32 %v1648, %v600
      %v1686 = vadd.s32 %v1650, %v601
      %vm1687 = vcmp.lt.s32.totalorder %v1661, %v1678
      %v1688 = vsel %vm1687, %v1661, %v1678
      %vm1689 = vcmp.lt.s32.totalorder %v1663, %v1679
      %v1690 = vsel %vm1689, %v1663, %v1679
      %vm1691 = vcmp.lt.s32.totalorder %v1665, %v1680
      %v1692 = vsel %vm1691, %v1665, %v1680
      %vm1693 = vcmp.lt.s32.totalorder %v1667, %v1681
      %v1694 = vsel %vm1693, %v1667, %v1681
      %vm1695 = vcmp.lt.s32.totalorder %v1669, %v1682
      %v1696 = vsel %vm1695, %v1669, %v1682
      %vm1697 = vcmp.lt.s32.totalorder %v1671, %v1683
      %v1698 = vsel %vm1697, %v1671, %v1683
      %vm1699 = vcmp.lt.s32.totalorder %v1673, %v1684
      %v1700 = vsel %vm1699, %v1673, %v1684
      %vm1701 = vcmp.lt.s32.totalorder %v1675, %v1685
      %v1702 = vsel %vm1701, %v1675, %v1685
      %vm1703 = vcmp.lt.s32.totalorder %v1677, %v1686
      %v1704 = vsel %vm1703, %v1677, %v1686
      %1705 = vrot.lane.b32.xlu0 %v1688, 32
      %v1706 = vpop.permute.xlu0 %1705
      %1707 = vrot.lane.b32.xlu0 %v1690, 32
      %v1708 = vpop.permute.xlu0 %1707
      %1709 = vrot.lane.b32.xlu0 %v1692, 32
      %v1710 = vpop.permute.xlu0 %1709
      %1711 = vrot.lane.b32.xlu0 %v1694, 32
      %v1712 = vpop.permute.xlu0 %1711
      %1713 = vrot.lane.b32.xlu0 %v1696, 32
      %v1714 = vpop.permute.xlu0 %1713
      %1715 = vrot.lane.b32.xlu0 %v1698, 32
      %v1716 = vpop.permute.xlu0 %1715
      %1717 = vrot.lane.b32.xlu0 %v1700, 32
      %v1718 = vpop.permute.xlu0 %1717
      %1719 = vrot.lane.b32.xlu0 %v1702, 32
      %v1720 = vpop.permute.xlu0 %1719
      %1721 = vrot.lane.b32.xlu0 %v1704, 32
      %v1722 = vpop.permute.xlu0 %1721
      %1723 = vrot.lane.b32.xlu0 %v1688, 96
      %v1724 = vpop.permute.xlu0 %1723
      %1725 = vrot.lane.b32.xlu0 %v1690, 96
      %v1726 = vpop.permute.xlu0 %1725
      %1727 = vrot.lane.b32.xlu0 %v1692, 96
      %v1728 = vpop.permute.xlu0 %1727
      %1729 = vrot.lane.b32.xlu0 %v1694, 96
      %v1730 = vpop.permute.xlu0 %1729
      %1731 = vrot.lane.b32.xlu0 %v1696, 96
      %v1732 = vpop.permute.xlu0 %1731
      %1733 = vrot.lane.b32.xlu0 %v1698, 96
      %v1734 = vpop.permute.xlu0 %1733
      %1735 = vrot.lane.b32.xlu0 %v1700, 96
      %v1736 = vpop.permute.xlu0 %1735
      %1737 = vrot.lane.b32.xlu0 %v1702, 96
      %v1738 = vpop.permute.xlu0 %1737
      %1739 = vrot.lane.b32.xlu0 %v1704, 96
      %v1740 = vpop.permute.xlu0 %1739
      %v1741 = vadd.s32 %v1706, %v647
      %v1742 = vadd.s32 %v1708, %v648
      %v1743 = vadd.s32 %v1710, %v649
      %v1744 = vadd.s32 %v1712, %v650
      %v1745 = vadd.s32 %v1714, %v651
      %v1746 = vadd.s32 %v1716, %v652
      %v1747 = vadd.s32 %v1718, %v653
      %v1748 = vadd.s32 %v1720, %v654
      %v1749 = vadd.s32 %v1722, %v655
      %vm1750 = vcmp.lt.s32.totalorder %v1688, %v1741
      %v1751 = vsel %vm1750, %v1688, %v1741
      %vm1752 = vcmp.lt.s32.totalorder %v1690, %v1742
      %v1753 = vsel %vm1752, %v1690, %v1742
      %vm1754 = vcmp.lt.s32.totalorder %v1692, %v1743
      %v1755 = vsel %vm1754, %v1692, %v1743
      %vm1756 = vcmp.lt.s32.totalorder %v1694, %v1744
      %v1757 = vsel %vm1756, %v1694, %v1744
      %vm1758 = vcmp.lt.s32.totalorder %v1696, %v1745
      %v1759 = vsel %vm1758, %v1696, %v1745
      %vm1760 = vcmp.lt.s32.totalorder %v1698, %v1746
      %v1761 = vsel %vm1760, %v1698, %v1746
      %vm1762 = vcmp.lt.s32.totalorder %v1700, %v1747
      %v1763 = vsel %vm1762, %v1700, %v1747
      %vm1764 = vcmp.lt.s32.totalorder %v1702, %v1748
      %v1765 = vsel %vm1764, %v1702, %v1748
      %vm1766 = vcmp.lt.s32.totalorder %v1704, %v1749
      %v1767 = vsel %vm1766, %v1704, %v1749
      %v1768 = vadd.s32 %v1724, %v683
      %v1769 = vadd.s32 %v1726, %v684
      %v1770 = vadd.s32 %v1728, %v685
      %v1771 = vadd.s32 %v1730, %v686
      %v1772 = vadd.s32 %v1732, %v687
      %v1773 = vadd.s32 %v1734, %v688
      %v1774 = vadd.s32 %v1736, %v689
      %v1775 = vadd.s32 %v1738, %v690
      %v1776 = vadd.s32 %v1740, %v691
      %vm1777 = vcmp.lt.s32.totalorder %v1751, %v1768
      %v1778 = vsel %vm1777, %v1751, %v1768
      %vm1779 = vcmp.lt.s32.totalorder %v1753, %v1769
      %v1780 = vsel %vm1779, %v1753, %v1769
      %vm1781 = vcmp.lt.s32.totalorder %v1755, %v1770
      %v1782 = vsel %vm1781, %v1755, %v1770
      %vm1783 = vcmp.lt.s32.totalorder %v1757, %v1771
      %v1784 = vsel %vm1783, %v1757, %v1771
      %vm1785 = vcmp.lt.s32.totalorder %v1759, %v1772
      %v1786 = vsel %vm1785, %v1759, %v1772
      %vm1787 = vcmp.lt.s32.totalorder %v1761, %v1773
      %v1788 = vsel %vm1787, %v1761, %v1773
      %vm1789 = vcmp.lt.s32.totalorder %v1763, %v1774
      %v1790 = vsel %vm1789, %v1763, %v1774
      %vm1791 = vcmp.lt.s32.totalorder %v1765, %v1775
      %v1792 = vsel %vm1791, %v1765, %v1775
      %vm1793 = vcmp.lt.s32.totalorder %v1767, %v1776
      %v1794 = vsel %vm1793, %v1767, %v1776
      %v1795 = vrot.slane %v1778, 7
      %v1796 = vrot.slane %v1780, 7
      %v1797 = vrot.slane %v1782, 7
      %v1798 = vrot.slane %v1784, 7
      %v1799 = vrot.slane %v1786, 7
      %v1800 = vrot.slane %v1788, 7
      %v1801 = vrot.slane %v1790, 7
      %v1802 = vrot.slane %v1792, 7
      %v1803 = vrot.slane %v1794, 7
      %v1804 = vsel %vm701, %v1802, %v1803
      %v1805 = vsel %vm701, %v1801, %v1802
      %v1806 = vsel %vm701, %v1800, %v1801
      %v1807 = vsel %vm701, %v1799, %v1800
      %v1808 = vsel %vm701, %v1798, %v1799
      %v1809 = vsel %vm701, %v1797, %v1798
      %v1810 = vsel %vm701, %v1796, %v1797
      %v1811 = vsel %vm701, %v1795, %v1796
      %v1812 = vsel %vm701, %v1803, %v1795
      %v1813 = vrot.slane %v1778, 1
      %v1814 = vrot.slane %v1780, 1
      %v1815 = vrot.slane %v1782, 1
      %v1816 = vrot.slane %v1784, 1
      %v1817 = vrot.slane %v1786, 1
      %v1818 = vrot.slane %v1788, 1
      %v1819 = vrot.slane %v1790, 1
      %v1820 = vrot.slane %v1792, 1
      %v1821 = vrot.slane %v1794, 1
      %v1822 = vsel %vm756, %v1820, %v1821
      %v1823 = vsel %vm756, %v1819, %v1820
      %v1824 = vsel %vm756, %v1818, %v1819
      %v1825 = vsel %vm756, %v1817, %v1818
      %v1826 = vsel %vm756, %v1816, %v1817
      %v1827 = vsel %vm756, %v1815, %v1816
      %v1828 = vsel %vm756, %v1814, %v1815
      %v1829 = vsel %vm756, %v1813, %v1814
      %v1830 = vsel %vm756, %v1821, %v1813
      %v1831 = vadd.s32 %v1812, %v738
      %v1832 = vadd.s32 %v1811, %v739
      %v1833 = vadd.s32 %v1810, %v740
      %v1834 = vadd.s32 %v1809, %v741
      %v1835 = vadd.s32 %v1808, %v742
      %v1836 = vadd.s32 %v1807, %v743
      %v1837 = vadd.s32 %v1806, %v744
      %v1838 = vadd.s32 %v1805, %v745
      %v1839 = vadd.s32 %v1804, %v746
      %vm1840 = vcmp.lt.s32.totalorder %v1778, %v1831
      %v1841 = vsel %vm1840, %v1778, %v1831
      %vm1842 = vcmp.lt.s32.totalorder %v1780, %v1832
      %v1843 = vsel %vm1842, %v1780, %v1832
      %vm1844 = vcmp.lt.s32.totalorder %v1782, %v1833
      %v1845 = vsel %vm1844, %v1782, %v1833
      %vm1846 = vcmp.lt.s32.totalorder %v1784, %v1834
      %v1847 = vsel %vm1846, %v1784, %v1834
      %vm1848 = vcmp.lt.s32.totalorder %v1786, %v1835
      %v1849 = vsel %vm1848, %v1786, %v1835
      %vm1850 = vcmp.lt.s32.totalorder %v1788, %v1836
      %v1851 = vsel %vm1850, %v1788, %v1836
      %vm1852 = vcmp.lt.s32.totalorder %v1790, %v1837
      %v1853 = vsel %vm1852, %v1790, %v1837
      %vm1854 = vcmp.lt.s32.totalorder %v1792, %v1838
      %v1855 = vsel %vm1854, %v1792, %v1838
      %vm1856 = vcmp.lt.s32.totalorder %v1794, %v1839
      %v1857 = vsel %vm1856, %v1794, %v1839
      %v1858 = vadd.s32 %v1829, %v775
      %v1859 = vadd.s32 %v1828, %v776
      %v1860 = vadd.s32 %v1827, %v777
      %v1861 = vadd.s32 %v1826, %v778
      %v1862 = vadd.s32 %v1825, %v779
      %v1863 = vadd.s32 %v1824, %v780
      %v1864 = vadd.s32 %v1823, %v781
      %v1865 = vadd.s32 %v1822, %v782
      %v1866 = vadd.s32 %v1830, %v783
      %vm1867 = vcmp.lt.s32.totalorder %v1841, %v1858
      %v1868 = vsel %vm1867, %v1841, %v1858
      %vm1869 = vcmp.lt.s32.totalorder %v1843, %v1859
      %v1870 = vsel %vm1869, %v1843, %v1859
      %vm1871 = vcmp.lt.s32.totalorder %v1845, %v1860
      %v1872 = vsel %vm1871, %v1845, %v1860
      %vm1873 = vcmp.lt.s32.totalorder %v1847, %v1861
      %v1874 = vsel %vm1873, %v1847, %v1861
      %vm1875 = vcmp.lt.s32.totalorder %v1849, %v1862
      %v1876 = vsel %vm1875, %v1849, %v1862
      %vm1877 = vcmp.lt.s32.totalorder %v1851, %v1863
      %v1878 = vsel %vm1877, %v1851, %v1863
      %vm1879 = vcmp.lt.s32.totalorder %v1853, %v1864
      %v1880 = vsel %vm1879, %v1853, %v1864
      %vm1881 = vcmp.lt.s32.totalorder %v1855, %v1865
      %v1882 = vsel %vm1881, %v1855, %v1865
      %vm1883 = vcmp.lt.s32.totalorder %v1857, %v1866
      %v1884 = vsel %vm1883, %v1857, %v1866
      %v1885 = vrot.slane %v1868, 6
      %v1886 = vrot.slane %v1870, 6
      %v1887 = vrot.slane %v1872, 6
      %v1888 = vrot.slane %v1874, 6
      %v1889 = vrot.slane %v1876, 6
      %v1890 = vrot.slane %v1878, 6
      %v1891 = vrot.slane %v1880, 6
      %v1892 = vrot.slane %v1882, 6
      %v1893 = vrot.slane %v1884, 6
      %v1894 = vsel %vm884, %v1892, %v1893
      %v1895 = vsel %vm884, %v1891, %v1892
      %v1896 = vsel %vm884, %v1890, %v1891
      %v1897 = vsel %vm884, %v1889, %v1890
      %v1898 = vsel %vm884, %v1888, %v1889
      %v1899 = vsel %vm884, %v1887, %v1888
      %v1900 = vsel %vm884, %v1886, %v1887
      %v1901 = vsel %vm884, %v1885, %v1886
      %v1902 = vsel %vm884, %v1893, %v1885
      %v1903 = vrot.slane %v1868, 2
      %v1904 = vrot.slane %v1870, 2
      %v1905 = vrot.slane %v1872, 2
      %v1906 = vrot.slane %v1874, 2
      %v1907 = vrot.slane %v1876, 2
      %v1908 = vrot.slane %v1878, 2
      %v1909 = vrot.slane %v1880, 2
      %v1910 = vrot.slane %v1882, 2
      %v1911 = vrot.slane %v1884, 2
      %v1912 = vsel %vm847, %v1910, %v1911
      %v1913 = vsel %vm847, %v1909, %v1910
      %v1914 = vsel %vm847, %v1908, %v1909
      %v1915 = vsel %vm847, %v1907, %v1908
      %v1916 = vsel %vm847, %v1906, %v1907
      %v1917 = vsel %vm847, %v1905, %v1906
      %v1918 = vsel %vm847, %v1904, %v1905
      %v1919 = vsel %vm847, %v1903, %v1904
      %v1920 = vsel %vm847, %v1911, %v1903
      %v1921 = vadd.s32 %v1902, %v829
      %v1922 = vadd.s32 %v1901, %v830
      %v1923 = vadd.s32 %v1900, %v831
      %v1924 = vadd.s32 %v1899, %v832
      %v1925 = vadd.s32 %v1898, %v833
      %v1926 = vadd.s32 %v1897, %v834
      %v1927 = vadd.s32 %v1896, %v835
      %v1928 = vadd.s32 %v1895, %v836
      %v1929 = vadd.s32 %v1894, %v837
      %vm1930 = vcmp.lt.s32.totalorder %v1868, %v1921
      %v1931 = vsel %vm1930, %v1868, %v1921
      %vm1932 = vcmp.lt.s32.totalorder %v1870, %v1922
      %v1933 = vsel %vm1932, %v1870, %v1922
      %vm1934 = vcmp.lt.s32.totalorder %v1872, %v1923
      %v1935 = vsel %vm1934, %v1872, %v1923
      %vm1936 = vcmp.lt.s32.totalorder %v1874, %v1924
      %v1937 = vsel %vm1936, %v1874, %v1924
      %vm1938 = vcmp.lt.s32.totalorder %v1876, %v1925
      %v1939 = vsel %vm1938, %v1876, %v1925
      %vm1940 = vcmp.lt.s32.totalorder %v1878, %v1926
      %v1941 = vsel %vm1940, %v1878, %v1926
      %vm1942 = vcmp.lt.s32.totalorder %v1880, %v1927
      %v1943 = vsel %vm1942, %v1880, %v1927
      %vm1944 = vcmp.lt.s32.totalorder %v1882, %v1928
      %v1945 = vsel %vm1944, %v1882, %v1928
      %vm1946 = vcmp.lt.s32.totalorder %v1884, %v1929
      %v1947 = vsel %vm1946, %v1884, %v1929
      %v1948 = vadd.s32 %v1919, %v866
      %v1949 = vadd.s32 %v1918, %v867
      %v1950 = vadd.s32 %v1917, %v868
      %v1951 = vadd.s32 %v1916, %v869
      %v1952 = vadd.s32 %v1915, %v870
      %v1953 = vadd.s32 %v1914, %v871
      %v1954 = vadd.s32 %v1913, %v872
      %v1955 = vadd.s32 %v1912, %v873
      %v1956 = vadd.s32 %v1920, %v874
      %vm1957 = vcmp.lt.s32.totalorder %v1931, %v1948
      %v1958 = vsel %vm1957, %v1931, %v1948
      %vm1959 = vcmp.lt.s32.totalorder %v1933, %v1949
      %v1960 = vsel %vm1959, %v1933, %v1949
      %vm1961 = vcmp.lt.s32.totalorder %v1935, %v1950
      %v1962 = vsel %vm1961, %v1935, %v1950
      %vm1963 = vcmp.lt.s32.totalorder %v1937, %v1951
      %v1964 = vsel %vm1963, %v1937, %v1951
      %vm1965 = vcmp.lt.s32.totalorder %v1939, %v1952
      %v1966 = vsel %vm1965, %v1939, %v1952
      %vm1967 = vcmp.lt.s32.totalorder %v1941, %v1953
      %v1968 = vsel %vm1967, %v1941, %v1953
      %vm1969 = vcmp.lt.s32.totalorder %v1943, %v1954
      %v1970 = vsel %vm1969, %v1943, %v1954
      %vm1971 = vcmp.lt.s32.totalorder %v1945, %v1955
      %v1972 = vsel %vm1971, %v1945, %v1955
      %vm1973 = vcmp.lt.s32.totalorder %v1947, %v1956
      %v1974 = vsel %vm1973, %v1947, %v1956
      %v1975 = vrot.slane %v1958, 4
      %v1976 = vrot.slane %v1960, 4
      %v1977 = vrot.slane %v1962, 4
      %v1978 = vrot.slane %v1964, 4
      %v1979 = vrot.slane %v1966, 4
      %v1980 = vrot.slane %v1968, 4
      %v1981 = vrot.slane %v1970, 4
      %v1982 = vrot.slane %v1972, 4
      %v1983 = vrot.slane %v1974, 4
      %v1984 = vsel %vm939, %v1982, %v1983
      %v1985 = vsel %vm939, %v1981, %v1982
      %v1986 = vsel %vm939, %v1980, %v1981
      %v1987 = vsel %vm939, %v1979, %v1980
      %v1988 = vsel %vm939, %v1978, %v1979
      %v1989 = vsel %vm939, %v1977, %v1978
      %v1990 = vsel %vm939, %v1976, %v1977
      %v1991 = vsel %vm939, %v1975, %v1976
      %v1992 = vsel %vm939, %v1983, %v1975
      %v1993 = vadd.s32 %v1992, %v921
      %v1994 = vadd.s32 %v1991, %v922
      %v1995 = vadd.s32 %v1990, %v923
      %v1996 = vadd.s32 %v1989, %v924
      %v1997 = vadd.s32 %v1988, %v925
      %v1998 = vadd.s32 %v1987, %v926
      %v1999 = vadd.s32 %v1986, %v927
      %v2000 = vadd.s32 %v1985, %v928
      %v2001 = vadd.s32 %v1984, %v929
      %vm2002 = vcmp.lt.s32.totalorder %v1958, %v1993
      %v2003 = vsel %vm2002, %v1958, %v1993
      %vm2004 = vcmp.lt.s32.totalorder %v1960, %v1994
      %v2005 = vsel %vm2004, %v1960, %v1994
      %vm2006 = vcmp.lt.s32.totalorder %v1962, %v1995
      %v2007 = vsel %vm2006, %v1962, %v1995
      %vm2008 = vcmp.lt.s32.totalorder %v1964, %v1996
      %v2009 = vsel %vm2008, %v1964, %v1996
      %vm2010 = vcmp.lt.s32.totalorder %v1966, %v1997
      %v2011 = vsel %vm2010, %v1966, %v1997
      %vm2012 = vcmp.lt.s32.totalorder %v1968, %v1998
      %v2013 = vsel %vm2012, %v1968, %v1998
      %vm2014 = vcmp.lt.s32.totalorder %v1970, %v1999
      %v2015 = vsel %vm2014, %v1970, %v1999
      %vm2016 = vcmp.lt.s32.totalorder %v1972, %v2000
      %v2017 = vsel %vm2016, %v1972, %v2000
      %vm2018 = vcmp.lt.s32.totalorder %v1974, %v2001
      %v2019 = vsel %vm2018, %v1974, %v2001
      %v2020 = vadd.s32 %v1991, %v958
      %v2021 = vadd.s32 %v1990, %v959
      %v2022 = vadd.s32 %v1989, %v960
      %v2023 = vadd.s32 %v1988, %v961
      %v2024 = vadd.s32 %v1987, %v962
      %v2025 = vadd.s32 %v1986, %v963
      %v2026 = vadd.s32 %v1985, %v964
      %v2027 = vadd.s32 %v1984, %v965
      %v2028 = vadd.s32 %v1992, %v966
      %vm2029 = vcmp.lt.s32.totalorder %v2003, %v2020
      %v2030 = vsel %vm2029, %v2003, %v2020
      %vm2031 = vcmp.lt.s32.totalorder %v2005, %v2021
      %v2032 = vsel %vm2031, %v2005, %v2021
      %vm2033 = vcmp.lt.s32.totalorder %v2007, %v2022
      %v2034 = vsel %vm2033, %v2007, %v2022
      %vm2035 = vcmp.lt.s32.totalorder %v2009, %v2023
      %v2036 = vsel %vm2035, %v2009, %v2023
      %vm2037 = vcmp.lt.s32.totalorder %v2011, %v2024
      %v2038 = vsel %vm2037, %v2011, %v2024
      %vm2039 = vcmp.lt.s32.totalorder %v2013, %v2025
      %v2040 = vsel %vm2039, %v2013, %v2025
      %vm2041 = vcmp.lt.s32.totalorder %v2015, %v2026
      %v2042 = vsel %vm2041, %v2015, %v2026
      %vm2043 = vcmp.lt.s32.totalorder %v2017, %v2027
      %v2044 = vsel %vm2043, %v2017, %v2027
      %vm2045 = vcmp.lt.s32.totalorder %v2019, %v2028
      %v2046 = vsel %vm2045, %v2019, %v2028
      %v2047 = vadd.s32 %v2046, %v994
      %v2048 = vadd.s32 %v2030, %v995
      %v2049 = vadd.s32 %v2032, %v996
      %v2050 = vadd.s32 %v2034, %v997
      %v2051 = vadd.s32 %v2036, %v998
      %v2052 = vadd.s32 %v2038, %v999
      %v2053 = vadd.s32 %v2040, %v1000
      %v2054 = vadd.s32 %v2042, %v1001
      %v2055 = vadd.s32 %v2044, %v1002
      %vm2056 = vcmp.lt.s32.totalorder %v2030, %v2047
      %v2057 = vsel %vm2056, %v2030, %v2047
      %vm2058 = vcmp.lt.s32.totalorder %v2032, %v2048
      %v2059 = vsel %vm2058, %v2032, %v2048
      %vm2060 = vcmp.lt.s32.totalorder %v2034, %v2049
      %v2061 = vsel %vm2060, %v2034, %v2049
      %vm2062 = vcmp.lt.s32.totalorder %v2036, %v2050
      %v2063 = vsel %vm2062, %v2036, %v2050
      %vm2064 = vcmp.lt.s32.totalorder %v2038, %v2051
      %v2065 = vsel %vm2064, %v2038, %v2051
      %vm2066 = vcmp.lt.s32.totalorder %v2040, %v2052
      %v2067 = vsel %vm2066, %v2040, %v2052
      %vm2068 = vcmp.lt.s32.totalorder %v2042, %v2053
      %v2069 = vsel %vm2068, %v2042, %v2053
      %vm2070 = vcmp.lt.s32.totalorder %v2044, %v2054
      %v2071 = vsel %vm2070, %v2044, %v2054
      %vm2072 = vcmp.lt.s32.totalorder %v2046, %v2055
      %v2073 = vsel %vm2072, %v2046, %v2055
      %v2074 = vadd.s32 %v2032, %v995
      %v2075 = vadd.s32 %v2034, %v996
      %v2076 = vadd.s32 %v2036, %v997
      %v2077 = vadd.s32 %v2038, %v998
      %v2078 = vadd.s32 %v2040, %v999
      %v2079 = vadd.s32 %v2042, %v1000
      %v2080 = vadd.s32 %v2044, %v1001
      %v2081 = vadd.s32 %v2046, %v1002
      %v2082 = vadd.s32 %v2030, %v994
      %vm2083 = vcmp.lt.s32.totalorder %v2057, %v2074
      %v2084 = vsel %vm2083, %v2057, %v2074
      %vm2085 = vcmp.lt.s32.totalorder %v2059, %v2075
      %v2086 = vsel %vm2085, %v2059, %v2075
      %vm2087 = vcmp.lt.s32.totalorder %v2061, %v2076
      %v2088 = vsel %vm2087, %v2061, %v2076
      %vm2089 = vcmp.lt.s32.totalorder %v2063, %v2077
      %v2090 = vsel %vm2089, %v2063, %v2077
      %vm2091 = vcmp.lt.s32.totalorder %v2065, %v2078
      %v2092 = vsel %vm2091, %v2065, %v2078
      %vm2093 = vcmp.lt.s32.totalorder %v2067, %v2079
      %v2094 = vsel %vm2093, %v2067, %v2079
      %vm2095 = vcmp.lt.s32.totalorder %v2069, %v2080
      %v2096 = vsel %vm2095, %v2069, %v2080
      %vm2097 = vcmp.lt.s32.totalorder %v2071, %v2081
      %v2098 = vsel %vm2097, %v2071, %v2081
      %vm2099 = vcmp.lt.s32.totalorder %v2073, %v2082
      %v2100 = vsel %vm2099, %v2073, %v2082
      %v2101 = vadd.s32 %v2098, %v1030
      %v2102 = vadd.s32 %v2100, %v1031
      %v2103 = vadd.s32 %v2084, %v1032
      %v2104 = vadd.s32 %v2086, %v1033
      %v2105 = vadd.s32 %v2088, %v1034
      %v2106 = vadd.s32 %v2090, %v1035
      %v2107 = vadd.s32 %v2092, %v1036
      %v2108 = vadd.s32 %v2094, %v1037
      %v2109 = vadd.s32 %v2096, %v1038
      %vm2110 = vcmp.lt.s32.totalorder %v2084, %v2101
      %v2111 = vsel %vm2110, %v2084, %v2101
      %vm2112 = vcmp.lt.s32.totalorder %v2086, %v2102
      %v2113 = vsel %vm2112, %v2086, %v2102
      %vm2114 = vcmp.lt.s32.totalorder %v2088, %v2103
      %v2115 = vsel %vm2114, %v2088, %v2103
      %vm2116 = vcmp.lt.s32.totalorder %v2090, %v2104
      %v2117 = vsel %vm2116, %v2090, %v2104
      %vm2118 = vcmp.lt.s32.totalorder %v2092, %v2105
      %v2119 = vsel %vm2118, %v2092, %v2105
      %vm2120 = vcmp.lt.s32.totalorder %v2094, %v2106
      %v2121 = vsel %vm2120, %v2094, %v2106
      %vm2122 = vcmp.lt.s32.totalorder %v2096, %v2107
      %v2123 = vsel %vm2122, %v2096, %v2107
      %vm2124 = vcmp.lt.s32.totalorder %v2098, %v2108
      %v2125 = vsel %vm2124, %v2098, %v2108
      %vm2126 = vcmp.lt.s32.totalorder %v2100, %v2109
      %v2127 = vsel %vm2126, %v2100, %v2109
      %v2128 = vadd.s32 %v2088, %v1032
      %v2129 = vadd.s32 %v2090, %v1033
      %v2130 = vadd.s32 %v2092, %v1034
      %v2131 = vadd.s32 %v2094, %v1035
      %v2132 = vadd.s32 %v2096, %v1036
      %v2133 = vadd.s32 %v2098, %v1037
      %v2134 = vadd.s32 %v2100, %v1038
      %v2135 = vadd.s32 %v2084, %v1030
      %v2136 = vadd.s32 %v2086, %v1031
      %vm2137 = vcmp.lt.s32.totalorder %v2111, %v2128
      %v2138 = vsel %vm2137, %v2111, %v2128
      %vm2139 = vcmp.lt.s32.totalorder %v2113, %v2129
      %v2140 = vsel %vm2139, %v2113, %v2129
      %vm2141 = vcmp.lt.s32.totalorder %v2115, %v2130
      %v2142 = vsel %vm2141, %v2115, %v2130
      %vm2143 = vcmp.lt.s32.totalorder %v2117, %v2131
      %v2144 = vsel %vm2143, %v2117, %v2131
      %vm2145 = vcmp.lt.s32.totalorder %v2119, %v2132
      %v2146 = vsel %vm2145, %v2119, %v2132
      %vm2147 = vcmp.lt.s32.totalorder %v2121, %v2133
      %v2148 = vsel %vm2147, %v2121, %v2133
      %vm2149 = vcmp.lt.s32.totalorder %v2123, %v2134
      %v2150 = vsel %vm2149, %v2123, %v2134
      %vm2151 = vcmp.lt.s32.totalorder %v2125, %v2135
      %v2152 = vsel %vm2151, %v2125, %v2135
      %vm2153 = vcmp.lt.s32.totalorder %v2127, %v2136
      %v2154 = vsel %vm2153, %v2127, %v2136
      %v2155 = vadd.s32 %v2148, %v1066
      %v2156 = vadd.s32 %v2150, %v1067
      %v2157 = vadd.s32 %v2152, %v1068
      %v2158 = vadd.s32 %v2154, %v1069
      %v2159 = vadd.s32 %v2138, %v1070
      %v2160 = vadd.s32 %v2140, %v1071
      %v2161 = vadd.s32 %v2142, %v1072
      %v2162 = vadd.s32 %v2144, %v1073
      %v2163 = vadd.s32 %v2146, %v1074
      %vm2164 = vcmp.lt.s32.totalorder %v2138, %v2155
      %v2165 = vsel %vm2164, %v2138, %v2155
      %vm2166 = vcmp.lt.s32.totalorder %v2140, %v2156
      %v2167 = vsel %vm2166, %v2140, %v2156
      %vm2168 = vcmp.lt.s32.totalorder %v2142, %v2157
      %v2169 = vsel %vm2168, %v2142, %v2157
      %vm2170 = vcmp.lt.s32.totalorder %v2144, %v2158
      %v2171 = vsel %vm2170, %v2144, %v2158
      %vm2172 = vcmp.lt.s32.totalorder %v2146, %v2159
      %v2173 = vsel %vm2172, %v2146, %v2159
      %vm2174 = vcmp.lt.s32.totalorder %v2148, %v2160
      %v2175 = vsel %vm2174, %v2148, %v2160
      %vm2176 = vcmp.lt.s32.totalorder %v2150, %v2161
      %v2177 = vsel %vm2176, %v2150, %v2161
      %vm2178 = vcmp.lt.s32.totalorder %v2152, %v2162
      %v2179 = vsel %vm2178, %v2152, %v2162
      %vm2180 = vcmp.lt.s32.totalorder %v2154, %v2163
      %v2181 = vsel %vm2180, %v2154, %v2163
      %v2182 = vadd.s32 %v2146, %v1070
      %v2183 = vadd.s32 %v2148, %v1071
      %v2184 = vadd.s32 %v2150, %v1072
      %v2185 = vadd.s32 %v2152, %v1073
      %v2186 = vadd.s32 %v2154, %v1074
      %v2187 = vadd.s32 %v2138, %v1066
      %v2188 = vadd.s32 %v2140, %v1067
      %v2189 = vadd.s32 %v2142, %v1068
      %v2190 = vadd.s32 %v2144, %v1069
      %vm2191 = vcmp.lt.s32.totalorder %v2165, %v2182
      %v2192 = vsel %vm2191, %v2165, %v2182
      %vm2193 = vcmp.lt.s32.totalorder %v2167, %v2183
      %v2194 = vsel %vm2193, %v2167, %v2183
      %vm2195 = vcmp.lt.s32.totalorder %v2169, %v2184
      %v2196 = vsel %vm2195, %v2169, %v2184
      %vm2197 = vcmp.lt.s32.totalorder %v2171, %v2185
      %v2198 = vsel %vm2197, %v2171, %v2185
      %vm2199 = vcmp.lt.s32.totalorder %v2173, %v2186
      %v2200 = vsel %vm2199, %v2173, %v2186
      %vm2201 = vcmp.lt.s32.totalorder %v2175, %v2187
      %v2202 = vsel %vm2201, %v2175, %v2187
      %vm2203 = vcmp.lt.s32.totalorder %v2177, %v2188
      %v2204 = vsel %vm2203, %v2177, %v2188
      %vm2205 = vcmp.lt.s32.totalorder %v2179, %v2189
      %v2206 = vsel %vm2205, %v2179, %v2189
      %vm2207 = vcmp.lt.s32.totalorder %v2181, %v2190
      %v2208 = vsel %vm2207, %v2181, %v2190
      %vm2209 = vcmp.ne.s32.totalorder %v2192, %v1078
      %vm2210 = vcmp.ne.s32.totalorder %v2194, %v1079
      %vm2211 = vcmp.ne.s32.totalorder %v2196, %v1080
      %vm2212 = vcmp.ne.s32.totalorder %v2198, %v1081
      %vm2213 = vcmp.ne.s32.totalorder %v2200, %v1082
      %vm2214 = vcmp.ne.s32.totalorder %v2202, %v1083
      %vm2215 = vcmp.ne.s32.totalorder %v2204, %v1084
      %vm2216 = vcmp.ne.s32.totalorder %v2206, %v1085
      %vm2217 = vcmp.ne.s32.totalorder %v2208, %v1086
      %v2218 = vsel %vm2209, 1, 0
      %v2219 = vsel %vm2210, 1, 0
      %v2220 = vsel %vm2211, 1, 0
      %v2221 = vsel %vm2212, 1, 0
      %v2222 = vsel %vm2213, 1, 0
      %v2223 = vsel %vm2214, 1, 0
      %v2224 = vsel %vm2215, 1, 0
      %v2225 = vsel %vm2216, 1, 0
      %v2226 = vsel %vm2217, 1, 0
      %vm2227 = vcmp.gt.s32.totalorder %v2218, %v2222
      %v2228 = vsel %vm2227, %v2218, %v2222
      %vm2229 = vcmp.gt.s32.totalorder %v2219, %v2223
      %v2230 = vsel %vm2229, %v2219, %v2223
      %vm2231 = vcmp.gt.s32.totalorder %v2220, %v2224
      %v2232 = vsel %vm2231, %v2220, %v2224
      %vm2233 = vcmp.gt.s32.totalorder %v2221, %v2225
      %v2234 = vsel %vm2233, %v2221, %v2225
      %vm2235 = vcmp.gt.s32.totalorder %v2228, %v2226
      %v2236 = vsel %vm2235, %v2228, %v2226
      %vm2237 = vcmp.gt.s32.totalorder %v2236, %v2230
      %v2238 = vsel %vm2237, %v2236, %v2230
      %vm2239 = vcmp.gt.s32.totalorder %v2232, %v2234
      %v2240 = vsel %vm2239, %v2232, %v2234
      %vm2241 = vcmp.gt.s32.totalorder %v2238, %v2240
      %v2242 = vsel %vm2241, %v2238, %v2240
      %v2243 = vand.u32 %v2242, 65535
      %v2244 = vshra.s32 %v2242, 16
      %v2245 = vcvt.s32.f32 %v2243
      %v2246 = vcvt.s32.f32 %v2244
      %2247 = vmax.xlane.f32.xlu0 %v2246
      %v2248 = vpop.xlane.xlu0 %2247
      %vm2249 = vcmp.eq.f32.partialorder %v2246, %v2248
      %v2250 = vsel %vm2249, %v2245, -inf
      %2251 = vmax.xlane.f32.xlu0 %v2250
      %v2252 = vpop.xlane.xlu0 %2251
      %v2253 = vcvt.f32.s32 %v2252
      %v2254 = vcvt.f32.s32 %v2248
      %v2255 = vshll.u32 %v2254, 16
      %v2256 = vadd.s32 %v2255, %v2253
      %v2257 = vrot.slane %v2256, 4
      %vm2258 = vcmp.gt.s32.totalorder %v2256, %v2257
      %v2259 = vsel %vm2258, %v2256, %v2257
      %v2260 = vrot.slane %v2259, 2
      %vm2261 = vcmp.gt.s32.totalorder %v2259, %v2260
      %v2262 = vsel %vm2261, %v2259, %v2260
      %v2263 = vrot.slane %v2262, 1
      %vm2264 = vcmp.gt.s32.totalorder %v2262, %v2263
      %v2265 = vsel %vm2264, %v2262, %v2263
      %s2266 = vtos %v2265
      %s2267 = sadd.s32 %s1076, 1
    $region14: #{region_cluster_forward.1} parent=1 // loop_footer
      _
    $region15: #{region_cluster_forward.1} parent=1 // loop_footer_branch
      %1075 = sbr.rel target = $region11
    $region16: #{region_cluster_forward.1} parent=1 // loop_exit
      _
    %vm2268 = vcmp.eq.s32.totalorder %v1078, %v116
    %vm2269 = vcmp.eq.s32.totalorder %v1079, %v117
    %vm2270 = vcmp.eq.s32.totalorder %v1080, %v118
    %vm2271 = vcmp.eq.s32.totalorder %v1081, %v119
    %vm2272 = vcmp.eq.s32.totalorder %v1082, %v120
    %vm2273 = vcmp.eq.s32.totalorder %v1083, %v121
    %vm2274 = vcmp.eq.s32.totalorder %v1084, %v122
    %vm2275 = vcmp.eq.s32.totalorder %v1085, %v123
    %vm2276 = vcmp.eq.s32.totalorder %v1086, %v124
    %v2277 = vsel %vm2268, %v1078, 9218
    %v2278 = vsel %vm2269, %v1079, 9218
    %v2279 = vsel %vm2270, %v1080, 9218
    %v2280 = vsel %vm2271, %v1081, 9218
    %v2281 = vsel %vm2272, %v1082, 9218
    %v2282 = vsel %vm2273, %v1083, 9218
    %v2283 = vsel %vm2274, %v1084, 9218
    %v2284 = vsel %vm2275, %v1085, 9218
    %v2285 = vsel %vm2276, %v1086, 9218
    // While loop
    $region17: #{region_cluster_forward.1} parent=1 // loop_pre_header
      _
    $region18: #{region_cluster_forward.1} parent=1 // loop_header
      %s2287 = sphi 0, %s2727
      %s2288 = sphi 1, %s2380
      %v2289 = vphi %v2277, %v2718
      %v2290 = vphi %v2278, %v2719
      %v2291 = vphi %v2279, %v2720
      %v2292 = vphi %v2280, %v2721
      %v2293 = vphi %v2281, %v2722
      %v2294 = vphi %v2282, %v2723
      %v2295 = vphi %v2283, %v2724
      %v2296 = vphi %v2284, %v2725
      %v2297 = vphi %v2285, %v2726
      %v2298 = vphi 0, %v2681
      %v2299 = vphi 0, %v2687
      %v2300 = vphi 0, %v2693
      %v2301 = vphi 0, %v2699
      %v2302 = vphi 0, %v2704
      %v2303 = vphi 0, %v2682
      %v2304 = vphi 0, %v2683
      %v2305 = vphi 0, %v2684
      %v2306 = vphi 0, %v2685
      %v2307 = vphi 0, %v2688
      %v2308 = vphi 0, %v2689
      %v2309 = vphi 0, %v2690
      %v2310 = vphi 0, %v2691
      %v2311 = vphi 0, %v2694
      %v2312 = vphi 0, %v2695
      %v2313 = vphi 0, %v2696
      %v2314 = vphi 0, %v2697
      %v2315 = vphi 0, %v2700
      %v2316 = vphi 0, %v2701
      %v2317 = vphi 0, %v2702
      %v2318 = vphi 0, %v2703
      %v2319 = vphi 0, %v2705
      %v2320 = vphi 0, %v2706
      %v2321 = vphi 0, %v2707
      %v2322 = vphi 0, %v2708
      %p2323 = scmp.gt.s32.totalorder %s2288, 0
      %p2324 = scmp.lt.s32.totalorder %s2287, 32
      %p2325 = pnand %p2323, %p2324
      %p2326 = pneg %p2325
    $region19: #{region_cluster_forward.1} parent=1 // loop_header_branch
      %2328 = sbr.rel (%p2325) target = $region23
    $region20: #{region_cluster_forward.1} parent=1 // loop_body
      %vm2329 = vcmp.lt.s32.totalorder %v2289, %v2293
      %v2330 = vsel %vm2329, %v2289, %v2293
      %vm2331 = vcmp.lt.s32.totalorder %v2290, %v2294
      %v2332 = vsel %vm2331, %v2290, %v2294
      %vm2333 = vcmp.lt.s32.totalorder %v2291, %v2295
      %v2334 = vsel %vm2333, %v2291, %v2295
      %vm2335 = vcmp.lt.s32.totalorder %v2292, %v2296
      %v2336 = vsel %vm2335, %v2292, %v2296
      %vm2337 = vcmp.lt.s32.totalorder %v2330, %v2297
      %v2338 = vsel %vm2337, %v2330, %v2297
      %vm2339 = vcmp.lt.s32.totalorder %v2338, %v2332
      %v2340 = vsel %vm2339, %v2338, %v2332
      %vm2341 = vcmp.lt.s32.totalorder %v2334, %v2336
      %v2342 = vsel %vm2341, %v2334, %v2336
      %vm2343 = vcmp.lt.s32.totalorder %v2340, %v2342
      %v2344 = vsel %vm2343, %v2340, %v2342
      %v2345 = vand.u32 %v2344, 65535
      %v2346 = vshra.s32 %v2344, 16
      %v2347 = vcvt.s32.f32 %v2345
      %v2348 = vcvt.s32.f32 %v2346
      %2349 = vmin.xlane.f32.xlu0 %v2348
      %v2350 = vpop.xlane.xlu0 %2349
      %vm2351 = vcmp.eq.f32.partialorder %v2348, %v2350
      %v2352 = vsel %vm2351, %v2347, inf
      %2353 = vmin.xlane.f32.xlu0 %v2352
      %v2354 = vpop.xlane.xlu0 %2353
      %v2355 = vcvt.f32.s32 %v2354
      %v2356 = vcvt.f32.s32 %v2350
      %v2357 = vshll.u32 %v2356, 16
      %v2358 = vadd.s32 %v2357, %v2355
      %v2359 = vrot.slane %v2358, 4
      %vm2360 = vcmp.lt.s32.totalorder %v2358, %v2359
      %v2361 = vsel %vm2360, %v2358, %v2359
      %v2362 = vrot.slane %v2361, 2
      %vm2363 = vcmp.lt.s32.totalorder %v2361, %v2362
      %v2364 = vsel %vm2363, %v2361, %v2362
      %v2365 = vrot.slane %v2364, 1
      %vm2366 = vcmp.lt.s32.totalorder %v2364, %v2365
      %v2367 = vsel %vm2366, %v2364, %v2365
      %s2368 = vtos %v2367
      %p2369 = scmp.lt.s32.totalorder %s2368, 9218
      %v2370 = vstv %s2368
      %vm2371 = vcmp.eq.s32.totalorder %v1078, %v2370
      %vm2372 = vcmp.eq.s32.totalorder %v1079, %v2370
      %vm2373 = vcmp.eq.s32.totalorder %v1080, %v2370
      %vm2374 = vcmp.eq.s32.totalorder %v1081, %v2370
      %vm2375 = vcmp.eq.s32.totalorder %v1082, %v2370
      %vm2376 = vcmp.eq.s32.totalorder %v1083, %v2370
      %vm2377 = vcmp.eq.s32.totalorder %v1084, %v2370
      %vm2378 = vcmp.eq.s32.totalorder %v1085, %v2370
      %vm2379 = vcmp.eq.s32.totalorder %v1086, %v2370
      %s2380 = scalar_select %p2369, 1, 0
      %v2381 = vstv %s2380
      %vm2382 = vcmp.eq.s32.totalorder %v2381, 1
      %vm2383 = vmand %vm2371, %vm2382
      %vm2384 = vmand %vm2372, %vm2382
      %vm2385 = vmand %vm2373, %vm2382
      %vm2386 = vmand %vm2374, %vm2382
      %vm2387 = vmand %vm2375, %vm2382
      %vm2388 = vmand %vm2376, %vm2382
      %vm2389 = vmand %vm2377, %vm2382
      %vm2390 = vmand %vm2378, %vm2382
      %vm2391 = vmand %vm2379, %vm2382
      %v2392 = vsel %vm2383, 1, 0
      %v2393 = vsel %vm2384, 1, 0
      %v2394 = vsel %vm2385, 1, 0
      %v2395 = vsel %vm2386, 1, 0
      %v2396 = vsel %vm2387, 1, 0
      %v2397 = vsel %vm2388, 1, 0
      %v2398 = vsel %vm2389, 1, 0
      %v2399 = vsel %vm2390, 1, 0
      %v2400 = vsel %vm2391, 1, 0
      %v2401 = vand.u32 %v2392, 65535
      %v2402 = vshra.s32 %v2392, 16
      %v2403 = vcvt.s32.f32 %v2401
      %v2404 = vcvt.s32.f32 %v2402
      %2405 = vmax.xlane.f32.xlu0 %v2404
      %v2406 = vpop.xlane.xlu0 %2405
      %vm2407 = vcmp.eq.f32.partialorder %v2404, %v2406
      %v2408 = vsel %vm2407, %v2403, -inf
      %2409 = vmax.xlane.f32.xlu0 %v2408
      %v2410 = vpop.xlane.xlu0 %2409
      %v2411 = vcvt.f32.s32 %v2410
      %v2412 = vcvt.f32.s32 %v2406
      %v2413 = vshll.u32 %v2412, 16
      %v2414 = vadd.s32 %v2413, %v2411
      %v2415 = vand.u32 %v2393, 65535
      %v2416 = vshra.s32 %v2393, 16
      %v2417 = vcvt.s32.f32 %v2415
      %v2418 = vcvt.s32.f32 %v2416
      %2419 = vmax.xlane.f32.xlu0 %v2418
      %v2420 = vpop.xlane.xlu0 %2419
      %vm2421 = vcmp.eq.f32.partialorder %v2418, %v2420
      %v2422 = vsel %vm2421, %v2417, -inf
      %2423 = vmax.xlane.f32.xlu0 %v2422
      %v2424 = vpop.xlane.xlu0 %2423
      %v2425 = vcvt.f32.s32 %v2424
      %v2426 = vcvt.f32.s32 %v2420
      %v2427 = vshll.u32 %v2426, 16
      %v2428 = vadd.s32 %v2427, %v2425
      %v2429 = vand.u32 %v2394, 65535
      %v2430 = vshra.s32 %v2394, 16
      %v2431 = vcvt.s32.f32 %v2429
      %v2432 = vcvt.s32.f32 %v2430
      %2433 = vmax.xlane.f32.xlu0 %v2432
      %v2434 = vpop.xlane.xlu0 %2433
      %vm2435 = vcmp.eq.f32.partialorder %v2432, %v2434
      %v2436 = vsel %vm2435, %v2431, -inf
      %2437 = vmax.xlane.f32.xlu0 %v2436
      %v2438 = vpop.xlane.xlu0 %2437
      %v2439 = vcvt.f32.s32 %v2438
      %v2440 = vcvt.f32.s32 %v2434
      %v2441 = vshll.u32 %v2440, 16
      %v2442 = vadd.s32 %v2441, %v2439
      %v2443 = vand.u32 %v2395, 65535
      %v2444 = vshra.s32 %v2395, 16
      %v2445 = vcvt.s32.f32 %v2443
      %v2446 = vcvt.s32.f32 %v2444
      %2447 = vmax.xlane.f32.xlu0 %v2446
      %v2448 = vpop.xlane.xlu0 %2447
      %vm2449 = vcmp.eq.f32.partialorder %v2446, %v2448
      %v2450 = vsel %vm2449, %v2445, -inf
      %2451 = vmax.xlane.f32.xlu0 %v2450
      %v2452 = vpop.xlane.xlu0 %2451
      %v2453 = vcvt.f32.s32 %v2452
      %v2454 = vcvt.f32.s32 %v2448
      %v2455 = vshll.u32 %v2454, 16
      %v2456 = vadd.s32 %v2455, %v2453
      %v2457 = vand.u32 %v2396, 65535
      %v2458 = vshra.s32 %v2396, 16
      %v2459 = vcvt.s32.f32 %v2457
      %v2460 = vcvt.s32.f32 %v2458
      %2461 = vmax.xlane.f32.xlu0 %v2460
      %v2462 = vpop.xlane.xlu0 %2461
      %vm2463 = vcmp.eq.f32.partialorder %v2460, %v2462
      %v2464 = vsel %vm2463, %v2459, -inf
      %2465 = vmax.xlane.f32.xlu0 %v2464
      %v2466 = vpop.xlane.xlu0 %2465
      %v2467 = vcvt.f32.s32 %v2466
      %v2468 = vcvt.f32.s32 %v2462
      %v2469 = vshll.u32 %v2468, 16
      %v2470 = vadd.s32 %v2469, %v2467
      %v2471 = vand.u32 %v2397, 65535
      %v2472 = vshra.s32 %v2397, 16
      %v2473 = vcvt.s32.f32 %v2471
      %v2474 = vcvt.s32.f32 %v2472
      %2475 = vmax.xlane.f32.xlu0 %v2474
      %v2476 = vpop.xlane.xlu0 %2475
      %vm2477 = vcmp.eq.f32.partialorder %v2474, %v2476
      %v2478 = vsel %vm2477, %v2473, -inf
      %2479 = vmax.xlane.f32.xlu0 %v2478
      %v2480 = vpop.xlane.xlu0 %2479
      %v2481 = vcvt.f32.s32 %v2480
      %v2482 = vcvt.f32.s32 %v2476
      %v2483 = vshll.u32 %v2482, 16
      %v2484 = vadd.s32 %v2483, %v2481
      %v2485 = vand.u32 %v2398, 65535
      %v2486 = vshra.s32 %v2398, 16
      %v2487 = vcvt.s32.f32 %v2485
      %v2488 = vcvt.s32.f32 %v2486
      %2489 = vmax.xlane.f32.xlu0 %v2488
      %v2490 = vpop.xlane.xlu0 %2489
      %vm2491 = vcmp.eq.f32.partialorder %v2488, %v2490
      %v2492 = vsel %vm2491, %v2487, -inf
      %2493 = vmax.xlane.f32.xlu0 %v2492
      %v2494 = vpop.xlane.xlu0 %2493
      %v2495 = vcvt.f32.s32 %v2494
      %v2496 = vcvt.f32.s32 %v2490
      %v2497 = vshll.u32 %v2496, 16
      %v2498 = vadd.s32 %v2497, %v2495
      %v2499 = vand.u32 %v2399, 65535
      %v2500 = vshra.s32 %v2399, 16
      %v2501 = vcvt.s32.f32 %v2499
      %v2502 = vcvt.s32.f32 %v2500
      %2503 = vmax.xlane.f32.xlu0 %v2502
      %v2504 = vpop.xlane.xlu0 %2503
      %vm2505 = vcmp.eq.f32.partialorder %v2502, %v2504
      %v2506 = vsel %vm2505, %v2501, -inf
      %2507 = vmax.xlane.f32.xlu0 %v2506
      %v2508 = vpop.xlane.xlu0 %2507
      %v2509 = vcvt.f32.s32 %v2508
      %v2510 = vcvt.f32.s32 %v2504
      %v2511 = vshll.u32 %v2510, 16
      %v2512 = vadd.s32 %v2511, %v2509
      %v2513 = vand.u32 %v2400, 65535
      %v2514 = vshra.s32 %v2400, 16
      %v2515 = vcvt.s32.f32 %v2513
      %v2516 = vcvt.s32.f32 %v2514
      %2517 = vmax.xlane.f32.xlu0 %v2516
      %v2518 = vpop.xlane.xlu0 %2517
      %vm2519 = vcmp.eq.f32.partialorder %v2516, %v2518
      %v2520 = vsel %vm2519, %v2515, -inf
      %2521 = vmax.xlane.f32.xlu0 %v2520
      %v2522 = vpop.xlane.xlu0 %2521
      %v2523 = vcvt.f32.s32 %v2522
      %v2524 = vcvt.f32.s32 %v2518
      %v2525 = vshll.u32 %v2524, 16
      %v2526 = vadd.s32 %v2525, %v2523
      %vm2527 = vcmp.gt.s32.totalorder %v2414, 0
      %vm2528 = vcmp.gt.s32.totalorder %v2428, 0
      %vm2529 = vcmp.gt.s32.totalorder %v2442, 0
      %vm2530 = vcmp.gt.s32.totalorder %v2456, 0
      %vm2531 = vcmp.gt.s32.totalorder %v2470, 0
      %vm2532 = vcmp.gt.s32.totalorder %v2484, 0
      %vm2533 = vcmp.gt.s32.totalorder %v2498, 0
      %vm2534 = vcmp.gt.s32.totalorder %v2512, 0
      %vm2535 = vcmp.gt.s32.totalorder %v2526, 0
      %vm2536 = vcmp.gt.s32.totalorder %v2392, %v2396
      %v2537 = vsel %vm2536, %v2392, %v2396
      %vm2538 = vcmp.gt.s32.totalorder %v2393, %v2397
      %v2539 = vsel %vm2538, %v2393, %v2397
      %vm2540 = vcmp.gt.s32.totalorder %v2394, %v2398
      %v2541 = vsel %vm2540, %v2394, %v2398
      %vm2542 = vcmp.gt.s32.totalorder %v2395, %v2399
      %v2543 = vsel %vm2542, %v2395, %v2399
      %vm2544 = vcmp.gt.s32.totalorder %v2537, %v2400
      %v2545 = vsel %vm2544, %v2537, %v2400
      %vm2546 = vcmp.gt.s32.totalorder %v2545, %v2539
      %v2547 = vsel %vm2546, %v2545, %v2539
      %vm2548 = vcmp.gt.s32.totalorder %v2541, %v2543
      %v2549 = vsel %vm2548, %v2541, %v2543
      %vm2550 = vcmp.gt.s32.totalorder %v2547, %v2549
      %v2551 = vsel %vm2550, %v2547, %v2549
      %v2552 = vrot.slane %v2551, 4
      %vm2553 = vcmp.gt.s32.totalorder %v2551, %v2552
      %v2554 = vsel %vm2553, %v2551, %v2552
      %v2555 = vrot.slane %v2554, 2
      %vm2556 = vcmp.gt.s32.totalorder %v2554, %v2555
      %v2557 = vsel %vm2556, %v2554, %v2555
      %v2558 = vrot.slane %v2557, 1
      %vm2559 = vcmp.gt.s32.totalorder %v2557, %v2558
      %v2560 = vsel %vm2559, %v2557, %v2558
      %vm2561 = vcmp.gt.s32.totalorder %v2560, 0
      %v2562 = vsel %vm2527, %v87, 9218
      %v2563 = vsel %vm2528, %v88, 9218
      %v2564 = vsel %vm2529, %v89, 9218
      %v2565 = vsel %vm2530, %v90, 9218
      %v2566 = vsel %vm2531, %v91, 9218
      %v2567 = vsel %vm2532, %v92, 9218
      %v2568 = vsel %vm2533, %v93, 9218
      %v2569 = vsel %vm2534, %v94, 9218
      %v2570 = vsel %vm2535, %v95, 9218
      %vm2571 = vcmp.lt.s32.totalorder %v2562, %v2566
      %v2572 = vsel %vm2571, %v2562, %v2566
      %vm2573 = vcmp.lt.s32.totalorder %v2563, %v2567
      %v2574 = vsel %vm2573, %v2563, %v2567
      %vm2575 = vcmp.lt.s32.totalorder %v2564, %v2568
      %v2576 = vsel %vm2575, %v2564, %v2568
      %vm2577 = vcmp.lt.s32.totalorder %v2565, %v2569
      %v2578 = vsel %vm2577, %v2565, %v2569
      %vm2579 = vcmp.lt.s32.totalorder %v2572, %v2570
      %v2580 = vsel %vm2579, %v2572, %v2570
      %vm2581 = vcmp.lt.s32.totalorder %v2580, %v2574
      %v2582 = vsel %vm2581, %v2580, %v2574
      %vm2583 = vcmp.lt.s32.totalorder %v2576, %v2578
      %v2584 = vsel %vm2583, %v2576, %v2578
      %vm2585 = vcmp.lt.s32.totalorder %v2582, %v2584
      %v2586 = vsel %vm2585, %v2582, %v2584
      %v2587 = vrot.slane %v2586, 4
      %vm2588 = vcmp.lt.s32.totalorder %v2586, %v2587
      %v2589 = vsel %vm2588, %v2586, %v2587
      %v2590 = vrot.slane %v2589, 2
      %vm2591 = vcmp.lt.s32.totalorder %v2589, %v2590
      %v2592 = vsel %vm2591, %v2589, %v2590
      %v2593 = vrot.slane %v2592, 1
      %vm2594 = vcmp.lt.s32.totalorder %v2592, %v2593
      %v2595 = vsel %vm2594, %v2592, %v2593
      %s2596 = vtos %v2595
      %v2597 = vadd.s32 %v87, 1
      %v2598 = vadd.s32 %v88, 1
      %v2599 = vadd.s32 %v89, 1
      %v2600 = vadd.s32 %v90, 1
      %v2601 = vadd.s32 %v91, 1
      %v2602 = vadd.s32 %v92, 1
      %v2603 = vadd.s32 %v93, 1
      %v2604 = vadd.s32 %v94, 1
      %v2605 = vadd.s32 %v95, 1
      %v2606 = vsel %vm2527, %v2597, 0
      %v2607 = vsel %vm2528, %v2598, 0
      %v2608 = vsel %vm2529, %v2599, 0
      %v2609 = vsel %vm2530, %v2600, 0
      %v2610 = vsel %vm2531, %v2601, 0
      %v2611 = vsel %vm2532, %v2602, 0
      %v2612 = vsel %vm2533, %v2603, 0
      %v2613 = vsel %vm2534, %v2604, 0
      %v2614 = vsel %vm2535, %v2605, 0
      %vm2615 = vcmp.gt.s32.totalorder %v2606, %v2610
      %v2616 = vsel %vm2615, %v2606, %v2610
      %vm2617 = vcmp.gt.s32.totalorder %v2607, %v2611
      %v2618 = vsel %vm2617, %v2607, %v2611
      %vm2619 = vcmp.gt.s32.totalorder %v2608, %v2612
      %v2620 = vsel %vm2619, %v2608, %v2612
      %vm2621 = vcmp.gt.s32.totalorder %v2609, %v2613
      %v2622 = vsel %vm2621, %v2609, %v2613
      %vm2623 = vcmp.gt.s32.totalorder %v2616, %v2614
      %v2624 = vsel %vm2623, %v2616, %v2614
      %vm2625 = vcmp.gt.s32.totalorder %v2624, %v2618
      %v2626 = vsel %vm2625, %v2624, %v2618
      %vm2627 = vcmp.gt.s32.totalorder %v2620, %v2622
      %v2628 = vsel %vm2627, %v2620, %v2622
      %vm2629 = vcmp.gt.s32.totalorder %v2626, %v2628
      %v2630 = vsel %vm2629, %v2626, %v2628
      %v2631 = vrot.slane %v2630, 4
      %vm2632 = vcmp.gt.s32.totalorder %v2630, %v2631
      %v2633 = vsel %vm2632, %v2630, %v2631
      %v2634 = vrot.slane %v2633, 2
      %vm2635 = vcmp.gt.s32.totalorder %v2633, %v2634
      %v2636 = vsel %vm2635, %v2633, %v2634
      %v2637 = vrot.slane %v2636, 1
      %vm2638 = vcmp.gt.s32.totalorder %v2636, %v2637
      %v2639 = vsel %vm2638, %v2636, %v2637
      %s2640 = vtos %v2639
      %v2641 = vsel %vm2561, %v97, 9218
      %v2642 = vand.u32 %v2641, 65535
      %v2643 = vshra.s32 %v2641, 16
      %v2644 = vcvt.s32.f32 %v2642
      %v2645 = vcvt.s32.f32 %v2643
      %2646 = vmin.xlane.f32.xlu0 %v2645
      %v2647 = vpop.xlane.xlu0 %2646
      %vm2648 = vcmp.eq.f32.partialorder %v2645, %v2647
      %v2649 = vsel %vm2648, %v2644, inf
      %2650 = vmin.xlane.f32.xlu0 %v2649
      %v2651 = vpop.xlane.xlu0 %2650
      %v2652 = vcvt.f32.s32 %v2651
      %v2653 = vcvt.f32.s32 %v2647
      %v2654 = vshll.u32 %v2653, 16
      %v2655 = vadd.s32 %v2654, %v2652
      %s2656 = vtos %v2655
      %v2657 = vadd.s32 %v97, 1
      %v2658 = vsel %vm2561, %v2657, 0
      %v2659 = vand.u32 %v2658, 65535
      %v2660 = vshra.s32 %v2658, 16
      %v2661 = vcvt.s32.f32 %v2659
      %v2662 = vcvt.s32.f32 %v2660
      %2663 = vmax.xlane.f32.xlu0 %v2662
      %v2664 = vpop.xlane.xlu0 %2663
      %vm2665 = vcmp.eq.f32.partialorder %v2662, %v2664
      %v2666 = vsel %vm2665, %v2661, -inf
      %2667 = vmax.xlane.f32.xlu0 %v2666
      %v2668 = vpop.xlane.xlu0 %2667
      %v2669 = vcvt.f32.s32 %v2668
      %v2670 = vcvt.f32.s32 %v2664
      %v2671 = vshll.u32 %v2670, 16
      %v2672 = vadd.s32 %v2671, %v2669
      %s2673 = vtos %v2672
      %v2674 = vstv %s2287
      %vm2675 = vcmp.eq.s32.totalorder %v97, %v2674
      %vm2676 = vcmp.eq.s32.totalorder %v87, %v2674
      %vm2677 = vcmp.eq.s32.totalorder %v88, %v2674
      %vm2678 = vcmp.eq.s32.totalorder %v89, %v2674
      %vm2679 = vcmp.eq.s32.totalorder %v90, %v2674
      %v2680 = vstv %s2596
      %v2681 = vsel %vm2675, %v2680, %v2298
      %v2682 = vsel %vm2676, %v2680, %v2303
      %v2683 = vsel %vm2677, %v2680, %v2304
      %v2684 = vsel %vm2678, %v2680, %v2305
      %v2685 = vsel %vm2679, %v2680, %v2306
      %v2686 = vstv %s2656
      %v2687 = vsel %vm2675, %v2686, %v2299
      %v2688 = vsel %vm2676, %v2686, %v2307
      %v2689 = vsel %vm2677, %v2686, %v2308
      %v2690 = vsel %vm2678, %v2686, %v2309
      %v2691 = vsel %vm2679, %v2686, %v2310
      %v2692 = vstv %s2640
      %v2693 = vsel %vm2675, %v2692, %v2300
      %v2694 = vsel %vm2676, %v2692, %v2311
      %v2695 = vsel %vm2677, %v2692, %v2312
      %v2696 = vsel %vm2678, %v2692, %v2313
      %v2697 = vsel %vm2679, %v2692, %v2314
      %v2698 = vstv %s2673
      %v2699 = vsel %vm2675, %v2698, %v2301
      %v2700 = vsel %vm2676, %v2698, %v2315
      %v2701 = vsel %vm2677, %v2698, %v2316
      %v2702 = vsel %vm2678, %v2698, %v2317
      %v2703 = vsel %vm2679, %v2698, %v2318
      %v2704 = vsel %vm2675, %v2381, %v2302
      %v2705 = vsel %vm2676, %v2381, %v2319
      %v2706 = vsel %vm2677, %v2381, %v2320
      %v2707 = vsel %vm2678, %v2381, %v2321
      %v2708 = vsel %vm2679, %v2381, %v2322
      %vm2709 = vcmp.eq.s32.totalorder %v2289, %v2370
      %vm2710 = vcmp.eq.s32.totalorder %v2290, %v2370
      %vm2711 = vcmp.eq.s32.totalorder %v2291, %v2370
      %vm2712 = vcmp.eq.s32.totalorder %v2292, %v2370
      %vm2713 = vcmp.eq.s32.totalorder %v2293, %v2370
      %vm2714 = vcmp.eq.s32.totalorder %v2294, %v2370
      %vm2715 = vcmp.eq.s32.totalorder %v2295, %v2370
      %vm2716 = vcmp.eq.s32.totalorder %v2296, %v2370
      %vm2717 = vcmp.eq.s32.totalorder %v2297, %v2370
      %v2718 = vsel %vm2709, 9218, %v2289
      %v2719 = vsel %vm2710, 9218, %v2290
      %v2720 = vsel %vm2711, 9218, %v2291
      %v2721 = vsel %vm2712, 9218, %v2292
      %v2722 = vsel %vm2713, 9218, %v2293
      %v2723 = vsel %vm2714, 9218, %v2294
      %v2724 = vsel %vm2715, 9218, %v2295
      %v2725 = vsel %vm2716, 9218, %v2296
      %v2726 = vsel %vm2717, 9218, %v2297
      %s2727 = sadd.s32 %s2287, 1
    $region21: #{region_cluster_forward.1} parent=1 // loop_footer
      _
    $region22: #{region_cluster_forward.1} parent=1 // loop_footer_branch
      %2286 = sbr.rel target = $region18
    $region23: #{region_cluster_forward.1} parent=1 // loop_exit
      _
    %v2728 = vadd.s32 %v2299, %v2301
    %v2729 = vadd.s32 %v2307, %v2315
    %v2730 = vadd.s32 %v2308, %v2316
    %v2731 = vadd.s32 %v2309, %v2317
    %v2732 = vadd.s32 %v2310, %v2318
    %v2733 = vsub.s32 %v2301, %v2299
    %v2734 = vsub.s32 %v2300, %v2298
    %v2735 = vmul.u32 %v2733, %v2734
    %v2736 = vsub.s32 %v2315, %v2307
    %v2737 = vsub.s32 %v2316, %v2308
    %v2738 = vsub.s32 %v2317, %v2309
    %v2739 = vsub.s32 %v2318, %v2310
    %v2740 = vsub.s32 %v2311, %v2303
    %v2741 = vsub.s32 %v2312, %v2304
    %v2742 = vsub.s32 %v2313, %v2305
    %v2743 = vsub.s32 %v2314, %v2306
    %v2744 = vmul.u32 %v2736, %v2740
    %v2745 = vmul.u32 %v2737, %v2741
    %v2746 = vmul.u32 %v2738, %v2742
    %v2747 = vmul.u32 %v2739, %v2743
    %vm2748 = vcmp.gt.s32.totalorder %v2302, 0
    %vm2749 = vcmp.gt.s32.totalorder %v2319, 0
    %vm2750 = vcmp.gt.s32.totalorder %v2320, 0
    %vm2751 = vcmp.gt.s32.totalorder %v2321, 0
    %vm2752 = vcmp.gt.s32.totalorder %v2322, 0
    %vm2753 = vcmp.lt.s32.totalorder %v2729, %v2728
    %vm2754 = vcmp.lt.s32.totalorder %v2730, %v2728
    %vm2755 = vcmp.lt.s32.totalorder %v2731, %v2728
    %vm2756 = vcmp.lt.s32.totalorder %v2732, %v2728
    %vm2757 = vcmp.eq.s32.totalorder %v2729, %v2728
    %vm2758 = vcmp.eq.s32.totalorder %v2730, %v2728
    %vm2759 = vcmp.eq.s32.totalorder %v2731, %v2728
    %vm2760 = vcmp.eq.s32.totalorder %v2732, %v2728
    %vm2761 = vcmp.lt.s32.totalorder %v87, %v97
    %vm2762 = vcmp.lt.s32.totalorder %v88, %v97
    %vm2763 = vcmp.lt.s32.totalorder %v89, %v97
    %vm2764 = vcmp.lt.s32.totalorder %v90, %v97
    %vm2765 = vmand %vm2757, %vm2761
    %vm2766 = vmand %vm2758, %vm2762
    %vm2767 = vmand %vm2759, %vm2763
    %vm2768 = vmand %vm2760, %vm2764
    %vm2769 = vmor %vm2753, %vm2765
    %vm2770 = vmor %vm2754, %vm2766
    %vm2771 = vmor %vm2755, %vm2767
    %vm2772 = vmor %vm2756, %vm2768
    %vm2773 = vcmp.lt.s32.totalorder %v2728, %v2729
    %vm2774 = vcmp.lt.s32.totalorder %v2728, %v2730
    %vm2775 = vcmp.lt.s32.totalorder %v2728, %v2731
    %vm2776 = vcmp.lt.s32.totalorder %v2728, %v2732
    %vm2777 = vcmp.eq.s32.totalorder %v2728, %v2729
    %vm2778 = vcmp.eq.s32.totalorder %v2728, %v2730
    %vm2779 = vcmp.eq.s32.totalorder %v2728, %v2731
    %vm2780 = vcmp.eq.s32.totalorder %v2728, %v2732
    %vm2781 = vcmp.lt.s32.totalorder %v97, %v87
    %vm2782 = vcmp.lt.s32.totalorder %v97, %v88
    %vm2783 = vcmp.lt.s32.totalorder %v97, %v89
    %vm2784 = vcmp.lt.s32.totalorder %v97, %v90
    %vm2785 = vmand %vm2777, %vm2781
    %vm2786 = vmand %vm2778, %vm2782
    %vm2787 = vmand %vm2779, %vm2783
    %vm2788 = vmand %vm2780, %vm2784
    %vm2789 = vmor %vm2773, %vm2785
    %vm2790 = vmor %vm2774, %vm2786
    %vm2791 = vmor %vm2775, %vm2787
    %vm2792 = vmor %vm2776, %vm2788
    %v2793 = vsel %vm2749, 1, 0
    %v2794 = vsel %vm2750, 1, 0
    %v2795 = vsel %vm2751, 1, 0
    %v2796 = vsel %vm2752, 1, 0
    %vm2797 = vcmp.eq.s32.totalorder %v2793, 1
    %vm2798 = vcmp.eq.s32.totalorder %v2794, 1
    %vm2799 = vcmp.eq.s32.totalorder %v2795, 1
    %vm2800 = vcmp.eq.s32.totalorder %v2796, 1
    %vm2801 = vmand %vm2769, %vm2797
    %vm2802 = vmand %vm2770, %vm2798
    %vm2803 = vmand %vm2771, %vm2799
    %vm2804 = vmand %vm2772, %vm2800
    %v2805 = vsel %vm2801, 1, 0
    %v2806 = vsel %vm2802, 1, 0
    %v2807 = vsel %vm2803, 1, 0
    %v2808 = vsel %vm2804, 1, 0
    %vm2809 = vcmask 261120
    %v2810 = vsel %vm2809, %v2805, 0
    %v2811 = vsel %vm2809, %v2806, 0
    %v2812 = vsel %vm2809, %v2807, 0
    %v2813 = vsel %vm2809, %v2808, 0
    %v2814 = vadd.s32 %v2810, %v2811
    %v2815 = vadd.s32 %v2812, %v2813
    %v2816 = vadd.s32 %v2814, %v2815
    %v2817 = vrot.slane %v2816, 4
    %v2818 = vadd.s32 %v2816, %v2817
    %v2819 = vrot.slane %v2818, 2
    %v2820 = vadd.s32 %v2818, %v2819
    %v2821 = vrot.slane %v2820, 1
    %v2822 = vadd.s32 %v2820, %v2821
    %v2823 = vsel %vm2748, 1, 0
    %vm2824 = vcmp.eq.s32.totalorder %v2823, 1
    %vm2825 = vmand %vm2789, %vm2824
    %vm2826 = vmand %vm2790, %vm2824
    %vm2827 = vmand %vm2791, %vm2824
    %vm2828 = vmand %vm2792, %vm2824
    %v2829 = vsel %vm2825, 1, 0
    %v2830 = vsel %vm2826, 1, 0
    %v2831 = vsel %vm2827, 1, 0
    %v2832 = vsel %vm2828, 1, 0
    %v2833 = vsel %vm2809, %v2829, 0
    %v2834 = vand.u32 %v2833, 65535
    %v2835 = vshrl.u32 %v2833, 16
    %v2836 = vcvt.s32.f32 %v2834
    %v2837 = vcvt.s32.f32 %v2835
    %2838 = vadd.xlane.f32.xlu0 %v2836
    %v2839 = vpop.xlane.xlu0 %2838
    %2840 = vadd.xlane.f32.xlu0 %v2837
    %v2841 = vpop.xlane.xlu0 %2840
    %v2842 = vcvt.f32.s32 %v2839
    %v2843 = vcvt.f32.s32 %v2841
    %v2844 = vshll.u32 %v2843, 16
    %v2845 = vadd.s32 %v2844, %v2842
    %v2846 = vsel %vm2809, %v2830, 0
    %v2847 = vand.u32 %v2846, 65535
    %v2848 = vshrl.u32 %v2846, 16
    %v2849 = vcvt.s32.f32 %v2847
    %v2850 = vcvt.s32.f32 %v2848
    %2851 = vadd.xlane.f32.xlu0 %v2849
    %v2852 = vpop.xlane.xlu0 %2851
    %2853 = vadd.xlane.f32.xlu0 %v2850
    %v2854 = vpop.xlane.xlu0 %2853
    %v2855 = vcvt.f32.s32 %v2852
    %v2856 = vcvt.f32.s32 %v2854
    %v2857 = vshll.u32 %v2856, 16
    %v2858 = vadd.s32 %v2857, %v2855
    %v2859 = vsel %vm2809, %v2831, 0
    %v2860 = vand.u32 %v2859, 65535
    %v2861 = vshrl.u32 %v2859, 16
    %v2862 = vcvt.s32.f32 %v2860
    %v2863 = vcvt.s32.f32 %v2861
    %2864 = vadd.xlane.f32.xlu0 %v2862
    %v2865 = vpop.xlane.xlu0 %2864
    %2866 = vadd.xlane.f32.xlu0 %v2863
    %v2867 = vpop.xlane.xlu0 %2866
    %v2868 = vcvt.f32.s32 %v2865
    %v2869 = vcvt.f32.s32 %v2867
    %v2870 = vshll.u32 %v2869, 16
    %v2871 = vadd.s32 %v2870, %v2868
    %v2872 = vsel %vm2809, %v2832, 0
    %v2873 = vand.u32 %v2872, 65535
    %v2874 = vshrl.u32 %v2872, 16
    %v2875 = vcvt.s32.f32 %v2873
    %v2876 = vcvt.s32.f32 %v2874
    %2877 = vadd.xlane.f32.xlu0 %v2875
    %v2878 = vpop.xlane.xlu0 %2877
    %2879 = vadd.xlane.f32.xlu0 %v2876
    %v2880 = vpop.xlane.xlu0 %2879
    %v2881 = vcvt.f32.s32 %v2878
    %v2882 = vcvt.f32.s32 %v2880
    %v2883 = vshll.u32 %v2882, 16
    %v2884 = vadd.s32 %v2883, %v2881
    %vm2885 = vcmp.lt.s32.totalorder %v2822, 26
    %vm2886 = vmand %vm2748, %vm2885
    %vm2887 = vcmp.ge.s32.totalorder %v2735, 100
    %vm2888 = vmand %vm2886, %vm2887
    %vm2889 = vcmp.lt.s32.totalorder %v2845, 26
    %vm2890 = vcmp.lt.s32.totalorder %v2858, 26
    %vm2891 = vcmp.lt.s32.totalorder %v2871, 26
    %vm2892 = vcmp.lt.s32.totalorder %v2884, 26
    %vm2893 = vmand %vm2749, %vm2889
    %vm2894 = vmand %vm2750, %vm2890
    %vm2895 = vmand %vm2751, %vm2891
    %vm2896 = vmand %vm2752, %vm2892
    %vm2897 = vcmp.ge.s32.totalorder %v2744, 100
    %vm2898 = vcmp.ge.s32.totalorder %v2745, 100
    %vm2899 = vcmp.ge.s32.totalorder %v2746, 100
    %vm2900 = vcmp.ge.s32.totalorder %v2747, 100
    %vm2901 = vmand %vm2893, %vm2897
    %vm2902 = vmand %vm2894, %vm2898
    %vm2903 = vmand %vm2895, %vm2899
    %vm2904 = vmand %vm2896, %vm2900
    %v2905 = vsel %vm2901, 1, 0
    %v2906 = vsel %vm2902, 1, 0
    %v2907 = vsel %vm2903, 1, 0
    %v2908 = vsel %vm2904, 1, 0
    %vm2909 = vcmp.eq.s32.totalorder %v2905, 1
    %vm2910 = vcmp.eq.s32.totalorder %v2906, 1
    %vm2911 = vcmp.eq.s32.totalorder %v2907, 1
    %vm2912 = vcmp.eq.s32.totalorder %v2908, 1
    %vm2913 = vmand %vm2769, %vm2909
    %vm2914 = vmand %vm2770, %vm2910
    %vm2915 = vmand %vm2771, %vm2911
    %vm2916 = vmand %vm2772, %vm2912
    %v2917 = vsel %vm2913, 1, 0
    %v2918 = vsel %vm2914, 1, 0
    %v2919 = vsel %vm2915, 1, 0
    %v2920 = vsel %vm2916, 1, 0
    %v2921 = vsel %vm2809, %v2917, 0
    %v2922 = vsel %vm2809, %v2918, 0
    %v2923 = vsel %vm2809, %v2919, 0
    %v2924 = vsel %vm2809, %v2920, 0
    %v2925 = vadd.s32 %v2921, %v2922
    %v2926 = vadd.s32 %v2923, %v2924
    %v2927 = vadd.s32 %v2925, %v2926
    %v2928 = vrot.slane %v2927, 4
    %v2929 = vadd.s32 %v2927, %v2928
    %v2930 = vrot.slane %v2929, 2
    %v2931 = vadd.s32 %v2929, %v2930
    %v2932 = vrot.slane %v2931, 1
    %v2933 = vadd.s32 %v2931, %v2932
    %v2934 = vsel %vm2888, 1, 0
    %vm2935 = vcmp.gt.s32.totalorder %v2934, 0
    %vm2936 = vcmp.eq.s32.totalorder %v2933, 0
    %vm2937 = vmand %vm2935, %vm2936
    %v2938 = vsel %vm2937, %v2298, 9218
    %v2939 = vsel %vm2809, %v2938, 2147483647
    %v2940 = vand.u32 %v2939, 65535
    %v2941 = vshra.s32 %v2939, 16
    %v2942 = vcvt.s32.f32 %v2940
    %v2943 = vcvt.s32.f32 %v2941
    %2944 = vmin.xlane.f32.xlu0 %v2943
    %v2945 = vpop.xlane.xlu0 %2944
    %vm2946 = vcmp.eq.f32.partialorder %v2943, %v2945
    %v2947 = vsel %vm2946, %v2942, inf
    %2948 = vmin.xlane.f32.xlu0 %v2947
    %v2949 = vpop.xlane.xlu0 %2948
    %v2950 = vcvt.f32.s32 %v2949
    %v2951 = vcvt.f32.s32 %v2945
    %v2952 = vshll.u32 %v2951, 16
    %v2953 = vadd.s32 %v2952, %v2950
    %s2954 = vtos %v2953
    %v2955 = vsel %vm2937, %v2299, 9218
    %v2956 = vsel %vm2809, %v2955, 2147483647
    %v2957 = vand.u32 %v2956, 65535
    %v2958 = vshra.s32 %v2956, 16
    %v2959 = vcvt.s32.f32 %v2957
    %v2960 = vcvt.s32.f32 %v2958
    %2961 = vmin.xlane.f32.xlu0 %v2960
    %v2962 = vpop.xlane.xlu0 %2961
    %vm2963 = vcmp.eq.f32.partialorder %v2960, %v2962
    %v2964 = vsel %vm2963, %v2959, inf
    %2965 = vmin.xlane.f32.xlu0 %v2964
    %v2966 = vpop.xlane.xlu0 %2965
    %v2967 = vcvt.f32.s32 %v2966
    %v2968 = vcvt.f32.s32 %v2962
    %v2969 = vshll.u32 %v2968, 16
    %v2970 = vadd.s32 %v2969, %v2967
    %s2971 = vtos %v2970
    %v2972 = vsel %vm2937, %v2300, 0
    %v2973 = vsel %vm2809, %v2972, 2147483648
    %v2974 = vand.u32 %v2973, 65535
    %v2975 = vshra.s32 %v2973, 16
    %v2976 = vcvt.s32.f32 %v2974
    %v2977 = vcvt.s32.f32 %v2975
    %2978 = vmax.xlane.f32.xlu0 %v2977
    %v2979 = vpop.xlane.xlu0 %2978
    %vm2980 = vcmp.eq.f32.partialorder %v2977, %v2979
    %v2981 = vsel %vm2980, %v2976, -inf
    %2982 = vmax.xlane.f32.xlu0 %v2981
    %v2983 = vpop.xlane.xlu0 %2982
    %v2984 = vcvt.f32.s32 %v2983
    %v2985 = vcvt.f32.s32 %v2979
    %v2986 = vshll.u32 %v2985, 16
    %v2987 = vadd.s32 %v2986, %v2984
    %s2988 = vtos %v2987
    %v2989 = vsel %vm2937, %v2301, 0
    %v2990 = vsel %vm2809, %v2989, 2147483648
    %v2991 = vand.u32 %v2990, 65535
    %v2992 = vshra.s32 %v2990, 16
    %v2993 = vcvt.s32.f32 %v2991
    %v2994 = vcvt.s32.f32 %v2992
    %2995 = vmax.xlane.f32.xlu0 %v2994
    %v2996 = vpop.xlane.xlu0 %2995
    %vm2997 = vcmp.eq.f32.partialorder %v2994, %v2996
    %v2998 = vsel %vm2997, %v2993, -inf
    %2999 = vmax.xlane.f32.xlu0 %v2998
    %v3000 = vpop.xlane.xlu0 %2999
    %v3001 = vcvt.f32.s32 %v3000
    %v3002 = vcvt.f32.s32 %v2996
    %v3003 = vshll.u32 %v3002, 16
    %v3004 = vadd.s32 %v3003, %v3001
    %s3005 = vtos %v3004
    %v3006 = vstv %s2954
    %vm3007 = vcmp.ge.s32.totalorder %v87, %v3006
    %vm3008 = vcmp.ge.s32.totalorder %v88, %v3006
    %vm3009 = vcmp.ge.s32.totalorder %v89, %v3006
    %vm3010 = vcmp.ge.s32.totalorder %v90, %v3006
    %vm3011 = vcmp.ge.s32.totalorder %v91, %v3006
    %vm3012 = vcmp.ge.s32.totalorder %v92, %v3006
    %vm3013 = vcmp.ge.s32.totalorder %v93, %v3006
    %vm3014 = vcmp.ge.s32.totalorder %v94, %v3006
    %v3015 = vstv %s2988
    %vm3016 = vcmp.lt.s32.totalorder %v87, %v3015
    %vm3017 = vcmp.lt.s32.totalorder %v88, %v3015
    %vm3018 = vcmp.lt.s32.totalorder %v89, %v3015
    %vm3019 = vcmp.lt.s32.totalorder %v90, %v3015
    %vm3020 = vcmp.lt.s32.totalorder %v91, %v3015
    %vm3021 = vcmp.lt.s32.totalorder %v92, %v3015
    %vm3022 = vcmp.lt.s32.totalorder %v93, %v3015
    %vm3023 = vcmp.lt.s32.totalorder %v94, %v3015
    %vm3024 = vmand %vm3007, %vm3016
    %vm3025 = vmand %vm3008, %vm3017
    %vm3026 = vmand %vm3009, %vm3018
    %vm3027 = vmand %vm3010, %vm3019
    %vm3028 = vmand %vm3011, %vm3020
    %vm3029 = vmand %vm3012, %vm3021
    %vm3030 = vmand %vm3013, %vm3022
    %vm3031 = vmand %vm3014, %vm3023
    %v3032 = vstv %s2971
    %vm3033 = vcmp.ge.s32.totalorder %v97, %v3032
    %v3034 = vstv %s3005
    %vm3035 = vcmp.lt.s32.totalorder %v97, %v3034
    %vm3036 = vmand %vm3033, %vm3035
    %vm3037 = vmand %vm3024, %vm3036
    %vm3038 = vmand %vm3025, %vm3036
    %vm3039 = vmand %vm3026, %vm3036
    %vm3040 = vmand %vm3027, %vm3036
    %vm3041 = vmand %vm3028, %vm3036
    %vm3042 = vmand %vm3029, %vm3036
    %vm3043 = vmand %vm3030, %vm3036
    %vm3044 = vmand %vm3031, %vm3036
    %vm3045 = vmpackc.low %vm3038, %vm3037
    %vm3046 = vmpackc.low %vm3040, %vm3039
    %vm3047 = vmpackc.even %vm3046, %vm3045
    %vm3048 = vmpackc.low %vm3042, %vm3041
    %vm3049 = vmpackc.low %vm3044, %vm3043
    %vm3050 = vmpackc.even %vm3049, %vm3048
    %v3051 = vsel %vm3047, 16843009, 0
    %v3052 = vsel %vm3050, 16843009, 0
    %3053 = vst.msk [vmem:[#allocation6] sm:$0xff] %vm68, %v3051
    %3054 = vst.msk [vmem:[#allocation6 + $0x8] sm:$0xff] %vm68, %v3052
    %vm3055 = vcmp.eq.s32.totalorder %v2933, 1
    %vm3056 = vmand %vm2935, %vm3055
    %v3057 = vsel %vm3056, %v2298, 9218
    %v3058 = vsel %vm2809, %v3057, 2147483647
    %v3059 = vand.u32 %v3058, 65535
    %v3060 = vshra.s32 %v3058, 16
    %v3061 = vcvt.s32.f32 %v3059
    %v3062 = vcvt.s32.f32 %v3060
    %3063 = vmin.xlane.f32.xlu0 %v3062
    %v3064 = vpop.xlane.xlu0 %3063
    %vm3065 = vcmp.eq.f32.partialorder %v3062, %v3064
    %v3066 = vsel %vm3065, %v3061, inf
    %3067 = vmin.xlane.f32.xlu0 %v3066
    %v3068 = vpop.xlane.xlu0 %3067
    %v3069 = vcvt.f32.s32 %v3068
    %v3070 = vcvt.f32.s32 %v3064
    %v3071 = vshll.u32 %v3070, 16
    %v3072 = vadd.s32 %v3071, %v3069
    %s3073 = vtos %v3072
    %v3074 = vsel %vm3056, %v2299, 9218
    %v3075 = vsel %vm2809, %v3074, 2147483647
    %v3076 = vand.u32 %v3075, 65535
    %v3077 = vshra.s32 %v3075, 16
    %v3078 = vcvt.s32.f32 %v3076
    %v3079 = vcvt.s32.f32 %v3077
    %3080 = vmin.xlane.f32.xlu0 %v3079
    %v3081 = vpop.xlane.xlu0 %3080
    %vm3082 = vcmp.eq.f32.partialorder %v3079, %v3081
    %v3083 = vsel %vm3082, %v3078, inf
    %3084 = vmin.xlane.f32.xlu0 %v3083
    %v3085 = vpop.xlane.xlu0 %3084
    %v3086 = vcvt.f32.s32 %v3085
    %v3087 = vcvt.f32.s32 %v3081
    %v3088 = vshll.u32 %v3087, 16
    %v3089 = vadd.s32 %v3088, %v3086
    %s3090 = vtos %v3089
    %v3091 = vsel %vm3056, %v2300, 0
    %v3092 = vsel %vm2809, %v3091, 2147483648
    %v3093 = vand.u32 %v3092, 65535
    %v3094 = vshra.s32 %v3092, 16
    %v3095 = vcvt.s32.f32 %v3093
    %v3096 = vcvt.s32.f32 %v3094
    %3097 = vmax.xlane.f32.xlu0 %v3096
    %v3098 = vpop.xlane.xlu0 %3097
    %vm3099 = vcmp.eq.f32.partialorder %v3096, %v3098
    %v3100 = vsel %vm3099, %v3095, -inf
    %3101 = vmax.xlane.f32.xlu0 %v3100
    %v3102 = vpop.xlane.xlu0 %3101
    %v3103 = vcvt.f32.s32 %v3102
    %v3104 = vcvt.f32.s32 %v3098
    %v3105 = vshll.u32 %v3104, 16
    %v3106 = vadd.s32 %v3105, %v3103
    %s3107 = vtos %v3106
    %v3108 = vsel %vm3056, %v2301, 0
    %v3109 = vsel %vm2809, %v3108, 2147483648
    %v3110 = vand.u32 %v3109, 65535
    %v3111 = vshra.s32 %v3109, 16
    %v3112 = vcvt.s32.f32 %v3110
    %v3113 = vcvt.s32.f32 %v3111
    %3114 = vmax.xlane.f32.xlu0 %v3113
    %v3115 = vpop.xlane.xlu0 %3114
    %vm3116 = vcmp.eq.f32.partialorder %v3113, %v3115
    %v3117 = vsel %vm3116, %v3112, -inf
    %3118 = vmax.xlane.f32.xlu0 %v3117
    %v3119 = vpop.xlane.xlu0 %3118
    %v3120 = vcvt.f32.s32 %v3119
    %v3121 = vcvt.f32.s32 %v3115
    %v3122 = vshll.u32 %v3121, 16
    %v3123 = vadd.s32 %v3122, %v3120
    %s3124 = vtos %v3123
    %v3125 = vstv %s3073
    %vm3126 = vcmp.ge.s32.totalorder %v87, %v3125
    %vm3127 = vcmp.ge.s32.totalorder %v88, %v3125
    %vm3128 = vcmp.ge.s32.totalorder %v89, %v3125
    %vm3129 = vcmp.ge.s32.totalorder %v90, %v3125
    %vm3130 = vcmp.ge.s32.totalorder %v91, %v3125
    %vm3131 = vcmp.ge.s32.totalorder %v92, %v3125
    %vm3132 = vcmp.ge.s32.totalorder %v93, %v3125
    %vm3133 = vcmp.ge.s32.totalorder %v94, %v3125
    %v3134 = vstv %s3107
    %vm3135 = vcmp.lt.s32.totalorder %v87, %v3134
    %vm3136 = vcmp.lt.s32.totalorder %v88, %v3134
    %vm3137 = vcmp.lt.s32.totalorder %v89, %v3134
    %vm3138 = vcmp.lt.s32.totalorder %v90, %v3134
    %vm3139 = vcmp.lt.s32.totalorder %v91, %v3134
    %vm3140 = vcmp.lt.s32.totalorder %v92, %v3134
    %vm3141 = vcmp.lt.s32.totalorder %v93, %v3134
    %vm3142 = vcmp.lt.s32.totalorder %v94, %v3134
    %vm3143 = vmand %vm3126, %vm3135
    %vm3144 = vmand %vm3127, %vm3136
    %vm3145 = vmand %vm3128, %vm3137
    %vm3146 = vmand %vm3129, %vm3138
    %vm3147 = vmand %vm3130, %vm3139
    %vm3148 = vmand %vm3131, %vm3140
    %vm3149 = vmand %vm3132, %vm3141
    %vm3150 = vmand %vm3133, %vm3142
    %v3151 = vstv %s3090
    %vm3152 = vcmp.ge.s32.totalorder %v97, %v3151
    %v3153 = vstv %s3124
    %vm3154 = vcmp.lt.s32.totalorder %v97, %v3153
    %vm3155 = vmand %vm3152, %vm3154
    %vm3156 = vmand %vm3143, %vm3155
    %vm3157 = vmand %vm3144, %vm3155
    %vm3158 = vmand %vm3145, %vm3155
    %vm3159 = vmand %vm3146, %vm3155
    %vm3160 = vmand %vm3147, %vm3155
    %vm3161 = vmand %vm3148, %vm3155
    %vm3162 = vmand %vm3149, %vm3155
    %vm3163 = vmand %vm3150, %vm3155
    %vm3164 = vmpackc.low %vm3157, %vm3156
    %vm3165 = vmpackc.low %vm3159, %vm3158
    %vm3166 = vmpackc.even %vm3165, %vm3164
    %vm3167 = vmpackc.low %vm3161, %vm3160
    %vm3168 = vmpackc.low %vm3163, %vm3162
    %vm3169 = vmpackc.even %vm3168, %vm3167
    %v3170 = vsel %vm3166, 16843009, 0
    %v3171 = vsel %vm3169, 16843009, 0
    %s3172 = scalar_lea.vmem [#allocation6], 16
    %3173 = vst.msk [vmem:[%s3172] sm:$0xff] %vm68, %v3170
    %3174 = vst.msk [vmem:[%s3172 + $0x8] sm:$0xff] %vm68, %v3171
    %vm3175 = vcmp.eq.s32.totalorder %v2933, 2
    %vm3176 = vmand %vm2935, %vm3175
    %v3177 = vsel %vm3176, %v2298, 9218
    %v3178 = vsel %vm2809, %v3177, 2147483647
    %v3179 = vand.u32 %v3178, 65535
    %v3180 = vshra.s32 %v3178, 16
    %v3181 = vcvt.s32.f32 %v3179
    %v3182 = vcvt.s32.f32 %v3180
    %3183 = vmin.xlane.f32.xlu0 %v3182
    %v3184 = vpop.xlane.xlu0 %3183
    %vm3185 = vcmp.eq.f32.partialorder %v3182, %v3184
    %v3186 = vsel %vm3185, %v3181, inf
    %3187 = vmin.xlane.f32.xlu0 %v3186
    %v3188 = vpop.xlane.xlu0 %3187
    %v3189 = vcvt.f32.s32 %v3188
    %v3190 = vcvt.f32.s32 %v3184
    %v3191 = vshll.u32 %v3190, 16
    %v3192 = vadd.s32 %v3191, %v3189
    %s3193 = vtos %v3192
    %v3194 = vsel %vm3176, %v2299, 9218
    %v3195 = vsel %vm2809, %v3194, 2147483647
    %v3196 = vand.u32 %v3195, 65535
    %v3197 = vshra.s32 %v3195, 16
    %v3198 = vcvt.s32.f32 %v3196
    %v3199 = vcvt.s32.f32 %v3197
    %3200 = vmin.xlane.f32.xlu0 %v3199
    %v3201 = vpop.xlane.xlu0 %3200
    %vm3202 = vcmp.eq.f32.partialorder %v3199, %v3201
    %v3203 = vsel %vm3202, %v3198, inf
    %3204 = vmin.xlane.f32.xlu0 %v3203
    %v3205 = vpop.xlane.xlu0 %3204
    %v3206 = vcvt.f32.s32 %v3205
    %v3207 = vcvt.f32.s32 %v3201
    %v3208 = vshll.u32 %v3207, 16
    %v3209 = vadd.s32 %v3208, %v3206
    %s3210 = vtos %v3209
    %v3211 = vsel %vm3176, %v2300, 0
    %v3212 = vsel %vm2809, %v3211, 2147483648
    %v3213 = vand.u32 %v3212, 65535
    %v3214 = vshra.s32 %v3212, 16
    %v3215 = vcvt.s32.f32 %v3213
    %v3216 = vcvt.s32.f32 %v3214
    %3217 = vmax.xlane.f32.xlu0 %v3216
    %v3218 = vpop.xlane.xlu0 %3217
    %vm3219 = vcmp.eq.f32.partialorder %v3216, %v3218
    %v3220 = vsel %vm3219, %v3215, -inf
    %3221 = vmax.xlane.f32.xlu0 %v3220
    %v3222 = vpop.xlane.xlu0 %3221
    %v3223 = vcvt.f32.s32 %v3222
    %v3224 = vcvt.f32.s32 %v3218
    %v3225 = vshll.u32 %v3224, 16
    %v3226 = vadd.s32 %v3225, %v3223
    %s3227 = vtos %v3226
    %v3228 = vsel %vm3176, %v2301, 0
    %v3229 = vsel %vm2809, %v3228, 2147483648
    %v3230 = vand.u32 %v3229, 65535
    %v3231 = vshra.s32 %v3229, 16
    %v3232 = vcvt.s32.f32 %v3230
    %v3233 = vcvt.s32.f32 %v3231
    %3234 = vmax.xlane.f32.xlu0 %v3233
    %v3235 = vpop.xlane.xlu0 %3234
    %vm3236 = vcmp.eq.f32.partialorder %v3233, %v3235
    %v3237 = vsel %vm3236, %v3232, -inf
    %3238 = vmax.xlane.f32.xlu0 %v3237
    %v3239 = vpop.xlane.xlu0 %3238
    %v3240 = vcvt.f32.s32 %v3239
    %v3241 = vcvt.f32.s32 %v3235
    %v3242 = vshll.u32 %v3241, 16
    %v3243 = vadd.s32 %v3242, %v3240
    %s3244 = vtos %v3243
    %v3245 = vstv %s3193
    %vm3246 = vcmp.ge.s32.totalorder %v87, %v3245
    %vm3247 = vcmp.ge.s32.totalorder %v88, %v3245
    %vm3248 = vcmp.ge.s32.totalorder %v89, %v3245
    %vm3249 = vcmp.ge.s32.totalorder %v90, %v3245
    %vm3250 = vcmp.ge.s32.totalorder %v91, %v3245
    %vm3251 = vcmp.ge.s32.totalorder %v92, %v3245
    %vm3252 = vcmp.ge.s32.totalorder %v93, %v3245
    %vm3253 = vcmp.ge.s32.totalorder %v94, %v3245
    %v3254 = vstv %s3227
    %vm3255 = vcmp.lt.s32.totalorder %v87, %v3254
    %vm3256 = vcmp.lt.s32.totalorder %v88, %v3254
    %vm3257 = vcmp.lt.s32.totalorder %v89, %v3254
    %vm3258 = vcmp.lt.s32.totalorder %v90, %v3254
    %vm3259 = vcmp.lt.s32.totalorder %v91, %v3254
    %vm3260 = vcmp.lt.s32.totalorder %v92, %v3254
    %vm3261 = vcmp.lt.s32.totalorder %v93, %v3254
    %vm3262 = vcmp.lt.s32.totalorder %v94, %v3254
    %vm3263 = vmand %vm3246, %vm3255
    %vm3264 = vmand %vm3247, %vm3256
    %vm3265 = vmand %vm3248, %vm3257
    %vm3266 = vmand %vm3249, %vm3258
    %vm3267 = vmand %vm3250, %vm3259
    %vm3268 = vmand %vm3251, %vm3260
    %vm3269 = vmand %vm3252, %vm3261
    %vm3270 = vmand %vm3253, %vm3262
    %v3271 = vstv %s3210
    %vm3272 = vcmp.ge.s32.totalorder %v97, %v3271
    %v3273 = vstv %s3244
    %vm3274 = vcmp.lt.s32.totalorder %v97, %v3273
    %vm3275 = vmand %vm3272, %vm3274
    %vm3276 = vmand %vm3263, %vm3275
    %vm3277 = vmand %vm3264, %vm3275
    %vm3278 = vmand %vm3265, %vm3275
    %vm3279 = vmand %vm3266, %vm3275
    %vm3280 = vmand %vm3267, %vm3275
    %vm3281 = vmand %vm3268, %vm3275
    %vm3282 = vmand %vm3269, %vm3275
    %vm3283 = vmand %vm3270, %vm3275
    %vm3284 = vmpackc.low %vm3277, %vm3276
    %vm3285 = vmpackc.low %vm3279, %vm3278
    %vm3286 = vmpackc.even %vm3285, %vm3284
    %vm3287 = vmpackc.low %vm3281, %vm3280
    %vm3288 = vmpackc.low %vm3283, %vm3282
    %vm3289 = vmpackc.even %vm3288, %vm3287
    %v3290 = vsel %vm3286, 16843009, 0
    %v3291 = vsel %vm3289, 16843009, 0
    %s3292 = scalar_lea.vmem [#allocation6], 32
    %3293 = vst.msk [vmem:[%s3292] sm:$0xff] %vm68, %v3290
    %3294 = vst.msk [vmem:[%s3292 + $0x8] sm:$0xff] %vm68, %v3291
    %vm3295 = vcmp.eq.s32.totalorder %v2933, 3
    %vm3296 = vmand %vm2935, %vm3295
    %v3297 = vsel %vm3296, %v2298, 9218
    %v3298 = vsel %vm2809, %v3297, 2147483647
    %v3299 = vand.u32 %v3298, 65535
    %v3300 = vshra.s32 %v3298, 16
    %v3301 = vcvt.s32.f32 %v3299
    %v3302 = vcvt.s32.f32 %v3300
    %3303 = vmin.xlane.f32.xlu0 %v3302
    %v3304 = vpop.xlane.xlu0 %3303
    %vm3305 = vcmp.eq.f32.partialorder %v3302, %v3304
    %v3306 = vsel %vm3305, %v3301, inf
    %3307 = vmin.xlane.f32.xlu0 %v3306
    %v3308 = vpop.xlane.xlu0 %3307
    %v3309 = vcvt.f32.s32 %v3308
    %v3310 = vcvt.f32.s32 %v3304
    %v3311 = vshll.u32 %v3310, 16
    %v3312 = vadd.s32 %v3311, %v3309
    %s3313 = vtos %v3312
    %v3314 = vsel %vm3296, %v2299, 9218
    %v3315 = vsel %vm2809, %v3314, 2147483647
    %v3316 = vand.u32 %v3315, 65535
    %v3317 = vshra.s32 %v3315, 16
    %v3318 = vcvt.s32.f32 %v3316
    %v3319 = vcvt.s32.f32 %v3317
    %3320 = vmin.xlane.f32.xlu0 %v3319
    %v3321 = vpop.xlane.xlu0 %3320
    %vm3322 = vcmp.eq.f32.partialorder %v3319, %v3321
    %v3323 = vsel %vm3322, %v3318, inf
    %3324 = vmin.xlane.f32.xlu0 %v3323
    %v3325 = vpop.xlane.xlu0 %3324
    %v3326 = vcvt.f32.s32 %v3325
    %v3327 = vcvt.f32.s32 %v3321
    %v3328 = vshll.u32 %v3327, 16
    %v3329 = vadd.s32 %v3328, %v3326
    %s3330 = vtos %v3329
    %v3331 = vsel %vm3296, %v2300, 0
    %v3332 = vsel %vm2809, %v3331, 2147483648
    %v3333 = vand.u32 %v3332, 65535
    %v3334 = vshra.s32 %v3332, 16
    %v3335 = vcvt.s32.f32 %v3333
    %v3336 = vcvt.s32.f32 %v3334
    %3337 = vmax.xlane.f32.xlu0 %v3336
    %v3338 = vpop.xlane.xlu0 %3337
    %vm3339 = vcmp.eq.f32.partialorder %v3336, %v3338
    %v3340 = vsel %vm3339, %v3335, -inf
    %3341 = vmax.xlane.f32.xlu0 %v3340
    %v3342 = vpop.xlane.xlu0 %3341
    %v3343 = vcvt.f32.s32 %v3342
    %v3344 = vcvt.f32.s32 %v3338
    %v3345 = vshll.u32 %v3344, 16
    %v3346 = vadd.s32 %v3345, %v3343
    %s3347 = vtos %v3346
    %v3348 = vsel %vm3296, %v2301, 0
    %v3349 = vsel %vm2809, %v3348, 2147483648
    %v3350 = vand.u32 %v3349, 65535
    %v3351 = vshra.s32 %v3349, 16
    %v3352 = vcvt.s32.f32 %v3350
    %v3353 = vcvt.s32.f32 %v3351
    %3354 = vmax.xlane.f32.xlu0 %v3353
    %v3355 = vpop.xlane.xlu0 %3354
    %vm3356 = vcmp.eq.f32.partialorder %v3353, %v3355
    %v3357 = vsel %vm3356, %v3352, -inf
    %3358 = vmax.xlane.f32.xlu0 %v3357
    %v3359 = vpop.xlane.xlu0 %3358
    %v3360 = vcvt.f32.s32 %v3359
    %v3361 = vcvt.f32.s32 %v3355
    %v3362 = vshll.u32 %v3361, 16
    %v3363 = vadd.s32 %v3362, %v3360
    %s3364 = vtos %v3363
    %v3365 = vstv %s3313
    %vm3366 = vcmp.ge.s32.totalorder %v87, %v3365
    %vm3367 = vcmp.ge.s32.totalorder %v88, %v3365
    %vm3368 = vcmp.ge.s32.totalorder %v89, %v3365
    %vm3369 = vcmp.ge.s32.totalorder %v90, %v3365
    %vm3370 = vcmp.ge.s32.totalorder %v91, %v3365
    %vm3371 = vcmp.ge.s32.totalorder %v92, %v3365
    %vm3372 = vcmp.ge.s32.totalorder %v93, %v3365
    %vm3373 = vcmp.ge.s32.totalorder %v94, %v3365
    %v3374 = vstv %s3347
    %vm3375 = vcmp.lt.s32.totalorder %v87, %v3374
    %vm3376 = vcmp.lt.s32.totalorder %v88, %v3374
    %vm3377 = vcmp.lt.s32.totalorder %v89, %v3374
    %vm3378 = vcmp.lt.s32.totalorder %v90, %v3374
    %vm3379 = vcmp.lt.s32.totalorder %v91, %v3374
    %vm3380 = vcmp.lt.s32.totalorder %v92, %v3374
    %vm3381 = vcmp.lt.s32.totalorder %v93, %v3374
    %vm3382 = vcmp.lt.s32.totalorder %v94, %v3374
    %vm3383 = vmand %vm3366, %vm3375
    %vm3384 = vmand %vm3367, %vm3376
    %vm3385 = vmand %vm3368, %vm3377
    %vm3386 = vmand %vm3369, %vm3378
    %vm3387 = vmand %vm3370, %vm3379
    %vm3388 = vmand %vm3371, %vm3380
    %vm3389 = vmand %vm3372, %vm3381
    %vm3390 = vmand %vm3373, %vm3382
    %v3391 = vstv %s3330
    %vm3392 = vcmp.ge.s32.totalorder %v97, %v3391
    %v3393 = vstv %s3364
    %vm3394 = vcmp.lt.s32.totalorder %v97, %v3393
    %vm3395 = vmand %vm3392, %vm3394
    %vm3396 = vmand %vm3383, %vm3395
    %vm3397 = vmand %vm3384, %vm3395
    %vm3398 = vmand %vm3385, %vm3395
    %vm3399 = vmand %vm3386, %vm3395
    %vm3400 = vmand %vm3387, %vm3395
    %vm3401 = vmand %vm3388, %vm3395
    %vm3402 = vmand %vm3389, %vm3395
    %vm3403 = vmand %vm3390, %vm3395
    %vm3404 = vmpackc.low %vm3397, %vm3396
    %vm3405 = vmpackc.low %vm3399, %vm3398
    %vm3406 = vmpackc.even %vm3405, %vm3404
    %vm3407 = vmpackc.low %vm3401, %vm3400
    %vm3408 = vmpackc.low %vm3403, %vm3402
    %vm3409 = vmpackc.even %vm3408, %vm3407
    %v3410 = vsel %vm3406, 16843009, 0
    %v3411 = vsel %vm3409, 16843009, 0
    %s3412 = scalar_lea.vmem [#allocation6], 48
    %3413 = vst.msk [vmem:[%s3412] sm:$0xff] %vm68, %v3410
    %3414 = vst.msk [vmem:[%s3412 + $0x8] sm:$0xff] %vm68, %v3411
    %vm3415 = vcmp.eq.s32.totalorder %v2933, 4
    %vm3416 = vmand %vm2935, %vm3415
    %v3417 = vsel %vm3416, %v2298, 9218
    %v3418 = vsel %vm2809, %v3417, 2147483647
    %v3419 = vand.u32 %v3418, 65535
    %v3420 = vshra.s32 %v3418, 16
    %v3421 = vcvt.s32.f32 %v3419
    %v3422 = vcvt.s32.f32 %v3420
    %3423 = vmin.xlane.f32.xlu0 %v3422
    %v3424 = vpop.xlane.xlu0 %3423
    %vm3425 = vcmp.eq.f32.partialorder %v3422, %v3424
    %v3426 = vsel %vm3425, %v3421, inf
    %3427 = vmin.xlane.f32.xlu0 %v3426
    %v3428 = vpop.xlane.xlu0 %3427
    %v3429 = vcvt.f32.s32 %v3428
    %v3430 = vcvt.f32.s32 %v3424
    %v3431 = vshll.u32 %v3430, 16
    %v3432 = vadd.s32 %v3431, %v3429
    %s3433 = vtos %v3432
    %v3434 = vsel %vm3416, %v2299, 9218
    %v3435 = vsel %vm2809, %v3434, 2147483647
    %v3436 = vand.u32 %v3435, 65535
    %v3437 = vshra.s32 %v3435, 16
    %v3438 = vcvt.s32.f32 %v3436
    %v3439 = vcvt.s32.f32 %v3437
    %3440 = vmin.xlane.f32.xlu0 %v3439
    %v3441 = vpop.xlane.xlu0 %3440
    %vm3442 = vcmp.eq.f32.partialorder %v3439, %v3441
    %v3443 = vsel %vm3442, %v3438, inf
    %3444 = vmin.xlane.f32.xlu0 %v3443
    %v3445 = vpop.xlane.xlu0 %3444
    %v3446 = vcvt.f32.s32 %v3445
    %v3447 = vcvt.f32.s32 %v3441
    %v3448 = vshll.u32 %v3447, 16
    %v3449 = vadd.s32 %v3448, %v3446
    %s3450 = vtos %v3449
    %v3451 = vsel %vm3416, %v2300, 0
    %v3452 = vsel %vm2809, %v3451, 2147483648
    %v3453 = vand.u32 %v3452, 65535
    %v3454 = vshra.s32 %v3452, 16
    %v3455 = vcvt.s32.f32 %v3453
    %v3456 = vcvt.s32.f32 %v3454
    %3457 = vmax.xlane.f32.xlu0 %v3456
    %v3458 = vpop.xlane.xlu0 %3457
    %vm3459 = vcmp.eq.f32.partialorder %v3456, %v3458
    %v3460 = vsel %vm3459, %v3455, -inf
    %3461 = vmax.xlane.f32.xlu0 %v3460
    %v3462 = vpop.xlane.xlu0 %3461
    %v3463 = vcvt.f32.s32 %v3462
    %v3464 = vcvt.f32.s32 %v3458
    %v3465 = vshll.u32 %v3464, 16
    %v3466 = vadd.s32 %v3465, %v3463
    %s3467 = vtos %v3466
    %v3468 = vsel %vm3416, %v2301, 0
    %v3469 = vsel %vm2809, %v3468, 2147483648
    %v3470 = vand.u32 %v3469, 65535
    %v3471 = vshra.s32 %v3469, 16
    %v3472 = vcvt.s32.f32 %v3470
    %v3473 = vcvt.s32.f32 %v3471
    %3474 = vmax.xlane.f32.xlu0 %v3473
    %v3475 = vpop.xlane.xlu0 %3474
    %vm3476 = vcmp.eq.f32.partialorder %v3473, %v3475
    %v3477 = vsel %vm3476, %v3472, -inf
    %3478 = vmax.xlane.f32.xlu0 %v3477
    %v3479 = vpop.xlane.xlu0 %3478
    %v3480 = vcvt.f32.s32 %v3479
    %v3481 = vcvt.f32.s32 %v3475
    %v3482 = vshll.u32 %v3481, 16
    %v3483 = vadd.s32 %v3482, %v3480
    %s3484 = vtos %v3483
    %v3485 = vstv %s3433
    %vm3486 = vcmp.ge.s32.totalorder %v87, %v3485
    %vm3487 = vcmp.ge.s32.totalorder %v88, %v3485
    %vm3488 = vcmp.ge.s32.totalorder %v89, %v3485
    %vm3489 = vcmp.ge.s32.totalorder %v90, %v3485
    %vm3490 = vcmp.ge.s32.totalorder %v91, %v3485
    %vm3491 = vcmp.ge.s32.totalorder %v92, %v3485
    %vm3492 = vcmp.ge.s32.totalorder %v93, %v3485
    %vm3493 = vcmp.ge.s32.totalorder %v94, %v3485
    %v3494 = vstv %s3467
    %vm3495 = vcmp.lt.s32.totalorder %v87, %v3494
    %vm3496 = vcmp.lt.s32.totalorder %v88, %v3494
    %vm3497 = vcmp.lt.s32.totalorder %v89, %v3494
    %vm3498 = vcmp.lt.s32.totalorder %v90, %v3494
    %vm3499 = vcmp.lt.s32.totalorder %v91, %v3494
    %vm3500 = vcmp.lt.s32.totalorder %v92, %v3494
    %vm3501 = vcmp.lt.s32.totalorder %v93, %v3494
    %vm3502 = vcmp.lt.s32.totalorder %v94, %v3494
    %vm3503 = vmand %vm3486, %vm3495
    %vm3504 = vmand %vm3487, %vm3496
    %vm3505 = vmand %vm3488, %vm3497
    %vm3506 = vmand %vm3489, %vm3498
    %vm3507 = vmand %vm3490, %vm3499
    %vm3508 = vmand %vm3491, %vm3500
    %vm3509 = vmand %vm3492, %vm3501
    %vm3510 = vmand %vm3493, %vm3502
    %v3511 = vstv %s3450
    %vm3512 = vcmp.ge.s32.totalorder %v97, %v3511
    %v3513 = vstv %s3484
    %vm3514 = vcmp.lt.s32.totalorder %v97, %v3513
    %vm3515 = vmand %vm3512, %vm3514
    %vm3516 = vmand %vm3503, %vm3515
    %vm3517 = vmand %vm3504, %vm3515
    %vm3518 = vmand %vm3505, %vm3515
    %vm3519 = vmand %vm3506, %vm3515
    %vm3520 = vmand %vm3507, %vm3515
    %vm3521 = vmand %vm3508, %vm3515
    %vm3522 = vmand %vm3509, %vm3515
    %vm3523 = vmand %vm3510, %vm3515
    %vm3524 = vmpackc.low %vm3517, %vm3516
    %vm3525 = vmpackc.low %vm3519, %vm3518
    %vm3526 = vmpackc.even %vm3525, %vm3524
    %vm3527 = vmpackc.low %vm3521, %vm3520
    %vm3528 = vmpackc.low %vm3523, %vm3522
    %vm3529 = vmpackc.even %vm3528, %vm3527
    %v3530 = vsel %vm3526, 16843009, 0
    %v3531 = vsel %vm3529, 16843009, 0
    %s3532 = scalar_lea.vmem [#allocation6], 64
    %3533 = vst.msk [vmem:[%s3532] sm:$0xff] %vm68, %v3530
    %3534 = vst.msk [vmem:[%s3532 + $0x8] sm:$0xff] %vm68, %v3531
    %vm3535 = vcmp.eq.s32.totalorder %v2933, 5
    %vm3536 = vmand %vm2935, %vm3535
    %v3537 = vsel %vm3536, %v2298, 9218
    %v3538 = vsel %vm2809, %v3537, 2147483647
    %v3539 = vand.u32 %v3538, 65535
    %v3540 = vshra.s32 %v3538, 16
    %v3541 = vcvt.s32.f32 %v3539
    %v3542 = vcvt.s32.f32 %v3540
    %3543 = vmin.xlane.f32.xlu0 %v3542
    %v3544 = vpop.xlane.xlu0 %3543
    %vm3545 = vcmp.eq.f32.partialorder %v3542, %v3544
    %v3546 = vsel %vm3545, %v3541, inf
    %3547 = vmin.xlane.f32.xlu0 %v3546
    %v3548 = vpop.xlane.xlu0 %3547
    %v3549 = vcvt.f32.s32 %v3548
    %v3550 = vcvt.f32.s32 %v3544
    %v3551 = vshll.u32 %v3550, 16
    %v3552 = vadd.s32 %v3551, %v3549
    %s3553 = vtos %v3552
    %v3554 = vsel %vm3536, %v2299, 9218
    %v3555 = vsel %vm2809, %v3554, 2147483647
    %v3556 = vand.u32 %v3555, 65535
    %v3557 = vshra.s32 %v3555, 16
    %v3558 = vcvt.s32.f32 %v3556
    %v3559 = vcvt.s32.f32 %v3557
    %3560 = vmin.xlane.f32.xlu0 %v3559
    %v3561 = vpop.xlane.xlu0 %3560
    %vm3562 = vcmp.eq.f32.partialorder %v3559, %v3561
    %v3563 = vsel %vm3562, %v3558, inf
    %3564 = vmin.xlane.f32.xlu0 %v3563
    %v3565 = vpop.xlane.xlu0 %3564
    %v3566 = vcvt.f32.s32 %v3565
    %v3567 = vcvt.f32.s32 %v3561
    %v3568 = vshll.u32 %v3567, 16
    %v3569 = vadd.s32 %v3568, %v3566
    %s3570 = vtos %v3569
    %v3571 = vsel %vm3536, %v2300, 0
    %v3572 = vsel %vm2809, %v3571, 2147483648
    %v3573 = vand.u32 %v3572, 65535
    %v3574 = vshra.s32 %v3572, 16
    %v3575 = vcvt.s32.f32 %v3573
    %v3576 = vcvt.s32.f32 %v3574
    %3577 = vmax.xlane.f32.xlu0 %v3576
    %v3578 = vpop.xlane.xlu0 %3577
    %vm3579 = vcmp.eq.f32.partialorder %v3576, %v3578
    %v3580 = vsel %vm3579, %v3575, -inf
    %3581 = vmax.xlane.f32.xlu0 %v3580
    %v3582 = vpop.xlane.xlu0 %3581
    %v3583 = vcvt.f32.s32 %v3582
    %v3584 = vcvt.f32.s32 %v3578
    %v3585 = vshll.u32 %v3584, 16
    %v3586 = vadd.s32 %v3585, %v3583
    %s3587 = vtos %v3586
    %v3588 = vsel %vm3536, %v2301, 0
    %v3589 = vsel %vm2809, %v3588, 2147483648
    %v3590 = vand.u32 %v3589, 65535
    %v3591 = vshra.s32 %v3589, 16
    %v3592 = vcvt.s32.f32 %v3590
    %v3593 = vcvt.s32.f32 %v3591
    %3594 = vmax.xlane.f32.xlu0 %v3593
    %v3595 = vpop.xlane.xlu0 %3594
    %vm3596 = vcmp.eq.f32.partialorder %v3593, %v3595
    %v3597 = vsel %vm3596, %v3592, -inf
    %3598 = vmax.xlane.f32.xlu0 %v3597
    %v3599 = vpop.xlane.xlu0 %3598
    %v3600 = vcvt.f32.s32 %v3599
    %v3601 = vcvt.f32.s32 %v3595
    %v3602 = vshll.u32 %v3601, 16
    %v3603 = vadd.s32 %v3602, %v3600
    %s3604 = vtos %v3603
    %v3605 = vstv %s3553
    %vm3606 = vcmp.ge.s32.totalorder %v87, %v3605
    %vm3607 = vcmp.ge.s32.totalorder %v88, %v3605
    %vm3608 = vcmp.ge.s32.totalorder %v89, %v3605
    %vm3609 = vcmp.ge.s32.totalorder %v90, %v3605
    %vm3610 = vcmp.ge.s32.totalorder %v91, %v3605
    %vm3611 = vcmp.ge.s32.totalorder %v92, %v3605
    %vm3612 = vcmp.ge.s32.totalorder %v93, %v3605
    %vm3613 = vcmp.ge.s32.totalorder %v94, %v3605
    %v3614 = vstv %s3587
    %vm3615 = vcmp.lt.s32.totalorder %v87, %v3614
    %vm3616 = vcmp.lt.s32.totalorder %v88, %v3614
    %vm3617 = vcmp.lt.s32.totalorder %v89, %v3614
    %vm3618 = vcmp.lt.s32.totalorder %v90, %v3614
    %vm3619 = vcmp.lt.s32.totalorder %v91, %v3614
    %vm3620 = vcmp.lt.s32.totalorder %v92, %v3614
    %vm3621 = vcmp.lt.s32.totalorder %v93, %v3614
    %vm3622 = vcmp.lt.s32.totalorder %v94, %v3614
    %vm3623 = vmand %vm3606, %vm3615
    %vm3624 = vmand %vm3607, %vm3616
    %vm3625 = vmand %vm3608, %vm3617
    %vm3626 = vmand %vm3609, %vm3618
    %vm3627 = vmand %vm3610, %vm3619
    %vm3628 = vmand %vm3611, %vm3620
    %vm3629 = vmand %vm3612, %vm3621
    %vm3630 = vmand %vm3613, %vm3622
    %v3631 = vstv %s3570
    %vm3632 = vcmp.ge.s32.totalorder %v97, %v3631
    %v3633 = vstv %s3604
    %vm3634 = vcmp.lt.s32.totalorder %v97, %v3633
    %vm3635 = vmand %vm3632, %vm3634
    %vm3636 = vmand %vm3623, %vm3635
    %vm3637 = vmand %vm3624, %vm3635
    %vm3638 = vmand %vm3625, %vm3635
    %vm3639 = vmand %vm3626, %vm3635
    %vm3640 = vmand %vm3627, %vm3635
    %vm3641 = vmand %vm3628, %vm3635
    %vm3642 = vmand %vm3629, %vm3635
    %vm3643 = vmand %vm3630, %vm3635
    %vm3644 = vmpackc.low %vm3637, %vm3636
    %vm3645 = vmpackc.low %vm3639, %vm3638
    %vm3646 = vmpackc.even %vm3645, %vm3644
    %vm3647 = vmpackc.low %vm3641, %vm3640
    %vm3648 = vmpackc.low %vm3643, %vm3642
    %vm3649 = vmpackc.even %vm3648, %vm3647
    %v3650 = vsel %vm3646, 16843009, 0
    %v3651 = vsel %vm3649, 16843009, 0
    %s3652 = scalar_lea.vmem [#allocation6], 80
    %3653 = vst.msk [vmem:[%s3652] sm:$0xff] %vm68, %v3650
    %3654 = vst.msk [vmem:[%s3652 + $0x8] sm:$0xff] %vm68, %v3651
    %vm3655 = vcmp.eq.s32.totalorder %v2933, 6
    %vm3656 = vmand %vm2935, %vm3655
    %v3657 = vsel %vm3656, %v2298, 9218
    %v3658 = vsel %vm2809, %v3657, 2147483647
    %v3659 = vand.u32 %v3658, 65535
    %v3660 = vshra.s32 %v3658, 16
    %v3661 = vcvt.s32.f32 %v3659
    %v3662 = vcvt.s32.f32 %v3660
    %3663 = vmin.xlane.f32.xlu0 %v3662
    %v3664 = vpop.xlane.xlu0 %3663
    %vm3665 = vcmp.eq.f32.partialorder %v3662, %v3664
    %v3666 = vsel %vm3665, %v3661, inf
    %3667 = vmin.xlane.f32.xlu0 %v3666
    %v3668 = vpop.xlane.xlu0 %3667
    %v3669 = vcvt.f32.s32 %v3668
    %v3670 = vcvt.f32.s32 %v3664
    %v3671 = vshll.u32 %v3670, 16
    %v3672 = vadd.s32 %v3671, %v3669
    %s3673 = vtos %v3672
    %v3674 = vsel %vm3656, %v2299, 9218
    %v3675 = vsel %vm2809, %v3674, 2147483647
    %v3676 = vand.u32 %v3675, 65535
    %v3677 = vshra.s32 %v3675, 16
    %v3678 = vcvt.s32.f32 %v3676
    %v3679 = vcvt.s32.f32 %v3677
    %3680 = vmin.xlane.f32.xlu0 %v3679
    %v3681 = vpop.xlane.xlu0 %3680
    %vm3682 = vcmp.eq.f32.partialorder %v3679, %v3681
    %v3683 = vsel %vm3682, %v3678, inf
    %3684 = vmin.xlane.f32.xlu0 %v3683
    %v3685 = vpop.xlane.xlu0 %3684
    %v3686 = vcvt.f32.s32 %v3685
    %v3687 = vcvt.f32.s32 %v3681
    %v3688 = vshll.u32 %v3687, 16
    %v3689 = vadd.s32 %v3688, %v3686
    %s3690 = vtos %v3689
    %v3691 = vsel %vm3656, %v2300, 0
    %v3692 = vsel %vm2809, %v3691, 2147483648
    %v3693 = vand.u32 %v3692, 65535
    %v3694 = vshra.s32 %v3692, 16
    %v3695 = vcvt.s32.f32 %v3693
    %v3696 = vcvt.s32.f32 %v3694
    %3697 = vmax.xlane.f32.xlu0 %v3696
    %v3698 = vpop.xlane.xlu0 %3697
    %vm3699 = vcmp.eq.f32.partialorder %v3696, %v3698
    %v3700 = vsel %vm3699, %v3695, -inf
    %3701 = vmax.xlane.f32.xlu0 %v3700
    %v3702 = vpop.xlane.xlu0 %3701
    %v3703 = vcvt.f32.s32 %v3702
    %v3704 = vcvt.f32.s32 %v3698
    %v3705 = vshll.u32 %v3704, 16
    %v3706 = vadd.s32 %v3705, %v3703
    %s3707 = vtos %v3706
    %v3708 = vsel %vm3656, %v2301, 0
    %v3709 = vsel %vm2809, %v3708, 2147483648
    %v3710 = vand.u32 %v3709, 65535
    %v3711 = vshra.s32 %v3709, 16
    %v3712 = vcvt.s32.f32 %v3710
    %v3713 = vcvt.s32.f32 %v3711
    %3714 = vmax.xlane.f32.xlu0 %v3713
    %v3715 = vpop.xlane.xlu0 %3714
    %vm3716 = vcmp.eq.f32.partialorder %v3713, %v3715
    %v3717 = vsel %vm3716, %v3712, -inf
    %3718 = vmax.xlane.f32.xlu0 %v3717
    %v3719 = vpop.xlane.xlu0 %3718
    %v3720 = vcvt.f32.s32 %v3719
    %v3721 = vcvt.f32.s32 %v3715
    %v3722 = vshll.u32 %v3721, 16
    %v3723 = vadd.s32 %v3722, %v3720
    %s3724 = vtos %v3723
    %v3725 = vstv %s3673
    %vm3726 = vcmp.ge.s32.totalorder %v87, %v3725
    %vm3727 = vcmp.ge.s32.totalorder %v88, %v3725
    %vm3728 = vcmp.ge.s32.totalorder %v89, %v3725
    %vm3729 = vcmp.ge.s32.totalorder %v90, %v3725
    %vm3730 = vcmp.ge.s32.totalorder %v91, %v3725
    %vm3731 = vcmp.ge.s32.totalorder %v92, %v3725
    %vm3732 = vcmp.ge.s32.totalorder %v93, %v3725
    %vm3733 = vcmp.ge.s32.totalorder %v94, %v3725
    %v3734 = vstv %s3707
    %vm3735 = vcmp.lt.s32.totalorder %v87, %v3734
    %vm3736 = vcmp.lt.s32.totalorder %v88, %v3734
    %vm3737 = vcmp.lt.s32.totalorder %v89, %v3734
    %vm3738 = vcmp.lt.s32.totalorder %v90, %v3734
    %vm3739 = vcmp.lt.s32.totalorder %v91, %v3734
    %vm3740 = vcmp.lt.s32.totalorder %v92, %v3734
    %vm3741 = vcmp.lt.s32.totalorder %v93, %v3734
    %vm3742 = vcmp.lt.s32.totalorder %v94, %v3734
    %vm3743 = vmand %vm3726, %vm3735
    %vm3744 = vmand %vm3727, %vm3736
    %vm3745 = vmand %vm3728, %vm3737
    %vm3746 = vmand %vm3729, %vm3738
    %vm3747 = vmand %vm3730, %vm3739
    %vm3748 = vmand %vm3731, %vm3740
    %vm3749 = vmand %vm3732, %vm3741
    %vm3750 = vmand %vm3733, %vm3742
    %v3751 = vstv %s3690
    %vm3752 = vcmp.ge.s32.totalorder %v97, %v3751
    %v3753 = vstv %s3724
    %vm3754 = vcmp.lt.s32.totalorder %v97, %v3753
    %vm3755 = vmand %vm3752, %vm3754
    %vm3756 = vmand %vm3743, %vm3755
    %vm3757 = vmand %vm3744, %vm3755
    %vm3758 = vmand %vm3745, %vm3755
    %vm3759 = vmand %vm3746, %vm3755
    %vm3760 = vmand %vm3747, %vm3755
    %vm3761 = vmand %vm3748, %vm3755
    %vm3762 = vmand %vm3749, %vm3755
    %vm3763 = vmand %vm3750, %vm3755
    %vm3764 = vmpackc.low %vm3757, %vm3756
    %vm3765 = vmpackc.low %vm3759, %vm3758
    %vm3766 = vmpackc.even %vm3765, %vm3764
    %vm3767 = vmpackc.low %vm3761, %vm3760
    %vm3768 = vmpackc.low %vm3763, %vm3762
    %vm3769 = vmpackc.even %vm3768, %vm3767
    %v3770 = vsel %vm3766, 16843009, 0
    %v3771 = vsel %vm3769, 16843009, 0
    %s3772 = scalar_lea.vmem [#allocation6], 96
    %3773 = vst.msk [vmem:[%s3772] sm:$0xff] %vm68, %v3770
    %3774 = vst.msk [vmem:[%s3772 + $0x8] sm:$0xff] %vm68, %v3771
    %vm3775 = vcmp.eq.s32.totalorder %v2933, 7
    %vm3776 = vmand %vm2935, %vm3775
    %v3777 = vsel %vm3776, %v2298, 9218
    %v3778 = vsel %vm2809, %v3777, 2147483647
    %v3779 = vand.u32 %v3778, 65535
    %v3780 = vshra.s32 %v3778, 16
    %v3781 = vcvt.s32.f32 %v3779
    %v3782 = vcvt.s32.f32 %v3780
    %3783 = vmin.xlane.f32.xlu0 %v3782
    %v3784 = vpop.xlane.xlu0 %3783
    %vm3785 = vcmp.eq.f32.partialorder %v3782, %v3784
    %v3786 = vsel %vm3785, %v3781, inf
    %3787 = vmin.xlane.f32.xlu0 %v3786
    %v3788 = vpop.xlane.xlu0 %3787
    %v3789 = vcvt.f32.s32 %v3788
    %v3790 = vcvt.f32.s32 %v3784
    %v3791 = vshll.u32 %v3790, 16
    %v3792 = vadd.s32 %v3791, %v3789
    %s3793 = vtos %v3792
    %v3794 = vsel %vm3776, %v2299, 9218
    %v3795 = vsel %vm2809, %v3794, 2147483647
    %v3796 = vand.u32 %v3795, 65535
    %v3797 = vshra.s32 %v3795, 16
    %v3798 = vcvt.s32.f32 %v3796
    %v3799 = vcvt.s32.f32 %v3797
    %3800 = vmin.xlane.f32.xlu0 %v3799
    %v3801 = vpop.xlane.xlu0 %3800
    %vm3802 = vcmp.eq.f32.partialorder %v3799, %v3801
    %v3803 = vsel %vm3802, %v3798, inf
    %3804 = vmin.xlane.f32.xlu0 %v3803
    %v3805 = vpop.xlane.xlu0 %3804
    %v3806 = vcvt.f32.s32 %v3805
    %v3807 = vcvt.f32.s32 %v3801
    %v3808 = vshll.u32 %v3807, 16
    %v3809 = vadd.s32 %v3808, %v3806
    %s3810 = vtos %v3809
    %v3811 = vsel %vm3776, %v2300, 0
    %v3812 = vsel %vm2809, %v3811, 2147483648
    %v3813 = vand.u32 %v3812, 65535
    %v3814 = vshra.s32 %v3812, 16
    %v3815 = vcvt.s32.f32 %v3813
    %v3816 = vcvt.s32.f32 %v3814
    %3817 = vmax.xlane.f32.xlu0 %v3816
    %v3818 = vpop.xlane.xlu0 %3817
    %vm3819 = vcmp.eq.f32.partialorder %v3816, %v3818
    %v3820 = vsel %vm3819, %v3815, -inf
    %3821 = vmax.xlane.f32.xlu0 %v3820
    %v3822 = vpop.xlane.xlu0 %3821
    %v3823 = vcvt.f32.s32 %v3822
    %v3824 = vcvt.f32.s32 %v3818
    %v3825 = vshll.u32 %v3824, 16
    %v3826 = vadd.s32 %v3825, %v3823
    %s3827 = vtos %v3826
    %v3828 = vsel %vm3776, %v2301, 0
    %v3829 = vsel %vm2809, %v3828, 2147483648
    %v3830 = vand.u32 %v3829, 65535
    %v3831 = vshra.s32 %v3829, 16
    %v3832 = vcvt.s32.f32 %v3830
    %v3833 = vcvt.s32.f32 %v3831
    %3834 = vmax.xlane.f32.xlu0 %v3833
    %v3835 = vpop.xlane.xlu0 %3834
    %vm3836 = vcmp.eq.f32.partialorder %v3833, %v3835
    %v3837 = vsel %vm3836, %v3832, -inf
    %3838 = vmax.xlane.f32.xlu0 %v3837
    %v3839 = vpop.xlane.xlu0 %3838
    %v3840 = vcvt.f32.s32 %v3839
    %v3841 = vcvt.f32.s32 %v3835
    %v3842 = vshll.u32 %v3841, 16
    %v3843 = vadd.s32 %v3842, %v3840
    %s3844 = vtos %v3843
    %v3845 = vstv %s3793
    %vm3846 = vcmp.ge.s32.totalorder %v87, %v3845
    %vm3847 = vcmp.ge.s32.totalorder %v88, %v3845
    %vm3848 = vcmp.ge.s32.totalorder %v89, %v3845
    %vm3849 = vcmp.ge.s32.totalorder %v90, %v3845
    %vm3850 = vcmp.ge.s32.totalorder %v91, %v3845
    %vm3851 = vcmp.ge.s32.totalorder %v92, %v3845
    %vm3852 = vcmp.ge.s32.totalorder %v93, %v3845
    %vm3853 = vcmp.ge.s32.totalorder %v94, %v3845
    %v3854 = vstv %s3827
    %vm3855 = vcmp.lt.s32.totalorder %v87, %v3854
    %vm3856 = vcmp.lt.s32.totalorder %v88, %v3854
    %vm3857 = vcmp.lt.s32.totalorder %v89, %v3854
    %vm3858 = vcmp.lt.s32.totalorder %v90, %v3854
    %vm3859 = vcmp.lt.s32.totalorder %v91, %v3854
    %vm3860 = vcmp.lt.s32.totalorder %v92, %v3854
    %vm3861 = vcmp.lt.s32.totalorder %v93, %v3854
    %vm3862 = vcmp.lt.s32.totalorder %v94, %v3854
    %vm3863 = vmand %vm3846, %vm3855
    %vm3864 = vmand %vm3847, %vm3856
    %vm3865 = vmand %vm3848, %vm3857
    %vm3866 = vmand %vm3849, %vm3858
    %vm3867 = vmand %vm3850, %vm3859
    %vm3868 = vmand %vm3851, %vm3860
    %vm3869 = vmand %vm3852, %vm3861
    %vm3870 = vmand %vm3853, %vm3862
    %v3871 = vstv %s3810
    %vm3872 = vcmp.ge.s32.totalorder %v97, %v3871
    %v3873 = vstv %s3844
    %vm3874 = vcmp.lt.s32.totalorder %v97, %v3873
    %vm3875 = vmand %vm3872, %vm3874
    %vm3876 = vmand %vm3863, %vm3875
    %vm3877 = vmand %vm3864, %vm3875
    %vm3878 = vmand %vm3865, %vm3875
    %vm3879 = vmand %vm3866, %vm3875
    %vm3880 = vmand %vm3867, %vm3875
    %vm3881 = vmand %vm3868, %vm3875
    %vm3882 = vmand %vm3869, %vm3875
    %vm3883 = vmand %vm3870, %vm3875
    %vm3884 = vmpackc.low %vm3877, %vm3876
    %vm3885 = vmpackc.low %vm3879, %vm3878
    %vm3886 = vmpackc.even %vm3885, %vm3884
    %vm3887 = vmpackc.low %vm3881, %vm3880
    %vm3888 = vmpackc.low %vm3883, %vm3882
    %vm3889 = vmpackc.even %vm3888, %vm3887
    %v3890 = vsel %vm3886, 16843009, 0
    %v3891 = vsel %vm3889, 16843009, 0
    %s3892 = scalar_lea.vmem [#allocation6], 112
    %3893 = vst.msk [vmem:[%s3892] sm:$0xff] %vm68, %v3890
    %3894 = vst.msk [vmem:[%s3892 + $0x8] sm:$0xff] %vm68, %v3891
    %vm3895 = vcmp.eq.s32.totalorder %v2933, 8
    %vm3896 = vmand %vm2935, %vm3895
    %v3897 = vsel %vm3896, %v2298, 9218
    %v3898 = vsel %vm2809, %v3897, 2147483647
    %v3899 = vand.u32 %v3898, 65535
    %v3900 = vshra.s32 %v3898, 16
    %v3901 = vcvt.s32.f32 %v3899
    %v3902 = vcvt.s32.f32 %v3900
    %3903 = vmin.xlane.f32.xlu0 %v3902
    %v3904 = vpop.xlane.xlu0 %3903
    %vm3905 = vcmp.eq.f32.partialorder %v3902, %v3904
    %v3906 = vsel %vm3905, %v3901, inf
    %3907 = vmin.xlane.f32.xlu0 %v3906
    %v3908 = vpop.xlane.xlu0 %3907
    %v3909 = vcvt.f32.s32 %v3908
    %v3910 = vcvt.f32.s32 %v3904
    %v3911 = vshll.u32 %v3910, 16
    %v3912 = vadd.s32 %v3911, %v3909
    %s3913 = vtos %v3912
    %v3914 = vsel %vm3896, %v2299, 9218
    %v3915 = vsel %vm2809, %v3914, 2147483647
    %v3916 = vand.u32 %v3915, 65535
    %v3917 = vshra.s32 %v3915, 16
    %v3918 = vcvt.s32.f32 %v3916
    %v3919 = vcvt.s32.f32 %v3917
    %3920 = vmin.xlane.f32.xlu0 %v3919
    %v3921 = vpop.xlane.xlu0 %3920
    %vm3922 = vcmp.eq.f32.partialorder %v3919, %v3921
    %v3923 = vsel %vm3922, %v3918, inf
    %3924 = vmin.xlane.f32.xlu0 %v3923
    %v3925 = vpop.xlane.xlu0 %3924
    %v3926 = vcvt.f32.s32 %v3925
    %v3927 = vcvt.f32.s32 %v3921
    %v3928 = vshll.u32 %v3927, 16
    %v3929 = vadd.s32 %v3928, %v3926
    %s3930 = vtos %v3929
    %v3931 = vsel %vm3896, %v2300, 0
    %v3932 = vsel %vm2809, %v3931, 2147483648
    %v3933 = vand.u32 %v3932, 65535
    %v3934 = vshra.s32 %v3932, 16
    %v3935 = vcvt.s32.f32 %v3933
    %v3936 = vcvt.s32.f32 %v3934
    %3937 = vmax.xlane.f32.xlu0 %v3936
    %v3938 = vpop.xlane.xlu0 %3937
    %vm3939 = vcmp.eq.f32.partialorder %v3936, %v3938
    %v3940 = vsel %vm3939, %v3935, -inf
    %3941 = vmax.xlane.f32.xlu0 %v3940
    %v3942 = vpop.xlane.xlu0 %3941
    %v3943 = vcvt.f32.s32 %v3942
    %v3944 = vcvt.f32.s32 %v3938
    %v3945 = vshll.u32 %v3944, 16
    %v3946 = vadd.s32 %v3945, %v3943
    %s3947 = vtos %v3946
    %v3948 = vsel %vm3896, %v2301, 0
    %v3949 = vsel %vm2809, %v3948, 2147483648
    %v3950 = vand.u32 %v3949, 65535
    %v3951 = vshra.s32 %v3949, 16
    %v3952 = vcvt.s32.f32 %v3950
    %v3953 = vcvt.s32.f32 %v3951
    %3954 = vmax.xlane.f32.xlu0 %v3953
    %v3955 = vpop.xlane.xlu0 %3954
    %vm3956 = vcmp.eq.f32.partialorder %v3953, %v3955
    %v3957 = vsel %vm3956, %v3952, -inf
    %3958 = vmax.xlane.f32.xlu0 %v3957
    %v3959 = vpop.xlane.xlu0 %3958
    %v3960 = vcvt.f32.s32 %v3959
    %v3961 = vcvt.f32.s32 %v3955
    %v3962 = vshll.u32 %v3961, 16
    %v3963 = vadd.s32 %v3962, %v3960
    %s3964 = vtos %v3963
    %v3965 = vstv %s3913
    %vm3966 = vcmp.ge.s32.totalorder %v87, %v3965
    %vm3967 = vcmp.ge.s32.totalorder %v88, %v3965
    %vm3968 = vcmp.ge.s32.totalorder %v89, %v3965
    %vm3969 = vcmp.ge.s32.totalorder %v90, %v3965
    %vm3970 = vcmp.ge.s32.totalorder %v91, %v3965
    %vm3971 = vcmp.ge.s32.totalorder %v92, %v3965
    %vm3972 = vcmp.ge.s32.totalorder %v93, %v3965
    %vm3973 = vcmp.ge.s32.totalorder %v94, %v3965
    %v3974 = vstv %s3947
    %vm3975 = vcmp.lt.s32.totalorder %v87, %v3974
    %vm3976 = vcmp.lt.s32.totalorder %v88, %v3974
    %vm3977 = vcmp.lt.s32.totalorder %v89, %v3974
    %vm3978 = vcmp.lt.s32.totalorder %v90, %v3974
    %vm3979 = vcmp.lt.s32.totalorder %v91, %v3974
    %vm3980 = vcmp.lt.s32.totalorder %v92, %v3974
    %vm3981 = vcmp.lt.s32.totalorder %v93, %v3974
    %vm3982 = vcmp.lt.s32.totalorder %v94, %v3974
    %vm3983 = vmand %vm3966, %vm3975
    %vm3984 = vmand %vm3967, %vm3976
    %vm3985 = vmand %vm3968, %vm3977
    %vm3986 = vmand %vm3969, %vm3978
    %vm3987 = vmand %vm3970, %vm3979
    %vm3988 = vmand %vm3971, %vm3980
    %vm3989 = vmand %vm3972, %vm3981
    %vm3990 = vmand %vm3973, %vm3982
    %v3991 = vstv %s3930
    %vm3992 = vcmp.ge.s32.totalorder %v97, %v3991
    %v3993 = vstv %s3964
    %vm3994 = vcmp.lt.s32.totalorder %v97, %v3993
    %vm3995 = vmand %vm3992, %vm3994
    %vm3996 = vmand %vm3983, %vm3995
    %vm3997 = vmand %vm3984, %vm3995
    %vm3998 = vmand %vm3985, %vm3995
    %vm3999 = vmand %vm3986, %vm3995
    %vm4000 = vmand %vm3987, %vm3995
    %vm4001 = vmand %vm3988, %vm3995
    %vm4002 = vmand %vm3989, %vm3995
    %vm4003 = vmand %vm3990, %vm3995
    %vm4004 = vmpackc.low %vm3997, %vm3996
    %vm4005 = vmpackc.low %vm3999, %vm3998
    %vm4006 = vmpackc.even %vm4005, %vm4004
    %vm4007 = vmpackc.low %vm4001, %vm4000
    %vm4008 = vmpackc.low %vm4003, %vm4002
    %vm4009 = vmpackc.even %vm4008, %vm4007
    %v4010 = vsel %vm4006, 16843009, 0
    %v4011 = vsel %vm4009, 16843009, 0
    %s4012 = scalar_lea.vmem [#allocation6], 128
    %4013 = vst.msk [vmem:[%s4012] sm:$0xff] %vm68, %v4010
    %4014 = vst.msk [vmem:[%s4012 + $0x8] sm:$0xff] %vm68, %v4011
    %vm4015 = vcmp.eq.s32.totalorder %v2933, 9
    %vm4016 = vmand %vm2935, %vm4015
    %v4017 = vsel %vm4016, %v2298, 9218
    %v4018 = vsel %vm2809, %v4017, 2147483647
    %v4019 = vand.u32 %v4018, 65535
    %v4020 = vshra.s32 %v4018, 16
    %v4021 = vcvt.s32.f32 %v4019
    %v4022 = vcvt.s32.f32 %v4020
    %4023 = vmin.xlane.f32.xlu0 %v4022
    %v4024 = vpop.xlane.xlu0 %4023
    %vm4025 = vcmp.eq.f32.partialorder %v4022, %v4024
    %v4026 = vsel %vm4025, %v4021, inf
    %4027 = vmin.xlane.f32.xlu0 %v4026
    %v4028 = vpop.xlane.xlu0 %4027
    %v4029 = vcvt.f32.s32 %v4028
    %v4030 = vcvt.f32.s32 %v4024
    %v4031 = vshll.u32 %v4030, 16
    %v4032 = vadd.s32 %v4031, %v4029
    %s4033 = vtos %v4032
    %v4034 = vsel %vm4016, %v2299, 9218
    %v4035 = vsel %vm2809, %v4034, 2147483647
    %v4036 = vand.u32 %v4035, 65535
    %v4037 = vshra.s32 %v4035, 16
    %v4038 = vcvt.s32.f32 %v4036
    %v4039 = vcvt.s32.f32 %v4037
    %4040 = vmin.xlane.f32.xlu0 %v4039
    %v4041 = vpop.xlane.xlu0 %4040
    %vm4042 = vcmp.eq.f32.partialorder %v4039, %v4041
    %v4043 = vsel %vm4042, %v4038, inf
    %4044 = vmin.xlane.f32.xlu0 %v4043
    %v4045 = vpop.xlane.xlu0 %4044
    %v4046 = vcvt.f32.s32 %v4045
    %v4047 = vcvt.f32.s32 %v4041
    %v4048 = vshll.u32 %v4047, 16
    %v4049 = vadd.s32 %v4048, %v4046
    %s4050 = vtos %v4049
    %v4051 = vsel %vm4016, %v2300, 0
    %v4052 = vsel %vm2809, %v4051, 2147483648
    %v4053 = vand.u32 %v4052, 65535
    %v4054 = vshra.s32 %v4052, 16
    %v4055 = vcvt.s32.f32 %v4053
    %v4056 = vcvt.s32.f32 %v4054
    %4057 = vmax.xlane.f32.xlu0 %v4056
    %v4058 = vpop.xlane.xlu0 %4057
    %vm4059 = vcmp.eq.f32.partialorder %v4056, %v4058
    %v4060 = vsel %vm4059, %v4055, -inf
    %4061 = vmax.xlane.f32.xlu0 %v4060
    %v4062 = vpop.xlane.xlu0 %4061
    %v4063 = vcvt.f32.s32 %v4062
    %v4064 = vcvt.f32.s32 %v4058
    %v4065 = vshll.u32 %v4064, 16
    %v4066 = vadd.s32 %v4065, %v4063
    %s4067 = vtos %v4066
    %v4068 = vsel %vm4016, %v2301, 0
    %v4069 = vsel %vm2809, %v4068, 2147483648
    %v4070 = vand.u32 %v4069, 65535
    %v4071 = vshra.s32 %v4069, 16
    %v4072 = vcvt.s32.f32 %v4070
    %v4073 = vcvt.s32.f32 %v4071
    %4074 = vmax.xlane.f32.xlu0 %v4073
    %v4075 = vpop.xlane.xlu0 %4074
    %vm4076 = vcmp.eq.f32.partialorder %v4073, %v4075
    %v4077 = vsel %vm4076, %v4072, -inf
    %4078 = vmax.xlane.f32.xlu0 %v4077
    %v4079 = vpop.xlane.xlu0 %4078
    %v4080 = vcvt.f32.s32 %v4079
    %v4081 = vcvt.f32.s32 %v4075
    %v4082 = vshll.u32 %v4081, 16
    %v4083 = vadd.s32 %v4082, %v4080
    %s4084 = vtos %v4083
    %v4085 = vstv %s4033
    %vm4086 = vcmp.ge.s32.totalorder %v87, %v4085
    %vm4087 = vcmp.ge.s32.totalorder %v88, %v4085
    %vm4088 = vcmp.ge.s32.totalorder %v89, %v4085
    %vm4089 = vcmp.ge.s32.totalorder %v90, %v4085
    %vm4090 = vcmp.ge.s32.totalorder %v91, %v4085
    %vm4091 = vcmp.ge.s32.totalorder %v92, %v4085
    %vm4092 = vcmp.ge.s32.totalorder %v93, %v4085
    %vm4093 = vcmp.ge.s32.totalorder %v94, %v4085
    %v4094 = vstv %s4067
    %vm4095 = vcmp.lt.s32.totalorder %v87, %v4094
    %vm4096 = vcmp.lt.s32.totalorder %v88, %v4094
    %vm4097 = vcmp.lt.s32.totalorder %v89, %v4094
    %vm4098 = vcmp.lt.s32.totalorder %v90, %v4094
    %vm4099 = vcmp.lt.s32.totalorder %v91, %v4094
    %vm4100 = vcmp.lt.s32.totalorder %v92, %v4094
    %vm4101 = vcmp.lt.s32.totalorder %v93, %v4094
    %vm4102 = vcmp.lt.s32.totalorder %v94, %v4094
    %vm4103 = vmand %vm4086, %vm4095
    %vm4104 = vmand %vm4087, %vm4096
    %vm4105 = vmand %vm4088, %vm4097
    %vm4106 = vmand %vm4089, %vm4098
    %vm4107 = vmand %vm4090, %vm4099
    %vm4108 = vmand %vm4091, %vm4100
    %vm4109 = vmand %vm4092, %vm4101
    %vm4110 = vmand %vm4093, %vm4102
    %v4111 = vstv %s4050
    %vm4112 = vcmp.ge.s32.totalorder %v97, %v4111
    %v4113 = vstv %s4084
    %vm4114 = vcmp.lt.s32.totalorder %v97, %v4113
    %vm4115 = vmand %vm4112, %vm4114
    %vm4116 = vmand %vm4103, %vm4115
    %vm4117 = vmand %vm4104, %vm4115
    %vm4118 = vmand %vm4105, %vm4115
    %vm4119 = vmand %vm4106, %vm4115
    %vm4120 = vmand %vm4107, %vm4115
    %vm4121 = vmand %vm4108, %vm4115
    %vm4122 = vmand %vm4109, %vm4115
    %vm4123 = vmand %vm4110, %vm4115
    %vm4124 = vmpackc.low %vm4117, %vm4116
    %vm4125 = vmpackc.low %vm4119, %vm4118
    %vm4126 = vmpackc.even %vm4125, %vm4124
    %vm4127 = vmpackc.low %vm4121, %vm4120
    %vm4128 = vmpackc.low %vm4123, %vm4122
    %vm4129 = vmpackc.even %vm4128, %vm4127
    %v4130 = vsel %vm4126, 16843009, 0
    %v4131 = vsel %vm4129, 16843009, 0
    %s4132 = scalar_lea.vmem [#allocation6], 144
    %4133 = vst.msk [vmem:[%s4132] sm:$0xff] %vm68, %v4130
    %4134 = vst.msk [vmem:[%s4132 + $0x8] sm:$0xff] %vm68, %v4131
    %vm4135 = vcmp.eq.s32.totalorder %v2933, 10
    %vm4136 = vmand %vm2935, %vm4135
    %v4137 = vsel %vm4136, %v2298, 9218
    %v4138 = vsel %vm2809, %v4137, 2147483647
    %v4139 = vand.u32 %v4138, 65535
    %v4140 = vshra.s32 %v4138, 16
    %v4141 = vcvt.s32.f32 %v4139
    %v4142 = vcvt.s32.f32 %v4140
    %4143 = vmin.xlane.f32.xlu0 %v4142
    %v4144 = vpop.xlane.xlu0 %4143
    %vm4145 = vcmp.eq.f32.partialorder %v4142, %v4144
    %v4146 = vsel %vm4145, %v4141, inf
    %4147 = vmin.xlane.f32.xlu0 %v4146
    %v4148 = vpop.xlane.xlu0 %4147
    %v4149 = vcvt.f32.s32 %v4148
    %v4150 = vcvt.f32.s32 %v4144
    %v4151 = vshll.u32 %v4150, 16
    %v4152 = vadd.s32 %v4151, %v4149
    %s4153 = vtos %v4152
    %v4154 = vsel %vm4136, %v2299, 9218
    %v4155 = vsel %vm2809, %v4154, 2147483647
    %v4156 = vand.u32 %v4155, 65535
    %v4157 = vshra.s32 %v4155, 16
    %v4158 = vcvt.s32.f32 %v4156
    %v4159 = vcvt.s32.f32 %v4157
    %4160 = vmin.xlane.f32.xlu0 %v4159
    %v4161 = vpop.xlane.xlu0 %4160
    %vm4162 = vcmp.eq.f32.partialorder %v4159, %v4161
    %v4163 = vsel %vm4162, %v4158, inf
    %4164 = vmin.xlane.f32.xlu0 %v4163
    %v4165 = vpop.xlane.xlu0 %4164
    %v4166 = vcvt.f32.s32 %v4165
    %v4167 = vcvt.f32.s32 %v4161
    %v4168 = vshll.u32 %v4167, 16
    %v4169 = vadd.s32 %v4168, %v4166
    %s4170 = vtos %v4169
    %v4171 = vsel %vm4136, %v2300, 0
    %v4172 = vsel %vm2809, %v4171, 2147483648
    %v4173 = vand.u32 %v4172, 65535
    %v4174 = vshra.s32 %v4172, 16
    %v4175 = vcvt.s32.f32 %v4173
    %v4176 = vcvt.s32.f32 %v4174
    %4177 = vmax.xlane.f32.xlu0 %v4176
    %v4178 = vpop.xlane.xlu0 %4177
    %vm4179 = vcmp.eq.f32.partialorder %v4176, %v4178
    %v4180 = vsel %vm4179, %v4175, -inf
    %4181 = vmax.xlane.f32.xlu0 %v4180
    %v4182 = vpop.xlane.xlu0 %4181
    %v4183 = vcvt.f32.s32 %v4182
    %v4184 = vcvt.f32.s32 %v4178
    %v4185 = vshll.u32 %v4184, 16
    %v4186 = vadd.s32 %v4185, %v4183
    %s4187 = vtos %v4186
    %v4188 = vsel %vm4136, %v2301, 0
    %v4189 = vsel %vm2809, %v4188, 2147483648
    %v4190 = vand.u32 %v4189, 65535
    %v4191 = vshra.s32 %v4189, 16
    %v4192 = vcvt.s32.f32 %v4190
    %v4193 = vcvt.s32.f32 %v4191
    %4194 = vmax.xlane.f32.xlu0 %v4193
    %v4195 = vpop.xlane.xlu0 %4194
    %vm4196 = vcmp.eq.f32.partialorder %v4193, %v4195
    %v4197 = vsel %vm4196, %v4192, -inf
    %4198 = vmax.xlane.f32.xlu0 %v4197
    %v4199 = vpop.xlane.xlu0 %4198
    %v4200 = vcvt.f32.s32 %v4199
    %v4201 = vcvt.f32.s32 %v4195
    %v4202 = vshll.u32 %v4201, 16
    %v4203 = vadd.s32 %v4202, %v4200
    %s4204 = vtos %v4203
    %v4205 = vstv %s4153
    %vm4206 = vcmp.ge.s32.totalorder %v87, %v4205
    %vm4207 = vcmp.ge.s32.totalorder %v88, %v4205
    %vm4208 = vcmp.ge.s32.totalorder %v89, %v4205
    %vm4209 = vcmp.ge.s32.totalorder %v90, %v4205
    %vm4210 = vcmp.ge.s32.totalorder %v91, %v4205
    %vm4211 = vcmp.ge.s32.totalorder %v92, %v4205
    %vm4212 = vcmp.ge.s32.totalorder %v93, %v4205
    %vm4213 = vcmp.ge.s32.totalorder %v94, %v4205
    %v4214 = vstv %s4187
    %vm4215 = vcmp.lt.s32.totalorder %v87, %v4214
    %vm4216 = vcmp.lt.s32.totalorder %v88, %v4214
    %vm4217 = vcmp.lt.s32.totalorder %v89, %v4214
    %vm4218 = vcmp.lt.s32.totalorder %v90, %v4214
    %vm4219 = vcmp.lt.s32.totalorder %v91, %v4214
    %vm4220 = vcmp.lt.s32.totalorder %v92, %v4214
    %vm4221 = vcmp.lt.s32.totalorder %v93, %v4214
    %vm4222 = vcmp.lt.s32.totalorder %v94, %v4214
    %vm4223 = vmand %vm4206, %vm4215
    %vm4224 = vmand %vm4207, %vm4216
    %vm4225 = vmand %vm4208, %vm4217
    %vm4226 = vmand %vm4209, %vm4218
    %vm4227 = vmand %vm4210, %vm4219
    %vm4228 = vmand %vm4211, %vm4220
    %vm4229 = vmand %vm4212, %vm4221
    %vm4230 = vmand %vm4213, %vm4222
    %v4231 = vstv %s4170
    %vm4232 = vcmp.ge.s32.totalorder %v97, %v4231
    %v4233 = vstv %s4204
    %vm4234 = vcmp.lt.s32.totalorder %v97, %v4233
    %vm4235 = vmand %vm4232, %vm4234
    %vm4236 = vmand %vm4223, %vm4235
    %vm4237 = vmand %vm4224, %vm4235
    %vm4238 = vmand %vm4225, %vm4235
    %vm4239 = vmand %vm4226, %vm4235
    %vm4240 = vmand %vm4227, %vm4235
    %vm4241 = vmand %vm4228, %vm4235
    %vm4242 = vmand %vm4229, %vm4235
    %vm4243 = vmand %vm4230, %vm4235
    %vm4244 = vmpackc.low %vm4237, %vm4236
    %vm4245 = vmpackc.low %vm4239, %vm4238
    %vm4246 = vmpackc.even %vm4245, %vm4244
    %vm4247 = vmpackc.low %vm4241, %vm4240
    %vm4248 = vmpackc.low %vm4243, %vm4242
    %vm4249 = vmpackc.even %vm4248, %vm4247
    %v4250 = vsel %vm4246, 16843009, 0
    %v4251 = vsel %vm4249, 16843009, 0
    %s4252 = scalar_lea.vmem [#allocation6], 160
    %4253 = vst.msk [vmem:[%s4252] sm:$0xff] %vm68, %v4250
    %4254 = vst.msk [vmem:[%s4252 + $0x8] sm:$0xff] %vm68, %v4251
    %vm4255 = vcmp.eq.s32.totalorder %v2933, 11
    %vm4256 = vmand %vm2935, %vm4255
    %v4257 = vsel %vm4256, %v2298, 9218
    %v4258 = vsel %vm2809, %v4257, 2147483647
    %v4259 = vand.u32 %v4258, 65535
    %v4260 = vshra.s32 %v4258, 16
    %v4261 = vcvt.s32.f32 %v4259
    %v4262 = vcvt.s32.f32 %v4260
    %4263 = vmin.xlane.f32.xlu0 %v4262
    %v4264 = vpop.xlane.xlu0 %4263
    %vm4265 = vcmp.eq.f32.partialorder %v4262, %v4264
    %v4266 = vsel %vm4265, %v4261, inf
    %4267 = vmin.xlane.f32.xlu0 %v4266
    %v4268 = vpop.xlane.xlu0 %4267
    %v4269 = vcvt.f32.s32 %v4268
    %v4270 = vcvt.f32.s32 %v4264
    %v4271 = vshll.u32 %v4270, 16
    %v4272 = vadd.s32 %v4271, %v4269
    %s4273 = vtos %v4272
    %v4274 = vsel %vm4256, %v2299, 9218
    %v4275 = vsel %vm2809, %v4274, 2147483647
    %v4276 = vand.u32 %v4275, 65535
    %v4277 = vshra.s32 %v4275, 16
    %v4278 = vcvt.s32.f32 %v4276
    %v4279 = vcvt.s32.f32 %v4277
    %4280 = vmin.xlane.f32.xlu0 %v4279
    %v4281 = vpop.xlane.xlu0 %4280
    %vm4282 = vcmp.eq.f32.partialorder %v4279, %v4281
    %v4283 = vsel %vm4282, %v4278, inf
    %4284 = vmin.xlane.f32.xlu0 %v4283
    %v4285 = vpop.xlane.xlu0 %4284
    %v4286 = vcvt.f32.s32 %v4285
    %v4287 = vcvt.f32.s32 %v4281
    %v4288 = vshll.u32 %v4287, 16
    %v4289 = vadd.s32 %v4288, %v4286
    %s4290 = vtos %v4289
    %v4291 = vsel %vm4256, %v2300, 0
    %v4292 = vsel %vm2809, %v4291, 2147483648
    %v4293 = vand.u32 %v4292, 65535
    %v4294 = vshra.s32 %v4292, 16
    %v4295 = vcvt.s32.f32 %v4293
    %v4296 = vcvt.s32.f32 %v4294
    %4297 = vmax.xlane.f32.xlu0 %v4296
    %v4298 = vpop.xlane.xlu0 %4297
    %vm4299 = vcmp.eq.f32.partialorder %v4296, %v4298
    %v4300 = vsel %vm4299, %v4295, -inf
    %4301 = vmax.xlane.f32.xlu0 %v4300
    %v4302 = vpop.xlane.xlu0 %4301
    %v4303 = vcvt.f32.s32 %v4302
    %v4304 = vcvt.f32.s32 %v4298
    %v4305 = vshll.u32 %v4304, 16
    %v4306 = vadd.s32 %v4305, %v4303
    %s4307 = vtos %v4306
    %v4308 = vsel %vm4256, %v2301, 0
    %v4309 = vsel %vm2809, %v4308, 2147483648
    %v4310 = vand.u32 %v4309, 65535
    %v4311 = vshra.s32 %v4309, 16
    %v4312 = vcvt.s32.f32 %v4310
    %v4313 = vcvt.s32.f32 %v4311
    %4314 = vmax.xlane.f32.xlu0 %v4313
    %v4315 = vpop.xlane.xlu0 %4314
    %vm4316 = vcmp.eq.f32.partialorder %v4313, %v4315
    %v4317 = vsel %vm4316, %v4312, -inf
    %4318 = vmax.xlane.f32.xlu0 %v4317
    %v4319 = vpop.xlane.xlu0 %4318
    %v4320 = vcvt.f32.s32 %v4319
    %v4321 = vcvt.f32.s32 %v4315
    %v4322 = vshll.u32 %v4321, 16
    %v4323 = vadd.s32 %v4322, %v4320
    %s4324 = vtos %v4323
    %v4325 = vstv %s4273
    %vm4326 = vcmp.ge.s32.totalorder %v87, %v4325
    %vm4327 = vcmp.ge.s32.totalorder %v88, %v4325
    %vm4328 = vcmp.ge.s32.totalorder %v89, %v4325
    %vm4329 = vcmp.ge.s32.totalorder %v90, %v4325
    %vm4330 = vcmp.ge.s32.totalorder %v91, %v4325
    %vm4331 = vcmp.ge.s32.totalorder %v92, %v4325
    %vm4332 = vcmp.ge.s32.totalorder %v93, %v4325
    %vm4333 = vcmp.ge.s32.totalorder %v94, %v4325
    %v4334 = vstv %s4307
    %vm4335 = vcmp.lt.s32.totalorder %v87, %v4334
    %vm4336 = vcmp.lt.s32.totalorder %v88, %v4334
    %vm4337 = vcmp.lt.s32.totalorder %v89, %v4334
    %vm4338 = vcmp.lt.s32.totalorder %v90, %v4334
    %vm4339 = vcmp.lt.s32.totalorder %v91, %v4334
    %vm4340 = vcmp.lt.s32.totalorder %v92, %v4334
    %vm4341 = vcmp.lt.s32.totalorder %v93, %v4334
    %vm4342 = vcmp.lt.s32.totalorder %v94, %v4334
    %vm4343 = vmand %vm4326, %vm4335
    %vm4344 = vmand %vm4327, %vm4336
    %vm4345 = vmand %vm4328, %vm4337
    %vm4346 = vmand %vm4329, %vm4338
    %vm4347 = vmand %vm4330, %vm4339
    %vm4348 = vmand %vm4331, %vm4340
    %vm4349 = vmand %vm4332, %vm4341
    %vm4350 = vmand %vm4333, %vm4342
    %v4351 = vstv %s4290
    %vm4352 = vcmp.ge.s32.totalorder %v97, %v4351
    %v4353 = vstv %s4324
    %vm4354 = vcmp.lt.s32.totalorder %v97, %v4353
    %vm4355 = vmand %vm4352, %vm4354
    %vm4356 = vmand %vm4343, %vm4355
    %vm4357 = vmand %vm4344, %vm4355
    %vm4358 = vmand %vm4345, %vm4355
    %vm4359 = vmand %vm4346, %vm4355
    %vm4360 = vmand %vm4347, %vm4355
    %vm4361 = vmand %vm4348, %vm4355
    %vm4362 = vmand %vm4349, %vm4355
    %vm4363 = vmand %vm4350, %vm4355
    %vm4364 = vmpackc.low %vm4357, %vm4356
    %vm4365 = vmpackc.low %vm4359, %vm4358
    %vm4366 = vmpackc.even %vm4365, %vm4364
    %vm4367 = vmpackc.low %vm4361, %vm4360
    %vm4368 = vmpackc.low %vm4363, %vm4362
    %vm4369 = vmpackc.even %vm4368, %vm4367
    %v4370 = vsel %vm4366, 16843009, 0
    %v4371 = vsel %vm4369, 16843009, 0
    %s4372 = scalar_lea.vmem [#allocation6], 176
    %4373 = vst.msk [vmem:[%s4372] sm:$0xff] %vm68, %v4370
    %4374 = vst.msk [vmem:[%s4372 + $0x8] sm:$0xff] %vm68, %v4371
    %vm4375 = vcmp.eq.s32.totalorder %v2933, 12
    %vm4376 = vmand %vm2935, %vm4375
    %v4377 = vsel %vm4376, %v2298, 9218
    %v4378 = vsel %vm2809, %v4377, 2147483647
    %v4379 = vand.u32 %v4378, 65535
    %v4380 = vshra.s32 %v4378, 16
    %v4381 = vcvt.s32.f32 %v4379
    %v4382 = vcvt.s32.f32 %v4380
    %4383 = vmin.xlane.f32.xlu0 %v4382
    %v4384 = vpop.xlane.xlu0 %4383
    %vm4385 = vcmp.eq.f32.partialorder %v4382, %v4384
    %v4386 = vsel %vm4385, %v4381, inf
    %4387 = vmin.xlane.f32.xlu0 %v4386
    %v4388 = vpop.xlane.xlu0 %4387
    %v4389 = vcvt.f32.s32 %v4388
    %v4390 = vcvt.f32.s32 %v4384
    %v4391 = vshll.u32 %v4390, 16
    %v4392 = vadd.s32 %v4391, %v4389
    %s4393 = vtos %v4392
    %v4394 = vsel %vm4376, %v2299, 9218
    %v4395 = vsel %vm2809, %v4394, 2147483647
    %v4396 = vand.u32 %v4395, 65535
    %v4397 = vshra.s32 %v4395, 16
    %v4398 = vcvt.s32.f32 %v4396
    %v4399 = vcvt.s32.f32 %v4397
    %4400 = vmin.xlane.f32.xlu0 %v4399
    %v4401 = vpop.xlane.xlu0 %4400
    %vm4402 = vcmp.eq.f32.partialorder %v4399, %v4401
    %v4403 = vsel %vm4402, %v4398, inf
    %4404 = vmin.xlane.f32.xlu0 %v4403
    %v4405 = vpop.xlane.xlu0 %4404
    %v4406 = vcvt.f32.s32 %v4405
    %v4407 = vcvt.f32.s32 %v4401
    %v4408 = vshll.u32 %v4407, 16
    %v4409 = vadd.s32 %v4408, %v4406
    %s4410 = vtos %v4409
    %v4411 = vsel %vm4376, %v2300, 0
    %v4412 = vsel %vm2809, %v4411, 2147483648
    %v4413 = vand.u32 %v4412, 65535
    %v4414 = vshra.s32 %v4412, 16
    %v4415 = vcvt.s32.f32 %v4413
    %v4416 = vcvt.s32.f32 %v4414
    %4417 = vmax.xlane.f32.xlu0 %v4416
    %v4418 = vpop.xlane.xlu0 %4417
    %vm4419 = vcmp.eq.f32.partialorder %v4416, %v4418
    %v4420 = vsel %vm4419, %v4415, -inf
    %4421 = vmax.xlane.f32.xlu0 %v4420
    %v4422 = vpop.xlane.xlu0 %4421
    %v4423 = vcvt.f32.s32 %v4422
    %v4424 = vcvt.f32.s32 %v4418
    %v4425 = vshll.u32 %v4424, 16
    %v4426 = vadd.s32 %v4425, %v4423
    %s4427 = vtos %v4426
    %v4428 = vsel %vm4376, %v2301, 0
    %v4429 = vsel %vm2809, %v4428, 2147483648
    %v4430 = vand.u32 %v4429, 65535
    %v4431 = vshra.s32 %v4429, 16
    %v4432 = vcvt.s32.f32 %v4430
    %v4433 = vcvt.s32.f32 %v4431
    %4434 = vmax.xlane.f32.xlu0 %v4433
    %v4435 = vpop.xlane.xlu0 %4434
    %vm4436 = vcmp.eq.f32.partialorder %v4433, %v4435
    %v4437 = vsel %vm4436, %v4432, -inf
    %4438 = vmax.xlane.f32.xlu0 %v4437
    %v4439 = vpop.xlane.xlu0 %4438
    %v4440 = vcvt.f32.s32 %v4439
    %v4441 = vcvt.f32.s32 %v4435
    %v4442 = vshll.u32 %v4441, 16
    %v4443 = vadd.s32 %v4442, %v4440
    %s4444 = vtos %v4443
    %v4445 = vstv %s4393
    %vm4446 = vcmp.ge.s32.totalorder %v87, %v4445
    %vm4447 = vcmp.ge.s32.totalorder %v88, %v4445
    %vm4448 = vcmp.ge.s32.totalorder %v89, %v4445
    %vm4449 = vcmp.ge.s32.totalorder %v90, %v4445
    %vm4450 = vcmp.ge.s32.totalorder %v91, %v4445
    %vm4451 = vcmp.ge.s32.totalorder %v92, %v4445
    %vm4452 = vcmp.ge.s32.totalorder %v93, %v4445
    %vm4453 = vcmp.ge.s32.totalorder %v94, %v4445
    %v4454 = vstv %s4427
    %vm4455 = vcmp.lt.s32.totalorder %v87, %v4454
    %vm4456 = vcmp.lt.s32.totalorder %v88, %v4454
    %vm4457 = vcmp.lt.s32.totalorder %v89, %v4454
    %vm4458 = vcmp.lt.s32.totalorder %v90, %v4454
    %vm4459 = vcmp.lt.s32.totalorder %v91, %v4454
    %vm4460 = vcmp.lt.s32.totalorder %v92, %v4454
    %vm4461 = vcmp.lt.s32.totalorder %v93, %v4454
    %vm4462 = vcmp.lt.s32.totalorder %v94, %v4454
    %vm4463 = vmand %vm4446, %vm4455
    %vm4464 = vmand %vm4447, %vm4456
    %vm4465 = vmand %vm4448, %vm4457
    %vm4466 = vmand %vm4449, %vm4458
    %vm4467 = vmand %vm4450, %vm4459
    %vm4468 = vmand %vm4451, %vm4460
    %vm4469 = vmand %vm4452, %vm4461
    %vm4470 = vmand %vm4453, %vm4462
    %v4471 = vstv %s4410
    %vm4472 = vcmp.ge.s32.totalorder %v97, %v4471
    %v4473 = vstv %s4444
    %vm4474 = vcmp.lt.s32.totalorder %v97, %v4473
    %vm4475 = vmand %vm4472, %vm4474
    %vm4476 = vmand %vm4463, %vm4475
    %vm4477 = vmand %vm4464, %vm4475
    %vm4478 = vmand %vm4465, %vm4475
    %vm4479 = vmand %vm4466, %vm4475
    %vm4480 = vmand %vm4467, %vm4475
    %vm4481 = vmand %vm4468, %vm4475
    %vm4482 = vmand %vm4469, %vm4475
    %vm4483 = vmand %vm4470, %vm4475
    %vm4484 = vmpackc.low %vm4477, %vm4476
    %vm4485 = vmpackc.low %vm4479, %vm4478
    %vm4486 = vmpackc.even %vm4485, %vm4484
    %vm4487 = vmpackc.low %vm4481, %vm4480
    %vm4488 = vmpackc.low %vm4483, %vm4482
    %vm4489 = vmpackc.even %vm4488, %vm4487
    %v4490 = vsel %vm4486, 16843009, 0
    %v4491 = vsel %vm4489, 16843009, 0
    %s4492 = scalar_lea.vmem [#allocation6], 192
    %4493 = vst.msk [vmem:[%s4492] sm:$0xff] %vm68, %v4490
    %4494 = vst.msk [vmem:[%s4492 + $0x8] sm:$0xff] %vm68, %v4491
    %vm4495 = vcmp.eq.s32.totalorder %v2933, 13
    %vm4496 = vmand %vm2935, %vm4495
    %v4497 = vsel %vm4496, %v2298, 9218
    %v4498 = vsel %vm2809, %v4497, 2147483647
    %v4499 = vand.u32 %v4498, 65535
    %v4500 = vshra.s32 %v4498, 16
    %v4501 = vcvt.s32.f32 %v4499
    %v4502 = vcvt.s32.f32 %v4500
    %4503 = vmin.xlane.f32.xlu0 %v4502
    %v4504 = vpop.xlane.xlu0 %4503
    %vm4505 = vcmp.eq.f32.partialorder %v4502, %v4504
    %v4506 = vsel %vm4505, %v4501, inf
    %4507 = vmin.xlane.f32.xlu0 %v4506
    %v4508 = vpop.xlane.xlu0 %4507
    %v4509 = vcvt.f32.s32 %v4508
    %v4510 = vcvt.f32.s32 %v4504
    %v4511 = vshll.u32 %v4510, 16
    %v4512 = vadd.s32 %v4511, %v4509
    %s4513 = vtos %v4512
    %v4514 = vsel %vm4496, %v2299, 9218
    %v4515 = vsel %vm2809, %v4514, 2147483647
    %v4516 = vand.u32 %v4515, 65535
    %v4517 = vshra.s32 %v4515, 16
    %v4518 = vcvt.s32.f32 %v4516
    %v4519 = vcvt.s32.f32 %v4517
    %4520 = vmin.xlane.f32.xlu0 %v4519
    %v4521 = vpop.xlane.xlu0 %4520
    %vm4522 = vcmp.eq.f32.partialorder %v4519, %v4521
    %v4523 = vsel %vm4522, %v4518, inf
    %4524 = vmin.xlane.f32.xlu0 %v4523
    %v4525 = vpop.xlane.xlu0 %4524
    %v4526 = vcvt.f32.s32 %v4525
    %v4527 = vcvt.f32.s32 %v4521
    %v4528 = vshll.u32 %v4527, 16
    %v4529 = vadd.s32 %v4528, %v4526
    %s4530 = vtos %v4529
    %v4531 = vsel %vm4496, %v2300, 0
    %v4532 = vsel %vm2809, %v4531, 2147483648
    %v4533 = vand.u32 %v4532, 65535
    %v4534 = vshra.s32 %v4532, 16
    %v4535 = vcvt.s32.f32 %v4533
    %v4536 = vcvt.s32.f32 %v4534
    %4537 = vmax.xlane.f32.xlu0 %v4536
    %v4538 = vpop.xlane.xlu0 %4537
    %vm4539 = vcmp.eq.f32.partialorder %v4536, %v4538
    %v4540 = vsel %vm4539, %v4535, -inf
    %4541 = vmax.xlane.f32.xlu0 %v4540
    %v4542 = vpop.xlane.xlu0 %4541
    %v4543 = vcvt.f32.s32 %v4542
    %v4544 = vcvt.f32.s32 %v4538
    %v4545 = vshll.u32 %v4544, 16
    %v4546 = vadd.s32 %v4545, %v4543
    %s4547 = vtos %v4546
    %v4548 = vsel %vm4496, %v2301, 0
    %v4549 = vsel %vm2809, %v4548, 2147483648
    %v4550 = vand.u32 %v4549, 65535
    %v4551 = vshra.s32 %v4549, 16
    %v4552 = vcvt.s32.f32 %v4550
    %v4553 = vcvt.s32.f32 %v4551
    %4554 = vmax.xlane.f32.xlu0 %v4553
    %v4555 = vpop.xlane.xlu0 %4554
    %vm4556 = vcmp.eq.f32.partialorder %v4553, %v4555
    %v4557 = vsel %vm4556, %v4552, -inf
    %4558 = vmax.xlane.f32.xlu0 %v4557
    %v4559 = vpop.xlane.xlu0 %4558
    %v4560 = vcvt.f32.s32 %v4559
    %v4561 = vcvt.f32.s32 %v4555
    %v4562 = vshll.u32 %v4561, 16
    %v4563 = vadd.s32 %v4562, %v4560
    %s4564 = vtos %v4563
    %v4565 = vstv %s4513
    %vm4566 = vcmp.ge.s32.totalorder %v87, %v4565
    %vm4567 = vcmp.ge.s32.totalorder %v88, %v4565
    %vm4568 = vcmp.ge.s32.totalorder %v89, %v4565
    %vm4569 = vcmp.ge.s32.totalorder %v90, %v4565
    %vm4570 = vcmp.ge.s32.totalorder %v91, %v4565
    %vm4571 = vcmp.ge.s32.totalorder %v92, %v4565
    %vm4572 = vcmp.ge.s32.totalorder %v93, %v4565
    %vm4573 = vcmp.ge.s32.totalorder %v94, %v4565
    %v4574 = vstv %s4547
    %vm4575 = vcmp.lt.s32.totalorder %v87, %v4574
    %vm4576 = vcmp.lt.s32.totalorder %v88, %v4574
    %vm4577 = vcmp.lt.s32.totalorder %v89, %v4574
    %vm4578 = vcmp.lt.s32.totalorder %v90, %v4574
    %vm4579 = vcmp.lt.s32.totalorder %v91, %v4574
    %vm4580 = vcmp.lt.s32.totalorder %v92, %v4574
    %vm4581 = vcmp.lt.s32.totalorder %v93, %v4574
    %vm4582 = vcmp.lt.s32.totalorder %v94, %v4574
    %vm4583 = vmand %vm4566, %vm4575
    %vm4584 = vmand %vm4567, %vm4576
    %vm4585 = vmand %vm4568, %vm4577
    %vm4586 = vmand %vm4569, %vm4578
    %vm4587 = vmand %vm4570, %vm4579
    %vm4588 = vmand %vm4571, %vm4580
    %vm4589 = vmand %vm4572, %vm4581
    %vm4590 = vmand %vm4573, %vm4582
    %v4591 = vstv %s4530
    %vm4592 = vcmp.ge.s32.totalorder %v97, %v4591
    %v4593 = vstv %s4564
    %vm4594 = vcmp.lt.s32.totalorder %v97, %v4593
    %vm4595 = vmand %vm4592, %vm4594
    %vm4596 = vmand %vm4583, %vm4595
    %vm4597 = vmand %vm4584, %vm4595
    %vm4598 = vmand %vm4585, %vm4595
    %vm4599 = vmand %vm4586, %vm4595
    %vm4600 = vmand %vm4587, %vm4595
    %vm4601 = vmand %vm4588, %vm4595
    %vm4602 = vmand %vm4589, %vm4595
    %vm4603 = vmand %vm4590, %vm4595
    %vm4604 = vmpackc.low %vm4597, %vm4596
    %vm4605 = vmpackc.low %vm4599, %vm4598
    %vm4606 = vmpackc.even %vm4605, %vm4604
    %vm4607 = vmpackc.low %vm4601, %vm4600
    %vm4608 = vmpackc.low %vm4603, %vm4602
    %vm4609 = vmpackc.even %vm4608, %vm4607
    %v4610 = vsel %vm4606, 16843009, 0
    %v4611 = vsel %vm4609, 16843009, 0
    %s4612 = scalar_lea.vmem [#allocation6], 208
    %4613 = vst.msk [vmem:[%s4612] sm:$0xff] %vm68, %v4610
    %4614 = vst.msk [vmem:[%s4612 + $0x8] sm:$0xff] %vm68, %v4611
    %vm4615 = vcmp.eq.s32.totalorder %v2933, 14
    %vm4616 = vmand %vm2935, %vm4615
    %v4617 = vsel %vm4616, %v2298, 9218
    %v4618 = vsel %vm2809, %v4617, 2147483647
    %v4619 = vand.u32 %v4618, 65535
    %v4620 = vshra.s32 %v4618, 16
    %v4621 = vcvt.s32.f32 %v4619
    %v4622 = vcvt.s32.f32 %v4620
    %4623 = vmin.xlane.f32.xlu0 %v4622
    %v4624 = vpop.xlane.xlu0 %4623
    %vm4625 = vcmp.eq.f32.partialorder %v4622, %v4624
    %v4626 = vsel %vm4625, %v4621, inf
    %4627 = vmin.xlane.f32.xlu0 %v4626
    %v4628 = vpop.xlane.xlu0 %4627
    %v4629 = vcvt.f32.s32 %v4628
    %v4630 = vcvt.f32.s32 %v4624
    %v4631 = vshll.u32 %v4630, 16
    %v4632 = vadd.s32 %v4631, %v4629
    %s4633 = vtos %v4632
    %v4634 = vsel %vm4616, %v2299, 9218
    %v4635 = vsel %vm2809, %v4634, 2147483647
    %v4636 = vand.u32 %v4635, 65535
    %v4637 = vshra.s32 %v4635, 16
    %v4638 = vcvt.s32.f32 %v4636
    %v4639 = vcvt.s32.f32 %v4637
    %4640 = vmin.xlane.f32.xlu0 %v4639
    %v4641 = vpop.xlane.xlu0 %4640
    %vm4642 = vcmp.eq.f32.partialorder %v4639, %v4641
    %v4643 = vsel %vm4642, %v4638, inf
    %4644 = vmin.xlane.f32.xlu0 %v4643
    %v4645 = vpop.xlane.xlu0 %4644
    %v4646 = vcvt.f32.s32 %v4645
    %v4647 = vcvt.f32.s32 %v4641
    %v4648 = vshll.u32 %v4647, 16
    %v4649 = vadd.s32 %v4648, %v4646
    %s4650 = vtos %v4649
    %v4651 = vsel %vm4616, %v2300, 0
    %v4652 = vsel %vm2809, %v4651, 2147483648
    %v4653 = vand.u32 %v4652, 65535
    %v4654 = vshra.s32 %v4652, 16
    %v4655 = vcvt.s32.f32 %v4653
    %v4656 = vcvt.s32.f32 %v4654
    %4657 = vmax.xlane.f32.xlu0 %v4656
    %v4658 = vpop.xlane.xlu0 %4657
    %vm4659 = vcmp.eq.f32.partialorder %v4656, %v4658
    %v4660 = vsel %vm4659, %v4655, -inf
    %4661 = vmax.xlane.f32.xlu0 %v4660
    %v4662 = vpop.xlane.xlu0 %4661
    %v4663 = vcvt.f32.s32 %v4662
    %v4664 = vcvt.f32.s32 %v4658
    %v4665 = vshll.u32 %v4664, 16
    %v4666 = vadd.s32 %v4665, %v4663
    %s4667 = vtos %v4666
    %v4668 = vsel %vm4616, %v2301, 0
    %v4669 = vsel %vm2809, %v4668, 2147483648
    %v4670 = vand.u32 %v4669, 65535
    %v4671 = vshra.s32 %v4669, 16
    %v4672 = vcvt.s32.f32 %v4670
    %v4673 = vcvt.s32.f32 %v4671
    %4674 = vmax.xlane.f32.xlu0 %v4673
    %v4675 = vpop.xlane.xlu0 %4674
    %vm4676 = vcmp.eq.f32.partialorder %v4673, %v4675
    %v4677 = vsel %vm4676, %v4672, -inf
    %4678 = vmax.xlane.f32.xlu0 %v4677
    %v4679 = vpop.xlane.xlu0 %4678
    %v4680 = vcvt.f32.s32 %v4679
    %v4681 = vcvt.f32.s32 %v4675
    %v4682 = vshll.u32 %v4681, 16
    %v4683 = vadd.s32 %v4682, %v4680
    %s4684 = vtos %v4683
    %v4685 = vstv %s4633
    %vm4686 = vcmp.ge.s32.totalorder %v87, %v4685
    %vm4687 = vcmp.ge.s32.totalorder %v88, %v4685
    %vm4688 = vcmp.ge.s32.totalorder %v89, %v4685
    %vm4689 = vcmp.ge.s32.totalorder %v90, %v4685
    %vm4690 = vcmp.ge.s32.totalorder %v91, %v4685
    %vm4691 = vcmp.ge.s32.totalorder %v92, %v4685
    %vm4692 = vcmp.ge.s32.totalorder %v93, %v4685
    %vm4693 = vcmp.ge.s32.totalorder %v94, %v4685
    %v4694 = vstv %s4667
    %vm4695 = vcmp.lt.s32.totalorder %v87, %v4694
    %vm4696 = vcmp.lt.s32.totalorder %v88, %v4694
    %vm4697 = vcmp.lt.s32.totalorder %v89, %v4694
    %vm4698 = vcmp.lt.s32.totalorder %v90, %v4694
    %vm4699 = vcmp.lt.s32.totalorder %v91, %v4694
    %vm4700 = vcmp.lt.s32.totalorder %v92, %v4694
    %vm4701 = vcmp.lt.s32.totalorder %v93, %v4694
    %vm4702 = vcmp.lt.s32.totalorder %v94, %v4694
    %vm4703 = vmand %vm4686, %vm4695
    %vm4704 = vmand %vm4687, %vm4696
    %vm4705 = vmand %vm4688, %vm4697
    %vm4706 = vmand %vm4689, %vm4698
    %vm4707 = vmand %vm4690, %vm4699
    %vm4708 = vmand %vm4691, %vm4700
    %vm4709 = vmand %vm4692, %vm4701
    %vm4710 = vmand %vm4693, %vm4702
    %v4711 = vstv %s4650
    %vm4712 = vcmp.ge.s32.totalorder %v97, %v4711
    %v4713 = vstv %s4684
    %vm4714 = vcmp.lt.s32.totalorder %v97, %v4713
    %vm4715 = vmand %vm4712, %vm4714
    %vm4716 = vmand %vm4703, %vm4715
    %vm4717 = vmand %vm4704, %vm4715
    %vm4718 = vmand %vm4705, %vm4715
    %vm4719 = vmand %vm4706, %vm4715
    %vm4720 = vmand %vm4707, %vm4715
    %vm4721 = vmand %vm4708, %vm4715
    %vm4722 = vmand %vm4709, %vm4715
    %vm4723 = vmand %vm4710, %vm4715
    %vm4724 = vmpackc.low %vm4717, %vm4716
    %vm4725 = vmpackc.low %vm4719, %vm4718
    %vm4726 = vmpackc.even %vm4725, %vm4724
    %vm4727 = vmpackc.low %vm4721, %vm4720
    %vm4728 = vmpackc.low %vm4723, %vm4722
    %vm4729 = vmpackc.even %vm4728, %vm4727
    %v4730 = vsel %vm4726, 16843009, 0
    %v4731 = vsel %vm4729, 16843009, 0
    %s4732 = scalar_lea.vmem [#allocation6], 224
    %4733 = vst.msk [vmem:[%s4732] sm:$0xff] %vm68, %v4730
    %4734 = vst.msk [vmem:[%s4732 + $0x8] sm:$0xff] %vm68, %v4731
    %vm4735 = vcmp.eq.s32.totalorder %v2933, 15
    %vm4736 = vmand %vm2935, %vm4735
    %v4737 = vsel %vm4736, %v2298, 9218
    %v4738 = vsel %vm2809, %v4737, 2147483647
    %v4739 = vand.u32 %v4738, 65535
    %v4740 = vshra.s32 %v4738, 16
    %v4741 = vcvt.s32.f32 %v4739
    %v4742 = vcvt.s32.f32 %v4740
    %4743 = vmin.xlane.f32.xlu0 %v4742
    %v4744 = vpop.xlane.xlu0 %4743
    %vm4745 = vcmp.eq.f32.partialorder %v4742, %v4744
    %v4746 = vsel %vm4745, %v4741, inf
    %4747 = vmin.xlane.f32.xlu0 %v4746
    %v4748 = vpop.xlane.xlu0 %4747
    %v4749 = vcvt.f32.s32 %v4748
    %v4750 = vcvt.f32.s32 %v4744
    %v4751 = vshll.u32 %v4750, 16
    %v4752 = vadd.s32 %v4751, %v4749
    %s4753 = vtos %v4752
    %v4754 = vsel %vm4736, %v2299, 9218
    %v4755 = vsel %vm2809, %v4754, 2147483647
    %v4756 = vand.u32 %v4755, 65535
    %v4757 = vshra.s32 %v4755, 16
    %v4758 = vcvt.s32.f32 %v4756
    %v4759 = vcvt.s32.f32 %v4757
    %4760 = vmin.xlane.f32.xlu0 %v4759
    %v4761 = vpop.xlane.xlu0 %4760
    %vm4762 = vcmp.eq.f32.partialorder %v4759, %v4761
    %v4763 = vsel %vm4762, %v4758, inf
    %4764 = vmin.xlane.f32.xlu0 %v4763
    %v4765 = vpop.xlane.xlu0 %4764
    %v4766 = vcvt.f32.s32 %v4765
    %v4767 = vcvt.f32.s32 %v4761
    %v4768 = vshll.u32 %v4767, 16
    %v4769 = vadd.s32 %v4768, %v4766
    %s4770 = vtos %v4769
    %v4771 = vsel %vm4736, %v2300, 0
    %v4772 = vsel %vm2809, %v4771, 2147483648
    %v4773 = vand.u32 %v4772, 65535
    %v4774 = vshra.s32 %v4772, 16
    %v4775 = vcvt.s32.f32 %v4773
    %v4776 = vcvt.s32.f32 %v4774
    %4777 = vmax.xlane.f32.xlu0 %v4776
    %v4778 = vpop.xlane.xlu0 %4777
    %vm4779 = vcmp.eq.f32.partialorder %v4776, %v4778
    %v4780 = vsel %vm4779, %v4775, -inf
    %4781 = vmax.xlane.f32.xlu0 %v4780
    %v4782 = vpop.xlane.xlu0 %4781
    %v4783 = vcvt.f32.s32 %v4782
    %v4784 = vcvt.f32.s32 %v4778
    %v4785 = vshll.u32 %v4784, 16
    %v4786 = vadd.s32 %v4785, %v4783
    %s4787 = vtos %v4786
    %v4788 = vsel %vm4736, %v2301, 0
    %v4789 = vsel %vm2809, %v4788, 2147483648
    %v4790 = vand.u32 %v4789, 65535
    %v4791 = vshra.s32 %v4789, 16
    %v4792 = vcvt.s32.f32 %v4790
    %v4793 = vcvt.s32.f32 %v4791
    %4794 = vmax.xlane.f32.xlu0 %v4793
    %v4795 = vpop.xlane.xlu0 %4794
    %vm4796 = vcmp.eq.f32.partialorder %v4793, %v4795
    %v4797 = vsel %vm4796, %v4792, -inf
    %4798 = vmax.xlane.f32.xlu0 %v4797
    %v4799 = vpop.xlane.xlu0 %4798
    %v4800 = vcvt.f32.s32 %v4799
    %v4801 = vcvt.f32.s32 %v4795
    %v4802 = vshll.u32 %v4801, 16
    %v4803 = vadd.s32 %v4802, %v4800
    %s4804 = vtos %v4803
    %v4805 = vstv %s4753
    %vm4806 = vcmp.ge.s32.totalorder %v87, %v4805
    %vm4807 = vcmp.ge.s32.totalorder %v88, %v4805
    %vm4808 = vcmp.ge.s32.totalorder %v89, %v4805
    %vm4809 = vcmp.ge.s32.totalorder %v90, %v4805
    %vm4810 = vcmp.ge.s32.totalorder %v91, %v4805
    %vm4811 = vcmp.ge.s32.totalorder %v92, %v4805
    %vm4812 = vcmp.ge.s32.totalorder %v93, %v4805
    %vm4813 = vcmp.ge.s32.totalorder %v94, %v4805
    %v4814 = vstv %s4787
    %vm4815 = vcmp.lt.s32.totalorder %v87, %v4814
    %vm4816 = vcmp.lt.s32.totalorder %v88, %v4814
    %vm4817 = vcmp.lt.s32.totalorder %v89, %v4814
    %vm4818 = vcmp.lt.s32.totalorder %v90, %v4814
    %vm4819 = vcmp.lt.s32.totalorder %v91, %v4814
    %vm4820 = vcmp.lt.s32.totalorder %v92, %v4814
    %vm4821 = vcmp.lt.s32.totalorder %v93, %v4814
    %vm4822 = vcmp.lt.s32.totalorder %v94, %v4814
    %vm4823 = vmand %vm4806, %vm4815
    %vm4824 = vmand %vm4807, %vm4816
    %vm4825 = vmand %vm4808, %vm4817
    %vm4826 = vmand %vm4809, %vm4818
    %vm4827 = vmand %vm4810, %vm4819
    %vm4828 = vmand %vm4811, %vm4820
    %vm4829 = vmand %vm4812, %vm4821
    %vm4830 = vmand %vm4813, %vm4822
    %v4831 = vstv %s4770
    %vm4832 = vcmp.ge.s32.totalorder %v97, %v4831
    %v4833 = vstv %s4804
    %vm4834 = vcmp.lt.s32.totalorder %v97, %v4833
    %vm4835 = vmand %vm4832, %vm4834
    %vm4836 = vmand %vm4823, %vm4835
    %vm4837 = vmand %vm4824, %vm4835
    %vm4838 = vmand %vm4825, %vm4835
    %vm4839 = vmand %vm4826, %vm4835
    %vm4840 = vmand %vm4827, %vm4835
    %vm4841 = vmand %vm4828, %vm4835
    %vm4842 = vmand %vm4829, %vm4835
    %vm4843 = vmand %vm4830, %vm4835
    %vm4844 = vmpackc.low %vm4837, %vm4836
    %vm4845 = vmpackc.low %vm4839, %vm4838
    %vm4846 = vmpackc.even %vm4845, %vm4844
    %vm4847 = vmpackc.low %vm4841, %vm4840
    %vm4848 = vmpackc.low %vm4843, %vm4842
    %vm4849 = vmpackc.even %vm4848, %vm4847
    %v4850 = vsel %vm4846, 16843009, 0
    %v4851 = vsel %vm4849, 16843009, 0
    %s4852 = scalar_lea.vmem [#allocation6], 240
    %4853 = vst.msk [vmem:[%s4852] sm:$0xff] %vm68, %v4850
    %4854 = vst.msk [vmem:[%s4852 + $0x8] sm:$0xff] %vm68, %v4851
    %vm4855 = vcmp.eq.s32.totalorder %v2933, 16
    %vm4856 = vmand %vm2935, %vm4855
    %v4857 = vsel %vm4856, %v2298, 9218
    %v4858 = vsel %vm2809, %v4857, 2147483647
    %v4859 = vand.u32 %v4858, 65535
    %v4860 = vshra.s32 %v4858, 16
    %v4861 = vcvt.s32.f32 %v4859
    %v4862 = vcvt.s32.f32 %v4860
    %4863 = vmin.xlane.f32.xlu0 %v4862
    %v4864 = vpop.xlane.xlu0 %4863
    %vm4865 = vcmp.eq.f32.partialorder %v4862, %v4864
    %v4866 = vsel %vm4865, %v4861, inf
    %4867 = vmin.xlane.f32.xlu0 %v4866
    %v4868 = vpop.xlane.xlu0 %4867
    %v4869 = vcvt.f32.s32 %v4868
    %v4870 = vcvt.f32.s32 %v4864
    %v4871 = vshll.u32 %v4870, 16
    %v4872 = vadd.s32 %v4871, %v4869
    %s4873 = vtos %v4872
    %v4874 = vsel %vm4856, %v2299, 9218
    %v4875 = vsel %vm2809, %v4874, 2147483647
    %v4876 = vand.u32 %v4875, 65535
    %v4877 = vshra.s32 %v4875, 16
    %v4878 = vcvt.s32.f32 %v4876
    %v4879 = vcvt.s32.f32 %v4877
    %4880 = vmin.xlane.f32.xlu0 %v4879
    %v4881 = vpop.xlane.xlu0 %4880
    %vm4882 = vcmp.eq.f32.partialorder %v4879, %v4881
    %v4883 = vsel %vm4882, %v4878, inf
    %4884 = vmin.xlane.f32.xlu0 %v4883
    %v4885 = vpop.xlane.xlu0 %4884
    %v4886 = vcvt.f32.s32 %v4885
    %v4887 = vcvt.f32.s32 %v4881
    %v4888 = vshll.u32 %v4887, 16
    %v4889 = vadd.s32 %v4888, %v4886
    %s4890 = vtos %v4889
    %v4891 = vsel %vm4856, %v2300, 0
    %v4892 = vsel %vm2809, %v4891, 2147483648
    %v4893 = vand.u32 %v4892, 65535
    %v4894 = vshra.s32 %v4892, 16
    %v4895 = vcvt.s32.f32 %v4893
    %v4896 = vcvt.s32.f32 %v4894
    %4897 = vmax.xlane.f32.xlu0 %v4896
    %v4898 = vpop.xlane.xlu0 %4897
    %vm4899 = vcmp.eq.f32.partialorder %v4896, %v4898
    %v4900 = vsel %vm4899, %v4895, -inf
    %4901 = vmax.xlane.f32.xlu0 %v4900
    %v4902 = vpop.xlane.xlu0 %4901
    %v4903 = vcvt.f32.s32 %v4902
    %v4904 = vcvt.f32.s32 %v4898
    %v4905 = vshll.u32 %v4904, 16
    %v4906 = vadd.s32 %v4905, %v4903
    %s4907 = vtos %v4906
    %v4908 = vsel %vm4856, %v2301, 0
    %v4909 = vsel %vm2809, %v4908, 2147483648
    %v4910 = vand.u32 %v4909, 65535
    %v4911 = vshra.s32 %v4909, 16
    %v4912 = vcvt.s32.f32 %v4910
    %v4913 = vcvt.s32.f32 %v4911
    %4914 = vmax.xlane.f32.xlu0 %v4913
    %v4915 = vpop.xlane.xlu0 %4914
    %vm4916 = vcmp.eq.f32.partialorder %v4913, %v4915
    %v4917 = vsel %vm4916, %v4912, -inf
    %4918 = vmax.xlane.f32.xlu0 %v4917
    %v4919 = vpop.xlane.xlu0 %4918
    %v4920 = vcvt.f32.s32 %v4919
    %v4921 = vcvt.f32.s32 %v4915
    %v4922 = vshll.u32 %v4921, 16
    %v4923 = vadd.s32 %v4922, %v4920
    %s4924 = vtos %v4923
    %v4925 = vstv %s4873
    %vm4926 = vcmp.ge.s32.totalorder %v87, %v4925
    %vm4927 = vcmp.ge.s32.totalorder %v88, %v4925
    %vm4928 = vcmp.ge.s32.totalorder %v89, %v4925
    %vm4929 = vcmp.ge.s32.totalorder %v90, %v4925
    %vm4930 = vcmp.ge.s32.totalorder %v91, %v4925
    %vm4931 = vcmp.ge.s32.totalorder %v92, %v4925
    %vm4932 = vcmp.ge.s32.totalorder %v93, %v4925
    %vm4933 = vcmp.ge.s32.totalorder %v94, %v4925
    %v4934 = vstv %s4907
    %vm4935 = vcmp.lt.s32.totalorder %v87, %v4934
    %vm4936 = vcmp.lt.s32.totalorder %v88, %v4934
    %vm4937 = vcmp.lt.s32.totalorder %v89, %v4934
    %vm4938 = vcmp.lt.s32.totalorder %v90, %v4934
    %vm4939 = vcmp.lt.s32.totalorder %v91, %v4934
    %vm4940 = vcmp.lt.s32.totalorder %v92, %v4934
    %vm4941 = vcmp.lt.s32.totalorder %v93, %v4934
    %vm4942 = vcmp.lt.s32.totalorder %v94, %v4934
    %vm4943 = vmand %vm4926, %vm4935
    %vm4944 = vmand %vm4927, %vm4936
    %vm4945 = vmand %vm4928, %vm4937
    %vm4946 = vmand %vm4929, %vm4938
    %vm4947 = vmand %vm4930, %vm4939
    %vm4948 = vmand %vm4931, %vm4940
    %vm4949 = vmand %vm4932, %vm4941
    %vm4950 = vmand %vm4933, %vm4942
    %v4951 = vstv %s4890
    %vm4952 = vcmp.ge.s32.totalorder %v97, %v4951
    %v4953 = vstv %s4924
    %vm4954 = vcmp.lt.s32.totalorder %v97, %v4953
    %vm4955 = vmand %vm4952, %vm4954
    %vm4956 = vmand %vm4943, %vm4955
    %vm4957 = vmand %vm4944, %vm4955
    %vm4958 = vmand %vm4945, %vm4955
    %vm4959 = vmand %vm4946, %vm4955
    %vm4960 = vmand %vm4947, %vm4955
    %vm4961 = vmand %vm4948, %vm4955
    %vm4962 = vmand %vm4949, %vm4955
    %vm4963 = vmand %vm4950, %vm4955
    %vm4964 = vmpackc.low %vm4957, %vm4956
    %vm4965 = vmpackc.low %vm4959, %vm4958
    %vm4966 = vmpackc.even %vm4965, %vm4964
    %vm4967 = vmpackc.low %vm4961, %vm4960
    %vm4968 = vmpackc.low %vm4963, %vm4962
    %vm4969 = vmpackc.even %vm4968, %vm4967
    %v4970 = vsel %vm4966, 16843009, 0
    %v4971 = vsel %vm4969, 16843009, 0
    %s4972 = scalar_lea.vmem [#allocation6], 256
    %4973 = vst.msk [vmem:[%s4972] sm:$0xff] %vm68, %v4970
    %4974 = vst.msk [vmem:[%s4972 + $0x8] sm:$0xff] %vm68, %v4971
    %vm4975 = vcmp.eq.s32.totalorder %v2933, 17
    %vm4976 = vmand %vm2935, %vm4975
    %v4977 = vsel %vm4976, %v2298, 9218
    %v4978 = vsel %vm2809, %v4977, 2147483647
    %v4979 = vand.u32 %v4978, 65535
    %v4980 = vshra.s32 %v4978, 16
    %v4981 = vcvt.s32.f32 %v4979
    %v4982 = vcvt.s32.f32 %v4980
    %4983 = vmin.xlane.f32.xlu0 %v4982
    %v4984 = vpop.xlane.xlu0 %4983
    %vm4985 = vcmp.eq.f32.partialorder %v4982, %v4984
    %v4986 = vsel %vm4985, %v4981, inf
    %4987 = vmin.xlane.f32.xlu0 %v4986
    %v4988 = vpop.xlane.xlu0 %4987
    %v4989 = vcvt.f32.s32 %v4988
    %v4990 = vcvt.f32.s32 %v4984
    %v4991 = vshll.u32 %v4990, 16
    %v4992 = vadd.s32 %v4991, %v4989
    %s4993 = vtos %v4992
    %v4994 = vsel %vm4976, %v2299, 9218
    %v4995 = vsel %vm2809, %v4994, 2147483647
    %v4996 = vand.u32 %v4995, 65535
    %v4997 = vshra.s32 %v4995, 16
    %v4998 = vcvt.s32.f32 %v4996
    %v4999 = vcvt.s32.f32 %v4997
    %5000 = vmin.xlane.f32.xlu0 %v4999
    %v5001 = vpop.xlane.xlu0 %5000
    %vm5002 = vcmp.eq.f32.partialorder %v4999, %v5001
    %v5003 = vsel %vm5002, %v4998, inf
    %5004 = vmin.xlane.f32.xlu0 %v5003
    %v5005 = vpop.xlane.xlu0 %5004
    %v5006 = vcvt.f32.s32 %v5005
    %v5007 = vcvt.f32.s32 %v5001
    %v5008 = vshll.u32 %v5007, 16
    %v5009 = vadd.s32 %v5008, %v5006
    %s5010 = vtos %v5009
    %v5011 = vsel %vm4976, %v2300, 0
    %v5012 = vsel %vm2809, %v5011, 2147483648
    %v5013 = vand.u32 %v5012, 65535
    %v5014 = vshra.s32 %v5012, 16
    %v5015 = vcvt.s32.f32 %v5013
    %v5016 = vcvt.s32.f32 %v5014
    %5017 = vmax.xlane.f32.xlu0 %v5016
    %v5018 = vpop.xlane.xlu0 %5017
    %vm5019 = vcmp.eq.f32.partialorder %v5016, %v5018
    %v5020 = vsel %vm5019, %v5015, -inf
    %5021 = vmax.xlane.f32.xlu0 %v5020
    %v5022 = vpop.xlane.xlu0 %5021
    %v5023 = vcvt.f32.s32 %v5022
    %v5024 = vcvt.f32.s32 %v5018
    %v5025 = vshll.u32 %v5024, 16
    %v5026 = vadd.s32 %v5025, %v5023
    %s5027 = vtos %v5026
    %v5028 = vsel %vm4976, %v2301, 0
    %v5029 = vsel %vm2809, %v5028, 2147483648
    %v5030 = vand.u32 %v5029, 65535
    %v5031 = vshra.s32 %v5029, 16
    %v5032 = vcvt.s32.f32 %v5030
    %v5033 = vcvt.s32.f32 %v5031
    %5034 = vmax.xlane.f32.xlu0 %v5033
    %v5035 = vpop.xlane.xlu0 %5034
    %vm5036 = vcmp.eq.f32.partialorder %v5033, %v5035
    %v5037 = vsel %vm5036, %v5032, -inf
    %5038 = vmax.xlane.f32.xlu0 %v5037
    %v5039 = vpop.xlane.xlu0 %5038
    %v5040 = vcvt.f32.s32 %v5039
    %v5041 = vcvt.f32.s32 %v5035
    %v5042 = vshll.u32 %v5041, 16
    %v5043 = vadd.s32 %v5042, %v5040
    %s5044 = vtos %v5043
    %v5045 = vstv %s4993
    %vm5046 = vcmp.ge.s32.totalorder %v87, %v5045
    %vm5047 = vcmp.ge.s32.totalorder %v88, %v5045
    %vm5048 = vcmp.ge.s32.totalorder %v89, %v5045
    %vm5049 = vcmp.ge.s32.totalorder %v90, %v5045
    %vm5050 = vcmp.ge.s32.totalorder %v91, %v5045
    %vm5051 = vcmp.ge.s32.totalorder %v92, %v5045
    %vm5052 = vcmp.ge.s32.totalorder %v93, %v5045
    %vm5053 = vcmp.ge.s32.totalorder %v94, %v5045
    %v5054 = vstv %s5027
    %vm5055 = vcmp.lt.s32.totalorder %v87, %v5054
    %vm5056 = vcmp.lt.s32.totalorder %v88, %v5054
    %vm5057 = vcmp.lt.s32.totalorder %v89, %v5054
    %vm5058 = vcmp.lt.s32.totalorder %v90, %v5054
    %vm5059 = vcmp.lt.s32.totalorder %v91, %v5054
    %vm5060 = vcmp.lt.s32.totalorder %v92, %v5054
    %vm5061 = vcmp.lt.s32.totalorder %v93, %v5054
    %vm5062 = vcmp.lt.s32.totalorder %v94, %v5054
    %vm5063 = vmand %vm5046, %vm5055
    %vm5064 = vmand %vm5047, %vm5056
    %vm5065 = vmand %vm5048, %vm5057
    %vm5066 = vmand %vm5049, %vm5058
    %vm5067 = vmand %vm5050, %vm5059
    %vm5068 = vmand %vm5051, %vm5060
    %vm5069 = vmand %vm5052, %vm5061
    %vm5070 = vmand %vm5053, %vm5062
    %v5071 = vstv %s5010
    %vm5072 = vcmp.ge.s32.totalorder %v97, %v5071
    %v5073 = vstv %s5044
    %vm5074 = vcmp.lt.s32.totalorder %v97, %v5073
    %vm5075 = vmand %vm5072, %vm5074
    %vm5076 = vmand %vm5063, %vm5075
    %vm5077 = vmand %vm5064, %vm5075
    %vm5078 = vmand %vm5065, %vm5075
    %vm5079 = vmand %vm5066, %vm5075
    %vm5080 = vmand %vm5067, %vm5075
    %vm5081 = vmand %vm5068, %vm5075
    %vm5082 = vmand %vm5069, %vm5075
    %vm5083 = vmand %vm5070, %vm5075
    %vm5084 = vmpackc.low %vm5077, %vm5076
    %vm5085 = vmpackc.low %vm5079, %vm5078
    %vm5086 = vmpackc.even %vm5085, %vm5084
    %vm5087 = vmpackc.low %vm5081, %vm5080
    %vm5088 = vmpackc.low %vm5083, %vm5082
    %vm5089 = vmpackc.even %vm5088, %vm5087
    %v5090 = vsel %vm5086, 16843009, 0
    %v5091 = vsel %vm5089, 16843009, 0
    %s5092 = scalar_lea.vmem [#allocation6], 272
    %5093 = vst.msk [vmem:[%s5092] sm:$0xff] %vm68, %v5090
    %5094 = vst.msk [vmem:[%s5092 + $0x8] sm:$0xff] %vm68, %v5091
    %vm5095 = vcmp.eq.s32.totalorder %v2933, 18
    %vm5096 = vmand %vm2935, %vm5095
    %v5097 = vsel %vm5096, %v2298, 9218
    %v5098 = vsel %vm2809, %v5097, 2147483647
    %v5099 = vand.u32 %v5098, 65535
    %v5100 = vshra.s32 %v5098, 16
    %v5101 = vcvt.s32.f32 %v5099
    %v5102 = vcvt.s32.f32 %v5100
    %5103 = vmin.xlane.f32.xlu0 %v5102
    %v5104 = vpop.xlane.xlu0 %5103
    %vm5105 = vcmp.eq.f32.partialorder %v5102, %v5104
    %v5106 = vsel %vm5105, %v5101, inf
    %5107 = vmin.xlane.f32.xlu0 %v5106
    %v5108 = vpop.xlane.xlu0 %5107
    %v5109 = vcvt.f32.s32 %v5108
    %v5110 = vcvt.f32.s32 %v5104
    %v5111 = vshll.u32 %v5110, 16
    %v5112 = vadd.s32 %v5111, %v5109
    %s5113 = vtos %v5112
    %v5114 = vsel %vm5096, %v2299, 9218
    %v5115 = vsel %vm2809, %v5114, 2147483647
    %v5116 = vand.u32 %v5115, 65535
    %v5117 = vshra.s32 %v5115, 16
    %v5118 = vcvt.s32.f32 %v5116
    %v5119 = vcvt.s32.f32 %v5117
    %5120 = vmin.xlane.f32.xlu0 %v5119
    %v5121 = vpop.xlane.xlu0 %5120
    %vm5122 = vcmp.eq.f32.partialorder %v5119, %v5121
    %v5123 = vsel %vm5122, %v5118, inf
    %5124 = vmin.xlane.f32.xlu0 %v5123
    %v5125 = vpop.xlane.xlu0 %5124
    %v5126 = vcvt.f32.s32 %v5125
    %v5127 = vcvt.f32.s32 %v5121
    %v5128 = vshll.u32 %v5127, 16
    %v5129 = vadd.s32 %v5128, %v5126
    %s5130 = vtos %v5129
    %v5131 = vsel %vm5096, %v2300, 0
    %v5132 = vsel %vm2809, %v5131, 2147483648
    %v5133 = vand.u32 %v5132, 65535
    %v5134 = vshra.s32 %v5132, 16
    %v5135 = vcvt.s32.f32 %v5133
    %v5136 = vcvt.s32.f32 %v5134
    %5137 = vmax.xlane.f32.xlu0 %v5136
    %v5138 = vpop.xlane.xlu0 %5137
    %vm5139 = vcmp.eq.f32.partialorder %v5136, %v5138
    %v5140 = vsel %vm5139, %v5135, -inf
    %5141 = vmax.xlane.f32.xlu0 %v5140
    %v5142 = vpop.xlane.xlu0 %5141
    %v5143 = vcvt.f32.s32 %v5142
    %v5144 = vcvt.f32.s32 %v5138
    %v5145 = vshll.u32 %v5144, 16
    %v5146 = vadd.s32 %v5145, %v5143
    %s5147 = vtos %v5146
    %v5148 = vsel %vm5096, %v2301, 0
    %v5149 = vsel %vm2809, %v5148, 2147483648
    %v5150 = vand.u32 %v5149, 65535
    %v5151 = vshra.s32 %v5149, 16
    %v5152 = vcvt.s32.f32 %v5150
    %v5153 = vcvt.s32.f32 %v5151
    %5154 = vmax.xlane.f32.xlu0 %v5153
    %v5155 = vpop.xlane.xlu0 %5154
    %vm5156 = vcmp.eq.f32.partialorder %v5153, %v5155
    %v5157 = vsel %vm5156, %v5152, -inf
    %5158 = vmax.xlane.f32.xlu0 %v5157
    %v5159 = vpop.xlane.xlu0 %5158
    %v5160 = vcvt.f32.s32 %v5159
    %v5161 = vcvt.f32.s32 %v5155
    %v5162 = vshll.u32 %v5161, 16
    %v5163 = vadd.s32 %v5162, %v5160
    %s5164 = vtos %v5163
    %v5165 = vstv %s5113
    %vm5166 = vcmp.ge.s32.totalorder %v87, %v5165
    %vm5167 = vcmp.ge.s32.totalorder %v88, %v5165
    %vm5168 = vcmp.ge.s32.totalorder %v89, %v5165
    %vm5169 = vcmp.ge.s32.totalorder %v90, %v5165
    %vm5170 = vcmp.ge.s32.totalorder %v91, %v5165
    %vm5171 = vcmp.ge.s32.totalorder %v92, %v5165
    %vm5172 = vcmp.ge.s32.totalorder %v93, %v5165
    %vm5173 = vcmp.ge.s32.totalorder %v94, %v5165
    %v5174 = vstv %s5147
    %vm5175 = vcmp.lt.s32.totalorder %v87, %v5174
    %vm5176 = vcmp.lt.s32.totalorder %v88, %v5174
    %vm5177 = vcmp.lt.s32.totalorder %v89, %v5174
    %vm5178 = vcmp.lt.s32.totalorder %v90, %v5174
    %vm5179 = vcmp.lt.s32.totalorder %v91, %v5174
    %vm5180 = vcmp.lt.s32.totalorder %v92, %v5174
    %vm5181 = vcmp.lt.s32.totalorder %v93, %v5174
    %vm5182 = vcmp.lt.s32.totalorder %v94, %v5174
    %vm5183 = vmand %vm5166, %vm5175
    %vm5184 = vmand %vm5167, %vm5176
    %vm5185 = vmand %vm5168, %vm5177
    %vm5186 = vmand %vm5169, %vm5178
    %vm5187 = vmand %vm5170, %vm5179
    %vm5188 = vmand %vm5171, %vm5180
    %vm5189 = vmand %vm5172, %vm5181
    %vm5190 = vmand %vm5173, %vm5182
    %v5191 = vstv %s5130
    %vm5192 = vcmp.ge.s32.totalorder %v97, %v5191
    %v5193 = vstv %s5164
    %vm5194 = vcmp.lt.s32.totalorder %v97, %v5193
    %vm5195 = vmand %vm5192, %vm5194
    %vm5196 = vmand %vm5183, %vm5195
    %vm5197 = vmand %vm5184, %vm5195
    %vm5198 = vmand %vm5185, %vm5195
    %vm5199 = vmand %vm5186, %vm5195
    %vm5200 = vmand %vm5187, %vm5195
    %vm5201 = vmand %vm5188, %vm5195
    %vm5202 = vmand %vm5189, %vm5195
    %vm5203 = vmand %vm5190, %vm5195
    %vm5204 = vmpackc.low %vm5197, %vm5196
    %vm5205 = vmpackc.low %vm5199, %vm5198
    %vm5206 = vmpackc.even %vm5205, %vm5204
    %vm5207 = vmpackc.low %vm5201, %vm5200
    %vm5208 = vmpackc.low %vm5203, %vm5202
    %vm5209 = vmpackc.even %vm5208, %vm5207
    %v5210 = vsel %vm5206, 16843009, 0
    %v5211 = vsel %vm5209, 16843009, 0
    %s5212 = scalar_lea.vmem [#allocation6], 288
    %5213 = vst.msk [vmem:[%s5212] sm:$0xff] %vm68, %v5210
    %5214 = vst.msk [vmem:[%s5212 + $0x8] sm:$0xff] %vm68, %v5211
    %vm5215 = vcmp.eq.s32.totalorder %v2933, 19
    %vm5216 = vmand %vm2935, %vm5215
    %v5217 = vsel %vm5216, %v2298, 9218
    %v5218 = vsel %vm2809, %v5217, 2147483647
    %v5219 = vand.u32 %v5218, 65535
    %v5220 = vshra.s32 %v5218, 16
    %v5221 = vcvt.s32.f32 %v5219
    %v5222 = vcvt.s32.f32 %v5220
    %5223 = vmin.xlane.f32.xlu0 %v5222
    %v5224 = vpop.xlane.xlu0 %5223
    %vm5225 = vcmp.eq.f32.partialorder %v5222, %v5224
    %v5226 = vsel %vm5225, %v5221, inf
    %5227 = vmin.xlane.f32.xlu0 %v5226
    %v5228 = vpop.xlane.xlu0 %5227
    %v5229 = vcvt.f32.s32 %v5228
    %v5230 = vcvt.f32.s32 %v5224
    %v5231 = vshll.u32 %v5230, 16
    %v5232 = vadd.s32 %v5231, %v5229
    %s5233 = vtos %v5232
    %v5234 = vsel %vm5216, %v2299, 9218
    %v5235 = vsel %vm2809, %v5234, 2147483647
    %v5236 = vand.u32 %v5235, 65535
    %v5237 = vshra.s32 %v5235, 16
    %v5238 = vcvt.s32.f32 %v5236
    %v5239 = vcvt.s32.f32 %v5237
    %5240 = vmin.xlane.f32.xlu0 %v5239
    %v5241 = vpop.xlane.xlu0 %5240
    %vm5242 = vcmp.eq.f32.partialorder %v5239, %v5241
    %v5243 = vsel %vm5242, %v5238, inf
    %5244 = vmin.xlane.f32.xlu0 %v5243
    %v5245 = vpop.xlane.xlu0 %5244
    %v5246 = vcvt.f32.s32 %v5245
    %v5247 = vcvt.f32.s32 %v5241
    %v5248 = vshll.u32 %v5247, 16
    %v5249 = vadd.s32 %v5248, %v5246
    %s5250 = vtos %v5249
    %v5251 = vsel %vm5216, %v2300, 0
    %v5252 = vsel %vm2809, %v5251, 2147483648
    %v5253 = vand.u32 %v5252, 65535
    %v5254 = vshra.s32 %v5252, 16
    %v5255 = vcvt.s32.f32 %v5253
    %v5256 = vcvt.s32.f32 %v5254
    %5257 = vmax.xlane.f32.xlu0 %v5256
    %v5258 = vpop.xlane.xlu0 %5257
    %vm5259 = vcmp.eq.f32.partialorder %v5256, %v5258
    %v5260 = vsel %vm5259, %v5255, -inf
    %5261 = vmax.xlane.f32.xlu0 %v5260
    %v5262 = vpop.xlane.xlu0 %5261
    %v5263 = vcvt.f32.s32 %v5262
    %v5264 = vcvt.f32.s32 %v5258
    %v5265 = vshll.u32 %v5264, 16
    %v5266 = vadd.s32 %v5265, %v5263
    %s5267 = vtos %v5266
    %v5268 = vsel %vm5216, %v2301, 0
    %v5269 = vsel %vm2809, %v5268, 2147483648
    %v5270 = vand.u32 %v5269, 65535
    %v5271 = vshra.s32 %v5269, 16
    %v5272 = vcvt.s32.f32 %v5270
    %v5273 = vcvt.s32.f32 %v5271
    %5274 = vmax.xlane.f32.xlu0 %v5273
    %v5275 = vpop.xlane.xlu0 %5274
    %vm5276 = vcmp.eq.f32.partialorder %v5273, %v5275
    %v5277 = vsel %vm5276, %v5272, -inf
    %5278 = vmax.xlane.f32.xlu0 %v5277
    %v5279 = vpop.xlane.xlu0 %5278
    %v5280 = vcvt.f32.s32 %v5279
    %v5281 = vcvt.f32.s32 %v5275
    %v5282 = vshll.u32 %v5281, 16
    %v5283 = vadd.s32 %v5282, %v5280
    %s5284 = vtos %v5283
    %v5285 = vstv %s5233
    %vm5286 = vcmp.ge.s32.totalorder %v87, %v5285
    %vm5287 = vcmp.ge.s32.totalorder %v88, %v5285
    %vm5288 = vcmp.ge.s32.totalorder %v89, %v5285
    %vm5289 = vcmp.ge.s32.totalorder %v90, %v5285
    %vm5290 = vcmp.ge.s32.totalorder %v91, %v5285
    %vm5291 = vcmp.ge.s32.totalorder %v92, %v5285
    %vm5292 = vcmp.ge.s32.totalorder %v93, %v5285
    %vm5293 = vcmp.ge.s32.totalorder %v94, %v5285
    %v5294 = vstv %s5267
    %vm5295 = vcmp.lt.s32.totalorder %v87, %v5294
    %vm5296 = vcmp.lt.s32.totalorder %v88, %v5294
    %vm5297 = vcmp.lt.s32.totalorder %v89, %v5294
    %vm5298 = vcmp.lt.s32.totalorder %v90, %v5294
    %vm5299 = vcmp.lt.s32.totalorder %v91, %v5294
    %vm5300 = vcmp.lt.s32.totalorder %v92, %v5294
    %vm5301 = vcmp.lt.s32.totalorder %v93, %v5294
    %vm5302 = vcmp.lt.s32.totalorder %v94, %v5294
    %vm5303 = vmand %vm5286, %vm5295
    %vm5304 = vmand %vm5287, %vm5296
    %vm5305 = vmand %vm5288, %vm5297
    %vm5306 = vmand %vm5289, %vm5298
    %vm5307 = vmand %vm5290, %vm5299
    %vm5308 = vmand %vm5291, %vm5300
    %vm5309 = vmand %vm5292, %vm5301
    %vm5310 = vmand %vm5293, %vm5302
    %v5311 = vstv %s5250
    %vm5312 = vcmp.ge.s32.totalorder %v97, %v5311
    %v5313 = vstv %s5284
    %vm5314 = vcmp.lt.s32.totalorder %v97, %v5313
    %vm5315 = vmand %vm5312, %vm5314
    %vm5316 = vmand %vm5303, %vm5315
    %vm5317 = vmand %vm5304, %vm5315
    %vm5318 = vmand %vm5305, %vm5315
    %vm5319 = vmand %vm5306, %vm5315
    %vm5320 = vmand %vm5307, %vm5315
    %vm5321 = vmand %vm5308, %vm5315
    %vm5322 = vmand %vm5309, %vm5315
    %vm5323 = vmand %vm5310, %vm5315
    %vm5324 = vmpackc.low %vm5317, %vm5316
    %vm5325 = vmpackc.low %vm5319, %vm5318
    %vm5326 = vmpackc.even %vm5325, %vm5324
    %vm5327 = vmpackc.low %vm5321, %vm5320
    %vm5328 = vmpackc.low %vm5323, %vm5322
    %vm5329 = vmpackc.even %vm5328, %vm5327
    %v5330 = vsel %vm5326, 16843009, 0
    %v5331 = vsel %vm5329, 16843009, 0
    %s5332 = scalar_lea.vmem [#allocation6], 304
    %5333 = vst.msk [vmem:[%s5332] sm:$0xff] %vm68, %v5330
    %5334 = vst.msk [vmem:[%s5332 + $0x8] sm:$0xff] %vm68, %v5331
    %vm5335 = vcmp.eq.s32.totalorder %v2933, 20
    %vm5336 = vmand %vm2935, %vm5335
    %v5337 = vsel %vm5336, %v2298, 9218
    %v5338 = vsel %vm2809, %v5337, 2147483647
    %v5339 = vand.u32 %v5338, 65535
    %v5340 = vshra.s32 %v5338, 16
    %v5341 = vcvt.s32.f32 %v5339
    %v5342 = vcvt.s32.f32 %v5340
    %5343 = vmin.xlane.f32.xlu0 %v5342
    %v5344 = vpop.xlane.xlu0 %5343
    %vm5345 = vcmp.eq.f32.partialorder %v5342, %v5344
    %v5346 = vsel %vm5345, %v5341, inf
    %5347 = vmin.xlane.f32.xlu0 %v5346
    %v5348 = vpop.xlane.xlu0 %5347
    %v5349 = vcvt.f32.s32 %v5348
    %v5350 = vcvt.f32.s32 %v5344
    %v5351 = vshll.u32 %v5350, 16
    %v5352 = vadd.s32 %v5351, %v5349
    %s5353 = vtos %v5352
    %v5354 = vsel %vm5336, %v2299, 9218
    %v5355 = vsel %vm2809, %v5354, 2147483647
    %v5356 = vand.u32 %v5355, 65535
    %v5357 = vshra.s32 %v5355, 16
    %v5358 = vcvt.s32.f32 %v5356
    %v5359 = vcvt.s32.f32 %v5357
    %5360 = vmin.xlane.f32.xlu0 %v5359
    %v5361 = vpop.xlane.xlu0 %5360
    %vm5362 = vcmp.eq.f32.partialorder %v5359, %v5361
    %v5363 = vsel %vm5362, %v5358, inf
    %5364 = vmin.xlane.f32.xlu0 %v5363
    %v5365 = vpop.xlane.xlu0 %5364
    %v5366 = vcvt.f32.s32 %v5365
    %v5367 = vcvt.f32.s32 %v5361
    %v5368 = vshll.u32 %v5367, 16
    %v5369 = vadd.s32 %v5368, %v5366
    %s5370 = vtos %v5369
    %v5371 = vsel %vm5336, %v2300, 0
    %v5372 = vsel %vm2809, %v5371, 2147483648
    %v5373 = vand.u32 %v5372, 65535
    %v5374 = vshra.s32 %v5372, 16
    %v5375 = vcvt.s32.f32 %v5373
    %v5376 = vcvt.s32.f32 %v5374
    %5377 = vmax.xlane.f32.xlu0 %v5376
    %v5378 = vpop.xlane.xlu0 %5377
    %vm5379 = vcmp.eq.f32.partialorder %v5376, %v5378
    %v5380 = vsel %vm5379, %v5375, -inf
    %5381 = vmax.xlane.f32.xlu0 %v5380
    %v5382 = vpop.xlane.xlu0 %5381
    %v5383 = vcvt.f32.s32 %v5382
    %v5384 = vcvt.f32.s32 %v5378
    %v5385 = vshll.u32 %v5384, 16
    %v5386 = vadd.s32 %v5385, %v5383
    %s5387 = vtos %v5386
    %v5388 = vsel %vm5336, %v2301, 0
    %v5389 = vsel %vm2809, %v5388, 2147483648
    %v5390 = vand.u32 %v5389, 65535
    %v5391 = vshra.s32 %v5389, 16
    %v5392 = vcvt.s32.f32 %v5390
    %v5393 = vcvt.s32.f32 %v5391
    %5394 = vmax.xlane.f32.xlu0 %v5393
    %v5395 = vpop.xlane.xlu0 %5394
    %vm5396 = vcmp.eq.f32.partialorder %v5393, %v5395
    %v5397 = vsel %vm5396, %v5392, -inf
    %5398 = vmax.xlane.f32.xlu0 %v5397
    %v5399 = vpop.xlane.xlu0 %5398
    %v5400 = vcvt.f32.s32 %v5399
    %v5401 = vcvt.f32.s32 %v5395
    %v5402 = vshll.u32 %v5401, 16
    %v5403 = vadd.s32 %v5402, %v5400
    %s5404 = vtos %v5403
    %v5405 = vstv %s5353
    %vm5406 = vcmp.ge.s32.totalorder %v87, %v5405
    %vm5407 = vcmp.ge.s32.totalorder %v88, %v5405
    %vm5408 = vcmp.ge.s32.totalorder %v89, %v5405
    %vm5409 = vcmp.ge.s32.totalorder %v90, %v5405
    %vm5410 = vcmp.ge.s32.totalorder %v91, %v5405
    %vm5411 = vcmp.ge.s32.totalorder %v92, %v5405
    %vm5412 = vcmp.ge.s32.totalorder %v93, %v5405
    %vm5413 = vcmp.ge.s32.totalorder %v94, %v5405
    %v5414 = vstv %s5387
    %vm5415 = vcmp.lt.s32.totalorder %v87, %v5414
    %vm5416 = vcmp.lt.s32.totalorder %v88, %v5414
    %vm5417 = vcmp.lt.s32.totalorder %v89, %v5414
    %vm5418 = vcmp.lt.s32.totalorder %v90, %v5414
    %vm5419 = vcmp.lt.s32.totalorder %v91, %v5414
    %vm5420 = vcmp.lt.s32.totalorder %v92, %v5414
    %vm5421 = vcmp.lt.s32.totalorder %v93, %v5414
    %vm5422 = vcmp.lt.s32.totalorder %v94, %v5414
    %vm5423 = vmand %vm5406, %vm5415
    %vm5424 = vmand %vm5407, %vm5416
    %vm5425 = vmand %vm5408, %vm5417
    %vm5426 = vmand %vm5409, %vm5418
    %vm5427 = vmand %vm5410, %vm5419
    %vm5428 = vmand %vm5411, %vm5420
    %vm5429 = vmand %vm5412, %vm5421
    %vm5430 = vmand %vm5413, %vm5422
    %v5431 = vstv %s5370
    %vm5432 = vcmp.ge.s32.totalorder %v97, %v5431
    %v5433 = vstv %s5404
    %vm5434 = vcmp.lt.s32.totalorder %v97, %v5433
    %vm5435 = vmand %vm5432, %vm5434
    %vm5436 = vmand %vm5423, %vm5435
    %vm5437 = vmand %vm5424, %vm5435
    %vm5438 = vmand %vm5425, %vm5435
    %vm5439 = vmand %vm5426, %vm5435
    %vm5440 = vmand %vm5427, %vm5435
    %vm5441 = vmand %vm5428, %vm5435
    %vm5442 = vmand %vm5429, %vm5435
    %vm5443 = vmand %vm5430, %vm5435
    %vm5444 = vmpackc.low %vm5437, %vm5436
    %vm5445 = vmpackc.low %vm5439, %vm5438
    %vm5446 = vmpackc.even %vm5445, %vm5444
    %vm5447 = vmpackc.low %vm5441, %vm5440
    %vm5448 = vmpackc.low %vm5443, %vm5442
    %vm5449 = vmpackc.even %vm5448, %vm5447
    %v5450 = vsel %vm5446, 16843009, 0
    %v5451 = vsel %vm5449, 16843009, 0
    %s5452 = scalar_lea.vmem [#allocation6], 320
    %5453 = vst.msk [vmem:[%s5452] sm:$0xff] %vm68, %v5450
    %5454 = vst.msk [vmem:[%s5452 + $0x8] sm:$0xff] %vm68, %v5451
    %vm5455 = vcmp.eq.s32.totalorder %v2933, 21
    %vm5456 = vmand %vm2935, %vm5455
    %v5457 = vsel %vm5456, %v2298, 9218
    %v5458 = vsel %vm2809, %v5457, 2147483647
    %v5459 = vand.u32 %v5458, 65535
    %v5460 = vshra.s32 %v5458, 16
    %v5461 = vcvt.s32.f32 %v5459
    %v5462 = vcvt.s32.f32 %v5460
    %5463 = vmin.xlane.f32.xlu0 %v5462
    %v5464 = vpop.xlane.xlu0 %5463
    %vm5465 = vcmp.eq.f32.partialorder %v5462, %v5464
    %v5466 = vsel %vm5465, %v5461, inf
    %5467 = vmin.xlane.f32.xlu0 %v5466
    %v5468 = vpop.xlane.xlu0 %5467
    %v5469 = vcvt.f32.s32 %v5468
    %v5470 = vcvt.f32.s32 %v5464
    %v5471 = vshll.u32 %v5470, 16
    %v5472 = vadd.s32 %v5471, %v5469
    %s5473 = vtos %v5472
    %v5474 = vsel %vm5456, %v2299, 9218
    %v5475 = vsel %vm2809, %v5474, 2147483647
    %v5476 = vand.u32 %v5475, 65535
    %v5477 = vshra.s32 %v5475, 16
    %v5478 = vcvt.s32.f32 %v5476
    %v5479 = vcvt.s32.f32 %v5477
    %5480 = vmin.xlane.f32.xlu0 %v5479
    %v5481 = vpop.xlane.xlu0 %5480
    %vm5482 = vcmp.eq.f32.partialorder %v5479, %v5481
    %v5483 = vsel %vm5482, %v5478, inf
    %5484 = vmin.xlane.f32.xlu0 %v5483
    %v5485 = vpop.xlane.xlu0 %5484
    %v5486 = vcvt.f32.s32 %v5485
    %v5487 = vcvt.f32.s32 %v5481
    %v5488 = vshll.u32 %v5487, 16
    %v5489 = vadd.s32 %v5488, %v5486
    %s5490 = vtos %v5489
    %v5491 = vsel %vm5456, %v2300, 0
    %v5492 = vsel %vm2809, %v5491, 2147483648
    %v5493 = vand.u32 %v5492, 65535
    %v5494 = vshra.s32 %v5492, 16
    %v5495 = vcvt.s32.f32 %v5493
    %v5496 = vcvt.s32.f32 %v5494
    %5497 = vmax.xlane.f32.xlu0 %v5496
    %v5498 = vpop.xlane.xlu0 %5497
    %vm5499 = vcmp.eq.f32.partialorder %v5496, %v5498
    %v5500 = vsel %vm5499, %v5495, -inf
    %5501 = vmax.xlane.f32.xlu0 %v5500
    %v5502 = vpop.xlane.xlu0 %5501
    %v5503 = vcvt.f32.s32 %v5502
    %v5504 = vcvt.f32.s32 %v5498
    %v5505 = vshll.u32 %v5504, 16
    %v5506 = vadd.s32 %v5505, %v5503
    %s5507 = vtos %v5506
    %v5508 = vsel %vm5456, %v2301, 0
    %v5509 = vsel %vm2809, %v5508, 2147483648
    %v5510 = vand.u32 %v5509, 65535
    %v5511 = vshra.s32 %v5509, 16
    %v5512 = vcvt.s32.f32 %v5510
    %v5513 = vcvt.s32.f32 %v5511
    %5514 = vmax.xlane.f32.xlu0 %v5513
    %v5515 = vpop.xlane.xlu0 %5514
    %vm5516 = vcmp.eq.f32.partialorder %v5513, %v5515
    %v5517 = vsel %vm5516, %v5512, -inf
    %5518 = vmax.xlane.f32.xlu0 %v5517
    %v5519 = vpop.xlane.xlu0 %5518
    %v5520 = vcvt.f32.s32 %v5519
    %v5521 = vcvt.f32.s32 %v5515
    %v5522 = vshll.u32 %v5521, 16
    %v5523 = vadd.s32 %v5522, %v5520
    %s5524 = vtos %v5523
    %v5525 = vstv %s5473
    %vm5526 = vcmp.ge.s32.totalorder %v87, %v5525
    %vm5527 = vcmp.ge.s32.totalorder %v88, %v5525
    %vm5528 = vcmp.ge.s32.totalorder %v89, %v5525
    %vm5529 = vcmp.ge.s32.totalorder %v90, %v5525
    %vm5530 = vcmp.ge.s32.totalorder %v91, %v5525
    %vm5531 = vcmp.ge.s32.totalorder %v92, %v5525
    %vm5532 = vcmp.ge.s32.totalorder %v93, %v5525
    %vm5533 = vcmp.ge.s32.totalorder %v94, %v5525
    %v5534 = vstv %s5507
    %vm5535 = vcmp.lt.s32.totalorder %v87, %v5534
    %vm5536 = vcmp.lt.s32.totalorder %v88, %v5534
    %vm5537 = vcmp.lt.s32.totalorder %v89, %v5534
    %vm5538 = vcmp.lt.s32.totalorder %v90, %v5534
    %vm5539 = vcmp.lt.s32.totalorder %v91, %v5534
    %vm5540 = vcmp.lt.s32.totalorder %v92, %v5534
    %vm5541 = vcmp.lt.s32.totalorder %v93, %v5534
    %vm5542 = vcmp.lt.s32.totalorder %v94, %v5534
    %vm5543 = vmand %vm5526, %vm5535
    %vm5544 = vmand %vm5527, %vm5536
    %vm5545 = vmand %vm5528, %vm5537
    %vm5546 = vmand %vm5529, %vm5538
    %vm5547 = vmand %vm5530, %vm5539
    %vm5548 = vmand %vm5531, %vm5540
    %vm5549 = vmand %vm5532, %vm5541
    %vm5550 = vmand %vm5533, %vm5542
    %v5551 = vstv %s5490
    %vm5552 = vcmp.ge.s32.totalorder %v97, %v5551
    %v5553 = vstv %s5524
    %vm5554 = vcmp.lt.s32.totalorder %v97, %v5553
    %vm5555 = vmand %vm5552, %vm5554
    %vm5556 = vmand %vm5543, %vm5555
    %vm5557 = vmand %vm5544, %vm5555
    %vm5558 = vmand %vm5545, %vm5555
    %vm5559 = vmand %vm5546, %vm5555
    %vm5560 = vmand %vm5547, %vm5555
    %vm5561 = vmand %vm5548, %vm5555
    %vm5562 = vmand %vm5549, %vm5555
    %vm5563 = vmand %vm5550, %vm5555
    %vm5564 = vmpackc.low %vm5557, %vm5556
    %vm5565 = vmpackc.low %vm5559, %vm5558
    %vm5566 = vmpackc.even %vm5565, %vm5564
    %vm5567 = vmpackc.low %vm5561, %vm5560
    %vm5568 = vmpackc.low %vm5563, %vm5562
    %vm5569 = vmpackc.even %vm5568, %vm5567
    %v5570 = vsel %vm5566, 16843009, 0
    %v5571 = vsel %vm5569, 16843009, 0
    %s5572 = scalar_lea.vmem [#allocation6], 336
    %5573 = vst.msk [vmem:[%s5572] sm:$0xff] %vm68, %v5570
    %5574 = vst.msk [vmem:[%s5572 + $0x8] sm:$0xff] %vm68, %v5571
    %vm5575 = vcmp.eq.s32.totalorder %v2933, 22
    %vm5576 = vmand %vm2935, %vm5575
    %v5577 = vsel %vm5576, %v2298, 9218
    %v5578 = vsel %vm2809, %v5577, 2147483647
    %v5579 = vand.u32 %v5578, 65535
    %v5580 = vshra.s32 %v5578, 16
    %v5581 = vcvt.s32.f32 %v5579
    %v5582 = vcvt.s32.f32 %v5580
    %5583 = vmin.xlane.f32.xlu0 %v5582
    %v5584 = vpop.xlane.xlu0 %5583
    %vm5585 = vcmp.eq.f32.partialorder %v5582, %v5584
    %v5586 = vsel %vm5585, %v5581, inf
    %5587 = vmin.xlane.f32.xlu0 %v5586
    %v5588 = vpop.xlane.xlu0 %5587
    %v5589 = vcvt.f32.s32 %v5588
    %v5590 = vcvt.f32.s32 %v5584
    %v5591 = vshll.u32 %v5590, 16
    %v5592 = vadd.s32 %v5591, %v5589
    %s5593 = vtos %v5592
    %v5594 = vsel %vm5576, %v2299, 9218
    %v5595 = vsel %vm2809, %v5594, 2147483647
    %v5596 = vand.u32 %v5595, 65535
    %v5597 = vshra.s32 %v5595, 16
    %v5598 = vcvt.s32.f32 %v5596
    %v5599 = vcvt.s32.f32 %v5597
    %5600 = vmin.xlane.f32.xlu0 %v5599
    %v5601 = vpop.xlane.xlu0 %5600
    %vm5602 = vcmp.eq.f32.partialorder %v5599, %v5601
    %v5603 = vsel %vm5602, %v5598, inf
    %5604 = vmin.xlane.f32.xlu0 %v5603
    %v5605 = vpop.xlane.xlu0 %5604
    %v5606 = vcvt.f32.s32 %v5605
    %v5607 = vcvt.f32.s32 %v5601
    %v5608 = vshll.u32 %v5607, 16
    %v5609 = vadd.s32 %v5608, %v5606
    %s5610 = vtos %v5609
    %v5611 = vsel %vm5576, %v2300, 0
    %v5612 = vsel %vm2809, %v5611, 2147483648
    %v5613 = vand.u32 %v5612, 65535
    %v5614 = vshra.s32 %v5612, 16
    %v5615 = vcvt.s32.f32 %v5613
    %v5616 = vcvt.s32.f32 %v5614
    %5617 = vmax.xlane.f32.xlu0 %v5616
    %v5618 = vpop.xlane.xlu0 %5617
    %vm5619 = vcmp.eq.f32.partialorder %v5616, %v5618
    %v5620 = vsel %vm5619, %v5615, -inf
    %5621 = vmax.xlane.f32.xlu0 %v5620
    %v5622 = vpop.xlane.xlu0 %5621
    %v5623 = vcvt.f32.s32 %v5622
    %v5624 = vcvt.f32.s32 %v5618
    %v5625 = vshll.u32 %v5624, 16
    %v5626 = vadd.s32 %v5625, %v5623
    %s5627 = vtos %v5626
    %v5628 = vsel %vm5576, %v2301, 0
    %v5629 = vsel %vm2809, %v5628, 2147483648
    %v5630 = vand.u32 %v5629, 65535
    %v5631 = vshra.s32 %v5629, 16
    %v5632 = vcvt.s32.f32 %v5630
    %v5633 = vcvt.s32.f32 %v5631
    %5634 = vmax.xlane.f32.xlu0 %v5633
    %v5635 = vpop.xlane.xlu0 %5634
    %vm5636 = vcmp.eq.f32.partialorder %v5633, %v5635
    %v5637 = vsel %vm5636, %v5632, -inf
    %5638 = vmax.xlane.f32.xlu0 %v5637
    %v5639 = vpop.xlane.xlu0 %5638
    %v5640 = vcvt.f32.s32 %v5639
    %v5641 = vcvt.f32.s32 %v5635
    %v5642 = vshll.u32 %v5641, 16
    %v5643 = vadd.s32 %v5642, %v5640
    %s5644 = vtos %v5643
    %v5645 = vstv %s5593
    %vm5646 = vcmp.ge.s32.totalorder %v87, %v5645
    %vm5647 = vcmp.ge.s32.totalorder %v88, %v5645
    %vm5648 = vcmp.ge.s32.totalorder %v89, %v5645
    %vm5649 = vcmp.ge.s32.totalorder %v90, %v5645
    %vm5650 = vcmp.ge.s32.totalorder %v91, %v5645
    %vm5651 = vcmp.ge.s32.totalorder %v92, %v5645
    %vm5652 = vcmp.ge.s32.totalorder %v93, %v5645
    %vm5653 = vcmp.ge.s32.totalorder %v94, %v5645
    %v5654 = vstv %s5627
    %vm5655 = vcmp.lt.s32.totalorder %v87, %v5654
    %vm5656 = vcmp.lt.s32.totalorder %v88, %v5654
    %vm5657 = vcmp.lt.s32.totalorder %v89, %v5654
    %vm5658 = vcmp.lt.s32.totalorder %v90, %v5654
    %vm5659 = vcmp.lt.s32.totalorder %v91, %v5654
    %vm5660 = vcmp.lt.s32.totalorder %v92, %v5654
    %vm5661 = vcmp.lt.s32.totalorder %v93, %v5654
    %vm5662 = vcmp.lt.s32.totalorder %v94, %v5654
    %vm5663 = vmand %vm5646, %vm5655
    %vm5664 = vmand %vm5647, %vm5656
    %vm5665 = vmand %vm5648, %vm5657
    %vm5666 = vmand %vm5649, %vm5658
    %vm5667 = vmand %vm5650, %vm5659
    %vm5668 = vmand %vm5651, %vm5660
    %vm5669 = vmand %vm5652, %vm5661
    %vm5670 = vmand %vm5653, %vm5662
    %v5671 = vstv %s5610
    %vm5672 = vcmp.ge.s32.totalorder %v97, %v5671
    %v5673 = vstv %s5644
    %vm5674 = vcmp.lt.s32.totalorder %v97, %v5673
    %vm5675 = vmand %vm5672, %vm5674
    %vm5676 = vmand %vm5663, %vm5675
    %vm5677 = vmand %vm5664, %vm5675
    %vm5678 = vmand %vm5665, %vm5675
    %vm5679 = vmand %vm5666, %vm5675
    %vm5680 = vmand %vm5667, %vm5675
    %vm5681 = vmand %vm5668, %vm5675
    %vm5682 = vmand %vm5669, %vm5675
    %vm5683 = vmand %vm5670, %vm5675
    %vm5684 = vmpackc.low %vm5677, %vm5676
    %vm5685 = vmpackc.low %vm5679, %vm5678
    %vm5686 = vmpackc.even %vm5685, %vm5684
    %vm5687 = vmpackc.low %vm5681, %vm5680
    %vm5688 = vmpackc.low %vm5683, %vm5682
    %vm5689 = vmpackc.even %vm5688, %vm5687
    %v5690 = vsel %vm5686, 16843009, 0
    %v5691 = vsel %vm5689, 16843009, 0
    %s5692 = scalar_lea.vmem [#allocation6], 352
    %5693 = vst.msk [vmem:[%s5692] sm:$0xff] %vm68, %v5690
    %5694 = vst.msk [vmem:[%s5692 + $0x8] sm:$0xff] %vm68, %v5691
    %vm5695 = vcmp.eq.s32.totalorder %v2933, 23
    %vm5696 = vmand %vm2935, %vm5695
    %v5697 = vsel %vm5696, %v2298, 9218
    %v5698 = vsel %vm2809, %v5697, 2147483647
    %v5699 = vand.u32 %v5698, 65535
    %v5700 = vshra.s32 %v5698, 16
    %v5701 = vcvt.s32.f32 %v5699
    %v5702 = vcvt.s32.f32 %v5700
    %5703 = vmin.xlane.f32.xlu0 %v5702
    %v5704 = vpop.xlane.xlu0 %5703
    %vm5705 = vcmp.eq.f32.partialorder %v5702, %v5704
    %v5706 = vsel %vm5705, %v5701, inf
    %5707 = vmin.xlane.f32.xlu0 %v5706
    %v5708 = vpop.xlane.xlu0 %5707
    %v5709 = vcvt.f32.s32 %v5708
    %v5710 = vcvt.f32.s32 %v5704
    %v5711 = vshll.u32 %v5710, 16
    %v5712 = vadd.s32 %v5711, %v5709
    %s5713 = vtos %v5712
    %v5714 = vsel %vm5696, %v2299, 9218
    %v5715 = vsel %vm2809, %v5714, 2147483647
    %v5716 = vand.u32 %v5715, 65535
    %v5717 = vshra.s32 %v5715, 16
    %v5718 = vcvt.s32.f32 %v5716
    %v5719 = vcvt.s32.f32 %v5717
    %5720 = vmin.xlane.f32.xlu0 %v5719
    %v5721 = vpop.xlane.xlu0 %5720
    %vm5722 = vcmp.eq.f32.partialorder %v5719, %v5721
    %v5723 = vsel %vm5722, %v5718, inf
    %5724 = vmin.xlane.f32.xlu0 %v5723
    %v5725 = vpop.xlane.xlu0 %5724
    %v5726 = vcvt.f32.s32 %v5725
    %v5727 = vcvt.f32.s32 %v5721
    %v5728 = vshll.u32 %v5727, 16
    %v5729 = vadd.s32 %v5728, %v5726
    %s5730 = vtos %v5729
    %v5731 = vsel %vm5696, %v2300, 0
    %v5732 = vsel %vm2809, %v5731, 2147483648
    %v5733 = vand.u32 %v5732, 65535
    %v5734 = vshra.s32 %v5732, 16
    %v5735 = vcvt.s32.f32 %v5733
    %v5736 = vcvt.s32.f32 %v5734
    %5737 = vmax.xlane.f32.xlu0 %v5736
    %v5738 = vpop.xlane.xlu0 %5737
    %vm5739 = vcmp.eq.f32.partialorder %v5736, %v5738
    %v5740 = vsel %vm5739, %v5735, -inf
    %5741 = vmax.xlane.f32.xlu0 %v5740
    %v5742 = vpop.xlane.xlu0 %5741
    %v5743 = vcvt.f32.s32 %v5742
    %v5744 = vcvt.f32.s32 %v5738
    %v5745 = vshll.u32 %v5744, 16
    %v5746 = vadd.s32 %v5745, %v5743
    %s5747 = vtos %v5746
    %v5748 = vsel %vm5696, %v2301, 0
    %v5749 = vsel %vm2809, %v5748, 2147483648
    %v5750 = vand.u32 %v5749, 65535
    %v5751 = vshra.s32 %v5749, 16
    %v5752 = vcvt.s32.f32 %v5750
    %v5753 = vcvt.s32.f32 %v5751
    %5754 = vmax.xlane.f32.xlu0 %v5753
    %v5755 = vpop.xlane.xlu0 %5754
    %vm5756 = vcmp.eq.f32.partialorder %v5753, %v5755
    %v5757 = vsel %vm5756, %v5752, -inf
    %5758 = vmax.xlane.f32.xlu0 %v5757
    %v5759 = vpop.xlane.xlu0 %5758
    %v5760 = vcvt.f32.s32 %v5759
    %v5761 = vcvt.f32.s32 %v5755
    %v5762 = vshll.u32 %v5761, 16
    %v5763 = vadd.s32 %v5762, %v5760
    %s5764 = vtos %v5763
    %v5765 = vstv %s5713
    %vm5766 = vcmp.ge.s32.totalorder %v87, %v5765
    %vm5767 = vcmp.ge.s32.totalorder %v88, %v5765
    %vm5768 = vcmp.ge.s32.totalorder %v89, %v5765
    %vm5769 = vcmp.ge.s32.totalorder %v90, %v5765
    %vm5770 = vcmp.ge.s32.totalorder %v91, %v5765
    %vm5771 = vcmp.ge.s32.totalorder %v92, %v5765
    %vm5772 = vcmp.ge.s32.totalorder %v93, %v5765
    %vm5773 = vcmp.ge.s32.totalorder %v94, %v5765
    %v5774 = vstv %s5747
    %vm5775 = vcmp.lt.s32.totalorder %v87, %v5774
    %vm5776 = vcmp.lt.s32.totalorder %v88, %v5774
    %vm5777 = vcmp.lt.s32.totalorder %v89, %v5774
    %vm5778 = vcmp.lt.s32.totalorder %v90, %v5774
    %vm5779 = vcmp.lt.s32.totalorder %v91, %v5774
    %vm5780 = vcmp.lt.s32.totalorder %v92, %v5774
    %vm5781 = vcmp.lt.s32.totalorder %v93, %v5774
    %vm5782 = vcmp.lt.s32.totalorder %v94, %v5774
    %vm5783 = vmand %vm5766, %vm5775
    %vm5784 = vmand %vm5767, %vm5776
    %vm5785 = vmand %vm5768, %vm5777
    %vm5786 = vmand %vm5769, %vm5778
    %vm5787 = vmand %vm5770, %vm5779
    %vm5788 = vmand %vm5771, %vm5780
    %vm5789 = vmand %vm5772, %vm5781
    %vm5790 = vmand %vm5773, %vm5782
    %v5791 = vstv %s5730
    %vm5792 = vcmp.ge.s32.totalorder %v97, %v5791
    %v5793 = vstv %s5764
    %vm5794 = vcmp.lt.s32.totalorder %v97, %v5793
    %vm5795 = vmand %vm5792, %vm5794
    %vm5796 = vmand %vm5783, %vm5795
    %vm5797 = vmand %vm5784, %vm5795
    %vm5798 = vmand %vm5785, %vm5795
    %vm5799 = vmand %vm5786, %vm5795
    %vm5800 = vmand %vm5787, %vm5795
    %vm5801 = vmand %vm5788, %vm5795
    %vm5802 = vmand %vm5789, %vm5795
    %vm5803 = vmand %vm5790, %vm5795
    %vm5804 = vmpackc.low %vm5797, %vm5796
    %vm5805 = vmpackc.low %vm5799, %vm5798
    %vm5806 = vmpackc.even %vm5805, %vm5804
    %vm5807 = vmpackc.low %vm5801, %vm5800
    %vm5808 = vmpackc.low %vm5803, %vm5802
    %vm5809 = vmpackc.even %vm5808, %vm5807
    %v5810 = vsel %vm5806, 16843009, 0
    %v5811 = vsel %vm5809, 16843009, 0
    %s5812 = scalar_lea.vmem [#allocation6], 368
    %5813 = vst.msk [vmem:[%s5812] sm:$0xff] %vm68, %v5810
    %5814 = vst.msk [vmem:[%s5812 + $0x8] sm:$0xff] %vm68, %v5811
    %vm5815 = vcmp.eq.s32.totalorder %v2933, 24
    %vm5816 = vmand %vm2935, %vm5815
    %v5817 = vsel %vm5816, %v2298, 9218
    %v5818 = vsel %vm2809, %v5817, 2147483647
    %v5819 = vand.u32 %v5818, 65535
    %v5820 = vshra.s32 %v5818, 16
    %v5821 = vcvt.s32.f32 %v5819
    %v5822 = vcvt.s32.f32 %v5820
    %5823 = vmin.xlane.f32.xlu0 %v5822
    %v5824 = vpop.xlane.xlu0 %5823
    %vm5825 = vcmp.eq.f32.partialorder %v5822, %v5824
    %v5826 = vsel %vm5825, %v5821, inf
    %5827 = vmin.xlane.f32.xlu0 %v5826
    %v5828 = vpop.xlane.xlu0 %5827
    %v5829 = vcvt.f32.s32 %v5828
    %v5830 = vcvt.f32.s32 %v5824
    %v5831 = vshll.u32 %v5830, 16
    %v5832 = vadd.s32 %v5831, %v5829
    %s5833 = vtos %v5832
    %v5834 = vsel %vm5816, %v2299, 9218
    %v5835 = vsel %vm2809, %v5834, 2147483647
    %v5836 = vand.u32 %v5835, 65535
    %v5837 = vshra.s32 %v5835, 16
    %v5838 = vcvt.s32.f32 %v5836
    %v5839 = vcvt.s32.f32 %v5837
    %5840 = vmin.xlane.f32.xlu0 %v5839
    %v5841 = vpop.xlane.xlu0 %5840
    %vm5842 = vcmp.eq.f32.partialorder %v5839, %v5841
    %v5843 = vsel %vm5842, %v5838, inf
    %5844 = vmin.xlane.f32.xlu0 %v5843
    %v5845 = vpop.xlane.xlu0 %5844
    %v5846 = vcvt.f32.s32 %v5845
    %v5847 = vcvt.f32.s32 %v5841
    %v5848 = vshll.u32 %v5847, 16
    %v5849 = vadd.s32 %v5848, %v5846
    %s5850 = vtos %v5849
    %v5851 = vsel %vm5816, %v2300, 0
    %v5852 = vsel %vm2809, %v5851, 2147483648
    %v5853 = vand.u32 %v5852, 65535
    %v5854 = vshra.s32 %v5852, 16
    %v5855 = vcvt.s32.f32 %v5853
    %v5856 = vcvt.s32.f32 %v5854
    %5857 = vmax.xlane.f32.xlu0 %v5856
    %v5858 = vpop.xlane.xlu0 %5857
    %vm5859 = vcmp.eq.f32.partialorder %v5856, %v5858
    %v5860 = vsel %vm5859, %v5855, -inf
    %5861 = vmax.xlane.f32.xlu0 %v5860
    %v5862 = vpop.xlane.xlu0 %5861
    %v5863 = vcvt.f32.s32 %v5862
    %v5864 = vcvt.f32.s32 %v5858
    %v5865 = vshll.u32 %v5864, 16
    %v5866 = vadd.s32 %v5865, %v5863
    %s5867 = vtos %v5866
    %v5868 = vsel %vm5816, %v2301, 0
    %v5869 = vsel %vm2809, %v5868, 2147483648
    %v5870 = vand.u32 %v5869, 65535
    %v5871 = vshra.s32 %v5869, 16
    %v5872 = vcvt.s32.f32 %v5870
    %v5873 = vcvt.s32.f32 %v5871
    %5874 = vmax.xlane.f32.xlu0 %v5873
    %v5875 = vpop.xlane.xlu0 %5874
    %vm5876 = vcmp.eq.f32.partialorder %v5873, %v5875
    %v5877 = vsel %vm5876, %v5872, -inf
    %5878 = vmax.xlane.f32.xlu0 %v5877
    %v5879 = vpop.xlane.xlu0 %5878
    %v5880 = vcvt.f32.s32 %v5879
    %v5881 = vcvt.f32.s32 %v5875
    %v5882 = vshll.u32 %v5881, 16
    %v5883 = vadd.s32 %v5882, %v5880
    %s5884 = vtos %v5883
    %v5885 = vstv %s5833
    %vm5886 = vcmp.ge.s32.totalorder %v87, %v5885
    %vm5887 = vcmp.ge.s32.totalorder %v88, %v5885
    %vm5888 = vcmp.ge.s32.totalorder %v89, %v5885
    %vm5889 = vcmp.ge.s32.totalorder %v90, %v5885
    %vm5890 = vcmp.ge.s32.totalorder %v91, %v5885
    %vm5891 = vcmp.ge.s32.totalorder %v92, %v5885
    %vm5892 = vcmp.ge.s32.totalorder %v93, %v5885
    %vm5893 = vcmp.ge.s32.totalorder %v94, %v5885
    %v5894 = vstv %s5867
    %vm5895 = vcmp.lt.s32.totalorder %v87, %v5894
    %vm5896 = vcmp.lt.s32.totalorder %v88, %v5894
    %vm5897 = vcmp.lt.s32.totalorder %v89, %v5894
    %vm5898 = vcmp.lt.s32.totalorder %v90, %v5894
    %vm5899 = vcmp.lt.s32.totalorder %v91, %v5894
    %vm5900 = vcmp.lt.s32.totalorder %v92, %v5894
    %vm5901 = vcmp.lt.s32.totalorder %v93, %v5894
    %vm5902 = vcmp.lt.s32.totalorder %v94, %v5894
    %vm5903 = vmand %vm5886, %vm5895
    %vm5904 = vmand %vm5887, %vm5896
    %vm5905 = vmand %vm5888, %vm5897
    %vm5906 = vmand %vm5889, %vm5898
    %vm5907 = vmand %vm5890, %vm5899
    %vm5908 = vmand %vm5891, %vm5900
    %vm5909 = vmand %vm5892, %vm5901
    %vm5910 = vmand %vm5893, %vm5902
    %v5911 = vstv %s5850
    %vm5912 = vcmp.ge.s32.totalorder %v97, %v5911
    %v5913 = vstv %s5884
    %vm5914 = vcmp.lt.s32.totalorder %v97, %v5913
    %vm5915 = vmand %vm5912, %vm5914
    %vm5916 = vmand %vm5903, %vm5915
    %vm5917 = vmand %vm5904, %vm5915
    %vm5918 = vmand %vm5905, %vm5915
    %vm5919 = vmand %vm5906, %vm5915
    %vm5920 = vmand %vm5907, %vm5915
    %vm5921 = vmand %vm5908, %vm5915
    %vm5922 = vmand %vm5909, %vm5915
    %vm5923 = vmand %vm5910, %vm5915
    %vm5924 = vmpackc.low %vm5917, %vm5916
    %vm5925 = vmpackc.low %vm5919, %vm5918
    %vm5926 = vmpackc.even %vm5925, %vm5924
    %vm5927 = vmpackc.low %vm5921, %vm5920
    %vm5928 = vmpackc.low %vm5923, %vm5922
    %vm5929 = vmpackc.even %vm5928, %vm5927
    %v5930 = vsel %vm5926, 16843009, 0
    %v5931 = vsel %vm5929, 16843009, 0
    %s5932 = scalar_lea.vmem [#allocation6], 384
    %5933 = vst.msk [vmem:[%s5932] sm:$0xff] %vm68, %v5930
    %5934 = vst.msk [vmem:[%s5932 + $0x8] sm:$0xff] %vm68, %v5931
    %vm5935 = vcmp.eq.s32.totalorder %v2933, 25
    %vm5936 = vmand %vm2935, %vm5935
    %v5937 = vsel %vm5936, %v2298, 9218
    %v5938 = vsel %vm2809, %v5937, 2147483647
    %v5939 = vand.u32 %v5938, 65535
    %v5940 = vshra.s32 %v5938, 16
    %v5941 = vcvt.s32.f32 %v5939
    %v5942 = vcvt.s32.f32 %v5940
    %5943 = vmin.xlane.f32.xlu0 %v5942
    %v5944 = vpop.xlane.xlu0 %5943
    %vm5945 = vcmp.eq.f32.partialorder %v5942, %v5944
    %v5946 = vsel %vm5945, %v5941, inf
    %5947 = vmin.xlane.f32.xlu0 %v5946
    %v5948 = vpop.xlane.xlu0 %5947
    %v5949 = vcvt.f32.s32 %v5948
    %v5950 = vcvt.f32.s32 %v5944
    %v5951 = vshll.u32 %v5950, 16
    %v5952 = vadd.s32 %v5951, %v5949
    %s5953 = vtos %v5952
    %v5954 = vsel %vm5936, %v2299, 9218
    %v5955 = vsel %vm2809, %v5954, 2147483647
    %v5956 = vand.u32 %v5955, 65535
    %v5957 = vshra.s32 %v5955, 16
    %v5958 = vcvt.s32.f32 %v5956
    %v5959 = vcvt.s32.f32 %v5957
    %5960 = vmin.xlane.f32.xlu0 %v5959
    %v5961 = vpop.xlane.xlu0 %5960
    %vm5962 = vcmp.eq.f32.partialorder %v5959, %v5961
    %v5963 = vsel %vm5962, %v5958, inf
    %5964 = vmin.xlane.f32.xlu0 %v5963
    %v5965 = vpop.xlane.xlu0 %5964
    %v5966 = vcvt.f32.s32 %v5965
    %v5967 = vcvt.f32.s32 %v5961
    %v5968 = vshll.u32 %v5967, 16
    %v5969 = vadd.s32 %v5968, %v5966
    %s5970 = vtos %v5969
    %v5971 = vsel %vm5936, %v2300, 0
    %v5972 = vsel %vm2809, %v5971, 2147483648
    %v5973 = vand.u32 %v5972, 65535
    %v5974 = vshra.s32 %v5972, 16
    %v5975 = vcvt.s32.f32 %v5973
    %v5976 = vcvt.s32.f32 %v5974
    %5977 = vmax.xlane.f32.xlu0 %v5976
    %v5978 = vpop.xlane.xlu0 %5977
    %vm5979 = vcmp.eq.f32.partialorder %v5976, %v5978
    %v5980 = vsel %vm5979, %v5975, -inf
    %5981 = vmax.xlane.f32.xlu0 %v5980
    %v5982 = vpop.xlane.xlu0 %5981
    %v5983 = vcvt.f32.s32 %v5982
    %v5984 = vcvt.f32.s32 %v5978
    %v5985 = vshll.u32 %v5984, 16
    %v5986 = vadd.s32 %v5985, %v5983
    %s5987 = vtos %v5986
    %v5988 = vsel %vm5936, %v2301, 0
    %v5989 = vsel %vm2809, %v5988, 2147483648
    %v5990 = vand.u32 %v5989, 65535
    %v5991 = vshra.s32 %v5989, 16
    %v5992 = vcvt.s32.f32 %v5990
    %v5993 = vcvt.s32.f32 %v5991
    %5994 = vmax.xlane.f32.xlu0 %v5993
    %v5995 = vpop.xlane.xlu0 %5994
    %vm5996 = vcmp.eq.f32.partialorder %v5993, %v5995
    %v5997 = vsel %vm5996, %v5992, -inf
    %5998 = vmax.xlane.f32.xlu0 %v5997
    %v5999 = vpop.xlane.xlu0 %5998
    %v6000 = vcvt.f32.s32 %v5999
    %v6001 = vcvt.f32.s32 %v5995
    %v6002 = vshll.u32 %v6001, 16
    %v6003 = vadd.s32 %v6002, %v6000
    %s6004 = vtos %v6003
    %v6005 = vstv %s5953
    %vm6006 = vcmp.ge.s32.totalorder %v87, %v6005
    %vm6007 = vcmp.ge.s32.totalorder %v88, %v6005
    %vm6008 = vcmp.ge.s32.totalorder %v89, %v6005
    %vm6009 = vcmp.ge.s32.totalorder %v90, %v6005
    %vm6010 = vcmp.ge.s32.totalorder %v91, %v6005
    %vm6011 = vcmp.ge.s32.totalorder %v92, %v6005
    %vm6012 = vcmp.ge.s32.totalorder %v93, %v6005
    %vm6013 = vcmp.ge.s32.totalorder %v94, %v6005
    %v6014 = vstv %s5987
    %vm6015 = vcmp.lt.s32.totalorder %v87, %v6014
    %vm6016 = vcmp.lt.s32.totalorder %v88, %v6014
    %vm6017 = vcmp.lt.s32.totalorder %v89, %v6014
    %vm6018 = vcmp.lt.s32.totalorder %v90, %v6014
    %vm6019 = vcmp.lt.s32.totalorder %v91, %v6014
    %vm6020 = vcmp.lt.s32.totalorder %v92, %v6014
    %vm6021 = vcmp.lt.s32.totalorder %v93, %v6014
    %vm6022 = vcmp.lt.s32.totalorder %v94, %v6014
    %vm6023 = vmand %vm6006, %vm6015
    %vm6024 = vmand %vm6007, %vm6016
    %vm6025 = vmand %vm6008, %vm6017
    %vm6026 = vmand %vm6009, %vm6018
    %vm6027 = vmand %vm6010, %vm6019
    %vm6028 = vmand %vm6011, %vm6020
    %vm6029 = vmand %vm6012, %vm6021
    %vm6030 = vmand %vm6013, %vm6022
    %v6031 = vstv %s5970
    %vm6032 = vcmp.ge.s32.totalorder %v97, %v6031
    %v6033 = vstv %s6004
    %vm6034 = vcmp.lt.s32.totalorder %v97, %v6033
    %vm6035 = vmand %vm6032, %vm6034
    %vm6036 = vmand %vm6023, %vm6035
    %vm6037 = vmand %vm6024, %vm6035
    %vm6038 = vmand %vm6025, %vm6035
    %vm6039 = vmand %vm6026, %vm6035
    %vm6040 = vmand %vm6027, %vm6035
    %vm6041 = vmand %vm6028, %vm6035
    %vm6042 = vmand %vm6029, %vm6035
    %vm6043 = vmand %vm6030, %vm6035
    %vm6044 = vmpackc.low %vm6037, %vm6036
    %vm6045 = vmpackc.low %vm6039, %vm6038
    %vm6046 = vmpackc.even %vm6045, %vm6044
    %vm6047 = vmpackc.low %vm6041, %vm6040
    %vm6048 = vmpackc.low %vm6043, %vm6042
    %vm6049 = vmpackc.even %vm6048, %vm6047
    %v6050 = vsel %vm6046, 16843009, 0
    %v6051 = vsel %vm6049, 16843009, 0
    %s6052 = scalar_lea.vmem [#allocation6], 400
    %6053 = vst.msk [vmem:[%s6052] sm:$0xff] %vm68, %v6050
    %6054 = vst.msk [vmem:[%s6052 + $0x8] sm:$0xff] %vm68, %v6051
    // Predicated region
    $region24: #{region_cluster_forward.1} parent=1 // pred_check
      _
    $region25: #{region_cluster_forward.1} parent=1 // pred_check_branch
      %6056 = sbr.rel (0) target = $region27
    $region26: #{region_cluster_forward.1} parent=1 // pred_region
      %s6058 = ssub.s32 6656, 6656
      %6059 = vsyncadd [#allocation5], %s6058
      %s6060 = sshll.u32 [#allocation6], 4
      %s6061 = int_to_ptr.vmem [resolvable:$true] %s6060
      %6066 = dma.vmem_to_hbm [thread:$0]  %s6061, 6656, %s1, [#allocation5], 128, 128, 8
    $region27: #{region_cluster_forward.1} parent=1 // pred_fallthru
      _
    // Predicated region
    $region28: #{region_cluster_forward.1} parent=1 // pred_check
      _
    $region29: #{region_cluster_forward.1} parent=1 // pred_check_branch
      %6068 = sbr.rel (0) target = $region31
    $region30: #{region_cluster_forward.1} parent=1 // pred_region
      %6069 = dma.done [#allocation5], 6656
    $region31: #{region_cluster_forward.1} parent=1 // pred_fallthru
      _
    %6070 = vsyncpa [#allocation4], 1
    %6071 = vsyncpa [#allocation5], 1

</llo_original>
